<compile_context>
chip_gen: v7x
topology: tpu7x:2x2x1
jax: 0.10.0
libtpu: 0.0.40
codegen_flags: <defaults>
</compile_context>

<pallas_src>
import functools

import jax
import jax.numpy as jnp
import numpy as np
from jax.experimental import pallas as pl
from jax.experimental.pallas import tpu as pltpu


def _tree_sum(vals):
    """Pairwise tree-sum -> short dependency chains (ILP across VALU slots)."""
    vals = list(vals)
    while len(vals) > 1:
        nxt = [vals[i] + vals[i + 1] for i in range(0, len(vals) - 1, 2)]
        if len(vals) % 2:
            nxt.append(vals[-1])
        vals = nxt
    return vals[0]


def _fused_conv_kernel(x_ref, w1_ref, b1_ref, w2_ref, b2_ref, o_ref,
                       pad1_ref, mid_ref, *, cin, cmid, cout, H, W):
    # x_ref:    (N, cin, H, W)          VMEM
    # w1_ref:   (cmid*cin*3*3,)         SMEM (OIHW flattened)
    # b1_ref:   (cmid,)                 SMEM
    # w2_ref:   (cout*cmid*2*2,)        SMEM (OIHW flattened)
    # b2_ref:   (cout,)                 SMEM
    # o_ref:    (N, cout, H, W)         VMEM
    # pad1_ref: (N, cin, H+2, W+2)      VMEM scratch (conv1 halo)
    # mid_ref:  (N, cmid, H+1, W+1)     VMEM scratch (conv1 output, pre-padded for conv2)

    # Zero-fill halo buffers, then drop the input into the (1,1) interior for the
    # 3x3 'same' padding.  conv1_2's 'same' padding is (0,1)/(0,1), so writing the
    # conv1 result into the top-left (H,W) corner of the zeroed (H+1,W+1) buffer
    # gives the padded intermediate for free.
    pad1_ref[...] = jnp.zeros(pad1_ref.shape, pad1_ref.dtype)
    mid_ref[...] = jnp.zeros(mid_ref.shape, mid_ref.dtype)
    pad1_ref[:, :, 1:1 + H, 1:1 + W] = x_ref[...]

    # ---- conv1_1: cin -> cmid, 3x3, pad (1,1)/(1,1) ----
    for co in range(cmid):
        partials = []
        for ci in range(cin):
            base = (co * cin + ci) * 9
            p = pad1_ref[:, ci, 0:H, 0:W] * w1_ref[base]
            for t in range(1, 9):
                i, j = divmod(t, 3)
                p = p + pad1_ref[:, ci, i:i + H, j:j + W] * w1_ref[base + t]
            partials.append(p)
        acc = _tree_sum(partials) + b1_ref[co]
        mid_ref[:, co, 0:H, 0:W] = acc

    # ---- conv1_2: cmid -> cout, 2x2, pad (0,1)/(0,1) ----
    for co in range(cout):
        partials = []
        for ci in range(cmid):
            base = (co * cmid + ci) * 4
            p = mid_ref[:, ci, 0:H, 0:W] * w2_ref[base]
            for t in range(1, 4):
                i, j = divmod(t, 2)
                p = p + mid_ref[:, ci, i:i + H, j:j + W] * w2_ref[base + t]
            partials.append(p)
        o_ref[:, co, :, :] = _tree_sum(partials) + b2_ref[co]


def custom_layer_forward(x, params):
    """Fused conv1_1 (3x3, 'same') -> conv1_2 (2x2, 'same'), one pallas_call."""
    w1, b1, w2, b2 = params
    N, Cin, H, W = x.shape
    Cmid = w1.shape[0]
    Cout = w2.shape[0]

    kernel = functools.partial(_fused_conv_kernel, cin=Cin, cmid=Cmid,
                               cout=Cout, H=H, W=W)
    return pl.pallas_call(
        kernel,
        out_shape=jax.ShapeDtypeStruct((N, Cout, H, W), jnp.float32),
        in_specs=[
            pl.BlockSpec(memory_space=pltpu.MemorySpace.VMEM),   # x
            pl.BlockSpec(memory_space=pltpu.MemorySpace.SMEM),   # w1 (scalars)
            pl.BlockSpec(memory_space=pltpu.MemorySpace.SMEM),   # b1
            pl.BlockSpec(memory_space=pltpu.MemorySpace.SMEM),   # w2 (scalars)
            pl.BlockSpec(memory_space=pltpu.MemorySpace.SMEM),   # b2
        ],
        out_specs=pl.BlockSpec(memory_space=pltpu.MemorySpace.VMEM),
        scratch_shapes=[
            pltpu.VMEM((N, Cin, H + 2, W + 2), jnp.float32),     # conv1 halo
            pltpu.VMEM((N, Cmid, H + 1, W + 1), jnp.float32),    # intermediate (+ conv2 halo)
        ],
    )(x, w1.reshape(-1), b1, w2.reshape(-1), b2)


def _conv_ref(x, w, b, pad):
    y = jax.lax.conv_general_dilated(
        x, w, window_strides=(1, 1), padding=[pad[0], pad[1]],
        dimension_numbers=("NCHW", "OIHW", "NCHW"))
    return y + b[None, :, None, None]


if __name__ == "__main__":
    in_ch, out_ch = 4, 8
    N, H, W = 2, 16, 16

    key = jax.random.PRNGKey(0)
    k1, k2, k3, k4, k5 = jax.random.split(key, 5)
    x = jax.random.normal(k1, (N, in_ch, H, W), jnp.float32)
    # Deterministic synthetic parameters (shapes dictated by the module __init__).
    w1 = jax.random.normal(k2, (3, in_ch, 3, 3), jnp.float32) * 0.1
    b1 = jax.random.normal(k3, (3,), jnp.float32) * 0.1
    w2 = jax.random.normal(k4, (out_ch, 3, 2, 2), jnp.float32) * 0.1
    b2 = jax.random.normal(k5, (out_ch,), jnp.float32) * 0.1
    params = (w1, b1, w2, b2)

    fwd = jax.jit(custom_layer_forward)
    out = fwd(x, params)
    jax.block_until_ready(out)

    # Cross-check against XLA's conv (same padding convention as PyTorch 'same').
    ref = _conv_ref(_conv_ref(x, w1, b1, ((1, 1), (1, 1))), w2, b2, ((0, 1), (0, 1)))
    np.testing.assert_allclose(np.asarray(out), np.asarray(ref), rtol=1e-4, atol=1e-4)

    print("KERNEL_OK")
</pallas_src>

<mosaic_0001>
module attributes {stable_mosaic.version = 11 : i64} {
  func.func @_fused_conv_kernel(%arg0: memref<2x4x16x16xf32, #tpu.memory_space<vmem>>, %arg1: memref<108xf32, #tpu.memory_space<smem>>, %arg2: memref<3xf32, #tpu.memory_space<smem>>, %arg3: memref<96xf32, #tpu.memory_space<smem>>, %arg4: memref<8xf32, #tpu.memory_space<smem>>, %arg5: memref<2x8x16x16xf32, #tpu.memory_space<vmem>>, %arg6: memref<2x4x18x18xf32, #tpu.memory_space<vmem>>, %arg7: memref<2x3x17x17xf32, #tpu.memory_space<vmem>>) attributes {dimension_semantics = [], scalar_prefetch = 0 : i64, scratch_operands = 2 : i64, tpu.core_type = #tpu.core_type<tc>} {
    %cst = arith.constant 0.000000e+00 : f32
    %0 = vector.broadcast %cst : f32 to vector<2x4x18x18xf32>
    %c0 = arith.constant 0 : index
    %c0_0 = arith.constant 0 : index
    %c0_1 = arith.constant 0 : index
    %c0_2 = arith.constant 0 : index
    %1 = vector.load %arg6[%c0, %c0_0, %c0_1, %c0_2] : memref<2x4x18x18xf32, #tpu.memory_space<vmem>>, vector<2x4x18x18xf32>
    tpu.vector_store %arg6[%c0, %c0_0, %c0_1, %c0_2], %0 {strides = array<i32>} : memref<2x4x18x18xf32, #tpu.memory_space<vmem>>, vector<2x4x18x18xf32>,
    %cst_3 = arith.constant 0.000000e+00 : f32
    %2 = vector.broadcast %cst_3 : f32 to vector<2x3x17x17xf32>
    %c0_4 = arith.constant 0 : index
    %c0_5 = arith.constant 0 : index
    %c0_6 = arith.constant 0 : index
    %c0_7 = arith.constant 0 : index
    %3 = vector.load %arg7[%c0_4, %c0_5, %c0_6, %c0_7] : memref<2x3x17x17xf32, #tpu.memory_space<vmem>>, vector<2x3x17x17xf32>
    tpu.vector_store %arg7[%c0_4, %c0_5, %c0_6, %c0_7], %2 {strides = array<i32>} : memref<2x3x17x17xf32, #tpu.memory_space<vmem>>, vector<2x3x17x17xf32>,
    %c0_8 = arith.constant 0 : index
    %c0_9 = arith.constant 0 : index
    %c0_10 = arith.constant 0 : index
    %c0_11 = arith.constant 0 : index
    %4 = vector.load %arg0[%c0_8, %c0_9, %c0_10, %c0_11] : memref<2x4x16x16xf32, #tpu.memory_space<vmem>>, vector<2x4x16x16xf32>
    %c0_12 = arith.constant 0 : index
    %c0_13 = arith.constant 0 : index
    %c1 = arith.constant 1 : index
    %c1_14 = arith.constant 1 : index
    %5 = vector.load %arg6[%c0_12, %c0_13, %c1, %c1_14] : memref<2x4x18x18xf32, #tpu.memory_space<vmem>>, vector<2x4x16x16xf32>
    tpu.vector_store %arg6[%c0_12, %c0_13, %c1, %c1_14], %4 {strides = array<i32>} : memref<2x4x18x18xf32, #tpu.memory_space<vmem>>, vector<2x4x16x16xf32>,
    %c0_15 = arith.constant 0 : index
    %c0_16 = arith.constant 0 : index
    %c0_17 = arith.constant 0 : index
    %c0_18 = arith.constant 0 : index
    %6 = vector.load %arg6[%c0_15, %c0_16, %c0_17, %c0_18] : memref<2x4x18x18xf32, #tpu.memory_space<vmem>>, vector<2x1x16x16xf32>
    %7 = vector.shape_cast %6 : vector<2x1x16x16xf32> to vector<2x16x16xf32>
    %c0_19 = arith.constant 0 : index
    %8 = memref.load %arg1[%c0_19] : memref<108xf32, #tpu.memory_space<smem>>
    %9 = vector.broadcast %8 : f32 to vector<2x16x16xf32>
    %10 = arith.mulf %7, %9 : vector<2x16x16xf32>
    %c0_20 = arith.constant 0 : index
    %c0_21 = arith.constant 0 : index
    %c0_22 = arith.constant 0 : index
    %c1_23 = arith.constant 1 : index
    %11 = vector.load %arg6[%c0_20, %c0_21, %c0_22, %c1_23] : memref<2x4x18x18xf32, #tpu.memory_space<vmem>>, vector<2x1x16x16xf32>
    %12 = vector.shape_cast %11 : vector<2x1x16x16xf32> to vector<2x16x16xf32>
    %c1_24 = arith.constant 1 : index
    %13 = memref.load %arg1[%c1_24] : memref<108xf32, #tpu.memory_space<smem>>
    %14 = vector.broadcast %13 : f32 to vector<2x16x16xf32>
    %15 = arith.mulf %12, %14 : vector<2x16x16xf32>
    %16 = arith.addf %10, %15 : vector<2x16x16xf32>
    %c0_25 = arith.constant 0 : index
    %c0_26 = arith.constant 0 : index
    %c0_27 = arith.constant 0 : index
    %c2 = arith.constant 2 : index
    %17 = vector.load %arg6[%c0_25, %c0_26, %c0_27, %c2] : memref<2x4x18x18xf32, #tpu.memory_space<vmem>>, vector<2x1x16x16xf32>
    %18 = vector.shape_cast %17 : vector<2x1x16x16xf32> to vector<2x16x16xf32>
    %c2_28 = arith.constant 2 : index
    %19 = memref.load %arg1[%c2_28] : memref<108xf32, #tpu.memory_space<smem>>
    %20 = vector.broadcast %19 : f32 to vector<2x16x16xf32>
    %21 = arith.mulf %18, %20 : vector<2x16x16xf32>
    %22 = arith.addf %16, %21 : vector<2x16x16xf32>
    %c0_29 = arith.constant 0 : index
    %c0_30 = arith.constant 0 : index
    %c1_31 = arith.constant 1 : index
    %c0_32 = arith.constant 0 : index
    %23 = vector.load %arg6[%c0_29, %c0_30, %c1_31, %c0_32] : memref<2x4x18x18xf32, #tpu.memory_space<vmem>>, vector<2x1x16x16xf32>
    %24 = vector.shape_cast %23 : vector<2x1x16x16xf32> to vector<2x16x16xf32>
    %c3 = arith.constant 3 : index
    %25 = memref.load %arg1[%c3] : memref<108xf32, #tpu.memory_space<smem>>
    %26 = vector.broadcast %25 : f32 to vector<2x16x16xf32>
    %27 = arith.mulf %24, %26 : vector<2x16x16xf32>
    %28 = arith.addf %22, %27 : vector<2x16x16xf32>
    %c0_33 = arith.constant 0 : index
    %c0_34 = arith.constant 0 : index
    %c1_35 = arith.constant 1 : index
    %c1_36 = arith.constant 1 : index
    %29 = vector.load %arg6[%c0_33, %c0_34, %c1_35, %c1_36] : memref<2x4x18x18xf32, #tpu.memory_space<vmem>>, vector<2x1x16x16xf32>
    %30 = vector.shape_cast %29 : vector<2x1x16x16xf32> to vector<2x16x16xf32>
    %c4 = arith.constant 4 : index
    %31 = memref.load %arg1[%c4] : memref<108xf32, #tpu.memory_space<smem>>
    %32 = vector.broadcast %31 : f32 to vector<2x16x16xf32>
    %33 = arith.mulf %30, %32 : vector<2x16x16xf32>
    %34 = arith.addf %28, %33 : vector<2x16x16xf32>
    %c0_37 = arith.constant 0 : index
    %c0_38 = arith.constant 0 : index
    %c1_39 = arith.constant 1 : index
    %c2_40 = arith.constant 2 : index
    %35 = vector.load %arg6[%c0_37, %c0_38, %c1_39, %c2_40] : memref<2x4x18x18xf32, #tpu.memory_space<vmem>>, vector<2x1x16x16xf32>
    %36 = vector.shape_cast %35 : vector<2x1x16x16xf32> to vector<2x16x16xf32>
    %c5 = arith.constant 5 : index
    %37 = memref.load %arg1[%c5] : memref<108xf32, #tpu.memory_space<smem>>
    %38 = vector.broadcast %37 : f32 to vector<2x16x16xf32>
    %39 = arith.mulf %36, %38 : vector<2x16x16xf32>
    %40 = arith.addf %34, %39 : vector<2x16x16xf32>
    %c0_41 = arith.constant 0 : index
    %c0_42 = arith.constant 0 : index
    %c2_43 = arith.constant 2 : index
    %c0_44 = arith.constant 0 : index
    %41 = vector.load %arg6[%c0_41, %c0_42, %c2_43, %c0_44] : memref<2x4x18x18xf32, #tpu.memory_space<vmem>>, vector<2x1x16x16xf32>
    %42 = vector.shape_cast %41 : vector<2x1x16x16xf32> to vector<2x16x16xf32>
    %c6 = arith.constant 6 : index
    %43 = memref.load %arg1[%c6] : memref<108xf32, #tpu.memory_space<smem>>
    %44 = vector.broadcast %43 : f32 to vector<2x16x16xf32>
    %45 = arith.mulf %42, %44 : vector<2x16x16xf32>
    %46 = arith.addf %40, %45 : vector<2x16x16xf32>
    %c0_45 = arith.constant 0 : index
    %c0_46 = arith.constant 0 : index
    %c2_47 = arith.constant 2 : index
    %c1_48 = arith.constant 1 : index
    %47 = vector.load %arg6[%c0_45, %c0_46, %c2_47, %c1_48] : memref<2x4x18x18xf32, #tpu.memory_space<vmem>>, vector<2x1x16x16xf32>
    %48 = vector.shape_cast %47 : vector<2x1x16x16xf32> to vector<2x16x16xf32>
    %c7 = arith.constant 7 : index
    %49 = memref.load %arg1[%c7] : memref<108xf32, #tpu.memory_space<smem>>
    %50 = vector.broadcast %49 : f32 to vector<2x16x16xf32>
    %51 = arith.mulf %48, %50 : vector<2x16x16xf32>
    %52 = arith.addf %46, %51 : vector<2x16x16xf32>
    %c0_49 = arith.constant 0 : index
    %c0_50 = arith.constant 0 : index
    %c2_51 = arith.constant 2 : index
    %c2_52 = arith.constant 2 : index
    %53 = vector.load %arg6[%c0_49, %c0_50, %c2_51, %c2_52] : memref<2x4x18x18xf32, #tpu.memory_space<vmem>>, vector<2x1x16x16xf32>
    %54 = vector.shape_cast %53 : vector<2x1x16x16xf32> to vector<2x16x16xf32>
    %c8 = arith.constant 8 : index
    %55 = memref.load %arg1[%c8] : memref<108xf32, #tpu.memory_space<smem>>
    %56 = vector.broadcast %55 : f32 to vector<2x16x16xf32>
    %57 = arith.mulf %54, %56 : vector<2x16x16xf32>
    %58 = arith.addf %52, %57 : vector<2x16x16xf32>
    %c0_53 = arith.constant 0 : index
    %c1_54 = arith.constant 1 : index
    %c0_55 = arith.constant 0 : index
    %c0_56 = arith.constant 0 : index
    %59 = vector.load %arg6[%c0_53, %c1_54, %c0_55, %c0_56] : memref<2x4x18x18xf32, #tpu.memory_space<vmem>>, vector<2x1x16x16xf32>
    %60 = vector.shape_cast %59 : vector<2x1x16x16xf32> to vector<2x16x16xf32>
    %c9 = arith.constant 9 : index
    %61 = memref.load %arg1[%c9] : memref<108xf32, #tpu.memory_space<smem>>
    %62 = vector.broadcast %61 : f32 to vector<2x16x16xf32>
    %63 = arith.mulf %60, %62 : vector<2x16x16xf32>
    %c0_57 = arith.constant 0 : index
    %c1_58 = arith.constant 1 : index
    %c0_59 = arith.constant 0 : index
    %c1_60 = arith.constant 1 : index
    %64 = vector.load %arg6[%c0_57, %c1_58, %c0_59, %c1_60] : memref<2x4x18x18xf32, #tpu.memory_space<vmem>>, vector<2x1x16x16xf32>
    %65 = vector.shape_cast %64 : vector<2x1x16x16xf32> to vector<2x16x16xf32>
    %c10 = arith.constant 10 : index
    %66 = memref.load %arg1[%c10] : memref<108xf32, #tpu.memory_space<smem>>
    %67 = vector.broadcast %66 : f32 to vector<2x16x16xf32>
    %68 = arith.mulf %65, %67 : vector<2x16x16xf32>
    %69 = arith.addf %63, %68 : vector<2x16x16xf32>
    %c0_61 = arith.constant 0 : index
    %c1_62 = arith.constant 1 : index
    %c0_63 = arith.constant 0 : index
    %c2_64 = arith.constant 2 : index
    %70 = vector.load %arg6[%c0_61, %c1_62, %c0_63, %c2_64] : memref<2x4x18x18xf32, #tpu.memory_space<vmem>>, vector<2x1x16x16xf32>
    %71 = vector.shape_cast %70 : vector<2x1x16x16xf32> to vector<2x16x16xf32>
    %c11 = arith.constant 11 : index
    %72 = memref.load %arg1[%c11] : memref<108xf32, #tpu.memory_space<smem>>
    %73 = vector.broadcast %72 : f32 to vector<2x16x16xf32>
    %74 = arith.mulf %71, %73 : vector<2x16x16xf32>
    %75 = arith.addf %69, %74 : vector<2x16x16xf32>
    %c0_65 = arith.constant 0 : index
    %c1_66 = arith.constant 1 : index
    %c1_67 = arith.constant 1 : index
    %c0_68 = arith.constant 0 : index
    %76 = vector.load %arg6[%c0_65, %c1_66, %c1_67, %c0_68] : memref<2x4x18x18xf32, #tpu.memory_space<vmem>>, vector<2x1x16x16xf32>
    %77 = vector.shape_cast %76 : vector<2x1x16x16xf32> to vector<2x16x16xf32>
    %c12 = arith.constant 12 : index
    %78 = memref.load %arg1[%c12] : memref<108xf32, #tpu.memory_space<smem>>
    %79 = vector.broadcast %78 : f32 to vector<2x16x16xf32>
    %80 = arith.mulf %77, %79 : vector<2x16x16xf32>
    %81 = arith.addf %75, %80 : vector<2x16x16xf32>
    %c0_69 = arith.constant 0 : index
    %c1_70 = arith.constant 1 : index
    %c1_71 = arith.constant 1 : index
    %c1_72 = arith.constant 1 : index
    %82 = vector.load %arg6[%c0_69, %c1_70, %c1_71, %c1_72] : memref<2x4x18x18xf32, #tpu.memory_space<vmem>>, vector<2x1x16x16xf32>
    %83 = vector.shape_cast %82 : vector<2x1x16x16xf32> to vector<2x16x16xf32>
    %c13 = arith.constant 13 : index
    %84 = memref.load %arg1[%c13] : memref<108xf32, #tpu.memory_space<smem>>
    %85 = vector.broadcast %84 : f32 to vector<2x16x16xf32>
    %86 = arith.mulf %83, %85 : vector<2x16x16xf32>
    %87 = arith.addf %81, %86 : vector<2x16x16xf32>
    %c0_73 = arith.constant 0 : index
    %c1_74 = arith.constant 1 : index
    %c1_75 = arith.constant 1 : index
    %c2_76 = arith.constant 2 : index
    %88 = vector.load %arg6[%c0_73, %c1_74, %c1_75, %c2_76] : memref<2x4x18x18xf32, #tpu.memory_space<vmem>>, vector<2x1x16x16xf32>
    %89 = vector.shape_cast %88 : vector<2x1x16x16xf32> to vector<2x16x16xf32>
    %c14 = arith.constant 14 : index
    %90 = memref.load %arg1[%c14] : memref<108xf32, #tpu.memory_space<smem>>
    %91 = vector.broadcast %90 : f32 to vector<2x16x16xf32>
    %92 = arith.mulf %89, %91 : vector<2x16x16xf32>
    %93 = arith.addf %87, %92 : vector<2x16x16xf32>
    %c0_77 = arith.constant 0 : index
    %c1_78 = arith.constant 1 : index
    %c2_79 = arith.constant 2 : index
    %c0_80 = arith.constant 0 : index
    %94 = vector.load %arg6[%c0_77, %c1_78, %c2_79, %c0_80] : memref<2x4x18x18xf32, #tpu.memory_space<vmem>>, vector<2x1x16x16xf32>
    %95 = vector.shape_cast %94 : vector<2x1x16x16xf32> to vector<2x16x16xf32>
    %c15 = arith.constant 15 : index
    %96 = memref.load %arg1[%c15] : memref<108xf32, #tpu.memory_space<smem>>
    %97 = vector.broadcast %96 : f32 to vector<2x16x16xf32>
    %98 = arith.mulf %95, %97 : vector<2x16x16xf32>
    %99 = arith.addf %93, %98 : vector<2x16x16xf32>
    %c0_81 = arith.constant 0 : index
    %c1_82 = arith.constant 1 : index
    %c2_83 = arith.constant 2 : index
    %c1_84 = arith.constant 1 : index
    %100 = vector.load %arg6[%c0_81, %c1_82, %c2_83, %c1_84] : memref<2x4x18x18xf32, #tpu.memory_space<vmem>>, vector<2x1x16x16xf32>
    %101 = vector.shape_cast %100 : vector<2x1x16x16xf32> to vector<2x16x16xf32>
    %c16 = arith.constant 16 : index
    %102 = memref.load %arg1[%c16] : memref<108xf32, #tpu.memory_space<smem>>
    %103 = vector.broadcast %102 : f32 to vector<2x16x16xf32>
    %104 = arith.mulf %101, %103 : vector<2x16x16xf32>
    %105 = arith.addf %99, %104 : vector<2x16x16xf32>
    %c0_85 = arith.constant 0 : index
    %c1_86 = arith.constant 1 : index
    %c2_87 = arith.constant 2 : index
    %c2_88 = arith.constant 2 : index
    %106 = vector.load %arg6[%c0_85, %c1_86, %c2_87, %c2_88] : memref<2x4x18x18xf32, #tpu.memory_space<vmem>>, vector<2x1x16x16xf32>
    %107 = vector.shape_cast %106 : vector<2x1x16x16xf32> to vector<2x16x16xf32>
    %c17 = arith.constant 17 : index
    %108 = memref.load %arg1[%c17] : memref<108xf32, #tpu.memory_space<smem>>
    %109 = vector.broadcast %108 : f32 to vector<2x16x16xf32>
    %110 = arith.mulf %107, %109 : vector<2x16x16xf32>
    %111 = arith.addf %105, %110 : vector<2x16x16xf32>
    %c0_89 = arith.constant 0 : index
    %c2_90 = arith.constant 2 : index
    %c0_91 = arith.constant 0 : index
    %c0_92 = arith.constant 0 : index
    %112 = vector.load %arg6[%c0_89, %c2_90, %c0_91, %c0_92] : memref<2x4x18x18xf32, #tpu.memory_space<vmem>>, vector<2x1x16x16xf32>
    %113 = vector.shape_cast %112 : vector<2x1x16x16xf32> to vector<2x16x16xf32>
    %c18 = arith.constant 18 : index
    %114 = memref.load %arg1[%c18] : memref<108xf32, #tpu.memory_space<smem>>
    %115 = vector.broadcast %114 : f32 to vector<2x16x16xf32>
    %116 = arith.mulf %113, %115 : vector<2x16x16xf32>
    %c0_93 = arith.constant 0 : index
    %c2_94 = arith.constant 2 : index
    %c0_95 = arith.constant 0 : index
    %c1_96 = arith.constant 1 : index
    %117 = vector.load %arg6[%c0_93, %c2_94, %c0_95, %c1_96] : memref<2x4x18x18xf32, #tpu.memory_space<vmem>>, vector<2x1x16x16xf32>
    %118 = vector.shape_cast %117 : vector<2x1x16x16xf32> to vector<2x16x16xf32>
    %c19 = arith.constant 19 : index
    %119 = memref.load %arg1[%c19] : memref<108xf32, #tpu.memory_space<smem>>
    %120 = vector.broadcast %119 : f32 to vector<2x16x16xf32>
    %121 = arith.mulf %118, %120 : vector<2x16x16xf32>
    %122 = arith.addf %116, %121 : vector<2x16x16xf32>
    %c0_97 = arith.constant 0 : index
    %c2_98 = arith.constant 2 : index
    %c0_99 = arith.constant 0 : index
    %c2_100 = arith.constant 2 : index
    %123 = vector.load %arg6[%c0_97, %c2_98, %c0_99, %c2_100] : memref<2x4x18x18xf32, #tpu.memory_space<vmem>>, vector<2x1x16x16xf32>
    %124 = vector.shape_cast %123 : vector<2x1x16x16xf32> to vector<2x16x16xf32>
    %c20 = arith.constant 20 : index
    %125 = memref.load %arg1[%c20] : memref<108xf32, #tpu.memory_space<smem>>
    %126 = vector.broadcast %125 : f32 to vector<2x16x16xf32>
    %127 = arith.mulf %124, %126 : vector<2x16x16xf32>
    %128 = arith.addf %122, %127 : vector<2x16x16xf32>
    %c0_101 = arith.constant 0 : index
    %c2_102 = arith.constant 2 : index
    %c1_103 = arith.constant 1 : index
    %c0_104 = arith.constant 0 : index
    %129 = vector.load %arg6[%c0_101, %c2_102, %c1_103, %c0_104] : memref<2x4x18x18xf32, #tpu.memory_space<vmem>>, vector<2x1x16x16xf32>
    %130 = vector.shape_cast %129 : vector<2x1x16x16xf32> to vector<2x16x16xf32>
    %c21 = arith.constant 21 : index
    %131 = memref.load %arg1[%c21] : memref<108xf32, #tpu.memory_space<smem>>
    %132 = vector.broadcast %131 : f32 to vector<2x16x16xf32>
    %133 = arith.mulf %130, %132 : vector<2x16x16xf32>
    %134 = arith.addf %128, %133 : vector<2x16x16xf32>
    %c0_105 = arith.constant 0 : index
    %c2_106 = arith.constant 2 : index
    %c1_107 = arith.constant 1 : index
    %c1_108 = arith.constant 1 : index
    %135 = vector.load %arg6[%c0_105, %c2_106, %c1_107, %c1_108] : memref<2x4x18x18xf32, #tpu.memory_space<vmem>>, vector<2x1x16x16xf32>
    %136 = vector.shape_cast %135 : vector<2x1x16x16xf32> to vector<2x16x16xf32>
    %c22 = arith.constant 22 : index
    %137 = memref.load %arg1[%c22] : memref<108xf32, #tpu.memory_space<smem>>
    %138 = vector.broadcast %137 : f32 to vector<2x16x16xf32>
    %139 = arith.mulf %136, %138 : vector<2x16x16xf32>
    %140 = arith.addf %134, %139 : vector<2x16x16xf32>
    %c0_109 = arith.constant 0 : index
    %c2_110 = arith.constant 2 : index
    %c1_111 = arith.constant 1 : index
    %c2_112 = arith.constant 2 : index
    %141 = vector.load %arg6[%c0_109, %c2_110, %c1_111, %c2_112] : memref<2x4x18x18xf32, #tpu.memory_space<vmem>>, vector<2x1x16x16xf32>
    %142 = vector.shape_cast %141 : vector<2x1x16x16xf32> to vector<2x16x16xf32>
    %c23 = arith.constant 23 : index
    %143 = memref.load %arg1[%c23] : memref<108xf32, #tpu.memory_space<smem>>
    %144 = vector.broadcast %143 : f32 to vector<2x16x16xf32>
    %145 = arith.mulf %142, %144 : vector<2x16x16xf32>
    %146 = arith.addf %140, %145 : vector<2x16x16xf32>
    %c0_113 = arith.constant 0 : index
    %c2_114 = arith.constant 2 : index
    %c2_115 = arith.constant 2 : index
    %c0_116 = arith.constant 0 : index
    %147 = vector.load %arg6[%c0_113, %c2_114, %c2_115, %c0_116] : memref<2x4x18x18xf32, #tpu.memory_space<vmem>>, vector<2x1x16x16xf32>
    %148 = vector.shape_cast %147 : vector<2x1x16x16xf32> to vector<2x16x16xf32>
    %c24 = arith.constant 24 : index
    %149 = memref.load %arg1[%c24] : memref<108xf32, #tpu.memory_space<smem>>
    %150 = vector.broadcast %149 : f32 to vector<2x16x16xf32>
    %151 = arith.mulf %148, %150 : vector<2x16x16xf32>
    %152 = arith.addf %146, %151 : vector<2x16x16xf32>
    %c0_117 = arith.constant 0 : index
    %c2_118 = arith.constant 2 : index
    %c2_119 = arith.constant 2 : index
    %c1_120 = arith.constant 1 : index
    %153 = vector.load %arg6[%c0_117, %c2_118, %c2_119, %c1_120] : memref<2x4x18x18xf32, #tpu.memory_space<vmem>>, vector<2x1x16x16xf32>
    %154 = vector.shape_cast %153 : vector<2x1x16x16xf32> to vector<2x16x16xf32>
    %c25 = arith.constant 25 : index
    %155 = memref.load %arg1[%c25] : memref<108xf32, #tpu.memory_space<smem>>
    %156 = vector.broadcast %155 : f32 to vector<2x16x16xf32>
    %157 = arith.mulf %154, %156 : vector<2x16x16xf32>
    %158 = arith.addf %152, %157 : vector<2x16x16xf32>
    %c0_121 = arith.constant 0 : index
    %c2_122 = arith.constant 2 : index
    %c2_123 = arith.constant 2 : index
    %c2_124 = arith.constant 2 : index
    %159 = vector.load %arg6[%c0_121, %c2_122, %c2_123, %c2_124] : memref<2x4x18x18xf32, #tpu.memory_space<vmem>>, vector<2x1x16x16xf32>
    %160 = vector.shape_cast %159 : vector<2x1x16x16xf32> to vector<2x16x16xf32>
    %c26 = arith.constant 26 : index
    %161 = memref.load %arg1[%c26] : memref<108xf32, #tpu.memory_space<smem>>
    %162 = vector.broadcast %161 : f32 to vector<2x16x16xf32>
    %163 = arith.mulf %160, %162 : vector<2x16x16xf32>
    %164 = arith.addf %158, %163 : vector<2x16x16xf32>
    %c0_125 = arith.constant 0 : index
    %c3_126 = arith.constant 3 : index
    %c0_127 = arith.constant 0 : index
    %c0_128 = arith.constant 0 : index
    %165 = vector.load %arg6[%c0_125, %c3_126, %c0_127, %c0_128] : memref<2x4x18x18xf32, #tpu.memory_space<vmem>>, vector<2x1x16x16xf32>
    %166 = vector.shape_cast %165 : vector<2x1x16x16xf32> to vector<2x16x16xf32>
    %c27 = arith.constant 27 : index
    %167 = memref.load %arg1[%c27] : memref<108xf32, #tpu.memory_space<smem>>
    %168 = vector.broadcast %167 : f32 to vector<2x16x16xf32>
    %169 = arith.mulf %166, %168 : vector<2x16x16xf32>
    %c0_129 = arith.constant 0 : index
    %c3_130 = arith.constant 3 : index
    %c0_131 = arith.constant 0 : index
    %c1_132 = arith.constant 1 : index
    %170 = vector.load %arg6[%c0_129, %c3_130, %c0_131, %c1_132] : memref<2x4x18x18xf32, #tpu.memory_space<vmem>>, vector<2x1x16x16xf32>
    %171 = vector.shape_cast %170 : vector<2x1x16x16xf32> to vector<2x16x16xf32>
    %c28 = arith.constant 28 : index
    %172 = memref.load %arg1[%c28] : memref<108xf32, #tpu.memory_space<smem>>
    %173 = vector.broadcast %172 : f32 to vector<2x16x16xf32>
    %174 = arith.mulf %171, %173 : vector<2x16x16xf32>
    %175 = arith.addf %169, %174 : vector<2x16x16xf32>
    %c0_133 = arith.constant 0 : index
    %c3_134 = arith.constant 3 : index
    %c0_135 = arith.constant 0 : index
    %c2_136 = arith.constant 2 : index
    %176 = vector.load %arg6[%c0_133, %c3_134, %c0_135, %c2_136] : memref<2x4x18x18xf32, #tpu.memory_space<vmem>>, vector<2x1x16x16xf32>
    %177 = vector.shape_cast %176 : vector<2x1x16x16xf32> to vector<2x16x16xf32>
    %c29 = arith.constant 29 : index
    %178 = memref.load %arg1[%c29] : memref<108xf32, #tpu.memory_space<smem>>
    %179 = vector.broadcast %178 : f32 to vector<2x16x16xf32>
    %180 = arith.mulf %177, %179 : vector<2x16x16xf32>
    %181 = arith.addf %175, %180 : vector<2x16x16xf32>
    %c0_137 = arith.constant 0 : index
    %c3_138 = arith.constant 3 : index
    %c1_139 = arith.constant 1 : index
    %c0_140 = arith.constant 0 : index
    %182 = vector.load %arg6[%c0_137, %c3_138, %c1_139, %c0_140] : memref<2x4x18x18xf32, #tpu.memory_space<vmem>>, vector<2x1x16x16xf32>
    %183 = vector.shape_cast %182 : vector<2x1x16x16xf32> to vector<2x16x16xf32>
    %c30 = arith.constant 30 : index
    %184 = memref.load %arg1[%c30] : memref<108xf32, #tpu.memory_space<smem>>
    %185 = vector.broadcast %184 : f32 to vector<2x16x16xf32>
    %186 = arith.mulf %183, %185 : vector<2x16x16xf32>
    %187 = arith.addf %181, %186 : vector<2x16x16xf32>
    %c0_141 = arith.constant 0 : index
    %c3_142 = arith.constant 3 : index
    %c1_143 = arith.constant 1 : index
    %c1_144 = arith.constant 1 : index
    %188 = vector.load %arg6[%c0_141, %c3_142, %c1_143, %c1_144] : memref<2x4x18x18xf32, #tpu.memory_space<vmem>>, vector<2x1x16x16xf32>
    %189 = vector.shape_cast %188 : vector<2x1x16x16xf32> to vector<2x16x16xf32>
    %c31 = arith.constant 31 : index
    %190 = memref.load %arg1[%c31] : memref<108xf32, #tpu.memory_space<smem>>
    %191 = vector.broadcast %190 : f32 to vector<2x16x16xf32>
    %192 = arith.mulf %189, %191 : vector<2x16x16xf32>
    %193 = arith.addf %187, %192 : vector<2x16x16xf32>
    %c0_145 = arith.constant 0 : index
    %c3_146 = arith.constant 3 : index
    %c1_147 = arith.constant 1 : index
    %c2_148 = arith.constant 2 : index
    %194 = vector.load %arg6[%c0_145, %c3_146, %c1_147, %c2_148] : memref<2x4x18x18xf32, #tpu.memory_space<vmem>>, vector<2x1x16x16xf32>
    %195 = vector.shape_cast %194 : vector<2x1x16x16xf32> to vector<2x16x16xf32>
    %c32 = arith.constant 32 : index
    %196 = memref.load %arg1[%c32] : memref<108xf32, #tpu.memory_space<smem>>
    %197 = vector.broadcast %196 : f32 to vector<2x16x16xf32>
    %198 = arith.mulf %195, %197 : vector<2x16x16xf32>
    %199 = arith.addf %193, %198 : vector<2x16x16xf32>
    %c0_149 = arith.constant 0 : index
    %c3_150 = arith.constant 3 : index
    %c2_151 = arith.constant 2 : index
    %c0_152 = arith.constant 0 : index
    %200 = vector.load %arg6[%c0_149, %c3_150, %c2_151, %c0_152] : memref<2x4x18x18xf32, #tpu.memory_space<vmem>>, vector<2x1x16x16xf32>
    %201 = vector.shape_cast %200 : vector<2x1x16x16xf32> to vector<2x16x16xf32>
    %c33 = arith.constant 33 : index
    %202 = memref.load %arg1[%c33] : memref<108xf32, #tpu.memory_space<smem>>
    %203 = vector.broadcast %202 : f32 to vector<2x16x16xf32>
    %204 = arith.mulf %201, %203 : vector<2x16x16xf32>
    %205 = arith.addf %199, %204 : vector<2x16x16xf32>
    %c0_153 = arith.constant 0 : index
    %c3_154 = arith.constant 3 : index
    %c2_155 = arith.constant 2 : index
    %c1_156 = arith.constant 1 : index
    %206 = vector.load %arg6[%c0_153, %c3_154, %c2_155, %c1_156] : memref<2x4x18x18xf32, #tpu.memory_space<vmem>>, vector<2x1x16x16xf32>
    %207 = vector.shape_cast %206 : vector<2x1x16x16xf32> to vector<2x16x16xf32>
    %c34 = arith.constant 34 : index
    %208 = memref.load %arg1[%c34] : memref<108xf32, #tpu.memory_space<smem>>
    %209 = vector.broadcast %208 : f32 to vector<2x16x16xf32>
    %210 = arith.mulf %207, %209 : vector<2x16x16xf32>
    %211 = arith.addf %205, %210 : vector<2x16x16xf32>
    %c0_157 = arith.constant 0 : index
    %c3_158 = arith.constant 3 : index
    %c2_159 = arith.constant 2 : index
    %c2_160 = arith.constant 2 : index
    %212 = vector.load %arg6[%c0_157, %c3_158, %c2_159, %c2_160] : memref<2x4x18x18xf32, #tpu.memory_space<vmem>>, vector<2x1x16x16xf32>
    %213 = vector.shape_cast %212 : vector<2x1x16x16xf32> to vector<2x16x16xf32>
    %c35 = arith.constant 35 : index
    %214 = memref.load %arg1[%c35] : memref<108xf32, #tpu.memory_space<smem>>
    %215 = vector.broadcast %214 : f32 to vector<2x16x16xf32>
    %216 = arith.mulf %213, %215 : vector<2x16x16xf32>
    %217 = arith.addf %211, %216 : vector<2x16x16xf32>
    %218 = arith.addf %58, %111 : vector<2x16x16xf32>
    %219 = arith.addf %164, %217 : vector<2x16x16xf32>
    %220 = arith.addf %218, %219 : vector<2x16x16xf32>
    %c0_161 = arith.constant 0 : index
    %221 = memref.load %arg2[%c0_161] : memref<3xf32, #tpu.memory_space<smem>>
    %222 = vector.broadcast %221 : f32 to vector<2x16x16xf32>
    %223 = arith.addf %220, %222 : vector<2x16x16xf32>
    %c0_162 = arith.constant 0 : index
    %c0_163 = arith.constant 0 : index
    %c0_164 = arith.constant 0 : index
    %c0_165 = arith.constant 0 : index
    %224 = vector.load %arg7[%c0_162, %c0_163, %c0_164, %c0_165] : memref<2x3x17x17xf32, #tpu.memory_space<vmem>>, vector<2x1x16x16xf32>
    %225 = vector.shape_cast %224 : vector<2x1x16x16xf32> to vector<2x16x16xf32>
    %226 = vector.shape_cast %223 : vector<2x16x16xf32> to vector<2x1x16x16xf32>
    tpu.vector_store %arg7[%c0_162, %c0_163, %c0_164, %c0_165], %226 {strides = array<i32>} : memref<2x3x17x17xf32, #tpu.memory_space<vmem>>, vector<2x1x16x16xf32>,
    %c0_166 = arith.constant 0 : index
    %c0_167 = arith.constant 0 : index
    %c0_168 = arith.constant 0 : index
    %c0_169 = arith.constant 0 : index
    %227 = vector.load %arg6[%c0_166, %c0_167, %c0_168, %c0_169] : memref<2x4x18x18xf32, #tpu.memory_space<vmem>>, vector<2x1x16x16xf32>
    %228 = vector.shape_cast %227 : vector<2x1x16x16xf32> to vector<2x16x16xf32>
    %c36 = arith.constant 36 : index
    %229 = memref.load %arg1[%c36] : memref<108xf32, #tpu.memory_space<smem>>
    %230 = vector.broadcast %229 : f32 to vector<2x16x16xf32>
    %231 = arith.mulf %228, %230 : vector<2x16x16xf32>
    %c0_170 = arith.constant 0 : index
    %c0_171 = arith.constant 0 : index
    %c0_172 = arith.constant 0 : index
    %c1_173 = arith.constant 1 : index
    %232 = vector.load %arg6[%c0_170, %c0_171, %c0_172, %c1_173] : memref<2x4x18x18xf32, #tpu.memory_space<vmem>>, vector<2x1x16x16xf32>
    %233 = vector.shape_cast %232 : vector<2x1x16x16xf32> to vector<2x16x16xf32>
    %c37 = arith.constant 37 : index
    %234 = memref.load %arg1[%c37] : memref<108xf32, #tpu.memory_space<smem>>
    %235 = vector.broadcast %234 : f32 to vector<2x16x16xf32>
    %236 = arith.mulf %233, %235 : vector<2x16x16xf32>
    %237 = arith.addf %231, %236 : vector<2x16x16xf32>
    %c0_174 = arith.constant 0 : index
    %c0_175 = arith.constant 0 : index
    %c0_176 = arith.constant 0 : index
    %c2_177 = arith.constant 2 : index
    %238 = vector.load %arg6[%c0_174, %c0_175, %c0_176, %c2_177] : memref<2x4x18x18xf32, #tpu.memory_space<vmem>>, vector<2x1x16x16xf32>
    %239 = vector.shape_cast %238 : vector<2x1x16x16xf32> to vector<2x16x16xf32>
    %c38 = arith.constant 38 : index
    %240 = memref.load %arg1[%c38] : memref<108xf32, #tpu.memory_space<smem>>
    %241 = vector.broadcast %240 : f32 to vector<2x16x16xf32>
    %242 = arith.mulf %239, %241 : vector<2x16x16xf32>
    %243 = arith.addf %237, %242 : vector<2x16x16xf32>
    %c0_178 = arith.constant 0 : index
    %c0_179 = arith.constant 0 : index
    %c1_180 = arith.constant 1 : index
    %c0_181 = arith.constant 0 : index
    %244 = vector.load %arg6[%c0_178, %c0_179, %c1_180, %c0_181] : memref<2x4x18x18xf32, #tpu.memory_space<vmem>>, vector<2x1x16x16xf32>
    %245 = vector.shape_cast %244 : vector<2x1x16x16xf32> to vector<2x16x16xf32>
    %c39 = arith.constant 39 : index
    %246 = memref.load %arg1[%c39] : memref<108xf32, #tpu.memory_space<smem>>
    %247 = vector.broadcast %246 : f32 to vector<2x16x16xf32>
    %248 = arith.mulf %245, %247 : vector<2x16x16xf32>
    %249 = arith.addf %243, %248 : vector<2x16x16xf32>
    %c0_182 = arith.constant 0 : index
    %c0_183 = arith.constant 0 : index
    %c1_184 = arith.constant 1 : index
    %c1_185 = arith.constant 1 : index
    %250 = vector.load %arg6[%c0_182, %c0_183, %c1_184, %c1_185] : memref<2x4x18x18xf32, #tpu.memory_space<vmem>>, vector<2x1x16x16xf32>
    %251 = vector.shape_cast %250 : vector<2x1x16x16xf32> to vector<2x16x16xf32>
    %c40 = arith.constant 40 : index
    %252 = memref.load %arg1[%c40] : memref<108xf32, #tpu.memory_space<smem>>
    %253 = vector.broadcast %252 : f32 to vector<2x16x16xf32>
    %254 = arith.mulf %251, %253 : vector<2x16x16xf32>
    %255 = arith.addf %249, %254 : vector<2x16x16xf32>
    %c0_186 = arith.constant 0 : index
    %c0_187 = arith.constant 0 : index
    %c1_188 = arith.constant 1 : index
    %c2_189 = arith.constant 2 : index
    %256 = vector.load %arg6[%c0_186, %c0_187, %c1_188, %c2_189] : memref<2x4x18x18xf32, #tpu.memory_space<vmem>>, vector<2x1x16x16xf32>
    %257 = vector.shape_cast %256 : vector<2x1x16x16xf32> to vector<2x16x16xf32>
    %c41 = arith.constant 41 : index
    %258 = memref.load %arg1[%c41] : memref<108xf32, #tpu.memory_space<smem>>
    %259 = vector.broadcast %258 : f32 to vector<2x16x16xf32>
    %260 = arith.mulf %257, %259 : vector<2x16x16xf32>
    %261 = arith.addf %255, %260 : vector<2x16x16xf32>
    %c0_190 = arith.constant 0 : index
    %c0_191 = arith.constant 0 : index
    %c2_192 = arith.constant 2 : index
    %c0_193 = arith.constant 0 : index
    %262 = vector.load %arg6[%c0_190, %c0_191, %c2_192, %c0_193] : memref<2x4x18x18xf32, #tpu.memory_space<vmem>>, vector<2x1x16x16xf32>
    %263 = vector.shape_cast %262 : vector<2x1x16x16xf32> to vector<2x16x16xf32>
    %c42 = arith.constant 42 : index
    %264 = memref.load %arg1[%c42] : memref<108xf32, #tpu.memory_space<smem>>
    %265 = vector.broadcast %264 : f32 to vector<2x16x16xf32>
    %266 = arith.mulf %263, %265 : vector<2x16x16xf32>
    %267 = arith.addf %261, %266 : vector<2x16x16xf32>
    %c0_194 = arith.constant 0 : index
    %c0_195 = arith.constant 0 : index
    %c2_196 = arith.constant 2 : index
    %c1_197 = arith.constant 1 : index
    %268 = vector.load %arg6[%c0_194, %c0_195, %c2_196, %c1_197] : memref<2x4x18x18xf32, #tpu.memory_space<vmem>>, vector<2x1x16x16xf32>
    %269 = vector.shape_cast %268 : vector<2x1x16x16xf32> to vector<2x16x16xf32>
    %c43 = arith.constant 43 : index
    %270 = memref.load %arg1[%c43] : memref<108xf32, #tpu.memory_space<smem>>
    %271 = vector.broadcast %270 : f32 to vector<2x16x16xf32>
    %272 = arith.mulf %269, %271 : vector<2x16x16xf32>
    %273 = arith.addf %267, %272 : vector<2x16x16xf32>
    %c0_198 = arith.constant 0 : index
    %c0_199 = arith.constant 0 : index
    %c2_200 = arith.constant 2 : index
    %c2_201 = arith.constant 2 : index
    %274 = vector.load %arg6[%c0_198, %c0_199, %c2_200, %c2_201] : memref<2x4x18x18xf32, #tpu.memory_space<vmem>>, vector<2x1x16x16xf32>
    %275 = vector.shape_cast %274 : vector<2x1x16x16xf32> to vector<2x16x16xf32>
    %c44 = arith.constant 44 : index
    %276 = memref.load %arg1[%c44] : memref<108xf32, #tpu.memory_space<smem>>
    %277 = vector.broadcast %276 : f32 to vector<2x16x16xf32>
    %278 = arith.mulf %275, %277 : vector<2x16x16xf32>
    %279 = arith.addf %273, %278 : vector<2x16x16xf32>
    %c0_202 = arith.constant 0 : index
    %c1_203 = arith.constant 1 : index
    %c0_204 = arith.constant 0 : index
    %c0_205 = arith.constant 0 : index
    %280 = vector.load %arg6[%c0_202, %c1_203, %c0_204, %c0_205] : memref<2x4x18x18xf32, #tpu.memory_space<vmem>>, vector<2x1x16x16xf32>
    %281 = vector.shape_cast %280 : vector<2x1x16x16xf32> to vector<2x16x16xf32>
    %c45 = arith.constant 45 : index
    %282 = memref.load %arg1[%c45] : memref<108xf32, #tpu.memory_space<smem>>
    %283 = vector.broadcast %282 : f32 to vector<2x16x16xf32>
    %284 = arith.mulf %281, %283 : vector<2x16x16xf32>
    %c0_206 = arith.constant 0 : index
    %c1_207 = arith.constant 1 : index
    %c0_208 = arith.constant 0 : index
    %c1_209 = arith.constant 1 : index
    %285 = vector.load %arg6[%c0_206, %c1_207, %c0_208, %c1_209] : memref<2x4x18x18xf32, #tpu.memory_space<vmem>>, vector<2x1x16x16xf32>
    %286 = vector.shape_cast %285 : vector<2x1x16x16xf32> to vector<2x16x16xf32>
    %c46 = arith.constant 46 : index
    %287 = memref.load %arg1[%c46] : memref<108xf32, #tpu.memory_space<smem>>
    %288 = vector.broadcast %287 : f32 to vector<2x16x16xf32>
    %289 = arith.mulf %286, %288 : vector<2x16x16xf32>
    %290 = arith.addf %284, %289 : vector<2x16x16xf32>
    %c0_210 = arith.constant 0 : index
    %c1_211 = arith.constant 1 : index
    %c0_212 = arith.constant 0 : index
    %c2_213 = arith.constant 2 : index
    %291 = vector.load %arg6[%c0_210, %c1_211, %c0_212, %c2_213] : memref<2x4x18x18xf32, #tpu.memory_space<vmem>>, vector<2x1x16x16xf32>
    %292 = vector.shape_cast %291 : vector<2x1x16x16xf32> to vector<2x16x16xf32>
    %c47 = arith.constant 47 : index
    %293 = memref.load %arg1[%c47] : memref<108xf32, #tpu.memory_space<smem>>
    %294 = vector.broadcast %293 : f32 to vector<2x16x16xf32>
    %295 = arith.mulf %292, %294 : vector<2x16x16xf32>
    %296 = arith.addf %290, %295 : vector<2x16x16xf32>
    %c0_214 = arith.constant 0 : index
    %c1_215 = arith.constant 1 : index
    %c1_216 = arith.constant 1 : index
    %c0_217 = arith.constant 0 : index
    %297 = vector.load %arg6[%c0_214, %c1_215, %c1_216, %c0_217] : memref<2x4x18x18xf32, #tpu.memory_space<vmem>>, vector<2x1x16x16xf32>
    %298 = vector.shape_cast %297 : vector<2x1x16x16xf32> to vector<2x16x16xf32>
    %c48 = arith.constant 48 : index
    %299 = memref.load %arg1[%c48] : memref<108xf32, #tpu.memory_space<smem>>
    %300 = vector.broadcast %299 : f32 to vector<2x16x16xf32>
    %301 = arith.mulf %298, %300 : vector<2x16x16xf32>
    %302 = arith.addf %296, %301 : vector<2x16x16xf32>
    %c0_218 = arith.constant 0 : index
    %c1_219 = arith.constant 1 : index
    %c1_220 = arith.constant 1 : index
    %c1_221 = arith.constant 1 : index
    %303 = vector.load %arg6[%c0_218, %c1_219, %c1_220, %c1_221] : memref<2x4x18x18xf32, #tpu.memory_space<vmem>>, vector<2x1x16x16xf32>
    %304 = vector.shape_cast %303 : vector<2x1x16x16xf32> to vector<2x16x16xf32>
    %c49 = arith.constant 49 : index
    %305 = memref.load %arg1[%c49] : memref<108xf32, #tpu.memory_space<smem>>
    %306 = vector.broadcast %305 : f32 to vector<2x16x16xf32>
    %307 = arith.mulf %304, %306 : vector<2x16x16xf32>
    %308 = arith.addf %302, %307 : vector<2x16x16xf32>
    %c0_222 = arith.constant 0 : index
    %c1_223 = arith.constant 1 : index
    %c1_224 = arith.constant 1 : index
    %c2_225 = arith.constant 2 : index
    %309 = vector.load %arg6[%c0_222, %c1_223, %c1_224, %c2_225] : memref<2x4x18x18xf32, #tpu.memory_space<vmem>>, vector<2x1x16x16xf32>
    %310 = vector.shape_cast %309 : vector<2x1x16x16xf32> to vector<2x16x16xf32>
    %c50 = arith.constant 50 : index
    %311 = memref.load %arg1[%c50] : memref<108xf32, #tpu.memory_space<smem>>
    %312 = vector.broadcast %311 : f32 to vector<2x16x16xf32>
    %313 = arith.mulf %310, %312 : vector<2x16x16xf32>
    %314 = arith.addf %308, %313 : vector<2x16x16xf32>
    %c0_226 = arith.constant 0 : index
    %c1_227 = arith.constant 1 : index
    %c2_228 = arith.constant 2 : index
    %c0_229 = arith.constant 0 : index
    %315 = vector.load %arg6[%c0_226, %c1_227, %c2_228, %c0_229] : memref<2x4x18x18xf32, #tpu.memory_space<vmem>>, vector<2x1x16x16xf32>
    %316 = vector.shape_cast %315 : vector<2x1x16x16xf32> to vector<2x16x16xf32>
    %c51 = arith.constant 51 : index
    %317 = memref.load %arg1[%c51] : memref<108xf32, #tpu.memory_space<smem>>
    %318 = vector.broadcast %317 : f32 to vector<2x16x16xf32>
    %319 = arith.mulf %316, %318 : vector<2x16x16xf32>
    %320 = arith.addf %314, %319 : vector<2x16x16xf32>
    %c0_230 = arith.constant 0 : index
    %c1_231 = arith.constant 1 : index
    %c2_232 = arith.constant 2 : index
    %c1_233 = arith.constant 1 : index
    %321 = vector.load %arg6[%c0_230, %c1_231, %c2_232, %c1_233] : memref<2x4x18x18xf32, #tpu.memory_space<vmem>>, vector<2x1x16x16xf32>
    %322 = vector.shape_cast %321 : vector<2x1x16x16xf32> to vector<2x16x16xf32>
    %c52 = arith.constant 52 : index
    %323 = memref.load %arg1[%c52] : memref<108xf32, #tpu.memory_space<smem>>
    %324 = vector.broadcast %323 : f32 to vector<2x16x16xf32>
    %325 = arith.mulf %322, %324 : vector<2x16x16xf32>
    %326 = arith.addf %320, %325 : vector<2x16x16xf32>
    %c0_234 = arith.constant 0 : index
    %c1_235 = arith.constant 1 : index
    %c2_236 = arith.constant 2 : index
    %c2_237 = arith.constant 2 : index
    %327 = vector.load %arg6[%c0_234, %c1_235, %c2_236, %c2_237] : memref<2x4x18x18xf32, #tpu.memory_space<vmem>>, vector<2x1x16x16xf32>
    %328 = vector.shape_cast %327 : vector<2x1x16x16xf32> to vector<2x16x16xf32>
    %c53 = arith.constant 53 : index
    %329 = memref.load %arg1[%c53] : memref<108xf32, #tpu.memory_space<smem>>
    %330 = vector.broadcast %329 : f32 to vector<2x16x16xf32>
    %331 = arith.mulf %328, %330 : vector<2x16x16xf32>
    %332 = arith.addf %326, %331 : vector<2x16x16xf32>
    %c0_238 = arith.constant 0 : index
    %c2_239 = arith.constant 2 : index
    %c0_240 = arith.constant 0 : index
    %c0_241 = arith.constant 0 : index
    %333 = vector.load %arg6[%c0_238, %c2_239, %c0_240, %c0_241] : memref<2x4x18x18xf32, #tpu.memory_space<vmem>>, vector<2x1x16x16xf32>
    %334 = vector.shape_cast %333 : vector<2x1x16x16xf32> to vector<2x16x16xf32>
    %c54 = arith.constant 54 : index
    %335 = memref.load %arg1[%c54] : memref<108xf32, #tpu.memory_space<smem>>
    %336 = vector.broadcast %335 : f32 to vector<2x16x16xf32>
    %337 = arith.mulf %334, %336 : vector<2x16x16xf32>
    %c0_242 = arith.constant 0 : index
    %c2_243 = arith.constant 2 : index
    %c0_244 = arith.constant 0 : index
    %c1_245 = arith.constant 1 : index
    %338 = vector.load %arg6[%c0_242, %c2_243, %c0_244, %c1_245] : memref<2x4x18x18xf32, #tpu.memory_space<vmem>>, vector<2x1x16x16xf32>
    %339 = vector.shape_cast %338 : vector<2x1x16x16xf32> to vector<2x16x16xf32>
    %c55 = arith.constant 55 : index
    %340 = memref.load %arg1[%c55] : memref<108xf32, #tpu.memory_space<smem>>
    %341 = vector.broadcast %340 : f32 to vector<2x16x16xf32>
    %342 = arith.mulf %339, %341 : vector<2x16x16xf32>
    %343 = arith.addf %337, %342 : vector<2x16x16xf32>
    %c0_246 = arith.constant 0 : index
    %c2_247 = arith.constant 2 : index
    %c0_248 = arith.constant 0 : index
    %c2_249 = arith.constant 2 : index
    %344 = vector.load %arg6[%c0_246, %c2_247, %c0_248, %c2_249] : memref<2x4x18x18xf32, #tpu.memory_space<vmem>>, vector<2x1x16x16xf32>
    %345 = vector.shape_cast %344 : vector<2x1x16x16xf32> to vector<2x16x16xf32>
    %c56 = arith.constant 56 : index
    %346 = memref.load %arg1[%c56] : memref<108xf32, #tpu.memory_space<smem>>
    %347 = vector.broadcast %346 : f32 to vector<2x16x16xf32>
    %348 = arith.mulf %345, %347 : vector<2x16x16xf32>
    %349 = arith.addf %343, %348 : vector<2x16x16xf32>
    %c0_250 = arith.constant 0 : index
    %c2_251 = arith.constant 2 : index
    %c1_252 = arith.constant 1 : index
    %c0_253 = arith.constant 0 : index
    %350 = vector.load %arg6[%c0_250, %c2_251, %c1_252, %c0_253] : memref<2x4x18x18xf32, #tpu.memory_space<vmem>>, vector<2x1x16x16xf32>
    %351 = vector.shape_cast %350 : vector<2x1x16x16xf32> to vector<2x16x16xf32>
    %c57 = arith.constant 57 : index
    %352 = memref.load %arg1[%c57] : memref<108xf32, #tpu.memory_space<smem>>
    %353 = vector.broadcast %352 : f32 to vector<2x16x16xf32>
    %354 = arith.mulf %351, %353 : vector<2x16x16xf32>
    %355 = arith.addf %349, %354 : vector<2x16x16xf32>
    %c0_254 = arith.constant 0 : index
    %c2_255 = arith.constant 2 : index
    %c1_256 = arith.constant 1 : index
    %c1_257 = arith.constant 1 : index
    %356 = vector.load %arg6[%c0_254, %c2_255, %c1_256, %c1_257] : memref<2x4x18x18xf32, #tpu.memory_space<vmem>>, vector<2x1x16x16xf32>
    %357 = vector.shape_cast %356 : vector<2x1x16x16xf32> to vector<2x16x16xf32>
    %c58 = arith.constant 58 : index
    %358 = memref.load %arg1[%c58] : memref<108xf32, #tpu.memory_space<smem>>
    %359 = vector.broadcast %358 : f32 to vector<2x16x16xf32>
    %360 = arith.mulf %357, %359 : vector<2x16x16xf32>
    %361 = arith.addf %355, %360 : vector<2x16x16xf32>
    %c0_258 = arith.constant 0 : index
    %c2_259 = arith.constant 2 : index
    %c1_260 = arith.constant 1 : index
    %c2_261 = arith.constant 2 : index
    %362 = vector.load %arg6[%c0_258, %c2_259, %c1_260, %c2_261] : memref<2x4x18x18xf32, #tpu.memory_space<vmem>>, vector<2x1x16x16xf32>
    %363 = vector.shape_cast %362 : vector<2x1x16x16xf32> to vector<2x16x16xf32>
    %c59 = arith.constant 59 : index
    %364 = memref.load %arg1[%c59] : memref<108xf32, #tpu.memory_space<smem>>
    %365 = vector.broadcast %364 : f32 to vector<2x16x16xf32>
    %366 = arith.mulf %363, %365 : vector<2x16x16xf32>
    %367 = arith.addf %361, %366 : vector<2x16x16xf32>
    %c0_262 = arith.constant 0 : index
    %c2_263 = arith.constant 2 : index
    %c2_264 = arith.constant 2 : index
    %c0_265 = arith.constant 0 : index
    %368 = vector.load %arg6[%c0_262, %c2_263, %c2_264, %c0_265] : memref<2x4x18x18xf32, #tpu.memory_space<vmem>>, vector<2x1x16x16xf32>
    %369 = vector.shape_cast %368 : vector<2x1x16x16xf32> to vector<2x16x16xf32>
    %c60 = arith.constant 60 : index
    %370 = memref.load %arg1[%c60] : memref<108xf32, #tpu.memory_space<smem>>
    %371 = vector.broadcast %370 : f32 to vector<2x16x16xf32>
    %372 = arith.mulf %369, %371 : vector<2x16x16xf32>
    %373 = arith.addf %367, %372 : vector<2x16x16xf32>
    %c0_266 = arith.constant 0 : index
    %c2_267 = arith.constant 2 : index
    %c2_268 = arith.constant 2 : index
    %c1_269 = arith.constant 1 : index
    %374 = vector.load %arg6[%c0_266, %c2_267, %c2_268, %c1_269] : memref<2x4x18x18xf32, #tpu.memory_space<vmem>>, vector<2x1x16x16xf32>
    %375 = vector.shape_cast %374 : vector<2x1x16x16xf32> to vector<2x16x16xf32>
    %c61 = arith.constant 61 : index
    %376 = memref.load %arg1[%c61] : memref<108xf32, #tpu.memory_space<smem>>
    %377 = vector.broadcast %376 : f32 to vector<2x16x16xf32>
    %378 = arith.mulf %375, %377 : vector<2x16x16xf32>
    %379 = arith.addf %373, %378 : vector<2x16x16xf32>
    %c0_270 = arith.constant 0 : index
    %c2_271 = arith.constant 2 : index
    %c2_272 = arith.constant 2 : index
    %c2_273 = arith.constant 2 : index
    %380 = vector.load %arg6[%c0_270, %c2_271, %c2_272, %c2_273] : memref<2x4x18x18xf32, #tpu.memory_space<vmem>>, vector<2x1x16x16xf32>
    %381 = vector.shape_cast %380 : vector<2x1x16x16xf32> to vector<2x16x16xf32>
    %c62 = arith.constant 62 : index
    %382 = memref.load %arg1[%c62] : memref<108xf32, #tpu.memory_space<smem>>
    %383 = vector.broadcast %382 : f32 to vector<2x16x16xf32>
    %384 = arith.mulf %381, %383 : vector<2x16x16xf32>
    %385 = arith.addf %379, %384 : vector<2x16x16xf32>
    %c0_274 = arith.constant 0 : index
    %c3_275 = arith.constant 3 : index
    %c0_276 = arith.constant 0 : index
    %c0_277 = arith.constant 0 : index
    %386 = vector.load %arg6[%c0_274, %c3_275, %c0_276, %c0_277] : memref<2x4x18x18xf32, #tpu.memory_space<vmem>>, vector<2x1x16x16xf32>
    %387 = vector.shape_cast %386 : vector<2x1x16x16xf32> to vector<2x16x16xf32>
    %c63 = arith.constant 63 : index
    %388 = memref.load %arg1[%c63] : memref<108xf32, #tpu.memory_space<smem>>
    %389 = vector.broadcast %388 : f32 to vector<2x16x16xf32>
    %390 = arith.mulf %387, %389 : vector<2x16x16xf32>
    %c0_278 = arith.constant 0 : index
    %c3_279 = arith.constant 3 : index
    %c0_280 = arith.constant 0 : index
    %c1_281 = arith.constant 1 : index
    %391 = vector.load %arg6[%c0_278, %c3_279, %c0_280, %c1_281] : memref<2x4x18x18xf32, #tpu.memory_space<vmem>>, vector<2x1x16x16xf32>
    %392 = vector.shape_cast %391 : vector<2x1x16x16xf32> to vector<2x16x16xf32>
    %c64 = arith.constant 64 : index
    %393 = memref.load %arg1[%c64] : memref<108xf32, #tpu.memory_space<smem>>
    %394 = vector.broadcast %393 : f32 to vector<2x16x16xf32>
    %395 = arith.mulf %392, %394 : vector<2x16x16xf32>
    %396 = arith.addf %390, %395 : vector<2x16x16xf32>
    %c0_282 = arith.constant 0 : index
    %c3_283 = arith.constant 3 : index
    %c0_284 = arith.constant 0 : index
    %c2_285 = arith.constant 2 : index
    %397 = vector.load %arg6[%c0_282, %c3_283, %c0_284, %c2_285] : memref<2x4x18x18xf32, #tpu.memory_space<vmem>>, vector<2x1x16x16xf32>
    %398 = vector.shape_cast %397 : vector<2x1x16x16xf32> to vector<2x16x16xf32>
    %c65 = arith.constant 65 : index
    %399 = memref.load %arg1[%c65] : memref<108xf32, #tpu.memory_space<smem>>
    %400 = vector.broadcast %399 : f32 to vector<2x16x16xf32>
    %401 = arith.mulf %398, %400 : vector<2x16x16xf32>
    %402 = arith.addf %396, %401 : vector<2x16x16xf32>
    %c0_286 = arith.constant 0 : index
    %c3_287 = arith.constant 3 : index
    %c1_288 = arith.constant 1 : index
    %c0_289 = arith.constant 0 : index
    %403 = vector.load %arg6[%c0_286, %c3_287, %c1_288, %c0_289] : memref<2x4x18x18xf32, #tpu.memory_space<vmem>>, vector<2x1x16x16xf32>
    %404 = vector.shape_cast %403 : vector<2x1x16x16xf32> to vector<2x16x16xf32>
    %c66 = arith.constant 66 : index
    %405 = memref.load %arg1[%c66] : memref<108xf32, #tpu.memory_space<smem>>
    %406 = vector.broadcast %405 : f32 to vector<2x16x16xf32>
    %407 = arith.mulf %404, %406 : vector<2x16x16xf32>
    %408 = arith.addf %402, %407 : vector<2x16x16xf32>
    %c0_290 = arith.constant 0 : index
    %c3_291 = arith.constant 3 : index
    %c1_292 = arith.constant 1 : index
    %c1_293 = arith.constant 1 : index
    %409 = vector.load %arg6[%c0_290, %c3_291, %c1_292, %c1_293] : memref<2x4x18x18xf32, #tpu.memory_space<vmem>>, vector<2x1x16x16xf32>
    %410 = vector.shape_cast %409 : vector<2x1x16x16xf32> to vector<2x16x16xf32>
    %c67 = arith.constant 67 : index
    %411 = memref.load %arg1[%c67] : memref<108xf32, #tpu.memory_space<smem>>
    %412 = vector.broadcast %411 : f32 to vector<2x16x16xf32>
    %413 = arith.mulf %410, %412 : vector<2x16x16xf32>
    %414 = arith.addf %408, %413 : vector<2x16x16xf32>
    %c0_294 = arith.constant 0 : index
    %c3_295 = arith.constant 3 : index
    %c1_296 = arith.constant 1 : index
    %c2_297 = arith.constant 2 : index
    %415 = vector.load %arg6[%c0_294, %c3_295, %c1_296, %c2_297] : memref<2x4x18x18xf32, #tpu.memory_space<vmem>>, vector<2x1x16x16xf32>
    %416 = vector.shape_cast %415 : vector<2x1x16x16xf32> to vector<2x16x16xf32>
    %c68 = arith.constant 68 : index
    %417 = memref.load %arg1[%c68] : memref<108xf32, #tpu.memory_space<smem>>
    %418 = vector.broadcast %417 : f32 to vector<2x16x16xf32>
    %419 = arith.mulf %416, %418 : vector<2x16x16xf32>
    %420 = arith.addf %414, %419 : vector<2x16x16xf32>
    %c0_298 = arith.constant 0 : index
    %c3_299 = arith.constant 3 : index
    %c2_300 = arith.constant 2 : index
    %c0_301 = arith.constant 0 : index
    %421 = vector.load %arg6[%c0_298, %c3_299, %c2_300, %c0_301] : memref<2x4x18x18xf32, #tpu.memory_space<vmem>>, vector<2x1x16x16xf32>
    %422 = vector.shape_cast %421 : vector<2x1x16x16xf32> to vector<2x16x16xf32>
    %c69 = arith.constant 69 : index
    %423 = memref.load %arg1[%c69] : memref<108xf32, #tpu.memory_space<smem>>
    %424 = vector.broadcast %423 : f32 to vector<2x16x16xf32>
    %425 = arith.mulf %422, %424 : vector<2x16x16xf32>
    %426 = arith.addf %420, %425 : vector<2x16x16xf32>
    %c0_302 = arith.constant 0 : index
    %c3_303 = arith.constant 3 : index
    %c2_304 = arith.constant 2 : index
    %c1_305 = arith.constant 1 : index
    %427 = vector.load %arg6[%c0_302, %c3_303, %c2_304, %c1_305] : memref<2x4x18x18xf32, #tpu.memory_space<vmem>>, vector<2x1x16x16xf32>
    %428 = vector.shape_cast %427 : vector<2x1x16x16xf32> to vector<2x16x16xf32>
    %c70 = arith.constant 70 : index
    %429 = memref.load %arg1[%c70] : memref<108xf32, #tpu.memory_space<smem>>
    %430 = vector.broadcast %429 : f32 to vector<2x16x16xf32>
    %431 = arith.mulf %428, %430 : vector<2x16x16xf32>
    %432 = arith.addf %426, %431 : vector<2x16x16xf32>
    %c0_306 = arith.constant 0 : index
    %c3_307 = arith.constant 3 : index
    %c2_308 = arith.constant 2 : index
    %c2_309 = arith.constant 2 : index
    %433 = vector.load %arg6[%c0_306, %c3_307, %c2_308, %c2_309] : memref<2x4x18x18xf32, #tpu.memory_space<vmem>>, vector<2x1x16x16xf32>
    %434 = vector.shape_cast %433 : vector<2x1x16x16xf32> to vector<2x16x16xf32>
    %c71 = arith.constant 71 : index
    %435 = memref.load %arg1[%c71] : memref<108xf32, #tpu.memory_space<smem>>
    %436 = vector.broadcast %435 : f32 to vector<2x16x16xf32>
    %437 = arith.mulf %434, %436 : vector<2x16x16xf32>
    %438 = arith.addf %432, %437 : vector<2x16x16xf32>
    %439 = arith.addf %279, %332 : vector<2x16x16xf32>
    %440 = arith.addf %385, %438 : vector<2x16x16xf32>
    %441 = arith.addf %439, %440 : vector<2x16x16xf32>
    %c1_310 = arith.constant 1 : index
    %442 = memref.load %arg2[%c1_310] : memref<3xf32, #tpu.memory_space<smem>>
    %443 = vector.broadcast %442 : f32 to vector<2x16x16xf32>
    %444 = arith.addf %441, %443 : vector<2x16x16xf32>
    %c0_311 = arith.constant 0 : index
    %c1_312 = arith.constant 1 : index
    %c0_313 = arith.constant 0 : index
    %c0_314 = arith.constant 0 : index
    %445 = vector.load %arg7[%c0_311, %c1_312, %c0_313, %c0_314] : memref<2x3x17x17xf32, #tpu.memory_space<vmem>>, vector<2x1x16x16xf32>
    %446 = vector.shape_cast %445 : vector<2x1x16x16xf32> to vector<2x16x16xf32>
    %447 = vector.shape_cast %444 : vector<2x16x16xf32> to vector<2x1x16x16xf32>
    tpu.vector_store %arg7[%c0_311, %c1_312, %c0_313, %c0_314], %447 {strides = array<i32>} : memref<2x3x17x17xf32, #tpu.memory_space<vmem>>, vector<2x1x16x16xf32>,
    %c0_315 = arith.constant 0 : index
    %c0_316 = arith.constant 0 : index
    %c0_317 = arith.constant 0 : index
    %c0_318 = arith.constant 0 : index
    %448 = vector.load %arg6[%c0_315, %c0_316, %c0_317, %c0_318] : memref<2x4x18x18xf32, #tpu.memory_space<vmem>>, vector<2x1x16x16xf32>
    %449 = vector.shape_cast %448 : vector<2x1x16x16xf32> to vector<2x16x16xf32>
    %c72 = arith.constant 72 : index
    %450 = memref.load %arg1[%c72] : memref<108xf32, #tpu.memory_space<smem>>
    %451 = vector.broadcast %450 : f32 to vector<2x16x16xf32>
    %452 = arith.mulf %449, %451 : vector<2x16x16xf32>
    %c0_319 = arith.constant 0 : index
    %c0_320 = arith.constant 0 : index
    %c0_321 = arith.constant 0 : index
    %c1_322 = arith.constant 1 : index
    %453 = vector.load %arg6[%c0_319, %c0_320, %c0_321, %c1_322] : memref<2x4x18x18xf32, #tpu.memory_space<vmem>>, vector<2x1x16x16xf32>
    %454 = vector.shape_cast %453 : vector<2x1x16x16xf32> to vector<2x16x16xf32>
    %c73 = arith.constant 73 : index
    %455 = memref.load %arg1[%c73] : memref<108xf32, #tpu.memory_space<smem>>
    %456 = vector.broadcast %455 : f32 to vector<2x16x16xf32>
    %457 = arith.mulf %454, %456 : vector<2x16x16xf32>
    %458 = arith.addf %452, %457 : vector<2x16x16xf32>
    %c0_323 = arith.constant 0 : index
    %c0_324 = arith.constant 0 : index
    %c0_325 = arith.constant 0 : index
    %c2_326 = arith.constant 2 : index
    %459 = vector.load %arg6[%c0_323, %c0_324, %c0_325, %c2_326] : memref<2x4x18x18xf32, #tpu.memory_space<vmem>>, vector<2x1x16x16xf32>
    %460 = vector.shape_cast %459 : vector<2x1x16x16xf32> to vector<2x16x16xf32>
    %c74 = arith.constant 74 : index
    %461 = memref.load %arg1[%c74] : memref<108xf32, #tpu.memory_space<smem>>
    %462 = vector.broadcast %461 : f32 to vector<2x16x16xf32>
    %463 = arith.mulf %460, %462 : vector<2x16x16xf32>
    %464 = arith.addf %458, %463 : vector<2x16x16xf32>
    %c0_327 = arith.constant 0 : index
    %c0_328 = arith.constant 0 : index
    %c1_329 = arith.constant 1 : index
    %c0_330 = arith.constant 0 : index
    %465 = vector.load %arg6[%c0_327, %c0_328, %c1_329, %c0_330] : memref<2x4x18x18xf32, #tpu.memory_space<vmem>>, vector<2x1x16x16xf32>
    %466 = vector.shape_cast %465 : vector<2x1x16x16xf32> to vector<2x16x16xf32>
    %c75 = arith.constant 75 : index
    %467 = memref.load %arg1[%c75] : memref<108xf32, #tpu.memory_space<smem>>
    %468 = vector.broadcast %467 : f32 to vector<2x16x16xf32>
    %469 = arith.mulf %466, %468 : vector<2x16x16xf32>
    %470 = arith.addf %464, %469 : vector<2x16x16xf32>
    %c0_331 = arith.constant 0 : index
    %c0_332 = arith.constant 0 : index
    %c1_333 = arith.constant 1 : index
    %c1_334 = arith.constant 1 : index
    %471 = vector.load %arg6[%c0_331, %c0_332, %c1_333, %c1_334] : memref<2x4x18x18xf32, #tpu.memory_space<vmem>>, vector<2x1x16x16xf32>
    %472 = vector.shape_cast %471 : vector<2x1x16x16xf32> to vector<2x16x16xf32>
    %c76 = arith.constant 76 : index
    %473 = memref.load %arg1[%c76] : memref<108xf32, #tpu.memory_space<smem>>
    %474 = vector.broadcast %473 : f32 to vector<2x16x16xf32>
    %475 = arith.mulf %472, %474 : vector<2x16x16xf32>
    %476 = arith.addf %470, %475 : vector<2x16x16xf32>
    %c0_335 = arith.constant 0 : index
    %c0_336 = arith.constant 0 : index
    %c1_337 = arith.constant 1 : index
    %c2_338 = arith.constant 2 : index
    %477 = vector.load %arg6[%c0_335, %c0_336, %c1_337, %c2_338] : memref<2x4x18x18xf32, #tpu.memory_space<vmem>>, vector<2x1x16x16xf32>
    %478 = vector.shape_cast %477 : vector<2x1x16x16xf32> to vector<2x16x16xf32>
    %c77 = arith.constant 77 : index
    %479 = memref.load %arg1[%c77] : memref<108xf32, #tpu.memory_space<smem>>
    %480 = vector.broadcast %479 : f32 to vector<2x16x16xf32>
    %481 = arith.mulf %478, %480 : vector<2x16x16xf32>
    %482 = arith.addf %476, %481 : vector<2x16x16xf32>
    %c0_339 = arith.constant 0 : index
    %c0_340 = arith.constant 0 : index
    %c2_341 = arith.constant 2 : index
    %c0_342 = arith.constant 0 : index
    %483 = vector.load %arg6[%c0_339, %c0_340, %c2_341, %c0_342] : memref<2x4x18x18xf32, #tpu.memory_space<vmem>>, vector<2x1x16x16xf32>
    %484 = vector.shape_cast %483 : vector<2x1x16x16xf32> to vector<2x16x16xf32>
    %c78 = arith.constant 78 : index
    %485 = memref.load %arg1[%c78] : memref<108xf32, #tpu.memory_space<smem>>
    %486 = vector.broadcast %485 : f32 to vector<2x16x16xf32>
    %487 = arith.mulf %484, %486 : vector<2x16x16xf32>
    %488 = arith.addf %482, %487 : vector<2x16x16xf32>
    %c0_343 = arith.constant 0 : index
    %c0_344 = arith.constant 0 : index
    %c2_345 = arith.constant 2 : index
    %c1_346 = arith.constant 1 : index
    %489 = vector.load %arg6[%c0_343, %c0_344, %c2_345, %c1_346] : memref<2x4x18x18xf32, #tpu.memory_space<vmem>>, vector<2x1x16x16xf32>
    %490 = vector.shape_cast %489 : vector<2x1x16x16xf32> to vector<2x16x16xf32>
    %c79 = arith.constant 79 : index
    %491 = memref.load %arg1[%c79] : memref<108xf32, #tpu.memory_space<smem>>
    %492 = vector.broadcast %491 : f32 to vector<2x16x16xf32>
    %493 = arith.mulf %490, %492 : vector<2x16x16xf32>
    %494 = arith.addf %488, %493 : vector<2x16x16xf32>
    %c0_347 = arith.constant 0 : index
    %c0_348 = arith.constant 0 : index
    %c2_349 = arith.constant 2 : index
    %c2_350 = arith.constant 2 : index
    %495 = vector.load %arg6[%c0_347, %c0_348, %c2_349, %c2_350] : memref<2x4x18x18xf32, #tpu.memory_space<vmem>>, vector<2x1x16x16xf32>
    %496 = vector.shape_cast %495 : vector<2x1x16x16xf32> to vector<2x16x16xf32>
    %c80 = arith.constant 80 : index
    %497 = memref.load %arg1[%c80] : memref<108xf32, #tpu.memory_space<smem>>
    %498 = vector.broadcast %497 : f32 to vector<2x16x16xf32>
    %499 = arith.mulf %496, %498 : vector<2x16x16xf32>
    %500 = arith.addf %494, %499 : vector<2x16x16xf32>
    %c0_351 = arith.constant 0 : index
    %c1_352 = arith.constant 1 : index
    %c0_353 = arith.constant 0 : index
    %c0_354 = arith.constant 0 : index
    %501 = vector.load %arg6[%c0_351, %c1_352, %c0_353, %c0_354] : memref<2x4x18x18xf32, #tpu.memory_space<vmem>>, vector<2x1x16x16xf32>
    %502 = vector.shape_cast %501 : vector<2x1x16x16xf32> to vector<2x16x16xf32>
    %c81 = arith.constant 81 : index
    %503 = memref.load %arg1[%c81] : memref<108xf32, #tpu.memory_space<smem>>
    %504 = vector.broadcast %503 : f32 to vector<2x16x16xf32>
    %505 = arith.mulf %502, %504 : vector<2x16x16xf32>
    %c0_355 = arith.constant 0 : index
    %c1_356 = arith.constant 1 : index
    %c0_357 = arith.constant 0 : index
    %c1_358 = arith.constant 1 : index
    %506 = vector.load %arg6[%c0_355, %c1_356, %c0_357, %c1_358] : memref<2x4x18x18xf32, #tpu.memory_space<vmem>>, vector<2x1x16x16xf32>
    %507 = vector.shape_cast %506 : vector<2x1x16x16xf32> to vector<2x16x16xf32>
    %c82 = arith.constant 82 : index
    %508 = memref.load %arg1[%c82] : memref<108xf32, #tpu.memory_space<smem>>
    %509 = vector.broadcast %508 : f32 to vector<2x16x16xf32>
    %510 = arith.mulf %507, %509 : vector<2x16x16xf32>
    %511 = arith.addf %505, %510 : vector<2x16x16xf32>
    %c0_359 = arith.constant 0 : index
    %c1_360 = arith.constant 1 : index
    %c0_361 = arith.constant 0 : index
    %c2_362 = arith.constant 2 : index
    %512 = vector.load %arg6[%c0_359, %c1_360, %c0_361, %c2_362] : memref<2x4x18x18xf32, #tpu.memory_space<vmem>>, vector<2x1x16x16xf32>
    %513 = vector.shape_cast %512 : vector<2x1x16x16xf32> to vector<2x16x16xf32>
    %c83 = arith.constant 83 : index
    %514 = memref.load %arg1[%c83] : memref<108xf32, #tpu.memory_space<smem>>
    %515 = vector.broadcast %514 : f32 to vector<2x16x16xf32>
    %516 = arith.mulf %513, %515 : vector<2x16x16xf32>
    %517 = arith.addf %511, %516 : vector<2x16x16xf32>
    %c0_363 = arith.constant 0 : index
    %c1_364 = arith.constant 1 : index
    %c1_365 = arith.constant 1 : index
    %c0_366 = arith.constant 0 : index
    %518 = vector.load %arg6[%c0_363, %c1_364, %c1_365, %c0_366] : memref<2x4x18x18xf32, #tpu.memory_space<vmem>>, vector<2x1x16x16xf32>
    %519 = vector.shape_cast %518 : vector<2x1x16x16xf32> to vector<2x16x16xf32>
    %c84 = arith.constant 84 : index
    %520 = memref.load %arg1[%c84] : memref<108xf32, #tpu.memory_space<smem>>
    %521 = vector.broadcast %520 : f32 to vector<2x16x16xf32>
    %522 = arith.mulf %519, %521 : vector<2x16x16xf32>
    %523 = arith.addf %517, %522 : vector<2x16x16xf32>
    %c0_367 = arith.constant 0 : index
    %c1_368 = arith.constant 1 : index
    %c1_369 = arith.constant 1 : index
    %c1_370 = arith.constant 1 : index
    %524 = vector.load %arg6[%c0_367, %c1_368, %c1_369, %c1_370] : memref<2x4x18x18xf32, #tpu.memory_space<vmem>>, vector<2x1x16x16xf32>
    %525 = vector.shape_cast %524 : vector<2x1x16x16xf32> to vector<2x16x16xf32>
    %c85 = arith.constant 85 : index
    %526 = memref.load %arg1[%c85] : memref<108xf32, #tpu.memory_space<smem>>
    %527 = vector.broadcast %526 : f32 to vector<2x16x16xf32>
    %528 = arith.mulf %525, %527 : vector<2x16x16xf32>
    %529 = arith.addf %523, %528 : vector<2x16x16xf32>
    %c0_371 = arith.constant 0 : index
    %c1_372 = arith.constant 1 : index
    %c1_373 = arith.constant 1 : index
    %c2_374 = arith.constant 2 : index
    %530 = vector.load %arg6[%c0_371, %c1_372, %c1_373, %c2_374] : memref<2x4x18x18xf32, #tpu.memory_space<vmem>>, vector<2x1x16x16xf32>
    %531 = vector.shape_cast %530 : vector<2x1x16x16xf32> to vector<2x16x16xf32>
    %c86 = arith.constant 86 : index
    %532 = memref.load %arg1[%c86] : memref<108xf32, #tpu.memory_space<smem>>
    %533 = vector.broadcast %532 : f32 to vector<2x16x16xf32>
    %534 = arith.mulf %531, %533 : vector<2x16x16xf32>
    %535 = arith.addf %529, %534 : vector<2x16x16xf32>
    %c0_375 = arith.constant 0 : index
    %c1_376 = arith.constant 1 : index
    %c2_377 = arith.constant 2 : index
    %c0_378 = arith.constant 0 : index
    %536 = vector.load %arg6[%c0_375, %c1_376, %c2_377, %c0_378] : memref<2x4x18x18xf32, #tpu.memory_space<vmem>>, vector<2x1x16x16xf32>
    %537 = vector.shape_cast %536 : vector<2x1x16x16xf32> to vector<2x16x16xf32>
    %c87 = arith.constant 87 : index
    %538 = memref.load %arg1[%c87] : memref<108xf32, #tpu.memory_space<smem>>
    %539 = vector.broadcast %538 : f32 to vector<2x16x16xf32>
    %540 = arith.mulf %537, %539 : vector<2x16x16xf32>
    %541 = arith.addf %535, %540 : vector<2x16x16xf32>
    %c0_379 = arith.constant 0 : index
    %c1_380 = arith.constant 1 : index
    %c2_381 = arith.constant 2 : index
    %c1_382 = arith.constant 1 : index
    %542 = vector.load %arg6[%c0_379, %c1_380, %c2_381, %c1_382] : memref<2x4x18x18xf32, #tpu.memory_space<vmem>>, vector<2x1x16x16xf32>
    %543 = vector.shape_cast %542 : vector<2x1x16x16xf32> to vector<2x16x16xf32>
    %c88 = arith.constant 88 : index
    %544 = memref.load %arg1[%c88] : memref<108xf32, #tpu.memory_space<smem>>
    %545 = vector.broadcast %544 : f32 to vector<2x16x16xf32>
    %546 = arith.mulf %543, %545 : vector<2x16x16xf32>
    %547 = arith.addf %541, %546 : vector<2x16x16xf32>
    %c0_383 = arith.constant 0 : index
    %c1_384 = arith.constant 1 : index
    %c2_385 = arith.constant 2 : index
    %c2_386 = arith.constant 2 : index
    %548 = vector.load %arg6[%c0_383, %c1_384, %c2_385, %c2_386] : memref<2x4x18x18xf32, #tpu.memory_space<vmem>>, vector<2x1x16x16xf32>
    %549 = vector.shape_cast %548 : vector<2x1x16x16xf32> to vector<2x16x16xf32>
    %c89 = arith.constant 89 : index
    %550 = memref.load %arg1[%c89] : memref<108xf32, #tpu.memory_space<smem>>
    %551 = vector.broadcast %550 : f32 to vector<2x16x16xf32>
    %552 = arith.mulf %549, %551 : vector<2x16x16xf32>
    %553 = arith.addf %547, %552 : vector<2x16x16xf32>
    %c0_387 = arith.constant 0 : index
    %c2_388 = arith.constant 2 : index
    %c0_389 = arith.constant 0 : index
    %c0_390 = arith.constant 0 : index
    %554 = vector.load %arg6[%c0_387, %c2_388, %c0_389, %c0_390] : memref<2x4x18x18xf32, #tpu.memory_space<vmem>>, vector<2x1x16x16xf32>
    %555 = vector.shape_cast %554 : vector<2x1x16x16xf32> to vector<2x16x16xf32>
    %c90 = arith.constant 90 : index
    %556 = memref.load %arg1[%c90] : memref<108xf32, #tpu.memory_space<smem>>
    %557 = vector.broadcast %556 : f32 to vector<2x16x16xf32>
    %558 = arith.mulf %555, %557 : vector<2x16x16xf32>
    %c0_391 = arith.constant 0 : index
    %c2_392 = arith.constant 2 : index
    %c0_393 = arith.constant 0 : index
    %c1_394 = arith.constant 1 : index
    %559 = vector.load %arg6[%c0_391, %c2_392, %c0_393, %c1_394] : memref<2x4x18x18xf32, #tpu.memory_space<vmem>>, vector<2x1x16x16xf32>
    %560 = vector.shape_cast %559 : vector<2x1x16x16xf32> to vector<2x16x16xf32>
    %c91 = arith.constant 91 : index
    %561 = memref.load %arg1[%c91] : memref<108xf32, #tpu.memory_space<smem>>
    %562 = vector.broadcast %561 : f32 to vector<2x16x16xf32>
    %563 = arith.mulf %560, %562 : vector<2x16x16xf32>
    %564 = arith.addf %558, %563 : vector<2x16x16xf32>
    %c0_395 = arith.constant 0 : index
    %c2_396 = arith.constant 2 : index
    %c0_397 = arith.constant 0 : index
    %c2_398 = arith.constant 2 : index
    %565 = vector.load %arg6[%c0_395, %c2_396, %c0_397, %c2_398] : memref<2x4x18x18xf32, #tpu.memory_space<vmem>>, vector<2x1x16x16xf32>
    %566 = vector.shape_cast %565 : vector<2x1x16x16xf32> to vector<2x16x16xf32>
    %c92 = arith.constant 92 : index
    %567 = memref.load %arg1[%c92] : memref<108xf32, #tpu.memory_space<smem>>
    %568 = vector.broadcast %567 : f32 to vector<2x16x16xf32>
    %569 = arith.mulf %566, %568 : vector<2x16x16xf32>
    %570 = arith.addf %564, %569 : vector<2x16x16xf32>
    %c0_399 = arith.constant 0 : index
    %c2_400 = arith.constant 2 : index
    %c1_401 = arith.constant 1 : index
    %c0_402 = arith.constant 0 : index
    %571 = vector.load %arg6[%c0_399, %c2_400, %c1_401, %c0_402] : memref<2x4x18x18xf32, #tpu.memory_space<vmem>>, vector<2x1x16x16xf32>
    %572 = vector.shape_cast %571 : vector<2x1x16x16xf32> to vector<2x16x16xf32>
    %c93 = arith.constant 93 : index
    %573 = memref.load %arg1[%c93] : memref<108xf32, #tpu.memory_space<smem>>
    %574 = vector.broadcast %573 : f32 to vector<2x16x16xf32>
    %575 = arith.mulf %572, %574 : vector<2x16x16xf32>
    %576 = arith.addf %570, %575 : vector<2x16x16xf32>
    %c0_403 = arith.constant 0 : index
    %c2_404 = arith.constant 2 : index
    %c1_405 = arith.constant 1 : index
    %c1_406 = arith.constant 1 : index
    %577 = vector.load %arg6[%c0_403, %c2_404, %c1_405, %c1_406] : memref<2x4x18x18xf32, #tpu.memory_space<vmem>>, vector<2x1x16x16xf32>
    %578 = vector.shape_cast %577 : vector<2x1x16x16xf32> to vector<2x16x16xf32>
    %c94 = arith.constant 94 : index
    %579 = memref.load %arg1[%c94] : memref<108xf32, #tpu.memory_space<smem>>
    %580 = vector.broadcast %579 : f32 to vector<2x16x16xf32>
    %581 = arith.mulf %578, %580 : vector<2x16x16xf32>
    %582 = arith.addf %576, %581 : vector<2x16x16xf32>
    %c0_407 = arith.constant 0 : index
    %c2_408 = arith.constant 2 : index
    %c1_409 = arith.constant 1 : index
    %c2_410 = arith.constant 2 : index
    %583 = vector.load %arg6[%c0_407, %c2_408, %c1_409, %c2_410] : memref<2x4x18x18xf32, #tpu.memory_space<vmem>>, vector<2x1x16x16xf32>
    %584 = vector.shape_cast %583 : vector<2x1x16x16xf32> to vector<2x16x16xf32>
    %c95 = arith.constant 95 : index
    %585 = memref.load %arg1[%c95] : memref<108xf32, #tpu.memory_space<smem>>
    %586 = vector.broadcast %585 : f32 to vector<2x16x16xf32>
    %587 = arith.mulf %584, %586 : vector<2x16x16xf32>
    %588 = arith.addf %582, %587 : vector<2x16x16xf32>
    %c0_411 = arith.constant 0 : index
    %c2_412 = arith.constant 2 : index
    %c2_413 = arith.constant 2 : index
    %c0_414 = arith.constant 0 : index
    %589 = vector.load %arg6[%c0_411, %c2_412, %c2_413, %c0_414] : memref<2x4x18x18xf32, #tpu.memory_space<vmem>>, vector<2x1x16x16xf32>
    %590 = vector.shape_cast %589 : vector<2x1x16x16xf32> to vector<2x16x16xf32>
    %c96 = arith.constant 96 : index
    %591 = memref.load %arg1[%c96] : memref<108xf32, #tpu.memory_space<smem>>
    %592 = vector.broadcast %591 : f32 to vector<2x16x16xf32>
    %593 = arith.mulf %590, %592 : vector<2x16x16xf32>
    %594 = arith.addf %588, %593 : vector<2x16x16xf32>
    %c0_415 = arith.constant 0 : index
    %c2_416 = arith.constant 2 : index
    %c2_417 = arith.constant 2 : index
    %c1_418 = arith.constant 1 : index
    %595 = vector.load %arg6[%c0_415, %c2_416, %c2_417, %c1_418] : memref<2x4x18x18xf32, #tpu.memory_space<vmem>>, vector<2x1x16x16xf32>
    %596 = vector.shape_cast %595 : vector<2x1x16x16xf32> to vector<2x16x16xf32>
    %c97 = arith.constant 97 : index
    %597 = memref.load %arg1[%c97] : memref<108xf32, #tpu.memory_space<smem>>
    %598 = vector.broadcast %597 : f32 to vector<2x16x16xf32>
    %599 = arith.mulf %596, %598 : vector<2x16x16xf32>
    %600 = arith.addf %594, %599 : vector<2x16x16xf32>
    %c0_419 = arith.constant 0 : index
    %c2_420 = arith.constant 2 : index
    %c2_421 = arith.constant 2 : index
    %c2_422 = arith.constant 2 : index
    %601 = vector.load %arg6[%c0_419, %c2_420, %c2_421, %c2_422] : memref<2x4x18x18xf32, #tpu.memory_space<vmem>>, vector<2x1x16x16xf32>
    %602 = vector.shape_cast %601 : vector<2x1x16x16xf32> to vector<2x16x16xf32>
    %c98 = arith.constant 98 : index
    %603 = memref.load %arg1[%c98] : memref<108xf32, #tpu.memory_space<smem>>
    %604 = vector.broadcast %603 : f32 to vector<2x16x16xf32>
    %605 = arith.mulf %602, %604 : vector<2x16x16xf32>
    %606 = arith.addf %600, %605 : vector<2x16x16xf32>
    %c0_423 = arith.constant 0 : index
    %c3_424 = arith.constant 3 : index
    %c0_425 = arith.constant 0 : index
    %c0_426 = arith.constant 0 : index
    %607 = vector.load %arg6[%c0_423, %c3_424, %c0_425, %c0_426] : memref<2x4x18x18xf32, #tpu.memory_space<vmem>>, vector<2x1x16x16xf32>
    %608 = vector.shape_cast %607 : vector<2x1x16x16xf32> to vector<2x16x16xf32>
    %c99 = arith.constant 99 : index
    %609 = memref.load %arg1[%c99] : memref<108xf32, #tpu.memory_space<smem>>
    %610 = vector.broadcast %609 : f32 to vector<2x16x16xf32>
    %611 = arith.mulf %608, %610 : vector<2x16x16xf32>
    %c0_427 = arith.constant 0 : index
    %c3_428 = arith.constant 3 : index
    %c0_429 = arith.constant 0 : index
    %c1_430 = arith.constant 1 : index
    %612 = vector.load %arg6[%c0_427, %c3_428, %c0_429, %c1_430] : memref<2x4x18x18xf32, #tpu.memory_space<vmem>>, vector<2x1x16x16xf32>
    %613 = vector.shape_cast %612 : vector<2x1x16x16xf32> to vector<2x16x16xf32>
    %c100 = arith.constant 100 : index
    %614 = memref.load %arg1[%c100] : memref<108xf32, #tpu.memory_space<smem>>
    %615 = vector.broadcast %614 : f32 to vector<2x16x16xf32>
    %616 = arith.mulf %613, %615 : vector<2x16x16xf32>
    %617 = arith.addf %611, %616 : vector<2x16x16xf32>
    %c0_431 = arith.constant 0 : index
    %c3_432 = arith.constant 3 : index
    %c0_433 = arith.constant 0 : index
    %c2_434 = arith.constant 2 : index
    %618 = vector.load %arg6[%c0_431, %c3_432, %c0_433, %c2_434] : memref<2x4x18x18xf32, #tpu.memory_space<vmem>>, vector<2x1x16x16xf32>
    %619 = vector.shape_cast %618 : vector<2x1x16x16xf32> to vector<2x16x16xf32>
    %c101 = arith.constant 101 : index
    %620 = memref.load %arg1[%c101] : memref<108xf32, #tpu.memory_space<smem>>
    %621 = vector.broadcast %620 : f32 to vector<2x16x16xf32>
    %622 = arith.mulf %619, %621 : vector<2x16x16xf32>
    %623 = arith.addf %617, %622 : vector<2x16x16xf32>
    %c0_435 = arith.constant 0 : index
    %c3_436 = arith.constant 3 : index
    %c1_437 = arith.constant 1 : index
    %c0_438 = arith.constant 0 : index
    %624 = vector.load %arg6[%c0_435, %c3_436, %c1_437, %c0_438] : memref<2x4x18x18xf32, #tpu.memory_space<vmem>>, vector<2x1x16x16xf32>
    %625 = vector.shape_cast %624 : vector<2x1x16x16xf32> to vector<2x16x16xf32>
    %c102 = arith.constant 102 : index
    %626 = memref.load %arg1[%c102] : memref<108xf32, #tpu.memory_space<smem>>
    %627 = vector.broadcast %626 : f32 to vector<2x16x16xf32>
    %628 = arith.mulf %625, %627 : vector<2x16x16xf32>
    %629 = arith.addf %623, %628 : vector<2x16x16xf32>
    %c0_439 = arith.constant 0 : index
    %c3_440 = arith.constant 3 : index
    %c1_441 = arith.constant 1 : index
    %c1_442 = arith.constant 1 : index
    %630 = vector.load %arg6[%c0_439, %c3_440, %c1_441, %c1_442] : memref<2x4x18x18xf32, #tpu.memory_space<vmem>>, vector<2x1x16x16xf32>
    %631 = vector.shape_cast %630 : vector<2x1x16x16xf32> to vector<2x16x16xf32>
    %c103 = arith.constant 103 : index
    %632 = memref.load %arg1[%c103] : memref<108xf32, #tpu.memory_space<smem>>
    %633 = vector.broadcast %632 : f32 to vector<2x16x16xf32>
    %634 = arith.mulf %631, %633 : vector<2x16x16xf32>
    %635 = arith.addf %629, %634 : vector<2x16x16xf32>
    %c0_443 = arith.constant 0 : index
    %c3_444 = arith.constant 3 : index
    %c1_445 = arith.constant 1 : index
    %c2_446 = arith.constant 2 : index
    %636 = vector.load %arg6[%c0_443, %c3_444, %c1_445, %c2_446] : memref<2x4x18x18xf32, #tpu.memory_space<vmem>>, vector<2x1x16x16xf32>
    %637 = vector.shape_cast %636 : vector<2x1x16x16xf32> to vector<2x16x16xf32>
    %c104 = arith.constant 104 : index
    %638 = memref.load %arg1[%c104] : memref<108xf32, #tpu.memory_space<smem>>
    %639 = vector.broadcast %638 : f32 to vector<2x16x16xf32>
    %640 = arith.mulf %637, %639 : vector<2x16x16xf32>
    %641 = arith.addf %635, %640 : vector<2x16x16xf32>
    %c0_447 = arith.constant 0 : index
    %c3_448 = arith.constant 3 : index
    %c2_449 = arith.constant 2 : index
    %c0_450 = arith.constant 0 : index
    %642 = vector.load %arg6[%c0_447, %c3_448, %c2_449, %c0_450] : memref<2x4x18x18xf32, #tpu.memory_space<vmem>>, vector<2x1x16x16xf32>
    %643 = vector.shape_cast %642 : vector<2x1x16x16xf32> to vector<2x16x16xf32>
    %c105 = arith.constant 105 : index
    %644 = memref.load %arg1[%c105] : memref<108xf32, #tpu.memory_space<smem>>
    %645 = vector.broadcast %644 : f32 to vector<2x16x16xf32>
    %646 = arith.mulf %643, %645 : vector<2x16x16xf32>
    %647 = arith.addf %641, %646 : vector<2x16x16xf32>
    %c0_451 = arith.constant 0 : index
    %c3_452 = arith.constant 3 : index
    %c2_453 = arith.constant 2 : index
    %c1_454 = arith.constant 1 : index
    %648 = vector.load %arg6[%c0_451, %c3_452, %c2_453, %c1_454] : memref<2x4x18x18xf32, #tpu.memory_space<vmem>>, vector<2x1x16x16xf32>
    %649 = vector.shape_cast %648 : vector<2x1x16x16xf32> to vector<2x16x16xf32>
    %c106 = arith.constant 106 : index
    %650 = memref.load %arg1[%c106] : memref<108xf32, #tpu.memory_space<smem>>
    %651 = vector.broadcast %650 : f32 to vector<2x16x16xf32>
    %652 = arith.mulf %649, %651 : vector<2x16x16xf32>
    %653 = arith.addf %647, %652 : vector<2x16x16xf32>
    %c0_455 = arith.constant 0 : index
    %c3_456 = arith.constant 3 : index
    %c2_457 = arith.constant 2 : index
    %c2_458 = arith.constant 2 : index
    %654 = vector.load %arg6[%c0_455, %c3_456, %c2_457, %c2_458] : memref<2x4x18x18xf32, #tpu.memory_space<vmem>>, vector<2x1x16x16xf32>
    %655 = vector.shape_cast %654 : vector<2x1x16x16xf32> to vector<2x16x16xf32>
    %c107 = arith.constant 107 : index
    %656 = memref.load %arg1[%c107] : memref<108xf32, #tpu.memory_space<smem>>
    %657 = vector.broadcast %656 : f32 to vector<2x16x16xf32>
    %658 = arith.mulf %655, %657 : vector<2x16x16xf32>
    %659 = arith.addf %653, %658 : vector<2x16x16xf32>
    %660 = arith.addf %500, %553 : vector<2x16x16xf32>
    %661 = arith.addf %606, %659 : vector<2x16x16xf32>
    %662 = arith.addf %660, %661 : vector<2x16x16xf32>
    %c2_459 = arith.constant 2 : index
    %663 = memref.load %arg2[%c2_459] : memref<3xf32, #tpu.memory_space<smem>>
    %664 = vector.broadcast %663 : f32 to vector<2x16x16xf32>
    %665 = arith.addf %662, %664 : vector<2x16x16xf32>
    %c0_460 = arith.constant 0 : index
    %c2_461 = arith.constant 2 : index
    %c0_462 = arith.constant 0 : index
    %c0_463 = arith.constant 0 : index
    %666 = vector.load %arg7[%c0_460, %c2_461, %c0_462, %c0_463] : memref<2x3x17x17xf32, #tpu.memory_space<vmem>>, vector<2x1x16x16xf32>
    %667 = vector.shape_cast %666 : vector<2x1x16x16xf32> to vector<2x16x16xf32>
    %668 = vector.shape_cast %665 : vector<2x16x16xf32> to vector<2x1x16x16xf32>
    tpu.vector_store %arg7[%c0_460, %c2_461, %c0_462, %c0_463], %668 {strides = array<i32>} : memref<2x3x17x17xf32, #tpu.memory_space<vmem>>, vector<2x1x16x16xf32>,
    %c0_464 = arith.constant 0 : index
    %c0_465 = arith.constant 0 : index
    %c0_466 = arith.constant 0 : index
    %c0_467 = arith.constant 0 : index
    %669 = vector.load %arg7[%c0_464, %c0_465, %c0_466, %c0_467] : memref<2x3x17x17xf32, #tpu.memory_space<vmem>>, vector<2x1x16x16xf32>
    %670 = vector.shape_cast %669 : vector<2x1x16x16xf32> to vector<2x16x16xf32>
    %c0_468 = arith.constant 0 : index
    %671 = memref.load %arg3[%c0_468] : memref<96xf32, #tpu.memory_space<smem>>
    %672 = vector.broadcast %671 : f32 to vector<2x16x16xf32>
    %673 = arith.mulf %670, %672 : vector<2x16x16xf32>
    %c0_469 = arith.constant 0 : index
    %c0_470 = arith.constant 0 : index
    %c0_471 = arith.constant 0 : index
    %c1_472 = arith.constant 1 : index
    %674 = vector.load %arg7[%c0_469, %c0_470, %c0_471, %c1_472] : memref<2x3x17x17xf32, #tpu.memory_space<vmem>>, vector<2x1x16x16xf32>
    %675 = vector.shape_cast %674 : vector<2x1x16x16xf32> to vector<2x16x16xf32>
    %c1_473 = arith.constant 1 : index
    %676 = memref.load %arg3[%c1_473] : memref<96xf32, #tpu.memory_space<smem>>
    %677 = vector.broadcast %676 : f32 to vector<2x16x16xf32>
    %678 = arith.mulf %675, %677 : vector<2x16x16xf32>
    %679 = arith.addf %673, %678 : vector<2x16x16xf32>
    %c0_474 = arith.constant 0 : index
    %c0_475 = arith.constant 0 : index
    %c1_476 = arith.constant 1 : index
    %c0_477 = arith.constant 0 : index
    %680 = vector.load %arg7[%c0_474, %c0_475, %c1_476, %c0_477] : memref<2x3x17x17xf32, #tpu.memory_space<vmem>>, vector<2x1x16x16xf32>
    %681 = vector.shape_cast %680 : vector<2x1x16x16xf32> to vector<2x16x16xf32>
    %c2_478 = arith.constant 2 : index
    %682 = memref.load %arg3[%c2_478] : memref<96xf32, #tpu.memory_space<smem>>
    %683 = vector.broadcast %682 : f32 to vector<2x16x16xf32>
    %684 = arith.mulf %681, %683 : vector<2x16x16xf32>
    %685 = arith.addf %679, %684 : vector<2x16x16xf32>
    %c0_479 = arith.constant 0 : index
    %c0_480 = arith.constant 0 : index
    %c1_481 = arith.constant 1 : index
    %c1_482 = arith.constant 1 : index
    %686 = vector.load %arg7[%c0_479, %c0_480, %c1_481, %c1_482] : memref<2x3x17x17xf32, #tpu.memory_space<vmem>>, vector<2x1x16x16xf32>
    %687 = vector.shape_cast %686 : vector<2x1x16x16xf32> to vector<2x16x16xf32>
    %c3_483 = arith.constant 3 : index
    %688 = memref.load %arg3[%c3_483] : memref<96xf32, #tpu.memory_space<smem>>
    %689 = vector.broadcast %688 : f32 to vector<2x16x16xf32>
    %690 = arith.mulf %687, %689 : vector<2x16x16xf32>
    %691 = arith.addf %685, %690 : vector<2x16x16xf32>
    %c0_484 = arith.constant 0 : index
    %c1_485 = arith.constant 1 : index
    %c0_486 = arith.constant 0 : index
    %c0_487 = arith.constant 0 : index
    %692 = vector.load %arg7[%c0_484, %c1_485, %c0_486, %c0_487] : memref<2x3x17x17xf32, #tpu.memory_space<vmem>>, vector<2x1x16x16xf32>
    %693 = vector.shape_cast %692 : vector<2x1x16x16xf32> to vector<2x16x16xf32>
    %c4_488 = arith.constant 4 : index
    %694 = memref.load %arg3[%c4_488] : memref<96xf32, #tpu.memory_space<smem>>
    %695 = vector.broadcast %694 : f32 to vector<2x16x16xf32>
    %696 = arith.mulf %693, %695 : vector<2x16x16xf32>
    %c0_489 = arith.constant 0 : index
    %c1_490 = arith.constant 1 : index
    %c0_491 = arith.constant 0 : index
    %c1_492 = arith.constant 1 : index
    %697 = vector.load %arg7[%c0_489, %c1_490, %c0_491, %c1_492] : memref<2x3x17x17xf32, #tpu.memory_space<vmem>>, vector<2x1x16x16xf32>
    %698 = vector.shape_cast %697 : vector<2x1x16x16xf32> to vector<2x16x16xf32>
    %c5_493 = arith.constant 5 : index
    %699 = memref.load %arg3[%c5_493] : memref<96xf32, #tpu.memory_space<smem>>
    %700 = vector.broadcast %699 : f32 to vector<2x16x16xf32>
    %701 = arith.mulf %698, %700 : vector<2x16x16xf32>
    %702 = arith.addf %696, %701 : vector<2x16x16xf32>
    %c0_494 = arith.constant 0 : index
    %c1_495 = arith.constant 1 : index
    %c1_496 = arith.constant 1 : index
    %c0_497 = arith.constant 0 : index
    %703 = vector.load %arg7[%c0_494, %c1_495, %c1_496, %c0_497] : memref<2x3x17x17xf32, #tpu.memory_space<vmem>>, vector<2x1x16x16xf32>
    %704 = vector.shape_cast %703 : vector<2x1x16x16xf32> to vector<2x16x16xf32>
    %c6_498 = arith.constant 6 : index
    %705 = memref.load %arg3[%c6_498] : memref<96xf32, #tpu.memory_space<smem>>
    %706 = vector.broadcast %705 : f32 to vector<2x16x16xf32>
    %707 = arith.mulf %704, %706 : vector<2x16x16xf32>
    %708 = arith.addf %702, %707 : vector<2x16x16xf32>
    %c0_499 = arith.constant 0 : index
    %c1_500 = arith.constant 1 : index
    %c1_501 = arith.constant 1 : index
    %c1_502 = arith.constant 1 : index
    %709 = vector.load %arg7[%c0_499, %c1_500, %c1_501, %c1_502] : memref<2x3x17x17xf32, #tpu.memory_space<vmem>>, vector<2x1x16x16xf32>
    %710 = vector.shape_cast %709 : vector<2x1x16x16xf32> to vector<2x16x16xf32>
    %c7_503 = arith.constant 7 : index
    %711 = memref.load %arg3[%c7_503] : memref<96xf32, #tpu.memory_space<smem>>
    %712 = vector.broadcast %711 : f32 to vector<2x16x16xf32>
    %713 = arith.mulf %710, %712 : vector<2x16x16xf32>
    %714 = arith.addf %708, %713 : vector<2x16x16xf32>
    %c0_504 = arith.constant 0 : index
    %c2_505 = arith.constant 2 : index
    %c0_506 = arith.constant 0 : index
    %c0_507 = arith.constant 0 : index
    %715 = vector.load %arg7[%c0_504, %c2_505, %c0_506, %c0_507] : memref<2x3x17x17xf32, #tpu.memory_space<vmem>>, vector<2x1x16x16xf32>
    %716 = vector.shape_cast %715 : vector<2x1x16x16xf32> to vector<2x16x16xf32>
    %c8_508 = arith.constant 8 : index
    %717 = memref.load %arg3[%c8_508] : memref<96xf32, #tpu.memory_space<smem>>
    %718 = vector.broadcast %717 : f32 to vector<2x16x16xf32>
    %719 = arith.mulf %716, %718 : vector<2x16x16xf32>
    %c0_509 = arith.constant 0 : index
    %c2_510 = arith.constant 2 : index
    %c0_511 = arith.constant 0 : index
    %c1_512 = arith.constant 1 : index
    %720 = vector.load %arg7[%c0_509, %c2_510, %c0_511, %c1_512] : memref<2x3x17x17xf32, #tpu.memory_space<vmem>>, vector<2x1x16x16xf32>
    %721 = vector.shape_cast %720 : vector<2x1x16x16xf32> to vector<2x16x16xf32>
    %c9_513 = arith.constant 9 : index
    %722 = memref.load %arg3[%c9_513] : memref<96xf32, #tpu.memory_space<smem>>
    %723 = vector.broadcast %722 : f32 to vector<2x16x16xf32>
    %724 = arith.mulf %721, %723 : vector<2x16x16xf32>
    %725 = arith.addf %719, %724 : vector<2x16x16xf32>
    %c0_514 = arith.constant 0 : index
    %c2_515 = arith.constant 2 : index
    %c1_516 = arith.constant 1 : index
    %c0_517 = arith.constant 0 : index
    %726 = vector.load %arg7[%c0_514, %c2_515, %c1_516, %c0_517] : memref<2x3x17x17xf32, #tpu.memory_space<vmem>>, vector<2x1x16x16xf32>
    %727 = vector.shape_cast %726 : vector<2x1x16x16xf32> to vector<2x16x16xf32>
    %c10_518 = arith.constant 10 : index
    %728 = memref.load %arg3[%c10_518] : memref<96xf32, #tpu.memory_space<smem>>
    %729 = vector.broadcast %728 : f32 to vector<2x16x16xf32>
    %730 = arith.mulf %727, %729 : vector<2x16x16xf32>
    %731 = arith.addf %725, %730 : vector<2x16x16xf32>
    %c0_519 = arith.constant 0 : index
    %c2_520 = arith.constant 2 : index
    %c1_521 = arith.constant 1 : index
    %c1_522 = arith.constant 1 : index
    %732 = vector.load %arg7[%c0_519, %c2_520, %c1_521, %c1_522] : memref<2x3x17x17xf32, #tpu.memory_space<vmem>>, vector<2x1x16x16xf32>
    %733 = vector.shape_cast %732 : vector<2x1x16x16xf32> to vector<2x16x16xf32>
    %c11_523 = arith.constant 11 : index
    %734 = memref.load %arg3[%c11_523] : memref<96xf32, #tpu.memory_space<smem>>
    %735 = vector.broadcast %734 : f32 to vector<2x16x16xf32>
    %736 = arith.mulf %733, %735 : vector<2x16x16xf32>
    %737 = arith.addf %731, %736 : vector<2x16x16xf32>
    %738 = arith.addf %691, %714 : vector<2x16x16xf32>
    %739 = arith.addf %738, %737 : vector<2x16x16xf32>
    %c0_524 = arith.constant 0 : index
    %740 = memref.load %arg4[%c0_524] : memref<8xf32, #tpu.memory_space<smem>>
    %741 = vector.broadcast %740 : f32 to vector<2x16x16xf32>
    %742 = arith.addf %739, %741 : vector<2x16x16xf32>
    %c0_525 = arith.constant 0 : index
    %c0_526 = arith.constant 0 : index
    %c0_527 = arith.constant 0 : index
    %c0_528 = arith.constant 0 : index
    %743 = vector.load %arg5[%c0_525, %c0_526, %c0_527, %c0_528] : memref<2x8x16x16xf32, #tpu.memory_space<vmem>>, vector<2x1x16x16xf32>
    %744 = vector.shape_cast %743 : vector<2x1x16x16xf32> to vector<2x16x16xf32>
    %745 = vector.shape_cast %742 : vector<2x16x16xf32> to vector<2x1x16x16xf32>
    tpu.vector_store %arg5[%c0_525, %c0_526, %c0_527, %c0_528], %745 {strides = array<i32>} : memref<2x8x16x16xf32, #tpu.memory_space<vmem>>, vector<2x1x16x16xf32>,
    %c0_529 = arith.constant 0 : index
    %c0_530 = arith.constant 0 : index
    %c0_531 = arith.constant 0 : index
    %c0_532 = arith.constant 0 : index
    %746 = vector.load %arg7[%c0_529, %c0_530, %c0_531, %c0_532] : memref<2x3x17x17xf32, #tpu.memory_space<vmem>>, vector<2x1x16x16xf32>
    %747 = vector.shape_cast %746 : vector<2x1x16x16xf32> to vector<2x16x16xf32>
    %c12_533 = arith.constant 12 : index
    %748 = memref.load %arg3[%c12_533] : memref<96xf32, #tpu.memory_space<smem>>
    %749 = vector.broadcast %748 : f32 to vector<2x16x16xf32>
    %750 = arith.mulf %747, %749 : vector<2x16x16xf32>
    %c0_534 = arith.constant 0 : index
    %c0_535 = arith.constant 0 : index
    %c0_536 = arith.constant 0 : index
    %c1_537 = arith.constant 1 : index
    %751 = vector.load %arg7[%c0_534, %c0_535, %c0_536, %c1_537] : memref<2x3x17x17xf32, #tpu.memory_space<vmem>>, vector<2x1x16x16xf32>
    %752 = vector.shape_cast %751 : vector<2x1x16x16xf32> to vector<2x16x16xf32>
    %c13_538 = arith.constant 13 : index
    %753 = memref.load %arg3[%c13_538] : memref<96xf32, #tpu.memory_space<smem>>
    %754 = vector.broadcast %753 : f32 to vector<2x16x16xf32>
    %755 = arith.mulf %752, %754 : vector<2x16x16xf32>
    %756 = arith.addf %750, %755 : vector<2x16x16xf32>
    %c0_539 = arith.constant 0 : index
    %c0_540 = arith.constant 0 : index
    %c1_541 = arith.constant 1 : index
    %c0_542 = arith.constant 0 : index
    %757 = vector.load %arg7[%c0_539, %c0_540, %c1_541, %c0_542] : memref<2x3x17x17xf32, #tpu.memory_space<vmem>>, vector<2x1x16x16xf32>
    %758 = vector.shape_cast %757 : vector<2x1x16x16xf32> to vector<2x16x16xf32>
    %c14_543 = arith.constant 14 : index
    %759 = memref.load %arg3[%c14_543] : memref<96xf32, #tpu.memory_space<smem>>
    %760 = vector.broadcast %759 : f32 to vector<2x16x16xf32>
    %761 = arith.mulf %758, %760 : vector<2x16x16xf32>
    %762 = arith.addf %756, %761 : vector<2x16x16xf32>
    %c0_544 = arith.constant 0 : index
    %c0_545 = arith.constant 0 : index
    %c1_546 = arith.constant 1 : index
    %c1_547 = arith.constant 1 : index
    %763 = vector.load %arg7[%c0_544, %c0_545, %c1_546, %c1_547] : memref<2x3x17x17xf32, #tpu.memory_space<vmem>>, vector<2x1x16x16xf32>
    %764 = vector.shape_cast %763 : vector<2x1x16x16xf32> to vector<2x16x16xf32>
    %c15_548 = arith.constant 15 : index
    %765 = memref.load %arg3[%c15_548] : memref<96xf32, #tpu.memory_space<smem>>
    %766 = vector.broadcast %765 : f32 to vector<2x16x16xf32>
    %767 = arith.mulf %764, %766 : vector<2x16x16xf32>
    %768 = arith.addf %762, %767 : vector<2x16x16xf32>
    %c0_549 = arith.constant 0 : index
    %c1_550 = arith.constant 1 : index
    %c0_551 = arith.constant 0 : index
    %c0_552 = arith.constant 0 : index
    %769 = vector.load %arg7[%c0_549, %c1_550, %c0_551, %c0_552] : memref<2x3x17x17xf32, #tpu.memory_space<vmem>>, vector<2x1x16x16xf32>
    %770 = vector.shape_cast %769 : vector<2x1x16x16xf32> to vector<2x16x16xf32>
    %c16_553 = arith.constant 16 : index
    %771 = memref.load %arg3[%c16_553] : memref<96xf32, #tpu.memory_space<smem>>
    %772 = vector.broadcast %771 : f32 to vector<2x16x16xf32>
    %773 = arith.mulf %770, %772 : vector<2x16x16xf32>
    %c0_554 = arith.constant 0 : index
    %c1_555 = arith.constant 1 : index
    %c0_556 = arith.constant 0 : index
    %c1_557 = arith.constant 1 : index
    %774 = vector.load %arg7[%c0_554, %c1_555, %c0_556, %c1_557] : memref<2x3x17x17xf32, #tpu.memory_space<vmem>>, vector<2x1x16x16xf32>
    %775 = vector.shape_cast %774 : vector<2x1x16x16xf32> to vector<2x16x16xf32>
    %c17_558 = arith.constant 17 : index
    %776 = memref.load %arg3[%c17_558] : memref<96xf32, #tpu.memory_space<smem>>
    %777 = vector.broadcast %776 : f32 to vector<2x16x16xf32>
    %778 = arith.mulf %775, %777 : vector<2x16x16xf32>
    %779 = arith.addf %773, %778 : vector<2x16x16xf32>
    %c0_559 = arith.constant 0 : index
    %c1_560 = arith.constant 1 : index
    %c1_561 = arith.constant 1 : index
    %c0_562 = arith.constant 0 : index
    %780 = vector.load %arg7[%c0_559, %c1_560, %c1_561, %c0_562] : memref<2x3x17x17xf32, #tpu.memory_space<vmem>>, vector<2x1x16x16xf32>
    %781 = vector.shape_cast %780 : vector<2x1x16x16xf32> to vector<2x16x16xf32>
    %c18_563 = arith.constant 18 : index
    %782 = memref.load %arg3[%c18_563] : memref<96xf32, #tpu.memory_space<smem>>
    %783 = vector.broadcast %782 : f32 to vector<2x16x16xf32>
    %784 = arith.mulf %781, %783 : vector<2x16x16xf32>
    %785 = arith.addf %779, %784 : vector<2x16x16xf32>
    %c0_564 = arith.constant 0 : index
    %c1_565 = arith.constant 1 : index
    %c1_566 = arith.constant 1 : index
    %c1_567 = arith.constant 1 : index
    %786 = vector.load %arg7[%c0_564, %c1_565, %c1_566, %c1_567] : memref<2x3x17x17xf32, #tpu.memory_space<vmem>>, vector<2x1x16x16xf32>
    %787 = vector.shape_cast %786 : vector<2x1x16x16xf32> to vector<2x16x16xf32>
    %c19_568 = arith.constant 19 : index
    %788 = memref.load %arg3[%c19_568] : memref<96xf32, #tpu.memory_space<smem>>
    %789 = vector.broadcast %788 : f32 to vector<2x16x16xf32>
    %790 = arith.mulf %787, %789 : vector<2x16x16xf32>
    %791 = arith.addf %785, %790 : vector<2x16x16xf32>
    %c0_569 = arith.constant 0 : index
    %c2_570 = arith.constant 2 : index
    %c0_571 = arith.constant 0 : index
    %c0_572 = arith.constant 0 : index
    %792 = vector.load %arg7[%c0_569, %c2_570, %c0_571, %c0_572] : memref<2x3x17x17xf32, #tpu.memory_space<vmem>>, vector<2x1x16x16xf32>
    %793 = vector.shape_cast %792 : vector<2x1x16x16xf32> to vector<2x16x16xf32>
    %c20_573 = arith.constant 20 : index
    %794 = memref.load %arg3[%c20_573] : memref<96xf32, #tpu.memory_space<smem>>
    %795 = vector.broadcast %794 : f32 to vector<2x16x16xf32>
    %796 = arith.mulf %793, %795 : vector<2x16x16xf32>
    %c0_574 = arith.constant 0 : index
    %c2_575 = arith.constant 2 : index
    %c0_576 = arith.constant 0 : index
    %c1_577 = arith.constant 1 : index
    %797 = vector.load %arg7[%c0_574, %c2_575, %c0_576, %c1_577] : memref<2x3x17x17xf32, #tpu.memory_space<vmem>>, vector<2x1x16x16xf32>
    %798 = vector.shape_cast %797 : vector<2x1x16x16xf32> to vector<2x16x16xf32>
    %c21_578 = arith.constant 21 : index
    %799 = memref.load %arg3[%c21_578] : memref<96xf32, #tpu.memory_space<smem>>
    %800 = vector.broadcast %799 : f32 to vector<2x16x16xf32>
    %801 = arith.mulf %798, %800 : vector<2x16x16xf32>
    %802 = arith.addf %796, %801 : vector<2x16x16xf32>
    %c0_579 = arith.constant 0 : index
    %c2_580 = arith.constant 2 : index
    %c1_581 = arith.constant 1 : index
    %c0_582 = arith.constant 0 : index
    %803 = vector.load %arg7[%c0_579, %c2_580, %c1_581, %c0_582] : memref<2x3x17x17xf32, #tpu.memory_space<vmem>>, vector<2x1x16x16xf32>
    %804 = vector.shape_cast %803 : vector<2x1x16x16xf32> to vector<2x16x16xf32>
    %c22_583 = arith.constant 22 : index
    %805 = memref.load %arg3[%c22_583] : memref<96xf32, #tpu.memory_space<smem>>
    %806 = vector.broadcast %805 : f32 to vector<2x16x16xf32>
    %807 = arith.mulf %804, %806 : vector<2x16x16xf32>
    %808 = arith.addf %802, %807 : vector<2x16x16xf32>
    %c0_584 = arith.constant 0 : index
    %c2_585 = arith.constant 2 : index
    %c1_586 = arith.constant 1 : index
    %c1_587 = arith.constant 1 : index
    %809 = vector.load %arg7[%c0_584, %c2_585, %c1_586, %c1_587] : memref<2x3x17x17xf32, #tpu.memory_space<vmem>>, vector<2x1x16x16xf32>
    %810 = vector.shape_cast %809 : vector<2x1x16x16xf32> to vector<2x16x16xf32>
    %c23_588 = arith.constant 23 : index
    %811 = memref.load %arg3[%c23_588] : memref<96xf32, #tpu.memory_space<smem>>
    %812 = vector.broadcast %811 : f32 to vector<2x16x16xf32>
    %813 = arith.mulf %810, %812 : vector<2x16x16xf32>
    %814 = arith.addf %808, %813 : vector<2x16x16xf32>
    %815 = arith.addf %768, %791 : vector<2x16x16xf32>
    %816 = arith.addf %815, %814 : vector<2x16x16xf32>
    %c1_589 = arith.constant 1 : index
    %817 = memref.load %arg4[%c1_589] : memref<8xf32, #tpu.memory_space<smem>>
    %818 = vector.broadcast %817 : f32 to vector<2x16x16xf32>
    %819 = arith.addf %816, %818 : vector<2x16x16xf32>
    %c0_590 = arith.constant 0 : index
    %c1_591 = arith.constant 1 : index
    %c0_592 = arith.constant 0 : index
    %c0_593 = arith.constant 0 : index
    %820 = vector.load %arg5[%c0_590, %c1_591, %c0_592, %c0_593] : memref<2x8x16x16xf32, #tpu.memory_space<vmem>>, vector<2x1x16x16xf32>
    %821 = vector.shape_cast %820 : vector<2x1x16x16xf32> to vector<2x16x16xf32>
    %822 = vector.shape_cast %819 : vector<2x16x16xf32> to vector<2x1x16x16xf32>
    tpu.vector_store %arg5[%c0_590, %c1_591, %c0_592, %c0_593], %822 {strides = array<i32>} : memref<2x8x16x16xf32, #tpu.memory_space<vmem>>, vector<2x1x16x16xf32>,
    %c0_594 = arith.constant 0 : index
    %c0_595 = arith.constant 0 : index
    %c0_596 = arith.constant 0 : index
    %c0_597 = arith.constant 0 : index
    %823 = vector.load %arg7[%c0_594, %c0_595, %c0_596, %c0_597] : memref<2x3x17x17xf32, #tpu.memory_space<vmem>>, vector<2x1x16x16xf32>
    %824 = vector.shape_cast %823 : vector<2x1x16x16xf32> to vector<2x16x16xf32>
    %c24_598 = arith.constant 24 : index
    %825 = memref.load %arg3[%c24_598] : memref<96xf32, #tpu.memory_space<smem>>
    %826 = vector.broadcast %825 : f32 to vector<2x16x16xf32>
    %827 = arith.mulf %824, %826 : vector<2x16x16xf32>
    %c0_599 = arith.constant 0 : index
    %c0_600 = arith.constant 0 : index
    %c0_601 = arith.constant 0 : index
    %c1_602 = arith.constant 1 : index
    %828 = vector.load %arg7[%c0_599, %c0_600, %c0_601, %c1_602] : memref<2x3x17x17xf32, #tpu.memory_space<vmem>>, vector<2x1x16x16xf32>
    %829 = vector.shape_cast %828 : vector<2x1x16x16xf32> to vector<2x16x16xf32>
    %c25_603 = arith.constant 25 : index
    %830 = memref.load %arg3[%c25_603] : memref<96xf32, #tpu.memory_space<smem>>
    %831 = vector.broadcast %830 : f32 to vector<2x16x16xf32>
    %832 = arith.mulf %829, %831 : vector<2x16x16xf32>
    %833 = arith.addf %827, %832 : vector<2x16x16xf32>
    %c0_604 = arith.constant 0 : index
    %c0_605 = arith.constant 0 : index
    %c1_606 = arith.constant 1 : index
    %c0_607 = arith.constant 0 : index
    %834 = vector.load %arg7[%c0_604, %c0_605, %c1_606, %c0_607] : memref<2x3x17x17xf32, #tpu.memory_space<vmem>>, vector<2x1x16x16xf32>
    %835 = vector.shape_cast %834 : vector<2x1x16x16xf32> to vector<2x16x16xf32>
    %c26_608 = arith.constant 26 : index
    %836 = memref.load %arg3[%c26_608] : memref<96xf32, #tpu.memory_space<smem>>
    %837 = vector.broadcast %836 : f32 to vector<2x16x16xf32>
    %838 = arith.mulf %835, %837 : vector<2x16x16xf32>
    %839 = arith.addf %833, %838 : vector<2x16x16xf32>
    %c0_609 = arith.constant 0 : index
    %c0_610 = arith.constant 0 : index
    %c1_611 = arith.constant 1 : index
    %c1_612 = arith.constant 1 : index
    %840 = vector.load %arg7[%c0_609, %c0_610, %c1_611, %c1_612] : memref<2x3x17x17xf32, #tpu.memory_space<vmem>>, vector<2x1x16x16xf32>
    %841 = vector.shape_cast %840 : vector<2x1x16x16xf32> to vector<2x16x16xf32>
    %c27_613 = arith.constant 27 : index
    %842 = memref.load %arg3[%c27_613] : memref<96xf32, #tpu.memory_space<smem>>
    %843 = vector.broadcast %842 : f32 to vector<2x16x16xf32>
    %844 = arith.mulf %841, %843 : vector<2x16x16xf32>
    %845 = arith.addf %839, %844 : vector<2x16x16xf32>
    %c0_614 = arith.constant 0 : index
    %c1_615 = arith.constant 1 : index
    %c0_616 = arith.constant 0 : index
    %c0_617 = arith.constant 0 : index
    %846 = vector.load %arg7[%c0_614, %c1_615, %c0_616, %c0_617] : memref<2x3x17x17xf32, #tpu.memory_space<vmem>>, vector<2x1x16x16xf32>
    %847 = vector.shape_cast %846 : vector<2x1x16x16xf32> to vector<2x16x16xf32>
    %c28_618 = arith.constant 28 : index
    %848 = memref.load %arg3[%c28_618] : memref<96xf32, #tpu.memory_space<smem>>
    %849 = vector.broadcast %848 : f32 to vector<2x16x16xf32>
    %850 = arith.mulf %847, %849 : vector<2x16x16xf32>
    %c0_619 = arith.constant 0 : index
    %c1_620 = arith.constant 1 : index
    %c0_621 = arith.constant 0 : index
    %c1_622 = arith.constant 1 : index
    %851 = vector.load %arg7[%c0_619, %c1_620, %c0_621, %c1_622] : memref<2x3x17x17xf32, #tpu.memory_space<vmem>>, vector<2x1x16x16xf32>
    %852 = vector.shape_cast %851 : vector<2x1x16x16xf32> to vector<2x16x16xf32>
    %c29_623 = arith.constant 29 : index
    %853 = memref.load %arg3[%c29_623] : memref<96xf32, #tpu.memory_space<smem>>
    %854 = vector.broadcast %853 : f32 to vector<2x16x16xf32>
    %855 = arith.mulf %852, %854 : vector<2x16x16xf32>
    %856 = arith.addf %850, %855 : vector<2x16x16xf32>
    %c0_624 = arith.constant 0 : index
    %c1_625 = arith.constant 1 : index
    %c1_626 = arith.constant 1 : index
    %c0_627 = arith.constant 0 : index
    %857 = vector.load %arg7[%c0_624, %c1_625, %c1_626, %c0_627] : memref<2x3x17x17xf32, #tpu.memory_space<vmem>>, vector<2x1x16x16xf32>
    %858 = vector.shape_cast %857 : vector<2x1x16x16xf32> to vector<2x16x16xf32>
    %c30_628 = arith.constant 30 : index
    %859 = memref.load %arg3[%c30_628] : memref<96xf32, #tpu.memory_space<smem>>
    %860 = vector.broadcast %859 : f32 to vector<2x16x16xf32>
    %861 = arith.mulf %858, %860 : vector<2x16x16xf32>
    %862 = arith.addf %856, %861 : vector<2x16x16xf32>
    %c0_629 = arith.constant 0 : index
    %c1_630 = arith.constant 1 : index
    %c1_631 = arith.constant 1 : index
    %c1_632 = arith.constant 1 : index
    %863 = vector.load %arg7[%c0_629, %c1_630, %c1_631, %c1_632] : memref<2x3x17x17xf32, #tpu.memory_space<vmem>>, vector<2x1x16x16xf32>
    %864 = vector.shape_cast %863 : vector<2x1x16x16xf32> to vector<2x16x16xf32>
    %c31_633 = arith.constant 31 : index
    %865 = memref.load %arg3[%c31_633] : memref<96xf32, #tpu.memory_space<smem>>
    %866 = vector.broadcast %865 : f32 to vector<2x16x16xf32>
    %867 = arith.mulf %864, %866 : vector<2x16x16xf32>
    %868 = arith.addf %862, %867 : vector<2x16x16xf32>
    %c0_634 = arith.constant 0 : index
    %c2_635 = arith.constant 2 : index
    %c0_636 = arith.constant 0 : index
    %c0_637 = arith.constant 0 : index
    %869 = vector.load %arg7[%c0_634, %c2_635, %c0_636, %c0_637] : memref<2x3x17x17xf32, #tpu.memory_space<vmem>>, vector<2x1x16x16xf32>
    %870 = vector.shape_cast %869 : vector<2x1x16x16xf32> to vector<2x16x16xf32>
    %c32_638 = arith.constant 32 : index
    %871 = memref.load %arg3[%c32_638] : memref<96xf32, #tpu.memory_space<smem>>
    %872 = vector.broadcast %871 : f32 to vector<2x16x16xf32>
    %873 = arith.mulf %870, %872 : vector<2x16x16xf32>
    %c0_639 = arith.constant 0 : index
    %c2_640 = arith.constant 2 : index
    %c0_641 = arith.constant 0 : index
    %c1_642 = arith.constant 1 : index
    %874 = vector.load %arg7[%c0_639, %c2_640, %c0_641, %c1_642] : memref<2x3x17x17xf32, #tpu.memory_space<vmem>>, vector<2x1x16x16xf32>
    %875 = vector.shape_cast %874 : vector<2x1x16x16xf32> to vector<2x16x16xf32>
    %c33_643 = arith.constant 33 : index
    %876 = memref.load %arg3[%c33_643] : memref<96xf32, #tpu.memory_space<smem>>
    %877 = vector.broadcast %876 : f32 to vector<2x16x16xf32>
    %878 = arith.mulf %875, %877 : vector<2x16x16xf32>
    %879 = arith.addf %873, %878 : vector<2x16x16xf32>
    %c0_644 = arith.constant 0 : index
    %c2_645 = arith.constant 2 : index
    %c1_646 = arith.constant 1 : index
    %c0_647 = arith.constant 0 : index
    %880 = vector.load %arg7[%c0_644, %c2_645, %c1_646, %c0_647] : memref<2x3x17x17xf32, #tpu.memory_space<vmem>>, vector<2x1x16x16xf32>
    %881 = vector.shape_cast %880 : vector<2x1x16x16xf32> to vector<2x16x16xf32>
    %c34_648 = arith.constant 34 : index
    %882 = memref.load %arg3[%c34_648] : memref<96xf32, #tpu.memory_space<smem>>
    %883 = vector.broadcast %882 : f32 to vector<2x16x16xf32>
    %884 = arith.mulf %881, %883 : vector<2x16x16xf32>
    %885 = arith.addf %879, %884 : vector<2x16x16xf32>
    %c0_649 = arith.constant 0 : index
    %c2_650 = arith.constant 2 : index
    %c1_651 = arith.constant 1 : index
    %c1_652 = arith.constant 1 : index
    %886 = vector.load %arg7[%c0_649, %c2_650, %c1_651, %c1_652] : memref<2x3x17x17xf32, #tpu.memory_space<vmem>>, vector<2x1x16x16xf32>
    %887 = vector.shape_cast %886 : vector<2x1x16x16xf32> to vector<2x16x16xf32>
    %c35_653 = arith.constant 35 : index
    %888 = memref.load %arg3[%c35_653] : memref<96xf32, #tpu.memory_space<smem>>
    %889 = vector.broadcast %888 : f32 to vector<2x16x16xf32>
    %890 = arith.mulf %887, %889 : vector<2x16x16xf32>
    %891 = arith.addf %885, %890 : vector<2x16x16xf32>
    %892 = arith.addf %845, %868 : vector<2x16x16xf32>
    %893 = arith.addf %892, %891 : vector<2x16x16xf32>
    %c2_654 = arith.constant 2 : index
    %894 = memref.load %arg4[%c2_654] : memref<8xf32, #tpu.memory_space<smem>>
    %895 = vector.broadcast %894 : f32 to vector<2x16x16xf32>
    %896 = arith.addf %893, %895 : vector<2x16x16xf32>
    %c0_655 = arith.constant 0 : index
    %c2_656 = arith.constant 2 : index
    %c0_657 = arith.constant 0 : index
    %c0_658 = arith.constant 0 : index
    %897 = vector.load %arg5[%c0_655, %c2_656, %c0_657, %c0_658] : memref<2x8x16x16xf32, #tpu.memory_space<vmem>>, vector<2x1x16x16xf32>
    %898 = vector.shape_cast %897 : vector<2x1x16x16xf32> to vector<2x16x16xf32>
    %899 = vector.shape_cast %896 : vector<2x16x16xf32> to vector<2x1x16x16xf32>
    tpu.vector_store %arg5[%c0_655, %c2_656, %c0_657, %c0_658], %899 {strides = array<i32>} : memref<2x8x16x16xf32, #tpu.memory_space<vmem>>, vector<2x1x16x16xf32>,
    %c0_659 = arith.constant 0 : index
    %c0_660 = arith.constant 0 : index
    %c0_661 = arith.constant 0 : index
    %c0_662 = arith.constant 0 : index
    %900 = vector.load %arg7[%c0_659, %c0_660, %c0_661, %c0_662] : memref<2x3x17x17xf32, #tpu.memory_space<vmem>>, vector<2x1x16x16xf32>
    %901 = vector.shape_cast %900 : vector<2x1x16x16xf32> to vector<2x16x16xf32>
    %c36_663 = arith.constant 36 : index
    %902 = memref.load %arg3[%c36_663] : memref<96xf32, #tpu.memory_space<smem>>
    %903 = vector.broadcast %902 : f32 to vector<2x16x16xf32>
    %904 = arith.mulf %901, %903 : vector<2x16x16xf32>
    %c0_664 = arith.constant 0 : index
    %c0_665 = arith.constant 0 : index
    %c0_666 = arith.constant 0 : index
    %c1_667 = arith.constant 1 : index
    %905 = vector.load %arg7[%c0_664, %c0_665, %c0_666, %c1_667] : memref<2x3x17x17xf32, #tpu.memory_space<vmem>>, vector<2x1x16x16xf32>
    %906 = vector.shape_cast %905 : vector<2x1x16x16xf32> to vector<2x16x16xf32>
    %c37_668 = arith.constant 37 : index
    %907 = memref.load %arg3[%c37_668] : memref<96xf32, #tpu.memory_space<smem>>
    %908 = vector.broadcast %907 : f32 to vector<2x16x16xf32>
    %909 = arith.mulf %906, %908 : vector<2x16x16xf32>
    %910 = arith.addf %904, %909 : vector<2x16x16xf32>
    %c0_669 = arith.constant 0 : index
    %c0_670 = arith.constant 0 : index
    %c1_671 = arith.constant 1 : index
    %c0_672 = arith.constant 0 : index
    %911 = vector.load %arg7[%c0_669, %c0_670, %c1_671, %c0_672] : memref<2x3x17x17xf32, #tpu.memory_space<vmem>>, vector<2x1x16x16xf32>
    %912 = vector.shape_cast %911 : vector<2x1x16x16xf32> to vector<2x16x16xf32>
    %c38_673 = arith.constant 38 : index
    %913 = memref.load %arg3[%c38_673] : memref<96xf32, #tpu.memory_space<smem>>
    %914 = vector.broadcast %913 : f32 to vector<2x16x16xf32>
    %915 = arith.mulf %912, %914 : vector<2x16x16xf32>
    %916 = arith.addf %910, %915 : vector<2x16x16xf32>
    %c0_674 = arith.constant 0 : index
    %c0_675 = arith.constant 0 : index
    %c1_676 = arith.constant 1 : index
    %c1_677 = arith.constant 1 : index
    %917 = vector.load %arg7[%c0_674, %c0_675, %c1_676, %c1_677] : memref<2x3x17x17xf32, #tpu.memory_space<vmem>>, vector<2x1x16x16xf32>
    %918 = vector.shape_cast %917 : vector<2x1x16x16xf32> to vector<2x16x16xf32>
    %c39_678 = arith.constant 39 : index
    %919 = memref.load %arg3[%c39_678] : memref<96xf32, #tpu.memory_space<smem>>
    %920 = vector.broadcast %919 : f32 to vector<2x16x16xf32>
    %921 = arith.mulf %918, %920 : vector<2x16x16xf32>
    %922 = arith.addf %916, %921 : vector<2x16x16xf32>
    %c0_679 = arith.constant 0 : index
    %c1_680 = arith.constant 1 : index
    %c0_681 = arith.constant 0 : index
    %c0_682 = arith.constant 0 : index
    %923 = vector.load %arg7[%c0_679, %c1_680, %c0_681, %c0_682] : memref<2x3x17x17xf32, #tpu.memory_space<vmem>>, vector<2x1x16x16xf32>
    %924 = vector.shape_cast %923 : vector<2x1x16x16xf32> to vector<2x16x16xf32>
    %c40_683 = arith.constant 40 : index
    %925 = memref.load %arg3[%c40_683] : memref<96xf32, #tpu.memory_space<smem>>
    %926 = vector.broadcast %925 : f32 to vector<2x16x16xf32>
    %927 = arith.mulf %924, %926 : vector<2x16x16xf32>
    %c0_684 = arith.constant 0 : index
    %c1_685 = arith.constant 1 : index
    %c0_686 = arith.constant 0 : index
    %c1_687 = arith.constant 1 : index
    %928 = vector.load %arg7[%c0_684, %c1_685, %c0_686, %c1_687] : memref<2x3x17x17xf32, #tpu.memory_space<vmem>>, vector<2x1x16x16xf32>
    %929 = vector.shape_cast %928 : vector<2x1x16x16xf32> to vector<2x16x16xf32>
    %c41_688 = arith.constant 41 : index
    %930 = memref.load %arg3[%c41_688] : memref<96xf32, #tpu.memory_space<smem>>
    %931 = vector.broadcast %930 : f32 to vector<2x16x16xf32>
    %932 = arith.mulf %929, %931 : vector<2x16x16xf32>
    %933 = arith.addf %927, %932 : vector<2x16x16xf32>
    %c0_689 = arith.constant 0 : index
    %c1_690 = arith.constant 1 : index
    %c1_691 = arith.constant 1 : index
    %c0_692 = arith.constant 0 : index
    %934 = vector.load %arg7[%c0_689, %c1_690, %c1_691, %c0_692] : memref<2x3x17x17xf32, #tpu.memory_space<vmem>>, vector<2x1x16x16xf32>
    %935 = vector.shape_cast %934 : vector<2x1x16x16xf32> to vector<2x16x16xf32>
    %c42_693 = arith.constant 42 : index
    %936 = memref.load %arg3[%c42_693] : memref<96xf32, #tpu.memory_space<smem>>
    %937 = vector.broadcast %936 : f32 to vector<2x16x16xf32>
    %938 = arith.mulf %935, %937 : vector<2x16x16xf32>
    %939 = arith.addf %933, %938 : vector<2x16x16xf32>
    %c0_694 = arith.constant 0 : index
    %c1_695 = arith.constant 1 : index
    %c1_696 = arith.constant 1 : index
    %c1_697 = arith.constant 1 : index
    %940 = vector.load %arg7[%c0_694, %c1_695, %c1_696, %c1_697] : memref<2x3x17x17xf32, #tpu.memory_space<vmem>>, vector<2x1x16x16xf32>
    %941 = vector.shape_cast %940 : vector<2x1x16x16xf32> to vector<2x16x16xf32>
    %c43_698 = arith.constant 43 : index
    %942 = memref.load %arg3[%c43_698] : memref<96xf32, #tpu.memory_space<smem>>
    %943 = vector.broadcast %942 : f32 to vector<2x16x16xf32>
    %944 = arith.mulf %941, %943 : vector<2x16x16xf32>
    %945 = arith.addf %939, %944 : vector<2x16x16xf32>
    %c0_699 = arith.constant 0 : index
    %c2_700 = arith.constant 2 : index
    %c0_701 = arith.constant 0 : index
    %c0_702 = arith.constant 0 : index
    %946 = vector.load %arg7[%c0_699, %c2_700, %c0_701, %c0_702] : memref<2x3x17x17xf32, #tpu.memory_space<vmem>>, vector<2x1x16x16xf32>
    %947 = vector.shape_cast %946 : vector<2x1x16x16xf32> to vector<2x16x16xf32>
    %c44_703 = arith.constant 44 : index
    %948 = memref.load %arg3[%c44_703] : memref<96xf32, #tpu.memory_space<smem>>
    %949 = vector.broadcast %948 : f32 to vector<2x16x16xf32>
    %950 = arith.mulf %947, %949 : vector<2x16x16xf32>
    %c0_704 = arith.constant 0 : index
    %c2_705 = arith.constant 2 : index
    %c0_706 = arith.constant 0 : index
    %c1_707 = arith.constant 1 : index
    %951 = vector.load %arg7[%c0_704, %c2_705, %c0_706, %c1_707] : memref<2x3x17x17xf32, #tpu.memory_space<vmem>>, vector<2x1x16x16xf32>
    %952 = vector.shape_cast %951 : vector<2x1x16x16xf32> to vector<2x16x16xf32>
    %c45_708 = arith.constant 45 : index
    %953 = memref.load %arg3[%c45_708] : memref<96xf32, #tpu.memory_space<smem>>
    %954 = vector.broadcast %953 : f32 to vector<2x16x16xf32>
    %955 = arith.mulf %952, %954 : vector<2x16x16xf32>
    %956 = arith.addf %950, %955 : vector<2x16x16xf32>
    %c0_709 = arith.constant 0 : index
    %c2_710 = arith.constant 2 : index
    %c1_711 = arith.constant 1 : index
    %c0_712 = arith.constant 0 : index
    %957 = vector.load %arg7[%c0_709, %c2_710, %c1_711, %c0_712] : memref<2x3x17x17xf32, #tpu.memory_space<vmem>>, vector<2x1x16x16xf32>
    %958 = vector.shape_cast %957 : vector<2x1x16x16xf32> to vector<2x16x16xf32>
    %c46_713 = arith.constant 46 : index
    %959 = memref.load %arg3[%c46_713] : memref<96xf32, #tpu.memory_space<smem>>
    %960 = vector.broadcast %959 : f32 to vector<2x16x16xf32>
    %961 = arith.mulf %958, %960 : vector<2x16x16xf32>
    %962 = arith.addf %956, %961 : vector<2x16x16xf32>
    %c0_714 = arith.constant 0 : index
    %c2_715 = arith.constant 2 : index
    %c1_716 = arith.constant 1 : index
    %c1_717 = arith.constant 1 : index
    %963 = vector.load %arg7[%c0_714, %c2_715, %c1_716, %c1_717] : memref<2x3x17x17xf32, #tpu.memory_space<vmem>>, vector<2x1x16x16xf32>
    %964 = vector.shape_cast %963 : vector<2x1x16x16xf32> to vector<2x16x16xf32>
    %c47_718 = arith.constant 47 : index
    %965 = memref.load %arg3[%c47_718] : memref<96xf32, #tpu.memory_space<smem>>
    %966 = vector.broadcast %965 : f32 to vector<2x16x16xf32>
    %967 = arith.mulf %964, %966 : vector<2x16x16xf32>
    %968 = arith.addf %962, %967 : vector<2x16x16xf32>
    %969 = arith.addf %922, %945 : vector<2x16x16xf32>
    %970 = arith.addf %969, %968 : vector<2x16x16xf32>
    %c3_719 = arith.constant 3 : index
    %971 = memref.load %arg4[%c3_719] : memref<8xf32, #tpu.memory_space<smem>>
    %972 = vector.broadcast %971 : f32 to vector<2x16x16xf32>
    %973 = arith.addf %970, %972 : vector<2x16x16xf32>
    %c0_720 = arith.constant 0 : index
    %c3_721 = arith.constant 3 : index
    %c0_722 = arith.constant 0 : index
    %c0_723 = arith.constant 0 : index
    %974 = vector.load %arg5[%c0_720, %c3_721, %c0_722, %c0_723] : memref<2x8x16x16xf32, #tpu.memory_space<vmem>>, vector<2x1x16x16xf32>
    %975 = vector.shape_cast %974 : vector<2x1x16x16xf32> to vector<2x16x16xf32>
    %976 = vector.shape_cast %973 : vector<2x16x16xf32> to vector<2x1x16x16xf32>
    tpu.vector_store %arg5[%c0_720, %c3_721, %c0_722, %c0_723], %976 {strides = array<i32>} : memref<2x8x16x16xf32, #tpu.memory_space<vmem>>, vector<2x1x16x16xf32>,
    %c0_724 = arith.constant 0 : index
    %c0_725 = arith.constant 0 : index
    %c0_726 = arith.constant 0 : index
    %c0_727 = arith.constant 0 : index
    %977 = vector.load %arg7[%c0_724, %c0_725, %c0_726, %c0_727] : memref<2x3x17x17xf32, #tpu.memory_space<vmem>>, vector<2x1x16x16xf32>
    %978 = vector.shape_cast %977 : vector<2x1x16x16xf32> to vector<2x16x16xf32>
    %c48_728 = arith.constant 48 : index
    %979 = memref.load %arg3[%c48_728] : memref<96xf32, #tpu.memory_space<smem>>
    %980 = vector.broadcast %979 : f32 to vector<2x16x16xf32>
    %981 = arith.mulf %978, %980 : vector<2x16x16xf32>
    %c0_729 = arith.constant 0 : index
    %c0_730 = arith.constant 0 : index
    %c0_731 = arith.constant 0 : index
    %c1_732 = arith.constant 1 : index
    %982 = vector.load %arg7[%c0_729, %c0_730, %c0_731, %c1_732] : memref<2x3x17x17xf32, #tpu.memory_space<vmem>>, vector<2x1x16x16xf32>
    %983 = vector.shape_cast %982 : vector<2x1x16x16xf32> to vector<2x16x16xf32>
    %c49_733 = arith.constant 49 : index
    %984 = memref.load %arg3[%c49_733] : memref<96xf32, #tpu.memory_space<smem>>
    %985 = vector.broadcast %984 : f32 to vector<2x16x16xf32>
    %986 = arith.mulf %983, %985 : vector<2x16x16xf32>
    %987 = arith.addf %981, %986 : vector<2x16x16xf32>
    %c0_734 = arith.constant 0 : index
    %c0_735 = arith.constant 0 : index
    %c1_736 = arith.constant 1 : index
    %c0_737 = arith.constant 0 : index
    %988 = vector.load %arg7[%c0_734, %c0_735, %c1_736, %c0_737] : memref<2x3x17x17xf32, #tpu.memory_space<vmem>>, vector<2x1x16x16xf32>
    %989 = vector.shape_cast %988 : vector<2x1x16x16xf32> to vector<2x16x16xf32>
    %c50_738 = arith.constant 50 : index
    %990 = memref.load %arg3[%c50_738] : memref<96xf32, #tpu.memory_space<smem>>
    %991 = vector.broadcast %990 : f32 to vector<2x16x16xf32>
    %992 = arith.mulf %989, %991 : vector<2x16x16xf32>
    %993 = arith.addf %987, %992 : vector<2x16x16xf32>
    %c0_739 = arith.constant 0 : index
    %c0_740 = arith.constant 0 : index
    %c1_741 = arith.constant 1 : index
    %c1_742 = arith.constant 1 : index
    %994 = vector.load %arg7[%c0_739, %c0_740, %c1_741, %c1_742] : memref<2x3x17x17xf32, #tpu.memory_space<vmem>>, vector<2x1x16x16xf32>
    %995 = vector.shape_cast %994 : vector<2x1x16x16xf32> to vector<2x16x16xf32>
    %c51_743 = arith.constant 51 : index
    %996 = memref.load %arg3[%c51_743] : memref<96xf32, #tpu.memory_space<smem>>
    %997 = vector.broadcast %996 : f32 to vector<2x16x16xf32>
    %998 = arith.mulf %995, %997 : vector<2x16x16xf32>
    %999 = arith.addf %993, %998 : vector<2x16x16xf32>
    %c0_744 = arith.constant 0 : index
    %c1_745 = arith.constant 1 : index
    %c0_746 = arith.constant 0 : index
    %c0_747 = arith.constant 0 : index
    %1000 = vector.load %arg7[%c0_744, %c1_745, %c0_746, %c0_747] : memref<2x3x17x17xf32, #tpu.memory_space<vmem>>, vector<2x1x16x16xf32>
    %1001 = vector.shape_cast %1000 : vector<2x1x16x16xf32> to vector<2x16x16xf32>
    %c52_748 = arith.constant 52 : index
    %1002 = memref.load %arg3[%c52_748] : memref<96xf32, #tpu.memory_space<smem>>
    %1003 = vector.broadcast %1002 : f32 to vector<2x16x16xf32>
    %1004 = arith.mulf %1001, %1003 : vector<2x16x16xf32>
    %c0_749 = arith.constant 0 : index
    %c1_750 = arith.constant 1 : index
    %c0_751 = arith.constant 0 : index
    %c1_752 = arith.constant 1 : index
    %1005 = vector.load %arg7[%c0_749, %c1_750, %c0_751, %c1_752] : memref<2x3x17x17xf32, #tpu.memory_space<vmem>>, vector<2x1x16x16xf32>
    %1006 = vector.shape_cast %1005 : vector<2x1x16x16xf32> to vector<2x16x16xf32>
    %c53_753 = arith.constant 53 : index
    %1007 = memref.load %arg3[%c53_753] : memref<96xf32, #tpu.memory_space<smem>>
    %1008 = vector.broadcast %1007 : f32 to vector<2x16x16xf32>
    %1009 = arith.mulf %1006, %1008 : vector<2x16x16xf32>
    %1010 = arith.addf %1004, %1009 : vector<2x16x16xf32>
    %c0_754 = arith.constant 0 : index
    %c1_755 = arith.constant 1 : index
    %c1_756 = arith.constant 1 : index
    %c0_757 = arith.constant 0 : index
    %1011 = vector.load %arg7[%c0_754, %c1_755, %c1_756, %c0_757] : memref<2x3x17x17xf32, #tpu.memory_space<vmem>>, vector<2x1x16x16xf32>
    %1012 = vector.shape_cast %1011 : vector<2x1x16x16xf32> to vector<2x16x16xf32>
    %c54_758 = arith.constant 54 : index
    %1013 = memref.load %arg3[%c54_758] : memref<96xf32, #tpu.memory_space<smem>>
    %1014 = vector.broadcast %1013 : f32 to vector<2x16x16xf32>
    %1015 = arith.mulf %1012, %1014 : vector<2x16x16xf32>
    %1016 = arith.addf %1010, %1015 : vector<2x16x16xf32>
    %c0_759 = arith.constant 0 : index
    %c1_760 = arith.constant 1 : index
    %c1_761 = arith.constant 1 : index
    %c1_762 = arith.constant 1 : index
    %1017 = vector.load %arg7[%c0_759, %c1_760, %c1_761, %c1_762] : memref<2x3x17x17xf32, #tpu.memory_space<vmem>>, vector<2x1x16x16xf32>
    %1018 = vector.shape_cast %1017 : vector<2x1x16x16xf32> to vector<2x16x16xf32>
    %c55_763 = arith.constant 55 : index
    %1019 = memref.load %arg3[%c55_763] : memref<96xf32, #tpu.memory_space<smem>>
    %1020 = vector.broadcast %1019 : f32 to vector<2x16x16xf32>
    %1021 = arith.mulf %1018, %1020 : vector<2x16x16xf32>
    %1022 = arith.addf %1016, %1021 : vector<2x16x16xf32>
    %c0_764 = arith.constant 0 : index
    %c2_765 = arith.constant 2 : index
    %c0_766 = arith.constant 0 : index
    %c0_767 = arith.constant 0 : index
    %1023 = vector.load %arg7[%c0_764, %c2_765, %c0_766, %c0_767] : memref<2x3x17x17xf32, #tpu.memory_space<vmem>>, vector<2x1x16x16xf32>
    %1024 = vector.shape_cast %1023 : vector<2x1x16x16xf32> to vector<2x16x16xf32>
    %c56_768 = arith.constant 56 : index
    %1025 = memref.load %arg3[%c56_768] : memref<96xf32, #tpu.memory_space<smem>>
    %1026 = vector.broadcast %1025 : f32 to vector<2x16x16xf32>
    %1027 = arith.mulf %1024, %1026 : vector<2x16x16xf32>
    %c0_769 = arith.constant 0 : index
    %c2_770 = arith.constant 2 : index
    %c0_771 = arith.constant 0 : index
    %c1_772 = arith.constant 1 : index
    %1028 = vector.load %arg7[%c0_769, %c2_770, %c0_771, %c1_772] : memref<2x3x17x17xf32, #tpu.memory_space<vmem>>, vector<2x1x16x16xf32>
    %1029 = vector.shape_cast %1028 : vector<2x1x16x16xf32> to vector<2x16x16xf32>
    %c57_773 = arith.constant 57 : index
    %1030 = memref.load %arg3[%c57_773] : memref<96xf32, #tpu.memory_space<smem>>
    %1031 = vector.broadcast %1030 : f32 to vector<2x16x16xf32>
    %1032 = arith.mulf %1029, %1031 : vector<2x16x16xf32>
    %1033 = arith.addf %1027, %1032 : vector<2x16x16xf32>
    %c0_774 = arith.constant 0 : index
    %c2_775 = arith.constant 2 : index
    %c1_776 = arith.constant 1 : index
    %c0_777 = arith.constant 0 : index
    %1034 = vector.load %arg7[%c0_774, %c2_775, %c1_776, %c0_777] : memref<2x3x17x17xf32, #tpu.memory_space<vmem>>, vector<2x1x16x16xf32>
    %1035 = vector.shape_cast %1034 : vector<2x1x16x16xf32> to vector<2x16x16xf32>
    %c58_778 = arith.constant 58 : index
    %1036 = memref.load %arg3[%c58_778] : memref<96xf32, #tpu.memory_space<smem>>
    %1037 = vector.broadcast %1036 : f32 to vector<2x16x16xf32>
    %1038 = arith.mulf %1035, %1037 : vector<2x16x16xf32>
    %1039 = arith.addf %1033, %1038 : vector<2x16x16xf32>
    %c0_779 = arith.constant 0 : index
    %c2_780 = arith.constant 2 : index
    %c1_781 = arith.constant 1 : index
    %c1_782 = arith.constant 1 : index
    %1040 = vector.load %arg7[%c0_779, %c2_780, %c1_781, %c1_782] : memref<2x3x17x17xf32, #tpu.memory_space<vmem>>, vector<2x1x16x16xf32>
    %1041 = vector.shape_cast %1040 : vector<2x1x16x16xf32> to vector<2x16x16xf32>
    %c59_783 = arith.constant 59 : index
    %1042 = memref.load %arg3[%c59_783] : memref<96xf32, #tpu.memory_space<smem>>
    %1043 = vector.broadcast %1042 : f32 to vector<2x16x16xf32>
    %1044 = arith.mulf %1041, %1043 : vector<2x16x16xf32>
    %1045 = arith.addf %1039, %1044 : vector<2x16x16xf32>
    %1046 = arith.addf %999, %1022 : vector<2x16x16xf32>
    %1047 = arith.addf %1046, %1045 : vector<2x16x16xf32>
    %c4_784 = arith.constant 4 : index
    %1048 = memref.load %arg4[%c4_784] : memref<8xf32, #tpu.memory_space<smem>>
    %1049 = vector.broadcast %1048 : f32 to vector<2x16x16xf32>
    %1050 = arith.addf %1047, %1049 : vector<2x16x16xf32>
    %c0_785 = arith.constant 0 : index
    %c4_786 = arith.constant 4 : index
    %c0_787 = arith.constant 0 : index
    %c0_788 = arith.constant 0 : index
    %1051 = vector.load %arg5[%c0_785, %c4_786, %c0_787, %c0_788] : memref<2x8x16x16xf32, #tpu.memory_space<vmem>>, vector<2x1x16x16xf32>
    %1052 = vector.shape_cast %1051 : vector<2x1x16x16xf32> to vector<2x16x16xf32>
    %1053 = vector.shape_cast %1050 : vector<2x16x16xf32> to vector<2x1x16x16xf32>
    tpu.vector_store %arg5[%c0_785, %c4_786, %c0_787, %c0_788], %1053 {strides = array<i32>} : memref<2x8x16x16xf32, #tpu.memory_space<vmem>>, vector<2x1x16x16xf32>,
    %c0_789 = arith.constant 0 : index
    %c0_790 = arith.constant 0 : index
    %c0_791 = arith.constant 0 : index
    %c0_792 = arith.constant 0 : index
    %1054 = vector.load %arg7[%c0_789, %c0_790, %c0_791, %c0_792] : memref<2x3x17x17xf32, #tpu.memory_space<vmem>>, vector<2x1x16x16xf32>
    %1055 = vector.shape_cast %1054 : vector<2x1x16x16xf32> to vector<2x16x16xf32>
    %c60_793 = arith.constant 60 : index
    %1056 = memref.load %arg3[%c60_793] : memref<96xf32, #tpu.memory_space<smem>>
    %1057 = vector.broadcast %1056 : f32 to vector<2x16x16xf32>
    %1058 = arith.mulf %1055, %1057 : vector<2x16x16xf32>
    %c0_794 = arith.constant 0 : index
    %c0_795 = arith.constant 0 : index
    %c0_796 = arith.constant 0 : index
    %c1_797 = arith.constant 1 : index
    %1059 = vector.load %arg7[%c0_794, %c0_795, %c0_796, %c1_797] : memref<2x3x17x17xf32, #tpu.memory_space<vmem>>, vector<2x1x16x16xf32>
    %1060 = vector.shape_cast %1059 : vector<2x1x16x16xf32> to vector<2x16x16xf32>
    %c61_798 = arith.constant 61 : index
    %1061 = memref.load %arg3[%c61_798] : memref<96xf32, #tpu.memory_space<smem>>
    %1062 = vector.broadcast %1061 : f32 to vector<2x16x16xf32>
    %1063 = arith.mulf %1060, %1062 : vector<2x16x16xf32>
    %1064 = arith.addf %1058, %1063 : vector<2x16x16xf32>
    %c0_799 = arith.constant 0 : index
    %c0_800 = arith.constant 0 : index
    %c1_801 = arith.constant 1 : index
    %c0_802 = arith.constant 0 : index
    %1065 = vector.load %arg7[%c0_799, %c0_800, %c1_801, %c0_802] : memref<2x3x17x17xf32, #tpu.memory_space<vmem>>, vector<2x1x16x16xf32>
    %1066 = vector.shape_cast %1065 : vector<2x1x16x16xf32> to vector<2x16x16xf32>
    %c62_803 = arith.constant 62 : index
    %1067 = memref.load %arg3[%c62_803] : memref<96xf32, #tpu.memory_space<smem>>
    %1068 = vector.broadcast %1067 : f32 to vector<2x16x16xf32>
    %1069 = arith.mulf %1066, %1068 : vector<2x16x16xf32>
    %1070 = arith.addf %1064, %1069 : vector<2x16x16xf32>
    %c0_804 = arith.constant 0 : index
    %c0_805 = arith.constant 0 : index
    %c1_806 = arith.constant 1 : index
    %c1_807 = arith.constant 1 : index
    %1071 = vector.load %arg7[%c0_804, %c0_805, %c1_806, %c1_807] : memref<2x3x17x17xf32, #tpu.memory_space<vmem>>, vector<2x1x16x16xf32>
    %1072 = vector.shape_cast %1071 : vector<2x1x16x16xf32> to vector<2x16x16xf32>
    %c63_808 = arith.constant 63 : index
    %1073 = memref.load %arg3[%c63_808] : memref<96xf32, #tpu.memory_space<smem>>
    %1074 = vector.broadcast %1073 : f32 to vector<2x16x16xf32>
    %1075 = arith.mulf %1072, %1074 : vector<2x16x16xf32>
    %1076 = arith.addf %1070, %1075 : vector<2x16x16xf32>
    %c0_809 = arith.constant 0 : index
    %c1_810 = arith.constant 1 : index
    %c0_811 = arith.constant 0 : index
    %c0_812 = arith.constant 0 : index
    %1077 = vector.load %arg7[%c0_809, %c1_810, %c0_811, %c0_812] : memref<2x3x17x17xf32, #tpu.memory_space<vmem>>, vector<2x1x16x16xf32>
    %1078 = vector.shape_cast %1077 : vector<2x1x16x16xf32> to vector<2x16x16xf32>
    %c64_813 = arith.constant 64 : index
    %1079 = memref.load %arg3[%c64_813] : memref<96xf32, #tpu.memory_space<smem>>
    %1080 = vector.broadcast %1079 : f32 to vector<2x16x16xf32>
    %1081 = arith.mulf %1078, %1080 : vector<2x16x16xf32>
    %c0_814 = arith.constant 0 : index
    %c1_815 = arith.constant 1 : index
    %c0_816 = arith.constant 0 : index
    %c1_817 = arith.constant 1 : index
    %1082 = vector.load %arg7[%c0_814, %c1_815, %c0_816, %c1_817] : memref<2x3x17x17xf32, #tpu.memory_space<vmem>>, vector<2x1x16x16xf32>
    %1083 = vector.shape_cast %1082 : vector<2x1x16x16xf32> to vector<2x16x16xf32>
    %c65_818 = arith.constant 65 : index
    %1084 = memref.load %arg3[%c65_818] : memref<96xf32, #tpu.memory_space<smem>>
    %1085 = vector.broadcast %1084 : f32 to vector<2x16x16xf32>
    %1086 = arith.mulf %1083, %1085 : vector<2x16x16xf32>
    %1087 = arith.addf %1081, %1086 : vector<2x16x16xf32>
    %c0_819 = arith.constant 0 : index
    %c1_820 = arith.constant 1 : index
    %c1_821 = arith.constant 1 : index
    %c0_822 = arith.constant 0 : index
    %1088 = vector.load %arg7[%c0_819, %c1_820, %c1_821, %c0_822] : memref<2x3x17x17xf32, #tpu.memory_space<vmem>>, vector<2x1x16x16xf32>
    %1089 = vector.shape_cast %1088 : vector<2x1x16x16xf32> to vector<2x16x16xf32>
    %c66_823 = arith.constant 66 : index
    %1090 = memref.load %arg3[%c66_823] : memref<96xf32, #tpu.memory_space<smem>>
    %1091 = vector.broadcast %1090 : f32 to vector<2x16x16xf32>
    %1092 = arith.mulf %1089, %1091 : vector<2x16x16xf32>
    %1093 = arith.addf %1087, %1092 : vector<2x16x16xf32>
    %c0_824 = arith.constant 0 : index
    %c1_825 = arith.constant 1 : index
    %c1_826 = arith.constant 1 : index
    %c1_827 = arith.constant 1 : index
    %1094 = vector.load %arg7[%c0_824, %c1_825, %c1_826, %c1_827] : memref<2x3x17x17xf32, #tpu.memory_space<vmem>>, vector<2x1x16x16xf32>
    %1095 = vector.shape_cast %1094 : vector<2x1x16x16xf32> to vector<2x16x16xf32>
    %c67_828 = arith.constant 67 : index
    %1096 = memref.load %arg3[%c67_828] : memref<96xf32, #tpu.memory_space<smem>>
    %1097 = vector.broadcast %1096 : f32 to vector<2x16x16xf32>
    %1098 = arith.mulf %1095, %1097 : vector<2x16x16xf32>
    %1099 = arith.addf %1093, %1098 : vector<2x16x16xf32>
    %c0_829 = arith.constant 0 : index
    %c2_830 = arith.constant 2 : index
    %c0_831 = arith.constant 0 : index
    %c0_832 = arith.constant 0 : index
    %1100 = vector.load %arg7[%c0_829, %c2_830, %c0_831, %c0_832] : memref<2x3x17x17xf32, #tpu.memory_space<vmem>>, vector<2x1x16x16xf32>
    %1101 = vector.shape_cast %1100 : vector<2x1x16x16xf32> to vector<2x16x16xf32>
    %c68_833 = arith.constant 68 : index
    %1102 = memref.load %arg3[%c68_833] : memref<96xf32, #tpu.memory_space<smem>>
    %1103 = vector.broadcast %1102 : f32 to vector<2x16x16xf32>
    %1104 = arith.mulf %1101, %1103 : vector<2x16x16xf32>
    %c0_834 = arith.constant 0 : index
    %c2_835 = arith.constant 2 : index
    %c0_836 = arith.constant 0 : index
    %c1_837 = arith.constant 1 : index
    %1105 = vector.load %arg7[%c0_834, %c2_835, %c0_836, %c1_837] : memref<2x3x17x17xf32, #tpu.memory_space<vmem>>, vector<2x1x16x16xf32>
    %1106 = vector.shape_cast %1105 : vector<2x1x16x16xf32> to vector<2x16x16xf32>
    %c69_838 = arith.constant 69 : index
    %1107 = memref.load %arg3[%c69_838] : memref<96xf32, #tpu.memory_space<smem>>
    %1108 = vector.broadcast %1107 : f32 to vector<2x16x16xf32>
    %1109 = arith.mulf %1106, %1108 : vector<2x16x16xf32>
    %1110 = arith.addf %1104, %1109 : vector<2x16x16xf32>
    %c0_839 = arith.constant 0 : index
    %c2_840 = arith.constant 2 : index
    %c1_841 = arith.constant 1 : index
    %c0_842 = arith.constant 0 : index
    %1111 = vector.load %arg7[%c0_839, %c2_840, %c1_841, %c0_842] : memref<2x3x17x17xf32, #tpu.memory_space<vmem>>, vector<2x1x16x16xf32>
    %1112 = vector.shape_cast %1111 : vector<2x1x16x16xf32> to vector<2x16x16xf32>
    %c70_843 = arith.constant 70 : index
    %1113 = memref.load %arg3[%c70_843] : memref<96xf32, #tpu.memory_space<smem>>
    %1114 = vector.broadcast %1113 : f32 to vector<2x16x16xf32>
    %1115 = arith.mulf %1112, %1114 : vector<2x16x16xf32>
    %1116 = arith.addf %1110, %1115 : vector<2x16x16xf32>
    %c0_844 = arith.constant 0 : index
    %c2_845 = arith.constant 2 : index
    %c1_846 = arith.constant 1 : index
    %c1_847 = arith.constant 1 : index
    %1117 = vector.load %arg7[%c0_844, %c2_845, %c1_846, %c1_847] : memref<2x3x17x17xf32, #tpu.memory_space<vmem>>, vector<2x1x16x16xf32>
    %1118 = vector.shape_cast %1117 : vector<2x1x16x16xf32> to vector<2x16x16xf32>
    %c71_848 = arith.constant 71 : index
    %1119 = memref.load %arg3[%c71_848] : memref<96xf32, #tpu.memory_space<smem>>
    %1120 = vector.broadcast %1119 : f32 to vector<2x16x16xf32>
    %1121 = arith.mulf %1118, %1120 : vector<2x16x16xf32>
    %1122 = arith.addf %1116, %1121 : vector<2x16x16xf32>
    %1123 = arith.addf %1076, %1099 : vector<2x16x16xf32>
    %1124 = arith.addf %1123, %1122 : vector<2x16x16xf32>
    %c5_849 = arith.constant 5 : index
    %1125 = memref.load %arg4[%c5_849] : memref<8xf32, #tpu.memory_space<smem>>
    %1126 = vector.broadcast %1125 : f32 to vector<2x16x16xf32>
    %1127 = arith.addf %1124, %1126 : vector<2x16x16xf32>
    %c0_850 = arith.constant 0 : index
    %c5_851 = arith.constant 5 : index
    %c0_852 = arith.constant 0 : index
    %c0_853 = arith.constant 0 : index
    %1128 = vector.load %arg5[%c0_850, %c5_851, %c0_852, %c0_853] : memref<2x8x16x16xf32, #tpu.memory_space<vmem>>, vector<2x1x16x16xf32>
    %1129 = vector.shape_cast %1128 : vector<2x1x16x16xf32> to vector<2x16x16xf32>
    %1130 = vector.shape_cast %1127 : vector<2x16x16xf32> to vector<2x1x16x16xf32>
    tpu.vector_store %arg5[%c0_850, %c5_851, %c0_852, %c0_853], %1130 {strides = array<i32>} : memref<2x8x16x16xf32, #tpu.memory_space<vmem>>, vector<2x1x16x16xf32>,
    %c0_854 = arith.constant 0 : index
    %c0_855 = arith.constant 0 : index
    %c0_856 = arith.constant 0 : index
    %c0_857 = arith.constant 0 : index
    %1131 = vector.load %arg7[%c0_854, %c0_855, %c0_856, %c0_857] : memref<2x3x17x17xf32, #tpu.memory_space<vmem>>, vector<2x1x16x16xf32>
    %1132 = vector.shape_cast %1131 : vector<2x1x16x16xf32> to vector<2x16x16xf32>
    %c72_858 = arith.constant 72 : index
    %1133 = memref.load %arg3[%c72_858] : memref<96xf32, #tpu.memory_space<smem>>
    %1134 = vector.broadcast %1133 : f32 to vector<2x16x16xf32>
    %1135 = arith.mulf %1132, %1134 : vector<2x16x16xf32>
    %c0_859 = arith.constant 0 : index
    %c0_860 = arith.constant 0 : index
    %c0_861 = arith.constant 0 : index
    %c1_862 = arith.constant 1 : index
    %1136 = vector.load %arg7[%c0_859, %c0_860, %c0_861, %c1_862] : memref<2x3x17x17xf32, #tpu.memory_space<vmem>>, vector<2x1x16x16xf32>
    %1137 = vector.shape_cast %1136 : vector<2x1x16x16xf32> to vector<2x16x16xf32>
    %c73_863 = arith.constant 73 : index
    %1138 = memref.load %arg3[%c73_863] : memref<96xf32, #tpu.memory_space<smem>>
    %1139 = vector.broadcast %1138 : f32 to vector<2x16x16xf32>
    %1140 = arith.mulf %1137, %1139 : vector<2x16x16xf32>
    %1141 = arith.addf %1135, %1140 : vector<2x16x16xf32>
    %c0_864 = arith.constant 0 : index
    %c0_865 = arith.constant 0 : index
    %c1_866 = arith.constant 1 : index
    %c0_867 = arith.constant 0 : index
    %1142 = vector.load %arg7[%c0_864, %c0_865, %c1_866, %c0_867] : memref<2x3x17x17xf32, #tpu.memory_space<vmem>>, vector<2x1x16x16xf32>
    %1143 = vector.shape_cast %1142 : vector<2x1x16x16xf32> to vector<2x16x16xf32>
    %c74_868 = arith.constant 74 : index
    %1144 = memref.load %arg3[%c74_868] : memref<96xf32, #tpu.memory_space<smem>>
    %1145 = vector.broadcast %1144 : f32 to vector<2x16x16xf32>
    %1146 = arith.mulf %1143, %1145 : vector<2x16x16xf32>
    %1147 = arith.addf %1141, %1146 : vector<2x16x16xf32>
    %c0_869 = arith.constant 0 : index
    %c0_870 = arith.constant 0 : index
    %c1_871 = arith.constant 1 : index
    %c1_872 = arith.constant 1 : index
    %1148 = vector.load %arg7[%c0_869, %c0_870, %c1_871, %c1_872] : memref<2x3x17x17xf32, #tpu.memory_space<vmem>>, vector<2x1x16x16xf32>
    %1149 = vector.shape_cast %1148 : vector<2x1x16x16xf32> to vector<2x16x16xf32>
    %c75_873 = arith.constant 75 : index
    %1150 = memref.load %arg3[%c75_873] : memref<96xf32, #tpu.memory_space<smem>>
    %1151 = vector.broadcast %1150 : f32 to vector<2x16x16xf32>
    %1152 = arith.mulf %1149, %1151 : vector<2x16x16xf32>
    %1153 = arith.addf %1147, %1152 : vector<2x16x16xf32>
    %c0_874 = arith.constant 0 : index
    %c1_875 = arith.constant 1 : index
    %c0_876 = arith.constant 0 : index
    %c0_877 = arith.constant 0 : index
    %1154 = vector.load %arg7[%c0_874, %c1_875, %c0_876, %c0_877] : memref<2x3x17x17xf32, #tpu.memory_space<vmem>>, vector<2x1x16x16xf32>
    %1155 = vector.shape_cast %1154 : vector<2x1x16x16xf32> to vector<2x16x16xf32>
    %c76_878 = arith.constant 76 : index
    %1156 = memref.load %arg3[%c76_878] : memref<96xf32, #tpu.memory_space<smem>>
    %1157 = vector.broadcast %1156 : f32 to vector<2x16x16xf32>
    %1158 = arith.mulf %1155, %1157 : vector<2x16x16xf32>
    %c0_879 = arith.constant 0 : index
    %c1_880 = arith.constant 1 : index
    %c0_881 = arith.constant 0 : index
    %c1_882 = arith.constant 1 : index
    %1159 = vector.load %arg7[%c0_879, %c1_880, %c0_881, %c1_882] : memref<2x3x17x17xf32, #tpu.memory_space<vmem>>, vector<2x1x16x16xf32>
    %1160 = vector.shape_cast %1159 : vector<2x1x16x16xf32> to vector<2x16x16xf32>
    %c77_883 = arith.constant 77 : index
    %1161 = memref.load %arg3[%c77_883] : memref<96xf32, #tpu.memory_space<smem>>
    %1162 = vector.broadcast %1161 : f32 to vector<2x16x16xf32>
    %1163 = arith.mulf %1160, %1162 : vector<2x16x16xf32>
    %1164 = arith.addf %1158, %1163 : vector<2x16x16xf32>
    %c0_884 = arith.constant 0 : index
    %c1_885 = arith.constant 1 : index
    %c1_886 = arith.constant 1 : index
    %c0_887 = arith.constant 0 : index
    %1165 = vector.load %arg7[%c0_884, %c1_885, %c1_886, %c0_887] : memref<2x3x17x17xf32, #tpu.memory_space<vmem>>, vector<2x1x16x16xf32>
    %1166 = vector.shape_cast %1165 : vector<2x1x16x16xf32> to vector<2x16x16xf32>
    %c78_888 = arith.constant 78 : index
    %1167 = memref.load %arg3[%c78_888] : memref<96xf32, #tpu.memory_space<smem>>
    %1168 = vector.broadcast %1167 : f32 to vector<2x16x16xf32>
    %1169 = arith.mulf %1166, %1168 : vector<2x16x16xf32>
    %1170 = arith.addf %1164, %1169 : vector<2x16x16xf32>
    %c0_889 = arith.constant 0 : index
    %c1_890 = arith.constant 1 : index
    %c1_891 = arith.constant 1 : index
    %c1_892 = arith.constant 1 : index
    %1171 = vector.load %arg7[%c0_889, %c1_890, %c1_891, %c1_892] : memref<2x3x17x17xf32, #tpu.memory_space<vmem>>, vector<2x1x16x16xf32>
    %1172 = vector.shape_cast %1171 : vector<2x1x16x16xf32> to vector<2x16x16xf32>
    %c79_893 = arith.constant 79 : index
    %1173 = memref.load %arg3[%c79_893] : memref<96xf32, #tpu.memory_space<smem>>
    %1174 = vector.broadcast %1173 : f32 to vector<2x16x16xf32>
    %1175 = arith.mulf %1172, %1174 : vector<2x16x16xf32>
    %1176 = arith.addf %1170, %1175 : vector<2x16x16xf32>
    %c0_894 = arith.constant 0 : index
    %c2_895 = arith.constant 2 : index
    %c0_896 = arith.constant 0 : index
    %c0_897 = arith.constant 0 : index
    %1177 = vector.load %arg7[%c0_894, %c2_895, %c0_896, %c0_897] : memref<2x3x17x17xf32, #tpu.memory_space<vmem>>, vector<2x1x16x16xf32>
    %1178 = vector.shape_cast %1177 : vector<2x1x16x16xf32> to vector<2x16x16xf32>
    %c80_898 = arith.constant 80 : index
    %1179 = memref.load %arg3[%c80_898] : memref<96xf32, #tpu.memory_space<smem>>
    %1180 = vector.broadcast %1179 : f32 to vector<2x16x16xf32>
    %1181 = arith.mulf %1178, %1180 : vector<2x16x16xf32>
    %c0_899 = arith.constant 0 : index
    %c2_900 = arith.constant 2 : index
    %c0_901 = arith.constant 0 : index
    %c1_902 = arith.constant 1 : index
    %1182 = vector.load %arg7[%c0_899, %c2_900, %c0_901, %c1_902] : memref<2x3x17x17xf32, #tpu.memory_space<vmem>>, vector<2x1x16x16xf32>
    %1183 = vector.shape_cast %1182 : vector<2x1x16x16xf32> to vector<2x16x16xf32>
    %c81_903 = arith.constant 81 : index
    %1184 = memref.load %arg3[%c81_903] : memref<96xf32, #tpu.memory_space<smem>>
    %1185 = vector.broadcast %1184 : f32 to vector<2x16x16xf32>
    %1186 = arith.mulf %1183, %1185 : vector<2x16x16xf32>
    %1187 = arith.addf %1181, %1186 : vector<2x16x16xf32>
    %c0_904 = arith.constant 0 : index
    %c2_905 = arith.constant 2 : index
    %c1_906 = arith.constant 1 : index
    %c0_907 = arith.constant 0 : index
    %1188 = vector.load %arg7[%c0_904, %c2_905, %c1_906, %c0_907] : memref<2x3x17x17xf32, #tpu.memory_space<vmem>>, vector<2x1x16x16xf32>
    %1189 = vector.shape_cast %1188 : vector<2x1x16x16xf32> to vector<2x16x16xf32>
    %c82_908 = arith.constant 82 : index
    %1190 = memref.load %arg3[%c82_908] : memref<96xf32, #tpu.memory_space<smem>>
    %1191 = vector.broadcast %1190 : f32 to vector<2x16x16xf32>
    %1192 = arith.mulf %1189, %1191 : vector<2x16x16xf32>
    %1193 = arith.addf %1187, %1192 : vector<2x16x16xf32>
    %c0_909 = arith.constant 0 : index
    %c2_910 = arith.constant 2 : index
    %c1_911 = arith.constant 1 : index
    %c1_912 = arith.constant 1 : index
    %1194 = vector.load %arg7[%c0_909, %c2_910, %c1_911, %c1_912] : memref<2x3x17x17xf32, #tpu.memory_space<vmem>>, vector<2x1x16x16xf32>
    %1195 = vector.shape_cast %1194 : vector<2x1x16x16xf32> to vector<2x16x16xf32>
    %c83_913 = arith.constant 83 : index
    %1196 = memref.load %arg3[%c83_913] : memref<96xf32, #tpu.memory_space<smem>>
    %1197 = vector.broadcast %1196 : f32 to vector<2x16x16xf32>
    %1198 = arith.mulf %1195, %1197 : vector<2x16x16xf32>
    %1199 = arith.addf %1193, %1198 : vector<2x16x16xf32>
    %1200 = arith.addf %1153, %1176 : vector<2x16x16xf32>
    %1201 = arith.addf %1200, %1199 : vector<2x16x16xf32>
    %c6_914 = arith.constant 6 : index
    %1202 = memref.load %arg4[%c6_914] : memref<8xf32, #tpu.memory_space<smem>>
    %1203 = vector.broadcast %1202 : f32 to vector<2x16x16xf32>
    %1204 = arith.addf %1201, %1203 : vector<2x16x16xf32>
    %c0_915 = arith.constant 0 : index
    %c6_916 = arith.constant 6 : index
    %c0_917 = arith.constant 0 : index
    %c0_918 = arith.constant 0 : index
    %1205 = vector.load %arg5[%c0_915, %c6_916, %c0_917, %c0_918] : memref<2x8x16x16xf32, #tpu.memory_space<vmem>>, vector<2x1x16x16xf32>
    %1206 = vector.shape_cast %1205 : vector<2x1x16x16xf32> to vector<2x16x16xf32>
    %1207 = vector.shape_cast %1204 : vector<2x16x16xf32> to vector<2x1x16x16xf32>
    tpu.vector_store %arg5[%c0_915, %c6_916, %c0_917, %c0_918], %1207 {strides = array<i32>} : memref<2x8x16x16xf32, #tpu.memory_space<vmem>>, vector<2x1x16x16xf32>,
    %c0_919 = arith.constant 0 : index
    %c0_920 = arith.constant 0 : index
    %c0_921 = arith.constant 0 : index
    %c0_922 = arith.constant 0 : index
    %1208 = vector.load %arg7[%c0_919, %c0_920, %c0_921, %c0_922] : memref<2x3x17x17xf32, #tpu.memory_space<vmem>>, vector<2x1x16x16xf32>
    %1209 = vector.shape_cast %1208 : vector<2x1x16x16xf32> to vector<2x16x16xf32>
    %c84_923 = arith.constant 84 : index
    %1210 = memref.load %arg3[%c84_923] : memref<96xf32, #tpu.memory_space<smem>>
    %1211 = vector.broadcast %1210 : f32 to vector<2x16x16xf32>
    %1212 = arith.mulf %1209, %1211 : vector<2x16x16xf32>
    %c0_924 = arith.constant 0 : index
    %c0_925 = arith.constant 0 : index
    %c0_926 = arith.constant 0 : index
    %c1_927 = arith.constant 1 : index
    %1213 = vector.load %arg7[%c0_924, %c0_925, %c0_926, %c1_927] : memref<2x3x17x17xf32, #tpu.memory_space<vmem>>, vector<2x1x16x16xf32>
    %1214 = vector.shape_cast %1213 : vector<2x1x16x16xf32> to vector<2x16x16xf32>
    %c85_928 = arith.constant 85 : index
    %1215 = memref.load %arg3[%c85_928] : memref<96xf32, #tpu.memory_space<smem>>
    %1216 = vector.broadcast %1215 : f32 to vector<2x16x16xf32>
    %1217 = arith.mulf %1214, %1216 : vector<2x16x16xf32>
    %1218 = arith.addf %1212, %1217 : vector<2x16x16xf32>
    %c0_929 = arith.constant 0 : index
    %c0_930 = arith.constant 0 : index
    %c1_931 = arith.constant 1 : index
    %c0_932 = arith.constant 0 : index
    %1219 = vector.load %arg7[%c0_929, %c0_930, %c1_931, %c0_932] : memref<2x3x17x17xf32, #tpu.memory_space<vmem>>, vector<2x1x16x16xf32>
    %1220 = vector.shape_cast %1219 : vector<2x1x16x16xf32> to vector<2x16x16xf32>
    %c86_933 = arith.constant 86 : index
    %1221 = memref.load %arg3[%c86_933] : memref<96xf32, #tpu.memory_space<smem>>
    %1222 = vector.broadcast %1221 : f32 to vector<2x16x16xf32>
    %1223 = arith.mulf %1220, %1222 : vector<2x16x16xf32>
    %1224 = arith.addf %1218, %1223 : vector<2x16x16xf32>
    %c0_934 = arith.constant 0 : index
    %c0_935 = arith.constant 0 : index
    %c1_936 = arith.constant 1 : index
    %c1_937 = arith.constant 1 : index
    %1225 = vector.load %arg7[%c0_934, %c0_935, %c1_936, %c1_937] : memref<2x3x17x17xf32, #tpu.memory_space<vmem>>, vector<2x1x16x16xf32>
    %1226 = vector.shape_cast %1225 : vector<2x1x16x16xf32> to vector<2x16x16xf32>
    %c87_938 = arith.constant 87 : index
    %1227 = memref.load %arg3[%c87_938] : memref<96xf32, #tpu.memory_space<smem>>
    %1228 = vector.broadcast %1227 : f32 to vector<2x16x16xf32>
    %1229 = arith.mulf %1226, %1228 : vector<2x16x16xf32>
    %1230 = arith.addf %1224, %1229 : vector<2x16x16xf32>
    %c0_939 = arith.constant 0 : index
    %c1_940 = arith.constant 1 : index
    %c0_941 = arith.constant 0 : index
    %c0_942 = arith.constant 0 : index
    %1231 = vector.load %arg7[%c0_939, %c1_940, %c0_941, %c0_942] : memref<2x3x17x17xf32, #tpu.memory_space<vmem>>, vector<2x1x16x16xf32>
    %1232 = vector.shape_cast %1231 : vector<2x1x16x16xf32> to vector<2x16x16xf32>
    %c88_943 = arith.constant 88 : index
    %1233 = memref.load %arg3[%c88_943] : memref<96xf32, #tpu.memory_space<smem>>
    %1234 = vector.broadcast %1233 : f32 to vector<2x16x16xf32>
    %1235 = arith.mulf %1232, %1234 : vector<2x16x16xf32>
    %c0_944 = arith.constant 0 : index
    %c1_945 = arith.constant 1 : index
    %c0_946 = arith.constant 0 : index
    %c1_947 = arith.constant 1 : index
    %1236 = vector.load %arg7[%c0_944, %c1_945, %c0_946, %c1_947] : memref<2x3x17x17xf32, #tpu.memory_space<vmem>>, vector<2x1x16x16xf32>
    %1237 = vector.shape_cast %1236 : vector<2x1x16x16xf32> to vector<2x16x16xf32>
    %c89_948 = arith.constant 89 : index
    %1238 = memref.load %arg3[%c89_948] : memref<96xf32, #tpu.memory_space<smem>>
    %1239 = vector.broadcast %1238 : f32 to vector<2x16x16xf32>
    %1240 = arith.mulf %1237, %1239 : vector<2x16x16xf32>
    %1241 = arith.addf %1235, %1240 : vector<2x16x16xf32>
    %c0_949 = arith.constant 0 : index
    %c1_950 = arith.constant 1 : index
    %c1_951 = arith.constant 1 : index
    %c0_952 = arith.constant 0 : index
    %1242 = vector.load %arg7[%c0_949, %c1_950, %c1_951, %c0_952] : memref<2x3x17x17xf32, #tpu.memory_space<vmem>>, vector<2x1x16x16xf32>
    %1243 = vector.shape_cast %1242 : vector<2x1x16x16xf32> to vector<2x16x16xf32>
    %c90_953 = arith.constant 90 : index
    %1244 = memref.load %arg3[%c90_953] : memref<96xf32, #tpu.memory_space<smem>>
    %1245 = vector.broadcast %1244 : f32 to vector<2x16x16xf32>
    %1246 = arith.mulf %1243, %1245 : vector<2x16x16xf32>
    %1247 = arith.addf %1241, %1246 : vector<2x16x16xf32>
    %c0_954 = arith.constant 0 : index
    %c1_955 = arith.constant 1 : index
    %c1_956 = arith.constant 1 : index
    %c1_957 = arith.constant 1 : index
    %1248 = vector.load %arg7[%c0_954, %c1_955, %c1_956, %c1_957] : memref<2x3x17x17xf32, #tpu.memory_space<vmem>>, vector<2x1x16x16xf32>
    %1249 = vector.shape_cast %1248 : vector<2x1x16x16xf32> to vector<2x16x16xf32>
    %c91_958 = arith.constant 91 : index
    %1250 = memref.load %arg3[%c91_958] : memref<96xf32, #tpu.memory_space<smem>>
    %1251 = vector.broadcast %1250 : f32 to vector<2x16x16xf32>
    %1252 = arith.mulf %1249, %1251 : vector<2x16x16xf32>
    %1253 = arith.addf %1247, %1252 : vector<2x16x16xf32>
    %c0_959 = arith.constant 0 : index
    %c2_960 = arith.constant 2 : index
    %c0_961 = arith.constant 0 : index
    %c0_962 = arith.constant 0 : index
    %1254 = vector.load %arg7[%c0_959, %c2_960, %c0_961, %c0_962] : memref<2x3x17x17xf32, #tpu.memory_space<vmem>>, vector<2x1x16x16xf32>
    %1255 = vector.shape_cast %1254 : vector<2x1x16x16xf32> to vector<2x16x16xf32>
    %c92_963 = arith.constant 92 : index
    %1256 = memref.load %arg3[%c92_963] : memref<96xf32, #tpu.memory_space<smem>>
    %1257 = vector.broadcast %1256 : f32 to vector<2x16x16xf32>
    %1258 = arith.mulf %1255, %1257 : vector<2x16x16xf32>
    %c0_964 = arith.constant 0 : index
    %c2_965 = arith.constant 2 : index
    %c0_966 = arith.constant 0 : index
    %c1_967 = arith.constant 1 : index
    %1259 = vector.load %arg7[%c0_964, %c2_965, %c0_966, %c1_967] : memref<2x3x17x17xf32, #tpu.memory_space<vmem>>, vector<2x1x16x16xf32>
    %1260 = vector.shape_cast %1259 : vector<2x1x16x16xf32> to vector<2x16x16xf32>
    %c93_968 = arith.constant 93 : index
    %1261 = memref.load %arg3[%c93_968] : memref<96xf32, #tpu.memory_space<smem>>
    %1262 = vector.broadcast %1261 : f32 to vector<2x16x16xf32>
    %1263 = arith.mulf %1260, %1262 : vector<2x16x16xf32>
    %1264 = arith.addf %1258, %1263 : vector<2x16x16xf32>
    %c0_969 = arith.constant 0 : index
    %c2_970 = arith.constant 2 : index
    %c1_971 = arith.constant 1 : index
    %c0_972 = arith.constant 0 : index
    %1265 = vector.load %arg7[%c0_969, %c2_970, %c1_971, %c0_972] : memref<2x3x17x17xf32, #tpu.memory_space<vmem>>, vector<2x1x16x16xf32>
    %1266 = vector.shape_cast %1265 : vector<2x1x16x16xf32> to vector<2x16x16xf32>
    %c94_973 = arith.constant 94 : index
    %1267 = memref.load %arg3[%c94_973] : memref<96xf32, #tpu.memory_space<smem>>
    %1268 = vector.broadcast %1267 : f32 to vector<2x16x16xf32>
    %1269 = arith.mulf %1266, %1268 : vector<2x16x16xf32>
    %1270 = arith.addf %1264, %1269 : vector<2x16x16xf32>
    %c0_974 = arith.constant 0 : index
    %c2_975 = arith.constant 2 : index
    %c1_976 = arith.constant 1 : index
    %c1_977 = arith.constant 1 : index
    %1271 = vector.load %arg7[%c0_974, %c2_975, %c1_976, %c1_977] : memref<2x3x17x17xf32, #tpu.memory_space<vmem>>, vector<2x1x16x16xf32>
    %1272 = vector.shape_cast %1271 : vector<2x1x16x16xf32> to vector<2x16x16xf32>
    %c95_978 = arith.constant 95 : index
    %1273 = memref.load %arg3[%c95_978] : memref<96xf32, #tpu.memory_space<smem>>
    %1274 = vector.broadcast %1273 : f32 to vector<2x16x16xf32>
    %1275 = arith.mulf %1272, %1274 : vector<2x16x16xf32>
    %1276 = arith.addf %1270, %1275 : vector<2x16x16xf32>
    %1277 = arith.addf %1230, %1253 : vector<2x16x16xf32>
    %1278 = arith.addf %1277, %1276 : vector<2x16x16xf32>
    %c7_979 = arith.constant 7 : index
    %1279 = memref.load %arg4[%c7_979] : memref<8xf32, #tpu.memory_space<smem>>
    %1280 = vector.broadcast %1279 : f32 to vector<2x16x16xf32>
    %1281 = arith.addf %1278, %1280 : vector<2x16x16xf32>
    %c0_980 = arith.constant 0 : index
    %c7_981 = arith.constant 7 : index
    %c0_982 = arith.constant 0 : index
    %c0_983 = arith.constant 0 : index
    %1282 = vector.load %arg5[%c0_980, %c7_981, %c0_982, %c0_983] : memref<2x8x16x16xf32, #tpu.memory_space<vmem>>, vector<2x1x16x16xf32>
    %1283 = vector.shape_cast %1282 : vector<2x1x16x16xf32> to vector<2x16x16xf32>
    %1284 = vector.shape_cast %1281 : vector<2x16x16xf32> to vector<2x1x16x16xf32>
    tpu.vector_store %arg5[%c0_980, %c7_981, %c0_982, %c0_983], %1284 {strides = array<i32>} : memref<2x8x16x16xf32, #tpu.memory_space<vmem>>, vector<2x1x16x16xf32>,
    return
  }
}

</mosaic_0001>

<llo_original>
// kernel: custom_layer_forward.1
$region0: #{custom_layer_forward.1}
  #allocation0 [shape = 'u32[]', space=smem, size = 0x4, offset = 0x4, fixed_abs, tag = 'smem constant byte address 0x4 - core index']
  #allocation1 [shape = 'u32[144,128]{1,0:T(1,128)}', space=vmem, size = 0x12000, scoped, tag = 'internal scratch']
  #allocation2 [shape = 'f32[2,4,18,18]{3,2,1,0:T(8,128)}', space=vmem, size = 0x18000, scoped, tag = 'scratch operand']
  #allocation3 [shape = 'f32[2,3,17,17]{3,2,1,0:T(8,128)}', space=vmem, size = 0x12000, scoped, tag = 'scratch operand']
  %s0 = inlined_call_operand.vmem [shape: f32[2,4,16,16], index: 0, kind: input, shape index: {}]
  %s1 = inlined_call_operand.vmem [shape: f32[108], index: 1, kind: input, shape index: {}]
  %s2 = inlined_call_operand.vmem [shape: f32[3], index: 2, kind: input, shape index: {}]
  %s3 = inlined_call_operand.vmem [shape: f32[96], index: 3, kind: input, shape index: {}]
  %s4 = inlined_call_operand.vmem [shape: f32[8], index: 4, kind: input, shape index: {}]
  %s5 = inlined_call_operand.hbm [shape: f32[2,8,16,16], index: 5, kind: output, shape index: {}]
  %s6 = sld [smem:[#allocation0]]
  $region46: #{custom_layer_forward.1} parent=0
    _
  %s8 = ssub.s32 1, %s6
  %s9 = scalar_select 0, %s8, %s6
  $region1: #{custom_layer_forward.1} parent=0
    #allocation4 [shape = 'u8[512]{0}', space=smem, size = 0x200, scoped, tag = 'input window, operand 1, single buffered']
    #allocation5 [shape = 's32[1]{0}', space=sflag, size = 0x4, scoped, tag = 'scoped memory for custom_layer_forward.1']
    #allocation6 [shape = 's32[1]{0}', space=sflag, size = 0x4, scoped, tag = 'scoped memory for custom_layer_forward.1']
    #allocation7 [shape = 'u8[512]{0}', space=smem, size = 0x200, scoped, tag = 'input window, operand 2, single buffered']
    #allocation8 [shape = 's32[1]{0}', space=sflag, size = 0x4, scoped, tag = 'scoped memory for custom_layer_forward.1']
    #allocation9 [shape = 'u8[512]{0}', space=smem, size = 0x200, scoped, tag = 'input window, operand 3, single buffered']
    #allocation10 [shape = 'u8[512]{0}', space=smem, size = 0x200, scoped, tag = 'input window, operand 4, single buffered']
    #allocation11 [shape = 's32[1]{0}', space=sflag, size = 0x4, scoped, tag = 'scoped memory for custom_layer_forward.1']
    #allocation12 [shape = 'u8[131072]{0}', space=vmem, size = 0x20000, scoped, tag = 'output window, operand 0, single buffered']
    %10 = vsyncpa [#allocation6], 0
    %11 = vsyncpa [#allocation8], 0
    %12 = vsyncpa [#allocation11], 0
    %13 = vsyncpa [#allocation5], 0
    // Predicated region
    $region2: #{custom_layer_forward.1} parent=1 // pred_check
      _
    $region3: #{custom_layer_forward.1} parent=1 // pred_check_branch
      %15 = sbr.rel (0) target = $region5
    $region4: #{custom_layer_forward.1} parent=1 // pred_region
      _
    $region5: #{custom_layer_forward.1} parent=1 // pred_fallthru
      _
    // Predicated region
    $region6: #{custom_layer_forward.1} parent=1 // pred_check
      _
    $region7: #{custom_layer_forward.1} parent=1 // pred_check_branch
      %17 = sbr.rel (0) target = $region9
    $region8: #{custom_layer_forward.1} parent=1 // pred_region
      %s19 = ssub.s32 16, 16
      %20 = vsyncadd [#allocation6], %s19
      %s22 = sshll.u32 %s1, 4
      %s23 = int_to_ptr.vmem [resolvable:$true] %s22
      %25 = dma.vmem_to_smem %s23, 16, [#allocation4], [#allocation6]
    $region9: #{custom_layer_forward.1} parent=1 // pred_fallthru
      _
    // Predicated region
    $region10: #{custom_layer_forward.1} parent=1 // pred_check
      _
    $region11: #{custom_layer_forward.1} parent=1 // pred_check_branch
      %27 = sbr.rel (0) target = $region13
    $region12: #{custom_layer_forward.1} parent=1 // pred_region
      %s29 = ssub.s32 16, 16
      %30 = vsyncadd [#allocation8], %s29
      %s32 = sshll.u32 %s2, 4
      %s33 = int_to_ptr.vmem [resolvable:$true] %s32
      %35 = dma.vmem_to_smem %s33, 16, [#allocation7], [#allocation8]
    $region13: #{custom_layer_forward.1} parent=1 // pred_fallthru
      _
    // Predicated region
    $region14: #{custom_layer_forward.1} parent=1 // pred_check
      _
    $region15: #{custom_layer_forward.1} parent=1 // pred_check_branch
      %37 = sbr.rel (0) target = $region17
    $region16: #{custom_layer_forward.1} parent=1 // pred_region
      %s39 = ssub.s32 16, 16
      %40 = vsyncadd [#allocation8], %s39
      %s42 = sshll.u32 %s3, 4
      %s43 = int_to_ptr.vmem [resolvable:$true] %s42
      %45 = dma.vmem_to_smem %s43, 16, [#allocation9], [#allocation8]
    $region17: #{custom_layer_forward.1} parent=1 // pred_fallthru
      _
    // Predicated region
    $region18: #{custom_layer_forward.1} parent=1 // pred_check
      _
    $region19: #{custom_layer_forward.1} parent=1 // pred_check_branch
      %47 = sbr.rel (0) target = $region21
    $region20: #{custom_layer_forward.1} parent=1 // pred_region
      %s49 = ssub.s32 16, 16
      %50 = vsyncadd [#allocation11], %s49
      %s52 = sshll.u32 %s4, 4
      %s53 = int_to_ptr.vmem [resolvable:$true] %s52
      %55 = dma.vmem_to_smem %s53, 16, [#allocation10], [#allocation11]
    $region21: #{custom_layer_forward.1} parent=1 // pred_fallthru
      _
    // Predicated region
    $region22: #{custom_layer_forward.1} parent=1 // pred_check
      _
    $region23: #{custom_layer_forward.1} parent=1 // pred_check_branch
      %57 = sbr.rel (0) target = $region25
    $region24: #{custom_layer_forward.1} parent=1 // pred_region
      %58 = dma.done [#allocation6], 16
    $region25: #{custom_layer_forward.1} parent=1 // pred_fallthru
      _
    // Predicated region
    $region26: #{custom_layer_forward.1} parent=1 // pred_check
      _
    $region27: #{custom_layer_forward.1} parent=1 // pred_check_branch
      %60 = sbr.rel (0) target = $region29
    $region28: #{custom_layer_forward.1} parent=1 // pred_region
      %61 = dma.done [#allocation8], 16
    $region29: #{custom_layer_forward.1} parent=1 // pred_fallthru
      _
    // Predicated region
    $region30: #{custom_layer_forward.1} parent=1 // pred_check
      _
    $region31: #{custom_layer_forward.1} parent=1 // pred_check_branch
      %63 = sbr.rel (0) target = $region33
    $region32: #{custom_layer_forward.1} parent=1 // pred_region
      %64 = dma.done [#allocation8], 16
    $region33: #{custom_layer_forward.1} parent=1 // pred_fallthru
      _
    // Predicated region
    $region34: #{custom_layer_forward.1} parent=1 // pred_check
      _
    $region35: #{custom_layer_forward.1} parent=1 // pred_check_branch
      %66 = sbr.rel (0) target = $region37
    $region36: #{custom_layer_forward.1} parent=1 // pred_region
      %67 = dma.done [#allocation11], 16
    $region37: #{custom_layer_forward.1} parent=1 // pred_fallthru
      _
    %68 = sfence
    %vm69 = vcmask 146432
    %70 = vst.msk [vmem:[#allocation2] sm:$0xff] %vm69, 0.0
    %71 = vst.msk [vmem:[#allocation2 + $0x8] sm:$0xff] %vm69, 0.0
    %vm72 = vcmask 140288
    %73 = vst.msk [vmem:[#allocation2 + $0x10] sm:$0x3] %vm72, 0.0
    %74 = vst.msk [vmem:[#allocation2 + $0x18] sm:$0xff] %vm69, 0.0
    %75 = vst.msk [vmem:[#allocation2 + $0x20] sm:$0xff] %vm69, 0.0
    %76 = vst.msk [vmem:[#allocation2 + $0x28] sm:$0x3] %vm72, 0.0
    %77 = vst.msk [vmem:[#allocation2 + $0x30] sm:$0xff] %vm69, 0.0
    %78 = vst.msk [vmem:[#allocation2 + $0x38] sm:$0xff] %vm69, 0.0
    %79 = vst.msk [vmem:[#allocation2 + $0x40] sm:$0x3] %vm72, 0.0
    %80 = vst.msk [vmem:[#allocation2 + $0x48] sm:$0xff] %vm69, 0.0
    %81 = vst.msk [vmem:[#allocation2 + $0x50] sm:$0xff] %vm69, 0.0
    %82 = vst.msk [vmem:[#allocation2 + $0x58] sm:$0x3] %vm72, 0.0
    %83 = vst.msk [vmem:[#allocation2 + $0x60] sm:$0xff] %vm69, 0.0
    %84 = vst.msk [vmem:[#allocation2 + $0x68] sm:$0xff] %vm69, 0.0
    %85 = vst.msk [vmem:[#allocation2 + $0x70] sm:$0x3] %vm72, 0.0
    %86 = vst.msk [vmem:[#allocation2 + $0x78] sm:$0xff] %vm69, 0.0
    %87 = vst.msk [vmem:[#allocation2 + $0x80] sm:$0xff] %vm69, 0.0
    %88 = vst.msk [vmem:[#allocation2 + $0x88] sm:$0x3] %vm72, 0.0
    %89 = vst.msk [vmem:[#allocation2 + $0x90] sm:$0xff] %vm69, 0.0
    %90 = vst.msk [vmem:[#allocation2 + $0x98] sm:$0xff] %vm69, 0.0
    %91 = vst.msk [vmem:[#allocation2 + $0xa0] sm:$0x3] %vm72, 0.0
    %92 = vst.msk [vmem:[#allocation2 + $0xa8] sm:$0xff] %vm69, 0.0
    %93 = vst.msk [vmem:[#allocation2 + $0xb0] sm:$0xff] %vm69, 0.0
    %94 = vst.msk [vmem:[#allocation2 + $0xb8] sm:$0x3] %vm72, 0.0
    %vm95 = vcmask 138240
    %96 = vst.msk [vmem:[#allocation3] sm:$0xff] %vm95, 0.0
    %97 = vst.msk [vmem:[#allocation3 + $0x8] sm:$0xff] %vm95, 0.0
    %vm98 = vcmask 131072
    %99 = vst.msk [vmem:[#allocation3 + $0x10] sm:$0x1] %vm98, 0.0
    %100 = vst.msk [vmem:[#allocation3 + $0x18] sm:$0xff] %vm95, 0.0
    %101 = vst.msk [vmem:[#allocation3 + $0x20] sm:$0xff] %vm95, 0.0
    %102 = vst.msk [vmem:[#allocation3 + $0x28] sm:$0x1] %vm98, 0.0
    %103 = vst.msk [vmem:[#allocation3 + $0x30] sm:$0xff] %vm95, 0.0
    %104 = vst.msk [vmem:[#allocation3 + $0x38] sm:$0xff] %vm95, 0.0
    %105 = vst.msk [vmem:[#allocation3 + $0x40] sm:$0x1] %vm98, 0.0
    %106 = vst.msk [vmem:[#allocation3 + $0x48] sm:$0xff] %vm95, 0.0
    %107 = vst.msk [vmem:[#allocation3 + $0x50] sm:$0xff] %vm95, 0.0
    %108 = vst.msk [vmem:[#allocation3 + $0x58] sm:$0x1] %vm98, 0.0
    %109 = vst.msk [vmem:[#allocation3 + $0x60] sm:$0xff] %vm95, 0.0
    %110 = vst.msk [vmem:[#allocation3 + $0x68] sm:$0xff] %vm95, 0.0
    %111 = vst.msk [vmem:[#allocation3 + $0x70] sm:$0x1] %vm98, 0.0
    %112 = vst.msk [vmem:[#allocation3 + $0x78] sm:$0xff] %vm95, 0.0
    %113 = vst.msk [vmem:[#allocation3 + $0x80] sm:$0xff] %vm95, 0.0
    %114 = vst.msk [vmem:[#allocation3 + $0x88] sm:$0x1] %vm98, 0.0
    %v115 = vld [vmem:[%s0] sm:$0xff]
    %v116 = vld [vmem:[%s0 + $0x8] sm:$0xff]
    %v117 = vld [vmem:[%s0 + $0x10] sm:$0xff]
    %v118 = vld [vmem:[%s0 + $0x18] sm:$0xff]
    %v119 = vld [vmem:[%s0 + $0x20] sm:$0xff]
    %v120 = vld [vmem:[%s0 + $0x28] sm:$0xff]
    %v121 = vld [vmem:[%s0 + $0x30] sm:$0xff]
    %v122 = vld [vmem:[%s0 + $0x38] sm:$0xff]
    %v123 = vld [vmem:[%s0 + $0x40] sm:$0xff]
    %v124 = vld [vmem:[%s0 + $0x48] sm:$0xff]
    %v125 = vld [vmem:[%s0 + $0x50] sm:$0xff]
    %v126 = vld [vmem:[%s0 + $0x58] sm:$0xff]
    %v127 = vld [vmem:[%s0 + $0x60] sm:$0xff]
    %v128 = vld [vmem:[%s0 + $0x68] sm:$0xff]
    %v129 = vld [vmem:[%s0 + $0x70] sm:$0xff]
    %v130 = vld [vmem:[%s0 + $0x78] sm:$0xff]
    %147 = vrot.lane.b32.xlu0 %v115, 1
    %v148 = vpop.permute.xlu0 %147
    %149 = vrot.lane.b32.xlu0 %v116, 1
    %v150 = vpop.permute.xlu0 %149
    %151 = vrot.lane.b32.xlu0 %v117, 1
    %v152 = vpop.permute.xlu0 %151
    %153 = vrot.lane.b32.xlu0 %v118, 1
    %v154 = vpop.permute.xlu0 %153
    %155 = vrot.lane.b32.xlu0 %v119, 1
    %v156 = vpop.permute.xlu0 %155
    %157 = vrot.lane.b32.xlu0 %v120, 1
    %v158 = vpop.permute.xlu0 %157
    %159 = vrot.lane.b32.xlu0 %v121, 1
    %v160 = vpop.permute.xlu0 %159
    %161 = vrot.lane.b32.xlu0 %v122, 1
    %v162 = vpop.permute.xlu0 %161
    %163 = vrot.lane.b32.xlu0 %v123, 1
    %v164 = vpop.permute.xlu0 %163
    %165 = vrot.lane.b32.xlu0 %v124, 1
    %v166 = vpop.permute.xlu0 %165
    %167 = vrot.lane.b32.xlu0 %v125, 1
    %v168 = vpop.permute.xlu0 %167
    %169 = vrot.lane.b32.xlu0 %v126, 1
    %v170 = vpop.permute.xlu0 %169
    %171 = vrot.lane.b32.xlu0 %v127, 1
    %v172 = vpop.permute.xlu0 %171
    %173 = vrot.lane.b32.xlu0 %v128, 1
    %v174 = vpop.permute.xlu0 %173
    %175 = vrot.lane.b32.xlu0 %v129, 1
    %v176 = vpop.permute.xlu0 %175
    %177 = vrot.lane.b32.xlu0 %v130, 1
    %v178 = vpop.permute.xlu0 %177
    %vm195 = vcmask 138248
    %196 = vst.msk [vmem:[#allocation2 + $0x1] sm:$0xff] %vm195, %v148
    %197 = vst.msk [vmem:[#allocation2 + $0x9] sm:$0xff] %vm195, %v150
    %198 = vst.msk [vmem:[#allocation2 + $0x19] sm:$0xff] %vm195, %v152
    %199 = vst.msk [vmem:[#allocation2 + $0x21] sm:$0xff] %vm195, %v154
    %200 = vst.msk [vmem:[#allocation2 + $0x31] sm:$0xff] %vm195, %v156
    %201 = vst.msk [vmem:[#allocation2 + $0x39] sm:$0xff] %vm195, %v158
    %202 = vst.msk [vmem:[#allocation2 + $0x49] sm:$0xff] %vm195, %v160
    %203 = vst.msk [vmem:[#allocation2 + $0x51] sm:$0xff] %vm195, %v162
    %204 = vst.msk [vmem:[#allocation2 + $0x61] sm:$0xff] %vm195, %v164
    %205 = vst.msk [vmem:[#allocation2 + $0x69] sm:$0xff] %vm195, %v166
    %206 = vst.msk [vmem:[#allocation2 + $0x79] sm:$0xff] %vm195, %v168
    %207 = vst.msk [vmem:[#allocation2 + $0x81] sm:$0xff] %vm195, %v170
    %208 = vst.msk [vmem:[#allocation2 + $0x91] sm:$0xff] %vm195, %v172
    %209 = vst.msk [vmem:[#allocation2 + $0x99] sm:$0xff] %vm195, %v174
    %210 = vst.msk [vmem:[#allocation2 + $0xa9] sm:$0xff] %vm195, %v176
    %211 = vst.msk [vmem:[#allocation2 + $0xb1] sm:$0xff] %vm195, %v178
    %v212 = vld [vmem:[#allocation2] sm:$0xff]
    %v213 = vld [vmem:[#allocation2 + $0x8] sm:$0xff]
    %v214 = vld [vmem:[#allocation2 + $0x60] sm:$0xff]
    %v215 = vld [vmem:[#allocation2 + $0x68] sm:$0xff]
    %s216 = sld [smem:[#allocation4]]
    %v217 = vstv %s216
    %v218 = vmul.f32 %v212, %v217
    %v219 = vmul.f32 %v213, %v217
    %v220 = vmul.f32 %v214, %v217
    %v221 = vmul.f32 %v215, %v217
    %s222 = sld [smem:[#allocation4 + $0x1]]
    %v223 = vstv %s222
    %v224 = vmul.f32 %v212, %v223
    %v225 = vmul.f32 %v213, %v223
    %v226 = vmul.f32 %v214, %v223
    %v227 = vmul.f32 %v215, %v223
    %232 = vrot.lane.b32.xlu0 %v224, 127
    %v233 = vpop.permute.xlu0 %232
    %234 = vrot.lane.b32.xlu0 %v225, 127
    %v235 = vpop.permute.xlu0 %234
    %236 = vrot.lane.b32.xlu0 %v226, 127
    %v237 = vpop.permute.xlu0 %236
    %238 = vrot.lane.b32.xlu0 %v227, 127
    %v239 = vpop.permute.xlu0 %238
    %v244 = vadd.f32 %v218, %v233
    %v245 = vadd.f32 %v219, %v235
    %v246 = vadd.f32 %v220, %v237
    %v247 = vadd.f32 %v221, %v239
    %s248 = sld [smem:[#allocation4 + $0x2]]
    %v249 = vstv %s248
    %v250 = vmul.f32 %v212, %v249
    %v251 = vmul.f32 %v213, %v249
    %v252 = vmul.f32 %v214, %v249
    %v253 = vmul.f32 %v215, %v249
    %258 = vrot.lane.b32.xlu0 %v250, 126
    %v259 = vpop.permute.xlu0 %258
    %260 = vrot.lane.b32.xlu0 %v251, 126
    %v261 = vpop.permute.xlu0 %260
    %262 = vrot.lane.b32.xlu0 %v252, 126
    %v263 = vpop.permute.xlu0 %262
    %264 = vrot.lane.b32.xlu0 %v253, 126
    %v265 = vpop.permute.xlu0 %264
    %v270 = vadd.f32 %v244, %v259
    %v271 = vadd.f32 %v245, %v261
    %v272 = vadd.f32 %v246, %v263
    %v273 = vadd.f32 %v247, %v265
    %v274 = vld [vmem:[#allocation2 + $0x1] sm:$0xff]
    %v275 = vld [vmem:[#allocation2 + $0x9] sm:$0xff]
    %v276 = vld [vmem:[#allocation2 + $0x61] sm:$0xff]
    %v277 = vld [vmem:[#allocation2 + $0x69] sm:$0xff]
    %s278 = sld [smem:[#allocation4 + $0x3]]
    %v279 = vstv %s278
    %v280 = vmul.f32 %v274, %v279
    %v281 = vmul.f32 %v275, %v279
    %v282 = vmul.f32 %v276, %v279
    %v283 = vmul.f32 %v277, %v279
    %v284 = vadd.f32 %v270, %v280
    %v285 = vadd.f32 %v271, %v281
    %v286 = vadd.f32 %v272, %v282
    %v287 = vadd.f32 %v273, %v283
    %s288 = sld [smem:[#allocation4 + $0x4]]
    %v289 = vstv %s288
    %v290 = vmul.f32 %v274, %v289
    %v291 = vmul.f32 %v275, %v289
    %v292 = vmul.f32 %v276, %v289
    %v293 = vmul.f32 %v277, %v289
    %298 = vrot.lane.b32.xlu0 %v290, 127
    %v299 = vpop.permute.xlu0 %298
    %300 = vrot.lane.b32.xlu0 %v291, 127
    %v301 = vpop.permute.xlu0 %300
    %302 = vrot.lane.b32.xlu0 %v292, 127
    %v303 = vpop.permute.xlu0 %302
    %304 = vrot.lane.b32.xlu0 %v293, 127
    %v305 = vpop.permute.xlu0 %304
    %v310 = vadd.f32 %v284, %v299
    %v311 = vadd.f32 %v285, %v301
    %v312 = vadd.f32 %v286, %v303
    %v313 = vadd.f32 %v287, %v305
    %s314 = sld [smem:[#allocation4 + $0x5]]
    %v315 = vstv %s314
    %v316 = vmul.f32 %v274, %v315
    %v317 = vmul.f32 %v275, %v315
    %v318 = vmul.f32 %v276, %v315
    %v319 = vmul.f32 %v277, %v315
    %324 = vrot.lane.b32.xlu0 %v316, 126
    %v325 = vpop.permute.xlu0 %324
    %326 = vrot.lane.b32.xlu0 %v317, 126
    %v327 = vpop.permute.xlu0 %326
    %328 = vrot.lane.b32.xlu0 %v318, 126
    %v329 = vpop.permute.xlu0 %328
    %330 = vrot.lane.b32.xlu0 %v319, 126
    %v331 = vpop.permute.xlu0 %330
    %v336 = vadd.f32 %v310, %v325
    %v337 = vadd.f32 %v311, %v327
    %v338 = vadd.f32 %v312, %v329
    %v339 = vadd.f32 %v313, %v331
    %v340 = vld [vmem:[#allocation2 + $0x2] sm:$0xff]
    %v341 = vld [vmem:[#allocation2 + $0xa] sm:$0xff]
    %v342 = vld [vmem:[#allocation2 + $0x62] sm:$0xff]
    %v343 = vld [vmem:[#allocation2 + $0x6a] sm:$0xff]
    %s344 = sld [smem:[#allocation4 + $0x6]]
    %v345 = vstv %s344
    %v346 = vmul.f32 %v340, %v345
    %v347 = vmul.f32 %v341, %v345
    %v348 = vmul.f32 %v342, %v345
    %v349 = vmul.f32 %v343, %v345
    %v350 = vadd.f32 %v336, %v346
    %v351 = vadd.f32 %v337, %v347
    %v352 = vadd.f32 %v338, %v348
    %v353 = vadd.f32 %v339, %v349
    %s354 = sld [smem:[#allocation4 + $0x7]]
    %v355 = vstv %s354
    %v356 = vmul.f32 %v340, %v355
    %v357 = vmul.f32 %v341, %v355
    %v358 = vmul.f32 %v342, %v355
    %v359 = vmul.f32 %v343, %v355
    %364 = vrot.lane.b32.xlu0 %v356, 127
    %v365 = vpop.permute.xlu0 %364
    %366 = vrot.lane.b32.xlu0 %v357, 127
    %v367 = vpop.permute.xlu0 %366
    %368 = vrot.lane.b32.xlu0 %v358, 127
    %v369 = vpop.permute.xlu0 %368
    %370 = vrot.lane.b32.xlu0 %v359, 127
    %v371 = vpop.permute.xlu0 %370
    %v376 = vadd.f32 %v350, %v365
    %v377 = vadd.f32 %v351, %v367
    %v378 = vadd.f32 %v352, %v369
    %v379 = vadd.f32 %v353, %v371
    %s380 = sld [smem:[#allocation4 + $0x8]]
    %v381 = vstv %s380
    %v382 = vmul.f32 %v340, %v381
    %v383 = vmul.f32 %v341, %v381
    %v384 = vmul.f32 %v342, %v381
    %v385 = vmul.f32 %v343, %v381
    %390 = vrot.lane.b32.xlu0 %v382, 126
    %v391 = vpop.permute.xlu0 %390
    %392 = vrot.lane.b32.xlu0 %v383, 126
    %v393 = vpop.permute.xlu0 %392
    %394 = vrot.lane.b32.xlu0 %v384, 126
    %v395 = vpop.permute.xlu0 %394
    %396 = vrot.lane.b32.xlu0 %v385, 126
    %v397 = vpop.permute.xlu0 %396
    %v402 = vadd.f32 %v376, %v391
    %v403 = vadd.f32 %v377, %v393
    %v404 = vadd.f32 %v378, %v395
    %v405 = vadd.f32 %v379, %v397
    %s406 = scalar_lea.vmem [#allocation2], 24
    %v407 = vld [vmem:[%s406] sm:$0xff]
    %v408 = vld [vmem:[%s406 + $0x8] sm:$0xff]
    %v409 = vld [vmem:[%s406 + $0x60] sm:$0xff]
    %v410 = vld [vmem:[%s406 + $0x68] sm:$0xff]
    %s411 = sld [smem:[#allocation4 + $0x9]]
    %v412 = vstv %s411
    %v413 = vmul.f32 %v407, %v412
    %v414 = vmul.f32 %v408, %v412
    %v415 = vmul.f32 %v409, %v412
    %v416 = vmul.f32 %v410, %v412
    %s417 = sld [smem:[#allocation4 + $0xa]]
    %v418 = vstv %s417
    %v419 = vmul.f32 %v407, %v418
    %v420 = vmul.f32 %v408, %v418
    %v421 = vmul.f32 %v409, %v418
    %v422 = vmul.f32 %v410, %v418
    %427 = vrot.lane.b32.xlu0 %v419, 127
    %v428 = vpop.permute.xlu0 %427
    %429 = vrot.lane.b32.xlu0 %v420, 127
    %v430 = vpop.permute.xlu0 %429
    %431 = vrot.lane.b32.xlu0 %v421, 127
    %v432 = vpop.permute.xlu0 %431
    %433 = vrot.lane.b32.xlu0 %v422, 127
    %v434 = vpop.permute.xlu0 %433
    %v439 = vadd.f32 %v413, %v428
    %v440 = vadd.f32 %v414, %v430
    %v441 = vadd.f32 %v415, %v432
    %v442 = vadd.f32 %v416, %v434
    %s443 = sld [smem:[#allocation4 + $0xb]]
    %v444 = vstv %s443
    %v445 = vmul.f32 %v407, %v444
    %v446 = vmul.f32 %v408, %v444
    %v447 = vmul.f32 %v409, %v444
    %v448 = vmul.f32 %v410, %v444
    %453 = vrot.lane.b32.xlu0 %v445, 126
    %v454 = vpop.permute.xlu0 %453
    %455 = vrot.lane.b32.xlu0 %v446, 126
    %v456 = vpop.permute.xlu0 %455
    %457 = vrot.lane.b32.xlu0 %v447, 126
    %v458 = vpop.permute.xlu0 %457
    %459 = vrot.lane.b32.xlu0 %v448, 126
    %v460 = vpop.permute.xlu0 %459
    %v465 = vadd.f32 %v439, %v454
    %v466 = vadd.f32 %v440, %v456
    %v467 = vadd.f32 %v441, %v458
    %v468 = vadd.f32 %v442, %v460
    %v469 = vld [vmem:[%s406 + $0x1] sm:$0xff]
    %v470 = vld [vmem:[%s406 + $0x9] sm:$0xff]
    %v471 = vld [vmem:[%s406 + $0x61] sm:$0xff]
    %v472 = vld [vmem:[%s406 + $0x69] sm:$0xff]
    %s473 = sld [smem:[#allocation4 + $0xc]]
    %v474 = vstv %s473
    %v475 = vmul.f32 %v469, %v474
    %v476 = vmul.f32 %v470, %v474
    %v477 = vmul.f32 %v471, %v474
    %v478 = vmul.f32 %v472, %v474
    %v479 = vadd.f32 %v465, %v475
    %v480 = vadd.f32 %v466, %v476
    %v481 = vadd.f32 %v467, %v477
    %v482 = vadd.f32 %v468, %v478
    %s483 = sld [smem:[#allocation4 + $0xd]]
    %v484 = vstv %s483
    %v485 = vmul.f32 %v469, %v484
    %v486 = vmul.f32 %v470, %v484
    %v487 = vmul.f32 %v471, %v484
    %v488 = vmul.f32 %v472, %v484
    %493 = vrot.lane.b32.xlu0 %v485, 127
    %v494 = vpop.permute.xlu0 %493
    %495 = vrot.lane.b32.xlu0 %v486, 127
    %v496 = vpop.permute.xlu0 %495
    %497 = vrot.lane.b32.xlu0 %v487, 127
    %v498 = vpop.permute.xlu0 %497
    %499 = vrot.lane.b32.xlu0 %v488, 127
    %v500 = vpop.permute.xlu0 %499
    %v505 = vadd.f32 %v479, %v494
    %v506 = vadd.f32 %v480, %v496
    %v507 = vadd.f32 %v481, %v498
    %v508 = vadd.f32 %v482, %v500
    %s509 = sld [smem:[#allocation4 + $0xe]]
    %v510 = vstv %s509
    %v511 = vmul.f32 %v469, %v510
    %v512 = vmul.f32 %v470, %v510
    %v513 = vmul.f32 %v471, %v510
    %v514 = vmul.f32 %v472, %v510
    %519 = vrot.lane.b32.xlu0 %v511, 126
    %v520 = vpop.permute.xlu0 %519
    %521 = vrot.lane.b32.xlu0 %v512, 126
    %v522 = vpop.permute.xlu0 %521
    %523 = vrot.lane.b32.xlu0 %v513, 126
    %v524 = vpop.permute.xlu0 %523
    %525 = vrot.lane.b32.xlu0 %v514, 126
    %v526 = vpop.permute.xlu0 %525
    %v531 = vadd.f32 %v505, %v520
    %v532 = vadd.f32 %v506, %v522
    %v533 = vadd.f32 %v507, %v524
    %v534 = vadd.f32 %v508, %v526
    %v535 = vld [vmem:[%s406 + $0x2] sm:$0xff]
    %v536 = vld [vmem:[%s406 + $0xa] sm:$0xff]
    %v537 = vld [vmem:[%s406 + $0x62] sm:$0xff]
    %v538 = vld [vmem:[%s406 + $0x6a] sm:$0xff]
    %s539 = sld [smem:[#allocation4 + $0xf]]
    %v540 = vstv %s539
    %v541 = vmul.f32 %v535, %v540
    %v542 = vmul.f32 %v536, %v540
    %v543 = vmul.f32 %v537, %v540
    %v544 = vmul.f32 %v538, %v540
    %v545 = vadd.f32 %v531, %v541
    %v546 = vadd.f32 %v532, %v542
    %v547 = vadd.f32 %v533, %v543
    %v548 = vadd.f32 %v534, %v544
    %s549 = sld [smem:[#allocation4 + $0x10]]
    %v550 = vstv %s549
    %v551 = vmul.f32 %v535, %v550
    %v552 = vmul.f32 %v536, %v550
    %v553 = vmul.f32 %v537, %v550
    %v554 = vmul.f32 %v538, %v550
    %559 = vrot.lane.b32.xlu0 %v551, 127
    %v560 = vpop.permute.xlu0 %559
    %561 = vrot.lane.b32.xlu0 %v552, 127
    %v562 = vpop.permute.xlu0 %561
    %563 = vrot.lane.b32.xlu0 %v553, 127
    %v564 = vpop.permute.xlu0 %563
    %565 = vrot.lane.b32.xlu0 %v554, 127
    %v566 = vpop.permute.xlu0 %565
    %v571 = vadd.f32 %v545, %v560
    %v572 = vadd.f32 %v546, %v562
    %v573 = vadd.f32 %v547, %v564
    %v574 = vadd.f32 %v548, %v566
    %s575 = sld [smem:[#allocation4 + $0x11]]
    %v576 = vstv %s575
    %v577 = vmul.f32 %v535, %v576
    %v578 = vmul.f32 %v536, %v576
    %v579 = vmul.f32 %v537, %v576
    %v580 = vmul.f32 %v538, %v576
    %585 = vrot.lane.b32.xlu0 %v577, 126
    %v586 = vpop.permute.xlu0 %585
    %587 = vrot.lane.b32.xlu0 %v578, 126
    %v588 = vpop.permute.xlu0 %587
    %589 = vrot.lane.b32.xlu0 %v579, 126
    %v590 = vpop.permute.xlu0 %589
    %591 = vrot.lane.b32.xlu0 %v580, 126
    %v592 = vpop.permute.xlu0 %591
    %v597 = vadd.f32 %v571, %v586
    %v598 = vadd.f32 %v572, %v588
    %v599 = vadd.f32 %v573, %v590
    %v600 = vadd.f32 %v574, %v592
    %s601 = scalar_lea.vmem [#allocation2], 48
    %v602 = vld [vmem:[%s601] sm:$0xff]
    %v603 = vld [vmem:[%s601 + $0x8] sm:$0xff]
    %v604 = vld [vmem:[%s601 + $0x60] sm:$0xff]
    %v605 = vld [vmem:[%s601 + $0x68] sm:$0xff]
    %s606 = sld [smem:[#allocation4 + $0x12]]
    %v607 = vstv %s606
    %v608 = vmul.f32 %v602, %v607
    %v609 = vmul.f32 %v603, %v607
    %v610 = vmul.f32 %v604, %v607
    %v611 = vmul.f32 %v605, %v607
    %s612 = sld [smem:[#allocation4 + $0x13]]
    %v613 = vstv %s612
    %v614 = vmul.f32 %v602, %v613
    %v615 = vmul.f32 %v603, %v613
    %v616 = vmul.f32 %v604, %v613
    %v617 = vmul.f32 %v605, %v613
    %622 = vrot.lane.b32.xlu0 %v614, 127
    %v623 = vpop.permute.xlu0 %622
    %624 = vrot.lane.b32.xlu0 %v615, 127
    %v625 = vpop.permute.xlu0 %624
    %626 = vrot.lane.b32.xlu0 %v616, 127
    %v627 = vpop.permute.xlu0 %626
    %628 = vrot.lane.b32.xlu0 %v617, 127
    %v629 = vpop.permute.xlu0 %628
    %v634 = vadd.f32 %v608, %v623
    %v635 = vadd.f32 %v609, %v625
    %v636 = vadd.f32 %v610, %v627
    %v637 = vadd.f32 %v611, %v629
    %s638 = sld [smem:[#allocation4 + $0x14]]
    %v639 = vstv %s638
    %v640 = vmul.f32 %v602, %v639
    %v641 = vmul.f32 %v603, %v639
    %v642 = vmul.f32 %v604, %v639
    %v643 = vmul.f32 %v605, %v639
    %648 = vrot.lane.b32.xlu0 %v640, 126
    %v649 = vpop.permute.xlu0 %648
    %650 = vrot.lane.b32.xlu0 %v641, 126
    %v651 = vpop.permute.xlu0 %650
    %652 = vrot.lane.b32.xlu0 %v642, 126
    %v653 = vpop.permute.xlu0 %652
    %654 = vrot.lane.b32.xlu0 %v643, 126
    %v655 = vpop.permute.xlu0 %654
    %v660 = vadd.f32 %v634, %v649
    %v661 = vadd.f32 %v635, %v651
    %v662 = vadd.f32 %v636, %v653
    %v663 = vadd.f32 %v637, %v655
    %v664 = vld [vmem:[%s601 + $0x1] sm:$0xff]
    %v665 = vld [vmem:[%s601 + $0x9] sm:$0xff]
    %v666 = vld [vmem:[%s601 + $0x61] sm:$0xff]
    %v667 = vld [vmem:[%s601 + $0x69] sm:$0xff]
    %s668 = sld [smem:[#allocation4 + $0x15]]
    %v669 = vstv %s668
    %v670 = vmul.f32 %v664, %v669
    %v671 = vmul.f32 %v665, %v669
    %v672 = vmul.f32 %v666, %v669
    %v673 = vmul.f32 %v667, %v669
    %v674 = vadd.f32 %v660, %v670
    %v675 = vadd.f32 %v661, %v671
    %v676 = vadd.f32 %v662, %v672
    %v677 = vadd.f32 %v663, %v673
    %s678 = sld [smem:[#allocation4 + $0x16]]
    %v679 = vstv %s678
    %v680 = vmul.f32 %v664, %v679
    %v681 = vmul.f32 %v665, %v679
    %v682 = vmul.f32 %v666, %v679
    %v683 = vmul.f32 %v667, %v679
    %688 = vrot.lane.b32.xlu0 %v680, 127
    %v689 = vpop.permute.xlu0 %688
    %690 = vrot.lane.b32.xlu0 %v681, 127
    %v691 = vpop.permute.xlu0 %690
    %692 = vrot.lane.b32.xlu0 %v682, 127
    %v693 = vpop.permute.xlu0 %692
    %694 = vrot.lane.b32.xlu0 %v683, 127
    %v695 = vpop.permute.xlu0 %694
    %v700 = vadd.f32 %v674, %v689
    %v701 = vadd.f32 %v675, %v691
    %v702 = vadd.f32 %v676, %v693
    %v703 = vadd.f32 %v677, %v695
    %s704 = sld [smem:[#allocation4 + $0x17]]
    %v705 = vstv %s704
    %v706 = vmul.f32 %v664, %v705
    %v707 = vmul.f32 %v665, %v705
    %v708 = vmul.f32 %v666, %v705
    %v709 = vmul.f32 %v667, %v705
    %714 = vrot.lane.b32.xlu0 %v706, 126
    %v715 = vpop.permute.xlu0 %714
    %716 = vrot.lane.b32.xlu0 %v707, 126
    %v717 = vpop.permute.xlu0 %716
    %718 = vrot.lane.b32.xlu0 %v708, 126
    %v719 = vpop.permute.xlu0 %718
    %720 = vrot.lane.b32.xlu0 %v709, 126
    %v721 = vpop.permute.xlu0 %720
    %v726 = vadd.f32 %v700, %v715
    %v727 = vadd.f32 %v701, %v717
    %v728 = vadd.f32 %v702, %v719
    %v729 = vadd.f32 %v703, %v721
    %v730 = vld [vmem:[%s601 + $0x2] sm:$0xff]
    %v731 = vld [vmem:[%s601 + $0xa] sm:$0xff]
    %v732 = vld [vmem:[%s601 + $0x62] sm:$0xff]
    %v733 = vld [vmem:[%s601 + $0x6a] sm:$0xff]
    %s734 = sld [smem:[#allocation4 + $0x18]]
    %v735 = vstv %s734
    %v736 = vmul.f32 %v730, %v735
    %v737 = vmul.f32 %v731, %v735
    %v738 = vmul.f32 %v732, %v735
    %v739 = vmul.f32 %v733, %v735
    %v740 = vadd.f32 %v726, %v736
    %v741 = vadd.f32 %v727, %v737
    %v742 = vadd.f32 %v728, %v738
    %v743 = vadd.f32 %v729, %v739
    %s744 = sld [smem:[#allocation4 + $0x19]]
    %v745 = vstv %s744
    %v746 = vmul.f32 %v730, %v745
    %v747 = vmul.f32 %v731, %v745
    %v748 = vmul.f32 %v732, %v745
    %v749 = vmul.f32 %v733, %v745
    %754 = vrot.lane.b32.xlu0 %v746, 127
    %v755 = vpop.permute.xlu0 %754
    %756 = vrot.lane.b32.xlu0 %v747, 127
    %v757 = vpop.permute.xlu0 %756
    %758 = vrot.lane.b32.xlu0 %v748, 127
    %v759 = vpop.permute.xlu0 %758
    %760 = vrot.lane.b32.xlu0 %v749, 127
    %v761 = vpop.permute.xlu0 %760
    %v766 = vadd.f32 %v740, %v755
    %v767 = vadd.f32 %v741, %v757
    %v768 = vadd.f32 %v742, %v759
    %v769 = vadd.f32 %v743, %v761
    %s770 = sld [smem:[#allocation4 + $0x1a]]
    %v771 = vstv %s770
    %v772 = vmul.f32 %v730, %v771
    %v773 = vmul.f32 %v731, %v771
    %v774 = vmul.f32 %v732, %v771
    %v775 = vmul.f32 %v733, %v771
    %780 = vrot.lane.b32.xlu0 %v772, 126
    %v781 = vpop.permute.xlu0 %780
    %782 = vrot.lane.b32.xlu0 %v773, 126
    %v783 = vpop.permute.xlu0 %782
    %784 = vrot.lane.b32.xlu0 %v774, 126
    %v785 = vpop.permute.xlu0 %784
    %786 = vrot.lane.b32.xlu0 %v775, 126
    %v787 = vpop.permute.xlu0 %786
    %v792 = vadd.f32 %v766, %v781
    %v793 = vadd.f32 %v767, %v783
    %v794 = vadd.f32 %v768, %v785
    %v795 = vadd.f32 %v769, %v787
    %s796 = scalar_lea.vmem [#allocation2], 72
    %v797 = vld [vmem:[%s796] sm:$0xff]
    %v798 = vld [vmem:[%s796 + $0x8] sm:$0xff]
    %v799 = vld [vmem:[%s796 + $0x60] sm:$0xff]
    %v800 = vld [vmem:[%s796 + $0x68] sm:$0xff]
    %s801 = sld [smem:[#allocation4 + $0x1b]]
    %v802 = vstv %s801
    %v803 = vmul.f32 %v797, %v802
    %v804 = vmul.f32 %v798, %v802
    %v805 = vmul.f32 %v799, %v802
    %v806 = vmul.f32 %v800, %v802
    %s807 = sld [smem:[#allocation4 + $0x1c]]
    %v808 = vstv %s807
    %v809 = vmul.f32 %v797, %v808
    %v810 = vmul.f32 %v798, %v808
    %v811 = vmul.f32 %v799, %v808
    %v812 = vmul.f32 %v800, %v808
    %817 = vrot.lane.b32.xlu0 %v809, 127
    %v818 = vpop.permute.xlu0 %817
    %819 = vrot.lane.b32.xlu0 %v810, 127
    %v820 = vpop.permute.xlu0 %819
    %821 = vrot.lane.b32.xlu0 %v811, 127
    %v822 = vpop.permute.xlu0 %821
    %823 = vrot.lane.b32.xlu0 %v812, 127
    %v824 = vpop.permute.xlu0 %823
    %v829 = vadd.f32 %v803, %v818
    %v830 = vadd.f32 %v804, %v820
    %v831 = vadd.f32 %v805, %v822
    %v832 = vadd.f32 %v806, %v824
    %s833 = sld [smem:[#allocation4 + $0x1d]]
    %v834 = vstv %s833
    %v835 = vmul.f32 %v797, %v834
    %v836 = vmul.f32 %v798, %v834
    %v837 = vmul.f32 %v799, %v834
    %v838 = vmul.f32 %v800, %v834
    %843 = vrot.lane.b32.xlu0 %v835, 126
    %v844 = vpop.permute.xlu0 %843
    %845 = vrot.lane.b32.xlu0 %v836, 126
    %v846 = vpop.permute.xlu0 %845
    %847 = vrot.lane.b32.xlu0 %v837, 126
    %v848 = vpop.permute.xlu0 %847
    %849 = vrot.lane.b32.xlu0 %v838, 126
    %v850 = vpop.permute.xlu0 %849
    %v855 = vadd.f32 %v829, %v844
    %v856 = vadd.f32 %v830, %v846
    %v857 = vadd.f32 %v831, %v848
    %v858 = vadd.f32 %v832, %v850
    %v859 = vld [vmem:[%s796 + $0x1] sm:$0xff]
    %v860 = vld [vmem:[%s796 + $0x9] sm:$0xff]
    %v861 = vld [vmem:[%s796 + $0x61] sm:$0xff]
    %v862 = vld [vmem:[%s796 + $0x69] sm:$0xff]
    %s863 = sld [smem:[#allocation4 + $0x1e]]
    %v864 = vstv %s863
    %v865 = vmul.f32 %v859, %v864
    %v866 = vmul.f32 %v860, %v864
    %v867 = vmul.f32 %v861, %v864
    %v868 = vmul.f32 %v862, %v864
    %v869 = vadd.f32 %v855, %v865
    %v870 = vadd.f32 %v856, %v866
    %v871 = vadd.f32 %v857, %v867
    %v872 = vadd.f32 %v858, %v868
    %s873 = sld [smem:[#allocation4 + $0x1f]]
    %v874 = vstv %s873
    %v875 = vmul.f32 %v859, %v874
    %v876 = vmul.f32 %v860, %v874
    %v877 = vmul.f32 %v861, %v874
    %v878 = vmul.f32 %v862, %v874
    %883 = vrot.lane.b32.xlu0 %v875, 127
    %v884 = vpop.permute.xlu0 %883
    %885 = vrot.lane.b32.xlu0 %v876, 127
    %v886 = vpop.permute.xlu0 %885
    %887 = vrot.lane.b32.xlu0 %v877, 127
    %v888 = vpop.permute.xlu0 %887
    %889 = vrot.lane.b32.xlu0 %v878, 127
    %v890 = vpop.permute.xlu0 %889
    %v895 = vadd.f32 %v869, %v884
    %v896 = vadd.f32 %v870, %v886
    %v897 = vadd.f32 %v871, %v888
    %v898 = vadd.f32 %v872, %v890
    %s899 = sld [smem:[#allocation4 + $0x20]]
    %v900 = vstv %s899
    %v901 = vmul.f32 %v859, %v900
    %v902 = vmul.f32 %v860, %v900
    %v903 = vmul.f32 %v861, %v900
    %v904 = vmul.f32 %v862, %v900
    %909 = vrot.lane.b32.xlu0 %v901, 126
    %v910 = vpop.permute.xlu0 %909
    %911 = vrot.lane.b32.xlu0 %v902, 126
    %v912 = vpop.permute.xlu0 %911
    %913 = vrot.lane.b32.xlu0 %v903, 126
    %v914 = vpop.permute.xlu0 %913
    %915 = vrot.lane.b32.xlu0 %v904, 126
    %v916 = vpop.permute.xlu0 %915
    %v921 = vadd.f32 %v895, %v910
    %v922 = vadd.f32 %v896, %v912
    %v923 = vadd.f32 %v897, %v914
    %v924 = vadd.f32 %v898, %v916
    %v925 = vld [vmem:[%s796 + $0x2] sm:$0xff]
    %v926 = vld [vmem:[%s796 + $0xa] sm:$0xff]
    %v927 = vld [vmem:[%s796 + $0x62] sm:$0xff]
    %v928 = vld [vmem:[%s796 + $0x6a] sm:$0xff]
    %s929 = sld [smem:[#allocation4 + $0x21]]
    %v930 = vstv %s929
    %v931 = vmul.f32 %v925, %v930
    %v932 = vmul.f32 %v926, %v930
    %v933 = vmul.f32 %v927, %v930
    %v934 = vmul.f32 %v928, %v930
    %v935 = vadd.f32 %v921, %v931
    %v936 = vadd.f32 %v922, %v932
    %v937 = vadd.f32 %v923, %v933
    %v938 = vadd.f32 %v924, %v934
    %s939 = sld [smem:[#allocation4 + $0x22]]
    %v940 = vstv %s939
    %v941 = vmul.f32 %v925, %v940
    %v942 = vmul.f32 %v926, %v940
    %v943 = vmul.f32 %v927, %v940
    %v944 = vmul.f32 %v928, %v940
    %949 = vrot.lane.b32.xlu0 %v941, 127
    %v950 = vpop.permute.xlu0 %949
    %951 = vrot.lane.b32.xlu0 %v942, 127
    %v952 = vpop.permute.xlu0 %951
    %953 = vrot.lane.b32.xlu0 %v943, 127
    %v954 = vpop.permute.xlu0 %953
    %955 = vrot.lane.b32.xlu0 %v944, 127
    %v956 = vpop.permute.xlu0 %955
    %v961 = vadd.f32 %v935, %v950
    %v962 = vadd.f32 %v936, %v952
    %v963 = vadd.f32 %v937, %v954
    %v964 = vadd.f32 %v938, %v956
    %s965 = sld [smem:[#allocation4 + $0x23]]
    %v966 = vstv %s965
    %v967 = vmul.f32 %v925, %v966
    %v968 = vmul.f32 %v926, %v966
    %v969 = vmul.f32 %v927, %v966
    %v970 = vmul.f32 %v928, %v966
    %975 = vrot.lane.b32.xlu0 %v967, 126
    %v976 = vpop.permute.xlu0 %975
    %977 = vrot.lane.b32.xlu0 %v968, 126
    %v978 = vpop.permute.xlu0 %977
    %979 = vrot.lane.b32.xlu0 %v969, 126
    %v980 = vpop.permute.xlu0 %979
    %981 = vrot.lane.b32.xlu0 %v970, 126
    %v982 = vpop.permute.xlu0 %981
    %v987 = vadd.f32 %v961, %v976
    %v988 = vadd.f32 %v962, %v978
    %v989 = vadd.f32 %v963, %v980
    %v990 = vadd.f32 %v964, %v982
    %v991 = vadd.f32 %v402, %v597
    %v992 = vadd.f32 %v403, %v598
    %v993 = vadd.f32 %v404, %v599
    %v994 = vadd.f32 %v405, %v600
    %v995 = vadd.f32 %v792, %v987
    %v996 = vadd.f32 %v793, %v988
    %v997 = vadd.f32 %v794, %v989
    %v998 = vadd.f32 %v795, %v990
    %v999 = vadd.f32 %v991, %v995
    %v1000 = vadd.f32 %v992, %v996
    %v1001 = vadd.f32 %v993, %v997
    %v1002 = vadd.f32 %v994, %v998
    %s1003 = sld [smem:[#allocation7]]
    %v1004 = vstv %s1003
    %v1005 = vadd.f32 %v999, %v1004
    %v1006 = vadd.f32 %v1000, %v1004
    %v1007 = vadd.f32 %v1001, %v1004
    %v1008 = vadd.f32 %v1002, %v1004
    %vm1009 = vcmask 130048
    %1010 = vst.msk [vmem:[#allocation3] sm:$0xff] %vm1009, %v1005
    %1011 = vst.msk [vmem:[#allocation3 + $0x8] sm:$0xff] %vm1009, %v1006
    %1012 = vst.msk [vmem:[#allocation3 + $0x48] sm:$0xff] %vm1009, %v1007
    %1013 = vst.msk [vmem:[#allocation3 + $0x50] sm:$0xff] %vm1009, %v1008
    %v1014 = vld [vmem:[#allocation2] sm:$0xff]
    %v1015 = vld [vmem:[#allocation2 + $0x8] sm:$0xff]
    %v1016 = vld [vmem:[#allocation2 + $0x60] sm:$0xff]
    %v1017 = vld [vmem:[#allocation2 + $0x68] sm:$0xff]
    %s1018 = sld [smem:[#allocation4 + $0x24]]
    %v1019 = vstv %s1018
    %v1020 = vmul.f32 %v1014, %v1019
    %v1021 = vmul.f32 %v1015, %v1019
    %v1022 = vmul.f32 %v1016, %v1019
    %v1023 = vmul.f32 %v1017, %v1019
    %s1024 = sld [smem:[#allocation4 + $0x25]]
    %v1025 = vstv %s1024
    %v1026 = vmul.f32 %v1014, %v1025
    %v1027 = vmul.f32 %v1015, %v1025
    %v1028 = vmul.f32 %v1016, %v1025
    %v1029 = vmul.f32 %v1017, %v1025
    %1034 = vrot.lane.b32.xlu0 %v1026, 127
    %v1035 = vpop.permute.xlu0 %1034
    %1036 = vrot.lane.b32.xlu0 %v1027, 127
    %v1037 = vpop.permute.xlu0 %1036
    %1038 = vrot.lane.b32.xlu0 %v1028, 127
    %v1039 = vpop.permute.xlu0 %1038
    %1040 = vrot.lane.b32.xlu0 %v1029, 127
    %v1041 = vpop.permute.xlu0 %1040
    %v1046 = vadd.f32 %v1020, %v1035
    %v1047 = vadd.f32 %v1021, %v1037
    %v1048 = vadd.f32 %v1022, %v1039
    %v1049 = vadd.f32 %v1023, %v1041
    %s1050 = sld [smem:[#allocation4 + $0x26]]
    %v1051 = vstv %s1050
    %v1052 = vmul.f32 %v1014, %v1051
    %v1053 = vmul.f32 %v1015, %v1051
    %v1054 = vmul.f32 %v1016, %v1051
    %v1055 = vmul.f32 %v1017, %v1051
    %1060 = vrot.lane.b32.xlu0 %v1052, 126
    %v1061 = vpop.permute.xlu0 %1060
    %1062 = vrot.lane.b32.xlu0 %v1053, 126
    %v1063 = vpop.permute.xlu0 %1062
    %1064 = vrot.lane.b32.xlu0 %v1054, 126
    %v1065 = vpop.permute.xlu0 %1064
    %1066 = vrot.lane.b32.xlu0 %v1055, 126
    %v1067 = vpop.permute.xlu0 %1066
    %v1072 = vadd.f32 %v1046, %v1061
    %v1073 = vadd.f32 %v1047, %v1063
    %v1074 = vadd.f32 %v1048, %v1065
    %v1075 = vadd.f32 %v1049, %v1067
    %v1076 = vld [vmem:[#allocation2 + $0x1] sm:$0xff]
    %v1077 = vld [vmem:[#allocation2 + $0x9] sm:$0xff]
    %v1078 = vld [vmem:[#allocation2 + $0x61] sm:$0xff]
    %v1079 = vld [vmem:[#allocation2 + $0x69] sm:$0xff]
    %s1080 = sld [smem:[#allocation4 + $0x27]]
    %v1081 = vstv %s1080
    %v1082 = vmul.f32 %v1076, %v1081
    %v1083 = vmul.f32 %v1077, %v1081
    %v1084 = vmul.f32 %v1078, %v1081
    %v1085 = vmul.f32 %v1079, %v1081
    %v1086 = vadd.f32 %v1072, %v1082
    %v1087 = vadd.f32 %v1073, %v1083
    %v1088 = vadd.f32 %v1074, %v1084
    %v1089 = vadd.f32 %v1075, %v1085
    %s1090 = sld [smem:[#allocation4 + $0x28]]
    %v1091 = vstv %s1090
    %v1092 = vmul.f32 %v1076, %v1091
    %v1093 = vmul.f32 %v1077, %v1091
    %v1094 = vmul.f32 %v1078, %v1091
    %v1095 = vmul.f32 %v1079, %v1091
    %1100 = vrot.lane.b32.xlu0 %v1092, 127
    %v1101 = vpop.permute.xlu0 %1100
    %1102 = vrot.lane.b32.xlu0 %v1093, 127
    %v1103 = vpop.permute.xlu0 %1102
    %1104 = vrot.lane.b32.xlu0 %v1094, 127
    %v1105 = vpop.permute.xlu0 %1104
    %1106 = vrot.lane.b32.xlu0 %v1095, 127
    %v1107 = vpop.permute.xlu0 %1106
    %v1112 = vadd.f32 %v1086, %v1101
    %v1113 = vadd.f32 %v1087, %v1103
    %v1114 = vadd.f32 %v1088, %v1105
    %v1115 = vadd.f32 %v1089, %v1107
    %s1116 = sld [smem:[#allocation4 + $0x29]]
    %v1117 = vstv %s1116
    %v1118 = vmul.f32 %v1076, %v1117
    %v1119 = vmul.f32 %v1077, %v1117
    %v1120 = vmul.f32 %v1078, %v1117
    %v1121 = vmul.f32 %v1079, %v1117
    %1126 = vrot.lane.b32.xlu0 %v1118, 126
    %v1127 = vpop.permute.xlu0 %1126
    %1128 = vrot.lane.b32.xlu0 %v1119, 126
    %v1129 = vpop.permute.xlu0 %1128
    %1130 = vrot.lane.b32.xlu0 %v1120, 126
    %v1131 = vpop.permute.xlu0 %1130
    %1132 = vrot.lane.b32.xlu0 %v1121, 126
    %v1133 = vpop.permute.xlu0 %1132
    %v1138 = vadd.f32 %v1112, %v1127
    %v1139 = vadd.f32 %v1113, %v1129
    %v1140 = vadd.f32 %v1114, %v1131
    %v1141 = vadd.f32 %v1115, %v1133
    %v1142 = vld [vmem:[#allocation2 + $0x2] sm:$0xff]
    %v1143 = vld [vmem:[#allocation2 + $0xa] sm:$0xff]
    %v1144 = vld [vmem:[#allocation2 + $0x62] sm:$0xff]
    %v1145 = vld [vmem:[#allocation2 + $0x6a] sm:$0xff]
    %s1146 = sld [smem:[#allocation4 + $0x2a]]
    %v1147 = vstv %s1146
    %v1148 = vmul.f32 %v1142, %v1147
    %v1149 = vmul.f32 %v1143, %v1147
    %v1150 = vmul.f32 %v1144, %v1147
    %v1151 = vmul.f32 %v1145, %v1147
    %v1152 = vadd.f32 %v1138, %v1148
    %v1153 = vadd.f32 %v1139, %v1149
    %v1154 = vadd.f32 %v1140, %v1150
    %v1155 = vadd.f32 %v1141, %v1151
    %s1156 = sld [smem:[#allocation4 + $0x2b]]
    %v1157 = vstv %s1156
    %v1158 = vmul.f32 %v1142, %v1157
    %v1159 = vmul.f32 %v1143, %v1157
    %v1160 = vmul.f32 %v1144, %v1157
    %v1161 = vmul.f32 %v1145, %v1157
    %1166 = vrot.lane.b32.xlu0 %v1158, 127
    %v1167 = vpop.permute.xlu0 %1166
    %1168 = vrot.lane.b32.xlu0 %v1159, 127
    %v1169 = vpop.permute.xlu0 %1168
    %1170 = vrot.lane.b32.xlu0 %v1160, 127
    %v1171 = vpop.permute.xlu0 %1170
    %1172 = vrot.lane.b32.xlu0 %v1161, 127
    %v1173 = vpop.permute.xlu0 %1172
    %v1178 = vadd.f32 %v1152, %v1167
    %v1179 = vadd.f32 %v1153, %v1169
    %v1180 = vadd.f32 %v1154, %v1171
    %v1181 = vadd.f32 %v1155, %v1173
    %s1182 = sld [smem:[#allocation4 + $0x2c]]
    %v1183 = vstv %s1182
    %v1184 = vmul.f32 %v1142, %v1183
    %v1185 = vmul.f32 %v1143, %v1183
    %v1186 = vmul.f32 %v1144, %v1183
    %v1187 = vmul.f32 %v1145, %v1183
    %1192 = vrot.lane.b32.xlu0 %v1184, 126
    %v1193 = vpop.permute.xlu0 %1192
    %1194 = vrot.lane.b32.xlu0 %v1185, 126
    %v1195 = vpop.permute.xlu0 %1194
    %1196 = vrot.lane.b32.xlu0 %v1186, 126
    %v1197 = vpop.permute.xlu0 %1196
    %1198 = vrot.lane.b32.xlu0 %v1187, 126
    %v1199 = vpop.permute.xlu0 %1198
    %v1204 = vadd.f32 %v1178, %v1193
    %v1205 = vadd.f32 %v1179, %v1195
    %v1206 = vadd.f32 %v1180, %v1197
    %v1207 = vadd.f32 %v1181, %v1199
    %v1208 = vld [vmem:[%s406] sm:$0xff]
    %v1209 = vld [vmem:[%s406 + $0x8] sm:$0xff]
    %v1210 = vld [vmem:[%s406 + $0x60] sm:$0xff]
    %v1211 = vld [vmem:[%s406 + $0x68] sm:$0xff]
    %s1212 = sld [smem:[#allocation4 + $0x2d]]
    %v1213 = vstv %s1212
    %v1214 = vmul.f32 %v1208, %v1213
    %v1215 = vmul.f32 %v1209, %v1213
    %v1216 = vmul.f32 %v1210, %v1213
    %v1217 = vmul.f32 %v1211, %v1213
    %s1218 = sld [smem:[#allocation4 + $0x2e]]
    %v1219 = vstv %s1218
    %v1220 = vmul.f32 %v1208, %v1219
    %v1221 = vmul.f32 %v1209, %v1219
    %v1222 = vmul.f32 %v1210, %v1219
    %v1223 = vmul.f32 %v1211, %v1219
    %1228 = vrot.lane.b32.xlu0 %v1220, 127
    %v1229 = vpop.permute.xlu0 %1228
    %1230 = vrot.lane.b32.xlu0 %v1221, 127
    %v1231 = vpop.permute.xlu0 %1230
    %1232 = vrot.lane.b32.xlu0 %v1222, 127
    %v1233 = vpop.permute.xlu0 %1232
    %1234 = vrot.lane.b32.xlu0 %v1223, 127
    %v1235 = vpop.permute.xlu0 %1234
    %v1240 = vadd.f32 %v1214, %v1229
    %v1241 = vadd.f32 %v1215, %v1231
    %v1242 = vadd.f32 %v1216, %v1233
    %v1243 = vadd.f32 %v1217, %v1235
    %s1244 = sld [smem:[#allocation4 + $0x2f]]
    %v1245 = vstv %s1244
    %v1246 = vmul.f32 %v1208, %v1245
    %v1247 = vmul.f32 %v1209, %v1245
    %v1248 = vmul.f32 %v1210, %v1245
    %v1249 = vmul.f32 %v1211, %v1245
    %1254 = vrot.lane.b32.xlu0 %v1246, 126
    %v1255 = vpop.permute.xlu0 %1254
    %1256 = vrot.lane.b32.xlu0 %v1247, 126
    %v1257 = vpop.permute.xlu0 %1256
    %1258 = vrot.lane.b32.xlu0 %v1248, 126
    %v1259 = vpop.permute.xlu0 %1258
    %1260 = vrot.lane.b32.xlu0 %v1249, 126
    %v1261 = vpop.permute.xlu0 %1260
    %v1266 = vadd.f32 %v1240, %v1255
    %v1267 = vadd.f32 %v1241, %v1257
    %v1268 = vadd.f32 %v1242, %v1259
    %v1269 = vadd.f32 %v1243, %v1261
    %v1270 = vld [vmem:[%s406 + $0x1] sm:$0xff]
    %v1271 = vld [vmem:[%s406 + $0x9] sm:$0xff]
    %v1272 = vld [vmem:[%s406 + $0x61] sm:$0xff]
    %v1273 = vld [vmem:[%s406 + $0x69] sm:$0xff]
    %s1274 = sld [smem:[#allocation4 + $0x30]]
    %v1275 = vstv %s1274
    %v1276 = vmul.f32 %v1270, %v1275
    %v1277 = vmul.f32 %v1271, %v1275
    %v1278 = vmul.f32 %v1272, %v1275
    %v1279 = vmul.f32 %v1273, %v1275
    %v1280 = vadd.f32 %v1266, %v1276
    %v1281 = vadd.f32 %v1267, %v1277
    %v1282 = vadd.f32 %v1268, %v1278
    %v1283 = vadd.f32 %v1269, %v1279
    %s1284 = sld [smem:[#allocation4 + $0x31]]
    %v1285 = vstv %s1284
    %v1286 = vmul.f32 %v1270, %v1285
    %v1287 = vmul.f32 %v1271, %v1285
    %v1288 = vmul.f32 %v1272, %v1285
    %v1289 = vmul.f32 %v1273, %v1285
    %1294 = vrot.lane.b32.xlu0 %v1286, 127
    %v1295 = vpop.permute.xlu0 %1294
    %1296 = vrot.lane.b32.xlu0 %v1287, 127
    %v1297 = vpop.permute.xlu0 %1296
    %1298 = vrot.lane.b32.xlu0 %v1288, 127
    %v1299 = vpop.permute.xlu0 %1298
    %1300 = vrot.lane.b32.xlu0 %v1289, 127
    %v1301 = vpop.permute.xlu0 %1300
    %v1306 = vadd.f32 %v1280, %v1295
    %v1307 = vadd.f32 %v1281, %v1297
    %v1308 = vadd.f32 %v1282, %v1299
    %v1309 = vadd.f32 %v1283, %v1301
    %s1310 = sld [smem:[#allocation4 + $0x32]]
    %v1311 = vstv %s1310
    %v1312 = vmul.f32 %v1270, %v1311
    %v1313 = vmul.f32 %v1271, %v1311
    %v1314 = vmul.f32 %v1272, %v1311
    %v1315 = vmul.f32 %v1273, %v1311
    %1320 = vrot.lane.b32.xlu0 %v1312, 126
    %v1321 = vpop.permute.xlu0 %1320
    %1322 = vrot.lane.b32.xlu0 %v1313, 126
    %v1323 = vpop.permute.xlu0 %1322
    %1324 = vrot.lane.b32.xlu0 %v1314, 126
    %v1325 = vpop.permute.xlu0 %1324
    %1326 = vrot.lane.b32.xlu0 %v1315, 126
    %v1327 = vpop.permute.xlu0 %1326
    %v1332 = vadd.f32 %v1306, %v1321
    %v1333 = vadd.f32 %v1307, %v1323
    %v1334 = vadd.f32 %v1308, %v1325
    %v1335 = vadd.f32 %v1309, %v1327
    %v1336 = vld [vmem:[%s406 + $0x2] sm:$0xff]
    %v1337 = vld [vmem:[%s406 + $0xa] sm:$0xff]
    %v1338 = vld [vmem:[%s406 + $0x62] sm:$0xff]
    %v1339 = vld [vmem:[%s406 + $0x6a] sm:$0xff]
    %s1340 = sld [smem:[#allocation4 + $0x33]]
    %v1341 = vstv %s1340
    %v1342 = vmul.f32 %v1336, %v1341
    %v1343 = vmul.f32 %v1337, %v1341
    %v1344 = vmul.f32 %v1338, %v1341
    %v1345 = vmul.f32 %v1339, %v1341
    %v1346 = vadd.f32 %v1332, %v1342
    %v1347 = vadd.f32 %v1333, %v1343
    %v1348 = vadd.f32 %v1334, %v1344
    %v1349 = vadd.f32 %v1335, %v1345
    %s1350 = sld [smem:[#allocation4 + $0x34]]
    %v1351 = vstv %s1350
    %v1352 = vmul.f32 %v1336, %v1351
    %v1353 = vmul.f32 %v1337, %v1351
    %v1354 = vmul.f32 %v1338, %v1351
    %v1355 = vmul.f32 %v1339, %v1351
    %1360 = vrot.lane.b32.xlu0 %v1352, 127
    %v1361 = vpop.permute.xlu0 %1360
    %1362 = vrot.lane.b32.xlu0 %v1353, 127
    %v1363 = vpop.permute.xlu0 %1362
    %1364 = vrot.lane.b32.xlu0 %v1354, 127
    %v1365 = vpop.permute.xlu0 %1364
    %1366 = vrot.lane.b32.xlu0 %v1355, 127
    %v1367 = vpop.permute.xlu0 %1366
    %v1372 = vadd.f32 %v1346, %v1361
    %v1373 = vadd.f32 %v1347, %v1363
    %v1374 = vadd.f32 %v1348, %v1365
    %v1375 = vadd.f32 %v1349, %v1367
    %s1376 = sld [smem:[#allocation4 + $0x35]]
    %v1377 = vstv %s1376
    %v1378 = vmul.f32 %v1336, %v1377
    %v1379 = vmul.f32 %v1337, %v1377
    %v1380 = vmul.f32 %v1338, %v1377
    %v1381 = vmul.f32 %v1339, %v1377
    %1386 = vrot.lane.b32.xlu0 %v1378, 126
    %v1387 = vpop.permute.xlu0 %1386
    %1388 = vrot.lane.b32.xlu0 %v1379, 126
    %v1389 = vpop.permute.xlu0 %1388
    %1390 = vrot.lane.b32.xlu0 %v1380, 126
    %v1391 = vpop.permute.xlu0 %1390
    %1392 = vrot.lane.b32.xlu0 %v1381, 126
    %v1393 = vpop.permute.xlu0 %1392
    %v1398 = vadd.f32 %v1372, %v1387
    %v1399 = vadd.f32 %v1373, %v1389
    %v1400 = vadd.f32 %v1374, %v1391
    %v1401 = vadd.f32 %v1375, %v1393
    %v1402 = vld [vmem:[%s601] sm:$0xff]
    %v1403 = vld [vmem:[%s601 + $0x8] sm:$0xff]
    %v1404 = vld [vmem:[%s601 + $0x60] sm:$0xff]
    %v1405 = vld [vmem:[%s601 + $0x68] sm:$0xff]
    %s1406 = sld [smem:[#allocation4 + $0x36]]
    %v1407 = vstv %s1406
    %v1408 = vmul.f32 %v1402, %v1407
    %v1409 = vmul.f32 %v1403, %v1407
    %v1410 = vmul.f32 %v1404, %v1407
    %v1411 = vmul.f32 %v1405, %v1407
    %s1412 = sld [smem:[#allocation4 + $0x37]]
    %v1413 = vstv %s1412
    %v1414 = vmul.f32 %v1402, %v1413
    %v1415 = vmul.f32 %v1403, %v1413
    %v1416 = vmul.f32 %v1404, %v1413
    %v1417 = vmul.f32 %v1405, %v1413
    %1422 = vrot.lane.b32.xlu0 %v1414, 127
    %v1423 = vpop.permute.xlu0 %1422
    %1424 = vrot.lane.b32.xlu0 %v1415, 127
    %v1425 = vpop.permute.xlu0 %1424
    %1426 = vrot.lane.b32.xlu0 %v1416, 127
    %v1427 = vpop.permute.xlu0 %1426
    %1428 = vrot.lane.b32.xlu0 %v1417, 127
    %v1429 = vpop.permute.xlu0 %1428
    %v1434 = vadd.f32 %v1408, %v1423
    %v1435 = vadd.f32 %v1409, %v1425
    %v1436 = vadd.f32 %v1410, %v1427
    %v1437 = vadd.f32 %v1411, %v1429
    %s1438 = sld [smem:[#allocation4 + $0x38]]
    %v1439 = vstv %s1438
    %v1440 = vmul.f32 %v1402, %v1439
    %v1441 = vmul.f32 %v1403, %v1439
    %v1442 = vmul.f32 %v1404, %v1439
    %v1443 = vmul.f32 %v1405, %v1439
    %1448 = vrot.lane.b32.xlu0 %v1440, 126
    %v1449 = vpop.permute.xlu0 %1448
    %1450 = vrot.lane.b32.xlu0 %v1441, 126
    %v1451 = vpop.permute.xlu0 %1450
    %1452 = vrot.lane.b32.xlu0 %v1442, 126
    %v1453 = vpop.permute.xlu0 %1452
    %1454 = vrot.lane.b32.xlu0 %v1443, 126
    %v1455 = vpop.permute.xlu0 %1454
    %v1460 = vadd.f32 %v1434, %v1449
    %v1461 = vadd.f32 %v1435, %v1451
    %v1462 = vadd.f32 %v1436, %v1453
    %v1463 = vadd.f32 %v1437, %v1455
    %v1464 = vld [vmem:[%s601 + $0x1] sm:$0xff]
    %v1465 = vld [vmem:[%s601 + $0x9] sm:$0xff]
    %v1466 = vld [vmem:[%s601 + $0x61] sm:$0xff]
    %v1467 = vld [vmem:[%s601 + $0x69] sm:$0xff]
    %s1468 = sld [smem:[#allocation4 + $0x39]]
    %v1469 = vstv %s1468
    %v1470 = vmul.f32 %v1464, %v1469
    %v1471 = vmul.f32 %v1465, %v1469
    %v1472 = vmul.f32 %v1466, %v1469
    %v1473 = vmul.f32 %v1467, %v1469
    %v1474 = vadd.f32 %v1460, %v1470
    %v1475 = vadd.f32 %v1461, %v1471
    %v1476 = vadd.f32 %v1462, %v1472
    %v1477 = vadd.f32 %v1463, %v1473
    %s1478 = sld [smem:[#allocation4 + $0x3a]]
    %v1479 = vstv %s1478
    %v1480 = vmul.f32 %v1464, %v1479
    %v1481 = vmul.f32 %v1465, %v1479
    %v1482 = vmul.f32 %v1466, %v1479
    %v1483 = vmul.f32 %v1467, %v1479
    %1488 = vrot.lane.b32.xlu0 %v1480, 127
    %v1489 = vpop.permute.xlu0 %1488
    %1490 = vrot.lane.b32.xlu0 %v1481, 127
    %v1491 = vpop.permute.xlu0 %1490
    %1492 = vrot.lane.b32.xlu0 %v1482, 127
    %v1493 = vpop.permute.xlu0 %1492
    %1494 = vrot.lane.b32.xlu0 %v1483, 127
    %v1495 = vpop.permute.xlu0 %1494
    %v1500 = vadd.f32 %v1474, %v1489
    %v1501 = vadd.f32 %v1475, %v1491
    %v1502 = vadd.f32 %v1476, %v1493
    %v1503 = vadd.f32 %v1477, %v1495
    %s1504 = sld [smem:[#allocation4 + $0x3b]]
    %v1505 = vstv %s1504
    %v1506 = vmul.f32 %v1464, %v1505
    %v1507 = vmul.f32 %v1465, %v1505
    %v1508 = vmul.f32 %v1466, %v1505
    %v1509 = vmul.f32 %v1467, %v1505
    %1514 = vrot.lane.b32.xlu0 %v1506, 126
    %v1515 = vpop.permute.xlu0 %1514
    %1516 = vrot.lane.b32.xlu0 %v1507, 126
    %v1517 = vpop.permute.xlu0 %1516
    %1518 = vrot.lane.b32.xlu0 %v1508, 126
    %v1519 = vpop.permute.xlu0 %1518
    %1520 = vrot.lane.b32.xlu0 %v1509, 126
    %v1521 = vpop.permute.xlu0 %1520
    %v1526 = vadd.f32 %v1500, %v1515
    %v1527 = vadd.f32 %v1501, %v1517
    %v1528 = vadd.f32 %v1502, %v1519
    %v1529 = vadd.f32 %v1503, %v1521
    %v1530 = vld [vmem:[%s601 + $0x2] sm:$0xff]
    %v1531 = vld [vmem:[%s601 + $0xa] sm:$0xff]
    %v1532 = vld [vmem:[%s601 + $0x62] sm:$0xff]
    %v1533 = vld [vmem:[%s601 + $0x6a] sm:$0xff]
    %s1534 = sld [smem:[#allocation4 + $0x3c]]
    %v1535 = vstv %s1534
    %v1536 = vmul.f32 %v1530, %v1535
    %v1537 = vmul.f32 %v1531, %v1535
    %v1538 = vmul.f32 %v1532, %v1535
    %v1539 = vmul.f32 %v1533, %v1535
    %v1540 = vadd.f32 %v1526, %v1536
    %v1541 = vadd.f32 %v1527, %v1537
    %v1542 = vadd.f32 %v1528, %v1538
    %v1543 = vadd.f32 %v1529, %v1539
    %s1544 = sld [smem:[#allocation4 + $0x3d]]
    %v1545 = vstv %s1544
    %v1546 = vmul.f32 %v1530, %v1545
    %v1547 = vmul.f32 %v1531, %v1545
    %v1548 = vmul.f32 %v1532, %v1545
    %v1549 = vmul.f32 %v1533, %v1545
    %1554 = vrot.lane.b32.xlu0 %v1546, 127
    %v1555 = vpop.permute.xlu0 %1554
    %1556 = vrot.lane.b32.xlu0 %v1547, 127
    %v1557 = vpop.permute.xlu0 %1556
    %1558 = vrot.lane.b32.xlu0 %v1548, 127
    %v1559 = vpop.permute.xlu0 %1558
    %1560 = vrot.lane.b32.xlu0 %v1549, 127
    %v1561 = vpop.permute.xlu0 %1560
    %v1566 = vadd.f32 %v1540, %v1555
    %v1567 = vadd.f32 %v1541, %v1557
    %v1568 = vadd.f32 %v1542, %v1559
    %v1569 = vadd.f32 %v1543, %v1561
    %s1570 = sld [smem:[#allocation4 + $0x3e]]
    %v1571 = vstv %s1570
    %v1572 = vmul.f32 %v1530, %v1571
    %v1573 = vmul.f32 %v1531, %v1571
    %v1574 = vmul.f32 %v1532, %v1571
    %v1575 = vmul.f32 %v1533, %v1571
    %1580 = vrot.lane.b32.xlu0 %v1572, 126
    %v1581 = vpop.permute.xlu0 %1580
    %1582 = vrot.lane.b32.xlu0 %v1573, 126
    %v1583 = vpop.permute.xlu0 %1582
    %1584 = vrot.lane.b32.xlu0 %v1574, 126
    %v1585 = vpop.permute.xlu0 %1584
    %1586 = vrot.lane.b32.xlu0 %v1575, 126
    %v1587 = vpop.permute.xlu0 %1586
    %v1592 = vadd.f32 %v1566, %v1581
    %v1593 = vadd.f32 %v1567, %v1583
    %v1594 = vadd.f32 %v1568, %v1585
    %v1595 = vadd.f32 %v1569, %v1587
    %v1596 = vld [vmem:[%s796] sm:$0xff]
    %v1597 = vld [vmem:[%s796 + $0x8] sm:$0xff]
    %v1598 = vld [vmem:[%s796 + $0x60] sm:$0xff]
    %v1599 = vld [vmem:[%s796 + $0x68] sm:$0xff]
    %s1600 = sld [smem:[#allocation4 + $0x3f]]
    %v1601 = vstv %s1600
    %v1602 = vmul.f32 %v1596, %v1601
    %v1603 = vmul.f32 %v1597, %v1601
    %v1604 = vmul.f32 %v1598, %v1601
    %v1605 = vmul.f32 %v1599, %v1601
    %s1606 = sld [smem:[#allocation4 + $0x40]]
    %v1607 = vstv %s1606
    %v1608 = vmul.f32 %v1596, %v1607
    %v1609 = vmul.f32 %v1597, %v1607
    %v1610 = vmul.f32 %v1598, %v1607
    %v1611 = vmul.f32 %v1599, %v1607
    %1616 = vrot.lane.b32.xlu0 %v1608, 127
    %v1617 = vpop.permute.xlu0 %1616
    %1618 = vrot.lane.b32.xlu0 %v1609, 127
    %v1619 = vpop.permute.xlu0 %1618
    %1620 = vrot.lane.b32.xlu0 %v1610, 127
    %v1621 = vpop.permute.xlu0 %1620
    %1622 = vrot.lane.b32.xlu0 %v1611, 127
    %v1623 = vpop.permute.xlu0 %1622
    %v1628 = vadd.f32 %v1602, %v1617
    %v1629 = vadd.f32 %v1603, %v1619
    %v1630 = vadd.f32 %v1604, %v1621
    %v1631 = vadd.f32 %v1605, %v1623
    %s1632 = sld [smem:[#allocation4 + $0x41]]
    %v1633 = vstv %s1632
    %v1634 = vmul.f32 %v1596, %v1633
    %v1635 = vmul.f32 %v1597, %v1633
    %v1636 = vmul.f32 %v1598, %v1633
    %v1637 = vmul.f32 %v1599, %v1633
    %1642 = vrot.lane.b32.xlu0 %v1634, 126
    %v1643 = vpop.permute.xlu0 %1642
    %1644 = vrot.lane.b32.xlu0 %v1635, 126
    %v1645 = vpop.permute.xlu0 %1644
    %1646 = vrot.lane.b32.xlu0 %v1636, 126
    %v1647 = vpop.permute.xlu0 %1646
    %1648 = vrot.lane.b32.xlu0 %v1637, 126
    %v1649 = vpop.permute.xlu0 %1648
    %v1654 = vadd.f32 %v1628, %v1643
    %v1655 = vadd.f32 %v1629, %v1645
    %v1656 = vadd.f32 %v1630, %v1647
    %v1657 = vadd.f32 %v1631, %v1649
    %v1658 = vld [vmem:[%s796 + $0x1] sm:$0xff]
    %v1659 = vld [vmem:[%s796 + $0x9] sm:$0xff]
    %v1660 = vld [vmem:[%s796 + $0x61] sm:$0xff]
    %v1661 = vld [vmem:[%s796 + $0x69] sm:$0xff]
    %s1662 = sld [smem:[#allocation4 + $0x42]]
    %v1663 = vstv %s1662
    %v1664 = vmul.f32 %v1658, %v1663
    %v1665 = vmul.f32 %v1659, %v1663
    %v1666 = vmul.f32 %v1660, %v1663
    %v1667 = vmul.f32 %v1661, %v1663
    %v1668 = vadd.f32 %v1654, %v1664
    %v1669 = vadd.f32 %v1655, %v1665
    %v1670 = vadd.f32 %v1656, %v1666
    %v1671 = vadd.f32 %v1657, %v1667
    %s1672 = sld [smem:[#allocation4 + $0x43]]
    %v1673 = vstv %s1672
    %v1674 = vmul.f32 %v1658, %v1673
    %v1675 = vmul.f32 %v1659, %v1673
    %v1676 = vmul.f32 %v1660, %v1673
    %v1677 = vmul.f32 %v1661, %v1673
    %1682 = vrot.lane.b32.xlu0 %v1674, 127
    %v1683 = vpop.permute.xlu0 %1682
    %1684 = vrot.lane.b32.xlu0 %v1675, 127
    %v1685 = vpop.permute.xlu0 %1684
    %1686 = vrot.lane.b32.xlu0 %v1676, 127
    %v1687 = vpop.permute.xlu0 %1686
    %1688 = vrot.lane.b32.xlu0 %v1677, 127
    %v1689 = vpop.permute.xlu0 %1688
    %v1694 = vadd.f32 %v1668, %v1683
    %v1695 = vadd.f32 %v1669, %v1685
    %v1696 = vadd.f32 %v1670, %v1687
    %v1697 = vadd.f32 %v1671, %v1689
    %s1698 = sld [smem:[#allocation4 + $0x44]]
    %v1699 = vstv %s1698
    %v1700 = vmul.f32 %v1658, %v1699
    %v1701 = vmul.f32 %v1659, %v1699
    %v1702 = vmul.f32 %v1660, %v1699
    %v1703 = vmul.f32 %v1661, %v1699
    %1708 = vrot.lane.b32.xlu0 %v1700, 126
    %v1709 = vpop.permute.xlu0 %1708
    %1710 = vrot.lane.b32.xlu0 %v1701, 126
    %v1711 = vpop.permute.xlu0 %1710
    %1712 = vrot.lane.b32.xlu0 %v1702, 126
    %v1713 = vpop.permute.xlu0 %1712
    %1714 = vrot.lane.b32.xlu0 %v1703, 126
    %v1715 = vpop.permute.xlu0 %1714
    %v1720 = vadd.f32 %v1694, %v1709
    %v1721 = vadd.f32 %v1695, %v1711
    %v1722 = vadd.f32 %v1696, %v1713
    %v1723 = vadd.f32 %v1697, %v1715
    %v1724 = vld [vmem:[%s796 + $0x2] sm:$0xff]
    %v1725 = vld [vmem:[%s796 + $0xa] sm:$0xff]
    %v1726 = vld [vmem:[%s796 + $0x62] sm:$0xff]
    %v1727 = vld [vmem:[%s796 + $0x6a] sm:$0xff]
    %s1728 = sld [smem:[#allocation4 + $0x45]]
    %v1729 = vstv %s1728
    %v1730 = vmul.f32 %v1724, %v1729
    %v1731 = vmul.f32 %v1725, %v1729
    %v1732 = vmul.f32 %v1726, %v1729
    %v1733 = vmul.f32 %v1727, %v1729
    %v1734 = vadd.f32 %v1720, %v1730
    %v1735 = vadd.f32 %v1721, %v1731
    %v1736 = vadd.f32 %v1722, %v1732
    %v1737 = vadd.f32 %v1723, %v1733
    %s1738 = sld [smem:[#allocation4 + $0x46]]
    %v1739 = vstv %s1738
    %v1740 = vmul.f32 %v1724, %v1739
    %v1741 = vmul.f32 %v1725, %v1739
    %v1742 = vmul.f32 %v1726, %v1739
    %v1743 = vmul.f32 %v1727, %v1739
    %1748 = vrot.lane.b32.xlu0 %v1740, 127
    %v1749 = vpop.permute.xlu0 %1748
    %1750 = vrot.lane.b32.xlu0 %v1741, 127
    %v1751 = vpop.permute.xlu0 %1750
    %1752 = vrot.lane.b32.xlu0 %v1742, 127
    %v1753 = vpop.permute.xlu0 %1752
    %1754 = vrot.lane.b32.xlu0 %v1743, 127
    %v1755 = vpop.permute.xlu0 %1754
    %v1760 = vadd.f32 %v1734, %v1749
    %v1761 = vadd.f32 %v1735, %v1751
    %v1762 = vadd.f32 %v1736, %v1753
    %v1763 = vadd.f32 %v1737, %v1755
    %s1764 = sld [smem:[#allocation4 + $0x47]]
    %v1765 = vstv %s1764
    %v1766 = vmul.f32 %v1724, %v1765
    %v1767 = vmul.f32 %v1725, %v1765
    %v1768 = vmul.f32 %v1726, %v1765
    %v1769 = vmul.f32 %v1727, %v1765
    %1774 = vrot.lane.b32.xlu0 %v1766, 126
    %v1775 = vpop.permute.xlu0 %1774
    %1776 = vrot.lane.b32.xlu0 %v1767, 126
    %v1777 = vpop.permute.xlu0 %1776
    %1778 = vrot.lane.b32.xlu0 %v1768, 126
    %v1779 = vpop.permute.xlu0 %1778
    %1780 = vrot.lane.b32.xlu0 %v1769, 126
    %v1781 = vpop.permute.xlu0 %1780
    %v1786 = vadd.f32 %v1760, %v1775
    %v1787 = vadd.f32 %v1761, %v1777
    %v1788 = vadd.f32 %v1762, %v1779
    %v1789 = vadd.f32 %v1763, %v1781
    %v1790 = vadd.f32 %v1204, %v1398
    %v1791 = vadd.f32 %v1205, %v1399
    %v1792 = vadd.f32 %v1206, %v1400
    %v1793 = vadd.f32 %v1207, %v1401
    %v1794 = vadd.f32 %v1592, %v1786
    %v1795 = vadd.f32 %v1593, %v1787
    %v1796 = vadd.f32 %v1594, %v1788
    %v1797 = vadd.f32 %v1595, %v1789
    %v1798 = vadd.f32 %v1790, %v1794
    %v1799 = vadd.f32 %v1791, %v1795
    %v1800 = vadd.f32 %v1792, %v1796
    %v1801 = vadd.f32 %v1793, %v1797
    %s1802 = sld [smem:[#allocation7 + $0x1]]
    %v1803 = vstv %s1802
    %v1804 = vadd.f32 %v1798, %v1803
    %v1805 = vadd.f32 %v1799, %v1803
    %v1806 = vadd.f32 %v1800, %v1803
    %v1807 = vadd.f32 %v1801, %v1803
    %s1808 = scalar_lea.vmem [#allocation3], 24
    %1809 = vst.msk [vmem:[%s1808] sm:$0xff] %vm1009, %v1804
    %1810 = vst.msk [vmem:[%s1808 + $0x8] sm:$0xff] %vm1009, %v1805
    %1811 = vst.msk [vmem:[%s1808 + $0x48] sm:$0xff] %vm1009, %v1806
    %1812 = vst.msk [vmem:[%s1808 + $0x50] sm:$0xff] %vm1009, %v1807
    %v1813 = vld [vmem:[#allocation2] sm:$0xff]
    %v1814 = vld [vmem:[#allocation2 + $0x8] sm:$0xff]
    %v1815 = vld [vmem:[#allocation2 + $0x60] sm:$0xff]
    %v1816 = vld [vmem:[#allocation2 + $0x68] sm:$0xff]
    %s1817 = sld [smem:[#allocation4 + $0x48]]
    %v1818 = vstv %s1817
    %v1819 = vmul.f32 %v1813, %v1818
    %v1820 = vmul.f32 %v1814, %v1818
    %v1821 = vmul.f32 %v1815, %v1818
    %v1822 = vmul.f32 %v1816, %v1818
    %s1823 = sld [smem:[#allocation4 + $0x49]]
    %v1824 = vstv %s1823
    %v1825 = vmul.f32 %v1813, %v1824
    %v1826 = vmul.f32 %v1814, %v1824
    %v1827 = vmul.f32 %v1815, %v1824
    %v1828 = vmul.f32 %v1816, %v1824
    %1833 = vrot.lane.b32.xlu0 %v1825, 127
    %v1834 = vpop.permute.xlu0 %1833
    %1835 = vrot.lane.b32.xlu0 %v1826, 127
    %v1836 = vpop.permute.xlu0 %1835
    %1837 = vrot.lane.b32.xlu0 %v1827, 127
    %v1838 = vpop.permute.xlu0 %1837
    %1839 = vrot.lane.b32.xlu0 %v1828, 127
    %v1840 = vpop.permute.xlu0 %1839
    %v1845 = vadd.f32 %v1819, %v1834
    %v1846 = vadd.f32 %v1820, %v1836
    %v1847 = vadd.f32 %v1821, %v1838
    %v1848 = vadd.f32 %v1822, %v1840
    %s1849 = sld [smem:[#allocation4 + $0x4a]]
    %v1850 = vstv %s1849
    %v1851 = vmul.f32 %v1813, %v1850
    %v1852 = vmul.f32 %v1814, %v1850
    %v1853 = vmul.f32 %v1815, %v1850
    %v1854 = vmul.f32 %v1816, %v1850
    %1859 = vrot.lane.b32.xlu0 %v1851, 126
    %v1860 = vpop.permute.xlu0 %1859
    %1861 = vrot.lane.b32.xlu0 %v1852, 126
    %v1862 = vpop.permute.xlu0 %1861
    %1863 = vrot.lane.b32.xlu0 %v1853, 126
    %v1864 = vpop.permute.xlu0 %1863
    %1865 = vrot.lane.b32.xlu0 %v1854, 126
    %v1866 = vpop.permute.xlu0 %1865
    %v1871 = vadd.f32 %v1845, %v1860
    %v1872 = vadd.f32 %v1846, %v1862
    %v1873 = vadd.f32 %v1847, %v1864
    %v1874 = vadd.f32 %v1848, %v1866
    %v1875 = vld [vmem:[#allocation2 + $0x1] sm:$0xff]
    %v1876 = vld [vmem:[#allocation2 + $0x9] sm:$0xff]
    %v1877 = vld [vmem:[#allocation2 + $0x61] sm:$0xff]
    %v1878 = vld [vmem:[#allocation2 + $0x69] sm:$0xff]
    %s1879 = sld [smem:[#allocation4 + $0x4b]]
    %v1880 = vstv %s1879
    %v1881 = vmul.f32 %v1875, %v1880
    %v1882 = vmul.f32 %v1876, %v1880
    %v1883 = vmul.f32 %v1877, %v1880
    %v1884 = vmul.f32 %v1878, %v1880
    %v1885 = vadd.f32 %v1871, %v1881
    %v1886 = vadd.f32 %v1872, %v1882
    %v1887 = vadd.f32 %v1873, %v1883
    %v1888 = vadd.f32 %v1874, %v1884
    %s1889 = sld [smem:[#allocation4 + $0x4c]]
    %v1890 = vstv %s1889
    %v1891 = vmul.f32 %v1875, %v1890
    %v1892 = vmul.f32 %v1876, %v1890
    %v1893 = vmul.f32 %v1877, %v1890
    %v1894 = vmul.f32 %v1878, %v1890
    %1899 = vrot.lane.b32.xlu0 %v1891, 127
    %v1900 = vpop.permute.xlu0 %1899
    %1901 = vrot.lane.b32.xlu0 %v1892, 127
    %v1902 = vpop.permute.xlu0 %1901
    %1903 = vrot.lane.b32.xlu0 %v1893, 127
    %v1904 = vpop.permute.xlu0 %1903
    %1905 = vrot.lane.b32.xlu0 %v1894, 127
    %v1906 = vpop.permute.xlu0 %1905
    %v1911 = vadd.f32 %v1885, %v1900
    %v1912 = vadd.f32 %v1886, %v1902
    %v1913 = vadd.f32 %v1887, %v1904
    %v1914 = vadd.f32 %v1888, %v1906
    %s1915 = sld [smem:[#allocation4 + $0x4d]]
    %v1916 = vstv %s1915
    %v1917 = vmul.f32 %v1875, %v1916
    %v1918 = vmul.f32 %v1876, %v1916
    %v1919 = vmul.f32 %v1877, %v1916
    %v1920 = vmul.f32 %v1878, %v1916
    %1925 = vrot.lane.b32.xlu0 %v1917, 126
    %v1926 = vpop.permute.xlu0 %1925
    %1927 = vrot.lane.b32.xlu0 %v1918, 126
    %v1928 = vpop.permute.xlu0 %1927
    %1929 = vrot.lane.b32.xlu0 %v1919, 126
    %v1930 = vpop.permute.xlu0 %1929
    %1931 = vrot.lane.b32.xlu0 %v1920, 126
    %v1932 = vpop.permute.xlu0 %1931
    %v1937 = vadd.f32 %v1911, %v1926
    %v1938 = vadd.f32 %v1912, %v1928
    %v1939 = vadd.f32 %v1913, %v1930
    %v1940 = vadd.f32 %v1914, %v1932
    %v1941 = vld [vmem:[#allocation2 + $0x2] sm:$0xff]
    %v1942 = vld [vmem:[#allocation2 + $0xa] sm:$0xff]
    %v1943 = vld [vmem:[#allocation2 + $0x62] sm:$0xff]
    %v1944 = vld [vmem:[#allocation2 + $0x6a] sm:$0xff]
    %s1945 = sld [smem:[#allocation4 + $0x4e]]
    %v1946 = vstv %s1945
    %v1947 = vmul.f32 %v1941, %v1946
    %v1948 = vmul.f32 %v1942, %v1946
    %v1949 = vmul.f32 %v1943, %v1946
    %v1950 = vmul.f32 %v1944, %v1946
    %v1951 = vadd.f32 %v1937, %v1947
    %v1952 = vadd.f32 %v1938, %v1948
    %v1953 = vadd.f32 %v1939, %v1949
    %v1954 = vadd.f32 %v1940, %v1950
    %s1955 = sld [smem:[#allocation4 + $0x4f]]
    %v1956 = vstv %s1955
    %v1957 = vmul.f32 %v1941, %v1956
    %v1958 = vmul.f32 %v1942, %v1956
    %v1959 = vmul.f32 %v1943, %v1956
    %v1960 = vmul.f32 %v1944, %v1956
    %1965 = vrot.lane.b32.xlu0 %v1957, 127
    %v1966 = vpop.permute.xlu0 %1965
    %1967 = vrot.lane.b32.xlu0 %v1958, 127
    %v1968 = vpop.permute.xlu0 %1967
    %1969 = vrot.lane.b32.xlu0 %v1959, 127
    %v1970 = vpop.permute.xlu0 %1969
    %1971 = vrot.lane.b32.xlu0 %v1960, 127
    %v1972 = vpop.permute.xlu0 %1971
    %v1977 = vadd.f32 %v1951, %v1966
    %v1978 = vadd.f32 %v1952, %v1968
    %v1979 = vadd.f32 %v1953, %v1970
    %v1980 = vadd.f32 %v1954, %v1972
    %s1981 = sld [smem:[#allocation4 + $0x50]]
    %v1982 = vstv %s1981
    %v1983 = vmul.f32 %v1941, %v1982
    %v1984 = vmul.f32 %v1942, %v1982
    %v1985 = vmul.f32 %v1943, %v1982
    %v1986 = vmul.f32 %v1944, %v1982
    %1991 = vrot.lane.b32.xlu0 %v1983, 126
    %v1992 = vpop.permute.xlu0 %1991
    %1993 = vrot.lane.b32.xlu0 %v1984, 126
    %v1994 = vpop.permute.xlu0 %1993
    %1995 = vrot.lane.b32.xlu0 %v1985, 126
    %v1996 = vpop.permute.xlu0 %1995
    %1997 = vrot.lane.b32.xlu0 %v1986, 126
    %v1998 = vpop.permute.xlu0 %1997
    %v2003 = vadd.f32 %v1977, %v1992
    %v2004 = vadd.f32 %v1978, %v1994
    %v2005 = vadd.f32 %v1979, %v1996
    %v2006 = vadd.f32 %v1980, %v1998
    %v2007 = vld [vmem:[%s406] sm:$0xff]
    %v2008 = vld [vmem:[%s406 + $0x8] sm:$0xff]
    %v2009 = vld [vmem:[%s406 + $0x60] sm:$0xff]
    %v2010 = vld [vmem:[%s406 + $0x68] sm:$0xff]
    %s2011 = sld [smem:[#allocation4 + $0x51]]
    %v2012 = vstv %s2011
    %v2013 = vmul.f32 %v2007, %v2012
    %v2014 = vmul.f32 %v2008, %v2012
    %v2015 = vmul.f32 %v2009, %v2012
    %v2016 = vmul.f32 %v2010, %v2012
    %s2017 = sld [smem:[#allocation4 + $0x52]]
    %v2018 = vstv %s2017
    %v2019 = vmul.f32 %v2007, %v2018
    %v2020 = vmul.f32 %v2008, %v2018
    %v2021 = vmul.f32 %v2009, %v2018
    %v2022 = vmul.f32 %v2010, %v2018
    %2027 = vrot.lane.b32.xlu0 %v2019, 127
    %v2028 = vpop.permute.xlu0 %2027
    %2029 = vrot.lane.b32.xlu0 %v2020, 127
    %v2030 = vpop.permute.xlu0 %2029
    %2031 = vrot.lane.b32.xlu0 %v2021, 127
    %v2032 = vpop.permute.xlu0 %2031
    %2033 = vrot.lane.b32.xlu0 %v2022, 127
    %v2034 = vpop.permute.xlu0 %2033
    %v2039 = vadd.f32 %v2013, %v2028
    %v2040 = vadd.f32 %v2014, %v2030
    %v2041 = vadd.f32 %v2015, %v2032
    %v2042 = vadd.f32 %v2016, %v2034
    %s2043 = sld [smem:[#allocation4 + $0x53]]
    %v2044 = vstv %s2043
    %v2045 = vmul.f32 %v2007, %v2044
    %v2046 = vmul.f32 %v2008, %v2044
    %v2047 = vmul.f32 %v2009, %v2044
    %v2048 = vmul.f32 %v2010, %v2044
    %2053 = vrot.lane.b32.xlu0 %v2045, 126
    %v2054 = vpop.permute.xlu0 %2053
    %2055 = vrot.lane.b32.xlu0 %v2046, 126
    %v2056 = vpop.permute.xlu0 %2055
    %2057 = vrot.lane.b32.xlu0 %v2047, 126
    %v2058 = vpop.permute.xlu0 %2057
    %2059 = vrot.lane.b32.xlu0 %v2048, 126
    %v2060 = vpop.permute.xlu0 %2059
    %v2065 = vadd.f32 %v2039, %v2054
    %v2066 = vadd.f32 %v2040, %v2056
    %v2067 = vadd.f32 %v2041, %v2058
    %v2068 = vadd.f32 %v2042, %v2060
    %v2069 = vld [vmem:[%s406 + $0x1] sm:$0xff]
    %v2070 = vld [vmem:[%s406 + $0x9] sm:$0xff]
    %v2071 = vld [vmem:[%s406 + $0x61] sm:$0xff]
    %v2072 = vld [vmem:[%s406 + $0x69] sm:$0xff]
    %s2073 = sld [smem:[#allocation4 + $0x54]]
    %v2074 = vstv %s2073
    %v2075 = vmul.f32 %v2069, %v2074
    %v2076 = vmul.f32 %v2070, %v2074
    %v2077 = vmul.f32 %v2071, %v2074
    %v2078 = vmul.f32 %v2072, %v2074
    %v2079 = vadd.f32 %v2065, %v2075
    %v2080 = vadd.f32 %v2066, %v2076
    %v2081 = vadd.f32 %v2067, %v2077
    %v2082 = vadd.f32 %v2068, %v2078
    %s2083 = sld [smem:[#allocation4 + $0x55]]
    %v2084 = vstv %s2083
    %v2085 = vmul.f32 %v2069, %v2084
    %v2086 = vmul.f32 %v2070, %v2084
    %v2087 = vmul.f32 %v2071, %v2084
    %v2088 = vmul.f32 %v2072, %v2084
    %2093 = vrot.lane.b32.xlu0 %v2085, 127
    %v2094 = vpop.permute.xlu0 %2093
    %2095 = vrot.lane.b32.xlu0 %v2086, 127
    %v2096 = vpop.permute.xlu0 %2095
    %2097 = vrot.lane.b32.xlu0 %v2087, 127
    %v2098 = vpop.permute.xlu0 %2097
    %2099 = vrot.lane.b32.xlu0 %v2088, 127
    %v2100 = vpop.permute.xlu0 %2099
    %v2105 = vadd.f32 %v2079, %v2094
    %v2106 = vadd.f32 %v2080, %v2096
    %v2107 = vadd.f32 %v2081, %v2098
    %v2108 = vadd.f32 %v2082, %v2100
    %s2109 = sld [smem:[#allocation4 + $0x56]]
    %v2110 = vstv %s2109
    %v2111 = vmul.f32 %v2069, %v2110
    %v2112 = vmul.f32 %v2070, %v2110
    %v2113 = vmul.f32 %v2071, %v2110
    %v2114 = vmul.f32 %v2072, %v2110
    %2119 = vrot.lane.b32.xlu0 %v2111, 126
    %v2120 = vpop.permute.xlu0 %2119
    %2121 = vrot.lane.b32.xlu0 %v2112, 126
    %v2122 = vpop.permute.xlu0 %2121
    %2123 = vrot.lane.b32.xlu0 %v2113, 126
    %v2124 = vpop.permute.xlu0 %2123
    %2125 = vrot.lane.b32.xlu0 %v2114, 126
    %v2126 = vpop.permute.xlu0 %2125
    %v2131 = vadd.f32 %v2105, %v2120
    %v2132 = vadd.f32 %v2106, %v2122
    %v2133 = vadd.f32 %v2107, %v2124
    %v2134 = vadd.f32 %v2108, %v2126
    %v2135 = vld [vmem:[%s406 + $0x2] sm:$0xff]
    %v2136 = vld [vmem:[%s406 + $0xa] sm:$0xff]
    %v2137 = vld [vmem:[%s406 + $0x62] sm:$0xff]
    %v2138 = vld [vmem:[%s406 + $0x6a] sm:$0xff]
    %s2139 = sld [smem:[#allocation4 + $0x57]]
    %v2140 = vstv %s2139
    %v2141 = vmul.f32 %v2135, %v2140
    %v2142 = vmul.f32 %v2136, %v2140
    %v2143 = vmul.f32 %v2137, %v2140
    %v2144 = vmul.f32 %v2138, %v2140
    %v2145 = vadd.f32 %v2131, %v2141
    %v2146 = vadd.f32 %v2132, %v2142
    %v2147 = vadd.f32 %v2133, %v2143
    %v2148 = vadd.f32 %v2134, %v2144
    %s2149 = sld [smem:[#allocation4 + $0x58]]
    %v2150 = vstv %s2149
    %v2151 = vmul.f32 %v2135, %v2150
    %v2152 = vmul.f32 %v2136, %v2150
    %v2153 = vmul.f32 %v2137, %v2150
    %v2154 = vmul.f32 %v2138, %v2150
    %2159 = vrot.lane.b32.xlu0 %v2151, 127
    %v2160 = vpop.permute.xlu0 %2159
    %2161 = vrot.lane.b32.xlu0 %v2152, 127
    %v2162 = vpop.permute.xlu0 %2161
    %2163 = vrot.lane.b32.xlu0 %v2153, 127
    %v2164 = vpop.permute.xlu0 %2163
    %2165 = vrot.lane.b32.xlu0 %v2154, 127
    %v2166 = vpop.permute.xlu0 %2165
    %v2171 = vadd.f32 %v2145, %v2160
    %v2172 = vadd.f32 %v2146, %v2162
    %v2173 = vadd.f32 %v2147, %v2164
    %v2174 = vadd.f32 %v2148, %v2166
    %s2175 = sld [smem:[#allocation4 + $0x59]]
    %v2176 = vstv %s2175
    %v2177 = vmul.f32 %v2135, %v2176
    %v2178 = vmul.f32 %v2136, %v2176
    %v2179 = vmul.f32 %v2137, %v2176
    %v2180 = vmul.f32 %v2138, %v2176
    %2185 = vrot.lane.b32.xlu0 %v2177, 126
    %v2186 = vpop.permute.xlu0 %2185
    %2187 = vrot.lane.b32.xlu0 %v2178, 126
    %v2188 = vpop.permute.xlu0 %2187
    %2189 = vrot.lane.b32.xlu0 %v2179, 126
    %v2190 = vpop.permute.xlu0 %2189
    %2191 = vrot.lane.b32.xlu0 %v2180, 126
    %v2192 = vpop.permute.xlu0 %2191
    %v2197 = vadd.f32 %v2171, %v2186
    %v2198 = vadd.f32 %v2172, %v2188
    %v2199 = vadd.f32 %v2173, %v2190
    %v2200 = vadd.f32 %v2174, %v2192
    %v2201 = vld [vmem:[%s601] sm:$0xff]
    %v2202 = vld [vmem:[%s601 + $0x8] sm:$0xff]
    %v2203 = vld [vmem:[%s601 + $0x60] sm:$0xff]
    %v2204 = vld [vmem:[%s601 + $0x68] sm:$0xff]
    %s2205 = sld [smem:[#allocation4 + $0x5a]]
    %v2206 = vstv %s2205
    %v2207 = vmul.f32 %v2201, %v2206
    %v2208 = vmul.f32 %v2202, %v2206
    %v2209 = vmul.f32 %v2203, %v2206
    %v2210 = vmul.f32 %v2204, %v2206
    %s2211 = sld [smem:[#allocation4 + $0x5b]]
    %v2212 = vstv %s2211
    %v2213 = vmul.f32 %v2201, %v2212
    %v2214 = vmul.f32 %v2202, %v2212
    %v2215 = vmul.f32 %v2203, %v2212
    %v2216 = vmul.f32 %v2204, %v2212
    %2221 = vrot.lane.b32.xlu0 %v2213, 127
    %v2222 = vpop.permute.xlu0 %2221
    %2223 = vrot.lane.b32.xlu0 %v2214, 127
    %v2224 = vpop.permute.xlu0 %2223
    %2225 = vrot.lane.b32.xlu0 %v2215, 127
    %v2226 = vpop.permute.xlu0 %2225
    %2227 = vrot.lane.b32.xlu0 %v2216, 127
    %v2228 = vpop.permute.xlu0 %2227
    %v2233 = vadd.f32 %v2207, %v2222
    %v2234 = vadd.f32 %v2208, %v2224
    %v2235 = vadd.f32 %v2209, %v2226
    %v2236 = vadd.f32 %v2210, %v2228
    %s2237 = sld [smem:[#allocation4 + $0x5c]]
    %v2238 = vstv %s2237
    %v2239 = vmul.f32 %v2201, %v2238
    %v2240 = vmul.f32 %v2202, %v2238
    %v2241 = vmul.f32 %v2203, %v2238
    %v2242 = vmul.f32 %v2204, %v2238
    %2247 = vrot.lane.b32.xlu0 %v2239, 126
    %v2248 = vpop.permute.xlu0 %2247
    %2249 = vrot.lane.b32.xlu0 %v2240, 126
    %v2250 = vpop.permute.xlu0 %2249
    %2251 = vrot.lane.b32.xlu0 %v2241, 126
    %v2252 = vpop.permute.xlu0 %2251
    %2253 = vrot.lane.b32.xlu0 %v2242, 126
    %v2254 = vpop.permute.xlu0 %2253
    %v2259 = vadd.f32 %v2233, %v2248
    %v2260 = vadd.f32 %v2234, %v2250
    %v2261 = vadd.f32 %v2235, %v2252
    %v2262 = vadd.f32 %v2236, %v2254
    %v2263 = vld [vmem:[%s601 + $0x1] sm:$0xff]
    %v2264 = vld [vmem:[%s601 + $0x9] sm:$0xff]
    %v2265 = vld [vmem:[%s601 + $0x61] sm:$0xff]
    %v2266 = vld [vmem:[%s601 + $0x69] sm:$0xff]
    %s2267 = sld [smem:[#allocation4 + $0x5d]]
    %v2268 = vstv %s2267
    %v2269 = vmul.f32 %v2263, %v2268
    %v2270 = vmul.f32 %v2264, %v2268
    %v2271 = vmul.f32 %v2265, %v2268
    %v2272 = vmul.f32 %v2266, %v2268
    %v2273 = vadd.f32 %v2259, %v2269
    %v2274 = vadd.f32 %v2260, %v2270
    %v2275 = vadd.f32 %v2261, %v2271
    %v2276 = vadd.f32 %v2262, %v2272
    %s2277 = sld [smem:[#allocation4 + $0x5e]]
    %v2278 = vstv %s2277
    %v2279 = vmul.f32 %v2263, %v2278
    %v2280 = vmul.f32 %v2264, %v2278
    %v2281 = vmul.f32 %v2265, %v2278
    %v2282 = vmul.f32 %v2266, %v2278
    %2287 = vrot.lane.b32.xlu0 %v2279, 127
    %v2288 = vpop.permute.xlu0 %2287
    %2289 = vrot.lane.b32.xlu0 %v2280, 127
    %v2290 = vpop.permute.xlu0 %2289
    %2291 = vrot.lane.b32.xlu0 %v2281, 127
    %v2292 = vpop.permute.xlu0 %2291
    %2293 = vrot.lane.b32.xlu0 %v2282, 127
    %v2294 = vpop.permute.xlu0 %2293
    %v2299 = vadd.f32 %v2273, %v2288
    %v2300 = vadd.f32 %v2274, %v2290
    %v2301 = vadd.f32 %v2275, %v2292
    %v2302 = vadd.f32 %v2276, %v2294
    %s2303 = sld [smem:[#allocation4 + $0x5f]]
    %v2304 = vstv %s2303
    %v2305 = vmul.f32 %v2263, %v2304
    %v2306 = vmul.f32 %v2264, %v2304
    %v2307 = vmul.f32 %v2265, %v2304
    %v2308 = vmul.f32 %v2266, %v2304
    %2313 = vrot.lane.b32.xlu0 %v2305, 126
    %v2314 = vpop.permute.xlu0 %2313
    %2315 = vrot.lane.b32.xlu0 %v2306, 126
    %v2316 = vpop.permute.xlu0 %2315
    %2317 = vrot.lane.b32.xlu0 %v2307, 126
    %v2318 = vpop.permute.xlu0 %2317
    %2319 = vrot.lane.b32.xlu0 %v2308, 126
    %v2320 = vpop.permute.xlu0 %2319
    %v2325 = vadd.f32 %v2299, %v2314
    %v2326 = vadd.f32 %v2300, %v2316
    %v2327 = vadd.f32 %v2301, %v2318
    %v2328 = vadd.f32 %v2302, %v2320
    %v2329 = vld [vmem:[%s601 + $0x2] sm:$0xff]
    %v2330 = vld [vmem:[%s601 + $0xa] sm:$0xff]
    %v2331 = vld [vmem:[%s601 + $0x62] sm:$0xff]
    %v2332 = vld [vmem:[%s601 + $0x6a] sm:$0xff]
    %s2333 = sld [smem:[#allocation4 + $0x60]]
    %v2334 = vstv %s2333
    %v2335 = vmul.f32 %v2329, %v2334
    %v2336 = vmul.f32 %v2330, %v2334
    %v2337 = vmul.f32 %v2331, %v2334
    %v2338 = vmul.f32 %v2332, %v2334
    %v2339 = vadd.f32 %v2325, %v2335
    %v2340 = vadd.f32 %v2326, %v2336
    %v2341 = vadd.f32 %v2327, %v2337
    %v2342 = vadd.f32 %v2328, %v2338
    %s2343 = sld [smem:[#allocation4 + $0x61]]
    %v2344 = vstv %s2343
    %v2345 = vmul.f32 %v2329, %v2344
    %v2346 = vmul.f32 %v2330, %v2344
    %v2347 = vmul.f32 %v2331, %v2344
    %v2348 = vmul.f32 %v2332, %v2344
    %2353 = vrot.lane.b32.xlu0 %v2345, 127
    %v2354 = vpop.permute.xlu0 %2353
    %2355 = vrot.lane.b32.xlu0 %v2346, 127
    %v2356 = vpop.permute.xlu0 %2355
    %2357 = vrot.lane.b32.xlu0 %v2347, 127
    %v2358 = vpop.permute.xlu0 %2357
    %2359 = vrot.lane.b32.xlu0 %v2348, 127
    %v2360 = vpop.permute.xlu0 %2359
    %v2365 = vadd.f32 %v2339, %v2354
    %v2366 = vadd.f32 %v2340, %v2356
    %v2367 = vadd.f32 %v2341, %v2358
    %v2368 = vadd.f32 %v2342, %v2360
    %s2369 = sld [smem:[#allocation4 + $0x62]]
    %v2370 = vstv %s2369
    %v2371 = vmul.f32 %v2329, %v2370
    %v2372 = vmul.f32 %v2330, %v2370
    %v2373 = vmul.f32 %v2331, %v2370
    %v2374 = vmul.f32 %v2332, %v2370
    %2379 = vrot.lane.b32.xlu0 %v2371, 126
    %v2380 = vpop.permute.xlu0 %2379
    %2381 = vrot.lane.b32.xlu0 %v2372, 126
    %v2382 = vpop.permute.xlu0 %2381
    %2383 = vrot.lane.b32.xlu0 %v2373, 126
    %v2384 = vpop.permute.xlu0 %2383
    %2385 = vrot.lane.b32.xlu0 %v2374, 126
    %v2386 = vpop.permute.xlu0 %2385
    %v2391 = vadd.f32 %v2365, %v2380
    %v2392 = vadd.f32 %v2366, %v2382
    %v2393 = vadd.f32 %v2367, %v2384
    %v2394 = vadd.f32 %v2368, %v2386
    %v2395 = vld [vmem:[%s796] sm:$0xff]
    %v2396 = vld [vmem:[%s796 + $0x8] sm:$0xff]
    %v2397 = vld [vmem:[%s796 + $0x60] sm:$0xff]
    %v2398 = vld [vmem:[%s796 + $0x68] sm:$0xff]
    %s2399 = sld [smem:[#allocation4 + $0x63]]
    %v2400 = vstv %s2399
    %v2401 = vmul.f32 %v2395, %v2400
    %v2402 = vmul.f32 %v2396, %v2400
    %v2403 = vmul.f32 %v2397, %v2400
    %v2404 = vmul.f32 %v2398, %v2400
    %s2405 = sld [smem:[#allocation4 + $0x64]]
    %v2406 = vstv %s2405
    %v2407 = vmul.f32 %v2395, %v2406
    %v2408 = vmul.f32 %v2396, %v2406
    %v2409 = vmul.f32 %v2397, %v2406
    %v2410 = vmul.f32 %v2398, %v2406
    %2415 = vrot.lane.b32.xlu0 %v2407, 127
    %v2416 = vpop.permute.xlu0 %2415
    %2417 = vrot.lane.b32.xlu0 %v2408, 127
    %v2418 = vpop.permute.xlu0 %2417
    %2419 = vrot.lane.b32.xlu0 %v2409, 127
    %v2420 = vpop.permute.xlu0 %2419
    %2421 = vrot.lane.b32.xlu0 %v2410, 127
    %v2422 = vpop.permute.xlu0 %2421
    %v2427 = vadd.f32 %v2401, %v2416
    %v2428 = vadd.f32 %v2402, %v2418
    %v2429 = vadd.f32 %v2403, %v2420
    %v2430 = vadd.f32 %v2404, %v2422
    %s2431 = sld [smem:[#allocation4 + $0x65]]
    %v2432 = vstv %s2431
    %v2433 = vmul.f32 %v2395, %v2432
    %v2434 = vmul.f32 %v2396, %v2432
    %v2435 = vmul.f32 %v2397, %v2432
    %v2436 = vmul.f32 %v2398, %v2432
    %2441 = vrot.lane.b32.xlu0 %v2433, 126
    %v2442 = vpop.permute.xlu0 %2441
    %2443 = vrot.lane.b32.xlu0 %v2434, 126
    %v2444 = vpop.permute.xlu0 %2443
    %2445 = vrot.lane.b32.xlu0 %v2435, 126
    %v2446 = vpop.permute.xlu0 %2445
    %2447 = vrot.lane.b32.xlu0 %v2436, 126
    %v2448 = vpop.permute.xlu0 %2447
    %v2453 = vadd.f32 %v2427, %v2442
    %v2454 = vadd.f32 %v2428, %v2444
    %v2455 = vadd.f32 %v2429, %v2446
    %v2456 = vadd.f32 %v2430, %v2448
    %v2457 = vld [vmem:[%s796 + $0x1] sm:$0xff]
    %v2458 = vld [vmem:[%s796 + $0x9] sm:$0xff]
    %v2459 = vld [vmem:[%s796 + $0x61] sm:$0xff]
    %v2460 = vld [vmem:[%s796 + $0x69] sm:$0xff]
    %s2461 = sld [smem:[#allocation4 + $0x66]]
    %v2462 = vstv %s2461
    %v2463 = vmul.f32 %v2457, %v2462
    %v2464 = vmul.f32 %v2458, %v2462
    %v2465 = vmul.f32 %v2459, %v2462
    %v2466 = vmul.f32 %v2460, %v2462
    %v2467 = vadd.f32 %v2453, %v2463
    %v2468 = vadd.f32 %v2454, %v2464
    %v2469 = vadd.f32 %v2455, %v2465
    %v2470 = vadd.f32 %v2456, %v2466
    %s2471 = sld [smem:[#allocation4 + $0x67]]
    %v2472 = vstv %s2471
    %v2473 = vmul.f32 %v2457, %v2472
    %v2474 = vmul.f32 %v2458, %v2472
    %v2475 = vmul.f32 %v2459, %v2472
    %v2476 = vmul.f32 %v2460, %v2472
    %2481 = vrot.lane.b32.xlu0 %v2473, 127
    %v2482 = vpop.permute.xlu0 %2481
    %2483 = vrot.lane.b32.xlu0 %v2474, 127
    %v2484 = vpop.permute.xlu0 %2483
    %2485 = vrot.lane.b32.xlu0 %v2475, 127
    %v2486 = vpop.permute.xlu0 %2485
    %2487 = vrot.lane.b32.xlu0 %v2476, 127
    %v2488 = vpop.permute.xlu0 %2487
    %v2493 = vadd.f32 %v2467, %v2482
    %v2494 = vadd.f32 %v2468, %v2484
    %v2495 = vadd.f32 %v2469, %v2486
    %v2496 = vadd.f32 %v2470, %v2488
    %s2497 = sld [smem:[#allocation4 + $0x68]]
    %v2498 = vstv %s2497
    %v2499 = vmul.f32 %v2457, %v2498
    %v2500 = vmul.f32 %v2458, %v2498
    %v2501 = vmul.f32 %v2459, %v2498
    %v2502 = vmul.f32 %v2460, %v2498
    %2507 = vrot.lane.b32.xlu0 %v2499, 126
    %v2508 = vpop.permute.xlu0 %2507
    %2509 = vrot.lane.b32.xlu0 %v2500, 126
    %v2510 = vpop.permute.xlu0 %2509
    %2511 = vrot.lane.b32.xlu0 %v2501, 126
    %v2512 = vpop.permute.xlu0 %2511
    %2513 = vrot.lane.b32.xlu0 %v2502, 126
    %v2514 = vpop.permute.xlu0 %2513
    %v2519 = vadd.f32 %v2493, %v2508
    %v2520 = vadd.f32 %v2494, %v2510
    %v2521 = vadd.f32 %v2495, %v2512
    %v2522 = vadd.f32 %v2496, %v2514
    %v2523 = vld [vmem:[%s796 + $0x2] sm:$0xff]
    %v2524 = vld [vmem:[%s796 + $0xa] sm:$0xff]
    %v2525 = vld [vmem:[%s796 + $0x62] sm:$0xff]
    %v2526 = vld [vmem:[%s796 + $0x6a] sm:$0xff]
    %s2527 = sld [smem:[#allocation4 + $0x69]]
    %v2528 = vstv %s2527
    %v2529 = vmul.f32 %v2523, %v2528
    %v2530 = vmul.f32 %v2524, %v2528
    %v2531 = vmul.f32 %v2525, %v2528
    %v2532 = vmul.f32 %v2526, %v2528
    %v2533 = vadd.f32 %v2519, %v2529
    %v2534 = vadd.f32 %v2520, %v2530
    %v2535 = vadd.f32 %v2521, %v2531
    %v2536 = vadd.f32 %v2522, %v2532
    %s2537 = sld [smem:[#allocation4 + $0x6a]]
    %v2538 = vstv %s2537
    %v2539 = vmul.f32 %v2523, %v2538
    %v2540 = vmul.f32 %v2524, %v2538
    %v2541 = vmul.f32 %v2525, %v2538
    %v2542 = vmul.f32 %v2526, %v2538
    %2547 = vrot.lane.b32.xlu0 %v2539, 127
    %v2548 = vpop.permute.xlu0 %2547
    %2549 = vrot.lane.b32.xlu0 %v2540, 127
    %v2550 = vpop.permute.xlu0 %2549
    %2551 = vrot.lane.b32.xlu0 %v2541, 127
    %v2552 = vpop.permute.xlu0 %2551
    %2553 = vrot.lane.b32.xlu0 %v2542, 127
    %v2554 = vpop.permute.xlu0 %2553
    %v2559 = vadd.f32 %v2533, %v2548
    %v2560 = vadd.f32 %v2534, %v2550
    %v2561 = vadd.f32 %v2535, %v2552
    %v2562 = vadd.f32 %v2536, %v2554
    %s2563 = sld [smem:[#allocation4 + $0x6b]]
    %v2564 = vstv %s2563
    %v2565 = vmul.f32 %v2523, %v2564
    %v2566 = vmul.f32 %v2524, %v2564
    %v2567 = vmul.f32 %v2525, %v2564
    %v2568 = vmul.f32 %v2526, %v2564
    %2573 = vrot.lane.b32.xlu0 %v2565, 126
    %v2574 = vpop.permute.xlu0 %2573
    %2575 = vrot.lane.b32.xlu0 %v2566, 126
    %v2576 = vpop.permute.xlu0 %2575
    %2577 = vrot.lane.b32.xlu0 %v2567, 126
    %v2578 = vpop.permute.xlu0 %2577
    %2579 = vrot.lane.b32.xlu0 %v2568, 126
    %v2580 = vpop.permute.xlu0 %2579
    %v2585 = vadd.f32 %v2559, %v2574
    %v2586 = vadd.f32 %v2560, %v2576
    %v2587 = vadd.f32 %v2561, %v2578
    %v2588 = vadd.f32 %v2562, %v2580
    %v2589 = vadd.f32 %v2003, %v2197
    %v2590 = vadd.f32 %v2004, %v2198
    %v2591 = vadd.f32 %v2005, %v2199
    %v2592 = vadd.f32 %v2006, %v2200
    %v2593 = vadd.f32 %v2391, %v2585
    %v2594 = vadd.f32 %v2392, %v2586
    %v2595 = vadd.f32 %v2393, %v2587
    %v2596 = vadd.f32 %v2394, %v2588
    %v2597 = vadd.f32 %v2589, %v2593
    %v2598 = vadd.f32 %v2590, %v2594
    %v2599 = vadd.f32 %v2591, %v2595
    %v2600 = vadd.f32 %v2592, %v2596
    %s2601 = sld [smem:[#allocation7 + $0x2]]
    %v2602 = vstv %s2601
    %v2603 = vadd.f32 %v2597, %v2602
    %v2604 = vadd.f32 %v2598, %v2602
    %v2605 = vadd.f32 %v2599, %v2602
    %v2606 = vadd.f32 %v2600, %v2602
    %s2607 = scalar_lea.vmem [#allocation3], 48
    %2608 = vst.msk [vmem:[%s2607] sm:$0xff] %vm1009, %v2603
    %2609 = vst.msk [vmem:[%s2607 + $0x8] sm:$0xff] %vm1009, %v2604
    %2610 = vst.msk [vmem:[%s2607 + $0x48] sm:$0xff] %vm1009, %v2605
    %2611 = vst.msk [vmem:[%s2607 + $0x50] sm:$0xff] %vm1009, %v2606
    %v2612 = vld [vmem:[#allocation3] sm:$0xff]
    %v2613 = vld [vmem:[#allocation3 + $0x8] sm:$0xff]
    %v2614 = vld [vmem:[#allocation3 + $0x48] sm:$0xff]
    %v2615 = vld [vmem:[#allocation3 + $0x50] sm:$0xff]
    %s2616 = sld [smem:[#allocation9]]
    %v2617 = vstv %s2616
    %v2618 = vmul.f32 %v2612, %v2617
    %v2619 = vmul.f32 %v2613, %v2617
    %v2620 = vmul.f32 %v2614, %v2617
    %v2621 = vmul.f32 %v2615, %v2617
    %s2622 = sld [smem:[#allocation9 + $0x1]]
    %v2623 = vstv %s2622
    %v2624 = vmul.f32 %v2612, %v2623
    %v2625 = vmul.f32 %v2613, %v2623
    %v2626 = vmul.f32 %v2614, %v2623
    %v2627 = vmul.f32 %v2615, %v2623
    %2632 = vrot.lane.b32.xlu0 %v2624, 127
    %v2633 = vpop.permute.xlu0 %2632
    %2634 = vrot.lane.b32.xlu0 %v2625, 127
    %v2635 = vpop.permute.xlu0 %2634
    %2636 = vrot.lane.b32.xlu0 %v2626, 127
    %v2637 = vpop.permute.xlu0 %2636
    %2638 = vrot.lane.b32.xlu0 %v2627, 127
    %v2639 = vpop.permute.xlu0 %2638
    %v2644 = vadd.f32 %v2618, %v2633
    %v2645 = vadd.f32 %v2619, %v2635
    %v2646 = vadd.f32 %v2620, %v2637
    %v2647 = vadd.f32 %v2621, %v2639
    %v2648 = vld [vmem:[#allocation3 + $0x1] sm:$0xff]
    %v2649 = vld [vmem:[#allocation3 + $0x9] sm:$0xff]
    %v2650 = vld [vmem:[#allocation3 + $0x49] sm:$0xff]
    %v2651 = vld [vmem:[#allocation3 + $0x51] sm:$0xff]
    %s2652 = sld [smem:[#allocation9 + $0x2]]
    %v2653 = vstv %s2652
    %v2654 = vmul.f32 %v2648, %v2653
    %v2655 = vmul.f32 %v2649, %v2653
    %v2656 = vmul.f32 %v2650, %v2653
    %v2657 = vmul.f32 %v2651, %v2653
    %v2658 = vadd.f32 %v2644, %v2654
    %v2659 = vadd.f32 %v2645, %v2655
    %v2660 = vadd.f32 %v2646, %v2656
    %v2661 = vadd.f32 %v2647, %v2657
    %s2662 = sld [smem:[#allocation9 + $0x3]]
    %v2663 = vstv %s2662
    %v2664 = vmul.f32 %v2648, %v2663
    %v2665 = vmul.f32 %v2649, %v2663
    %v2666 = vmul.f32 %v2650, %v2663
    %v2667 = vmul.f32 %v2651, %v2663
    %2672 = vrot.lane.b32.xlu0 %v2664, 127
    %v2673 = vpop.permute.xlu0 %2672
    %2674 = vrot.lane.b32.xlu0 %v2665, 127
    %v2675 = vpop.permute.xlu0 %2674
    %2676 = vrot.lane.b32.xlu0 %v2666, 127
    %v2677 = vpop.permute.xlu0 %2676
    %2678 = vrot.lane.b32.xlu0 %v2667, 127
    %v2679 = vpop.permute.xlu0 %2678
    %v2684 = vadd.f32 %v2658, %v2673
    %v2685 = vadd.f32 %v2659, %v2675
    %v2686 = vadd.f32 %v2660, %v2677
    %v2687 = vadd.f32 %v2661, %v2679
    %v2688 = vld [vmem:[%s1808] sm:$0xff]
    %v2689 = vld [vmem:[%s1808 + $0x8] sm:$0xff]
    %v2690 = vld [vmem:[%s1808 + $0x48] sm:$0xff]
    %v2691 = vld [vmem:[%s1808 + $0x50] sm:$0xff]
    %s2692 = sld [smem:[#allocation9 + $0x4]]
    %v2693 = vstv %s2692
    %v2694 = vmul.f32 %v2688, %v2693
    %v2695 = vmul.f32 %v2689, %v2693
    %v2696 = vmul.f32 %v2690, %v2693
    %v2697 = vmul.f32 %v2691, %v2693
    %s2698 = sld [smem:[#allocation9 + $0x5]]
    %v2699 = vstv %s2698
    %v2700 = vmul.f32 %v2688, %v2699
    %v2701 = vmul.f32 %v2689, %v2699
    %v2702 = vmul.f32 %v2690, %v2699
    %v2703 = vmul.f32 %v2691, %v2699
    %2708 = vrot.lane.b32.xlu0 %v2700, 127
    %v2709 = vpop.permute.xlu0 %2708
    %2710 = vrot.lane.b32.xlu0 %v2701, 127
    %v2711 = vpop.permute.xlu0 %2710
    %2712 = vrot.lane.b32.xlu0 %v2702, 127
    %v2713 = vpop.permute.xlu0 %2712
    %2714 = vrot.lane.b32.xlu0 %v2703, 127
    %v2715 = vpop.permute.xlu0 %2714
    %v2720 = vadd.f32 %v2694, %v2709
    %v2721 = vadd.f32 %v2695, %v2711
    %v2722 = vadd.f32 %v2696, %v2713
    %v2723 = vadd.f32 %v2697, %v2715
    %v2724 = vld [vmem:[%s1808 + $0x1] sm:$0xff]
    %v2725 = vld [vmem:[%s1808 + $0x9] sm:$0xff]
    %v2726 = vld [vmem:[%s1808 + $0x49] sm:$0xff]
    %v2727 = vld [vmem:[%s1808 + $0x51] sm:$0xff]
    %s2728 = sld [smem:[#allocation9 + $0x6]]
    %v2729 = vstv %s2728
    %v2730 = vmul.f32 %v2724, %v2729
    %v2731 = vmul.f32 %v2725, %v2729
    %v2732 = vmul.f32 %v2726, %v2729
    %v2733 = vmul.f32 %v2727, %v2729
    %v2734 = vadd.f32 %v2720, %v2730
    %v2735 = vadd.f32 %v2721, %v2731
    %v2736 = vadd.f32 %v2722, %v2732
    %v2737 = vadd.f32 %v2723, %v2733
    %s2738 = sld [smem:[#allocation9 + $0x7]]
    %v2739 = vstv %s2738
    %v2740 = vmul.f32 %v2724, %v2739
    %v2741 = vmul.f32 %v2725, %v2739
    %v2742 = vmul.f32 %v2726, %v2739
    %v2743 = vmul.f32 %v2727, %v2739
    %2748 = vrot.lane.b32.xlu0 %v2740, 127
    %v2749 = vpop.permute.xlu0 %2748
    %2750 = vrot.lane.b32.xlu0 %v2741, 127
    %v2751 = vpop.permute.xlu0 %2750
    %2752 = vrot.lane.b32.xlu0 %v2742, 127
    %v2753 = vpop.permute.xlu0 %2752
    %2754 = vrot.lane.b32.xlu0 %v2743, 127
    %v2755 = vpop.permute.xlu0 %2754
    %v2760 = vadd.f32 %v2734, %v2749
    %v2761 = vadd.f32 %v2735, %v2751
    %v2762 = vadd.f32 %v2736, %v2753
    %v2763 = vadd.f32 %v2737, %v2755
    %v2764 = vld [vmem:[%s2607] sm:$0xff]
    %v2765 = vld [vmem:[%s2607 + $0x8] sm:$0xff]
    %v2766 = vld [vmem:[%s2607 + $0x48] sm:$0xff]
    %v2767 = vld [vmem:[%s2607 + $0x50] sm:$0xff]
    %s2768 = sld [smem:[#allocation9 + $0x8]]
    %v2769 = vstv %s2768
    %v2770 = vmul.f32 %v2764, %v2769
    %v2771 = vmul.f32 %v2765, %v2769
    %v2772 = vmul.f32 %v2766, %v2769
    %v2773 = vmul.f32 %v2767, %v2769
    %s2774 = sld [smem:[#allocation9 + $0x9]]
    %v2775 = vstv %s2774
    %v2776 = vmul.f32 %v2764, %v2775
    %v2777 = vmul.f32 %v2765, %v2775
    %v2778 = vmul.f32 %v2766, %v2775
    %v2779 = vmul.f32 %v2767, %v2775
    %2784 = vrot.lane.b32.xlu0 %v2776, 127
    %v2785 = vpop.permute.xlu0 %2784
    %2786 = vrot.lane.b32.xlu0 %v2777, 127
    %v2787 = vpop.permute.xlu0 %2786
    %2788 = vrot.lane.b32.xlu0 %v2778, 127
    %v2789 = vpop.permute.xlu0 %2788
    %2790 = vrot.lane.b32.xlu0 %v2779, 127
    %v2791 = vpop.permute.xlu0 %2790
    %v2796 = vadd.f32 %v2770, %v2785
    %v2797 = vadd.f32 %v2771, %v2787
    %v2798 = vadd.f32 %v2772, %v2789
    %v2799 = vadd.f32 %v2773, %v2791
    %v2800 = vld [vmem:[%s2607 + $0x1] sm:$0xff]
    %v2801 = vld [vmem:[%s2607 + $0x9] sm:$0xff]
    %v2802 = vld [vmem:[%s2607 + $0x49] sm:$0xff]
    %v2803 = vld [vmem:[%s2607 + $0x51] sm:$0xff]
    %s2804 = sld [smem:[#allocation9 + $0xa]]
    %v2805 = vstv %s2804
    %v2806 = vmul.f32 %v2800, %v2805
    %v2807 = vmul.f32 %v2801, %v2805
    %v2808 = vmul.f32 %v2802, %v2805
    %v2809 = vmul.f32 %v2803, %v2805
    %v2810 = vadd.f32 %v2796, %v2806
    %v2811 = vadd.f32 %v2797, %v2807
    %v2812 = vadd.f32 %v2798, %v2808
    %v2813 = vadd.f32 %v2799, %v2809
    %s2814 = sld [smem:[#allocation9 + $0xb]]
    %v2815 = vstv %s2814
    %v2816 = vmul.f32 %v2800, %v2815
    %v2817 = vmul.f32 %v2801, %v2815
    %v2818 = vmul.f32 %v2802, %v2815
    %v2819 = vmul.f32 %v2803, %v2815
    %2824 = vrot.lane.b32.xlu0 %v2816, 127
    %v2825 = vpop.permute.xlu0 %2824
    %2826 = vrot.lane.b32.xlu0 %v2817, 127
    %v2827 = vpop.permute.xlu0 %2826
    %2828 = vrot.lane.b32.xlu0 %v2818, 127
    %v2829 = vpop.permute.xlu0 %2828
    %2830 = vrot.lane.b32.xlu0 %v2819, 127
    %v2831 = vpop.permute.xlu0 %2830
    %v2836 = vadd.f32 %v2810, %v2825
    %v2837 = vadd.f32 %v2811, %v2827
    %v2838 = vadd.f32 %v2812, %v2829
    %v2839 = vadd.f32 %v2813, %v2831
    %v2840 = vadd.f32 %v2684, %v2760
    %v2841 = vadd.f32 %v2685, %v2761
    %v2842 = vadd.f32 %v2686, %v2762
    %v2843 = vadd.f32 %v2687, %v2763
    %v2844 = vadd.f32 %v2840, %v2836
    %v2845 = vadd.f32 %v2841, %v2837
    %v2846 = vadd.f32 %v2842, %v2838
    %v2847 = vadd.f32 %v2843, %v2839
    %s2848 = sld [smem:[#allocation10]]
    %v2849 = vstv %s2848
    %v2850 = vadd.f32 %v2844, %v2849
    %v2851 = vadd.f32 %v2845, %v2849
    %v2852 = vadd.f32 %v2846, %v2849
    %v2853 = vadd.f32 %v2847, %v2849
    %2854 = vst.msk [vmem:[#allocation12] sm:$0xff] %vm1009, %v2850
    %2855 = vst.msk [vmem:[#allocation12 + $0x8] sm:$0xff] %vm1009, %v2851
    %2856 = vst.msk [vmem:[#allocation12 + $0x80] sm:$0xff] %vm1009, %v2852
    %2857 = vst.msk [vmem:[#allocation12 + $0x88] sm:$0xff] %vm1009, %v2853
    %v2858 = vld [vmem:[#allocation3] sm:$0xff]
    %v2859 = vld [vmem:[#allocation3 + $0x8] sm:$0xff]
    %v2860 = vld [vmem:[#allocation3 + $0x48] sm:$0xff]
    %v2861 = vld [vmem:[#allocation3 + $0x50] sm:$0xff]
    %s2862 = sld [smem:[#allocation9 + $0xc]]
    %v2863 = vstv %s2862
    %v2864 = vmul.f32 %v2858, %v2863
    %v2865 = vmul.f32 %v2859, %v2863
    %v2866 = vmul.f32 %v2860, %v2863
    %v2867 = vmul.f32 %v2861, %v2863
    %s2868 = sld [smem:[#allocation9 + $0xd]]
    %v2869 = vstv %s2868
    %v2870 = vmul.f32 %v2858, %v2869
    %v2871 = vmul.f32 %v2859, %v2869
    %v2872 = vmul.f32 %v2860, %v2869
    %v2873 = vmul.f32 %v2861, %v2869
    %2878 = vrot.lane.b32.xlu0 %v2870, 127
    %v2879 = vpop.permute.xlu0 %2878
    %2880 = vrot.lane.b32.xlu0 %v2871, 127
    %v2881 = vpop.permute.xlu0 %2880
    %2882 = vrot.lane.b32.xlu0 %v2872, 127
    %v2883 = vpop.permute.xlu0 %2882
    %2884 = vrot.lane.b32.xlu0 %v2873, 127
    %v2885 = vpop.permute.xlu0 %2884
    %v2890 = vadd.f32 %v2864, %v2879
    %v2891 = vadd.f32 %v2865, %v2881
    %v2892 = vadd.f32 %v2866, %v2883
    %v2893 = vadd.f32 %v2867, %v2885
    %v2894 = vld [vmem:[#allocation3 + $0x1] sm:$0xff]
    %v2895 = vld [vmem:[#allocation3 + $0x9] sm:$0xff]
    %v2896 = vld [vmem:[#allocation3 + $0x49] sm:$0xff]
    %v2897 = vld [vmem:[#allocation3 + $0x51] sm:$0xff]
    %s2898 = sld [smem:[#allocation9 + $0xe]]
    %v2899 = vstv %s2898
    %v2900 = vmul.f32 %v2894, %v2899
    %v2901 = vmul.f32 %v2895, %v2899
    %v2902 = vmul.f32 %v2896, %v2899
    %v2903 = vmul.f32 %v2897, %v2899
    %v2904 = vadd.f32 %v2890, %v2900
    %v2905 = vadd.f32 %v2891, %v2901
    %v2906 = vadd.f32 %v2892, %v2902
    %v2907 = vadd.f32 %v2893, %v2903
    %s2908 = sld [smem:[#allocation9 + $0xf]]
    %v2909 = vstv %s2908
    %v2910 = vmul.f32 %v2894, %v2909
    %v2911 = vmul.f32 %v2895, %v2909
    %v2912 = vmul.f32 %v2896, %v2909
    %v2913 = vmul.f32 %v2897, %v2909
    %2918 = vrot.lane.b32.xlu0 %v2910, 127
    %v2919 = vpop.permute.xlu0 %2918
    %2920 = vrot.lane.b32.xlu0 %v2911, 127
    %v2921 = vpop.permute.xlu0 %2920
    %2922 = vrot.lane.b32.xlu0 %v2912, 127
    %v2923 = vpop.permute.xlu0 %2922
    %2924 = vrot.lane.b32.xlu0 %v2913, 127
    %v2925 = vpop.permute.xlu0 %2924
    %v2930 = vadd.f32 %v2904, %v2919
    %v2931 = vadd.f32 %v2905, %v2921
    %v2932 = vadd.f32 %v2906, %v2923
    %v2933 = vadd.f32 %v2907, %v2925
    %v2934 = vld [vmem:[%s1808] sm:$0xff]
    %v2935 = vld [vmem:[%s1808 + $0x8] sm:$0xff]
    %v2936 = vld [vmem:[%s1808 + $0x48] sm:$0xff]
    %v2937 = vld [vmem:[%s1808 + $0x50] sm:$0xff]
    %s2938 = sld [smem:[#allocation9 + $0x10]]
    %v2939 = vstv %s2938
    %v2940 = vmul.f32 %v2934, %v2939
    %v2941 = vmul.f32 %v2935, %v2939
    %v2942 = vmul.f32 %v2936, %v2939
    %v2943 = vmul.f32 %v2937, %v2939
    %s2944 = sld [smem:[#allocation9 + $0x11]]
    %v2945 = vstv %s2944
    %v2946 = vmul.f32 %v2934, %v2945
    %v2947 = vmul.f32 %v2935, %v2945
    %v2948 = vmul.f32 %v2936, %v2945
    %v2949 = vmul.f32 %v2937, %v2945
    %2954 = vrot.lane.b32.xlu0 %v2946, 127
    %v2955 = vpop.permute.xlu0 %2954
    %2956 = vrot.lane.b32.xlu0 %v2947, 127
    %v2957 = vpop.permute.xlu0 %2956
    %2958 = vrot.lane.b32.xlu0 %v2948, 127
    %v2959 = vpop.permute.xlu0 %2958
    %2960 = vrot.lane.b32.xlu0 %v2949, 127
    %v2961 = vpop.permute.xlu0 %2960
    %v2966 = vadd.f32 %v2940, %v2955
    %v2967 = vadd.f32 %v2941, %v2957
    %v2968 = vadd.f32 %v2942, %v2959
    %v2969 = vadd.f32 %v2943, %v2961
    %v2970 = vld [vmem:[%s1808 + $0x1] sm:$0xff]
    %v2971 = vld [vmem:[%s1808 + $0x9] sm:$0xff]
    %v2972 = vld [vmem:[%s1808 + $0x49] sm:$0xff]
    %v2973 = vld [vmem:[%s1808 + $0x51] sm:$0xff]
    %s2974 = sld [smem:[#allocation9 + $0x12]]
    %v2975 = vstv %s2974
    %v2976 = vmul.f32 %v2970, %v2975
    %v2977 = vmul.f32 %v2971, %v2975
    %v2978 = vmul.f32 %v2972, %v2975
    %v2979 = vmul.f32 %v2973, %v2975
    %v2980 = vadd.f32 %v2966, %v2976
    %v2981 = vadd.f32 %v2967, %v2977
    %v2982 = vadd.f32 %v2968, %v2978
    %v2983 = vadd.f32 %v2969, %v2979
    %s2984 = sld [smem:[#allocation9 + $0x13]]
    %v2985 = vstv %s2984
    %v2986 = vmul.f32 %v2970, %v2985
    %v2987 = vmul.f32 %v2971, %v2985
    %v2988 = vmul.f32 %v2972, %v2985
    %v2989 = vmul.f32 %v2973, %v2985
    %2994 = vrot.lane.b32.xlu0 %v2986, 127
    %v2995 = vpop.permute.xlu0 %2994
    %2996 = vrot.lane.b32.xlu0 %v2987, 127
    %v2997 = vpop.permute.xlu0 %2996
    %2998 = vrot.lane.b32.xlu0 %v2988, 127
    %v2999 = vpop.permute.xlu0 %2998
    %3000 = vrot.lane.b32.xlu0 %v2989, 127
    %v3001 = vpop.permute.xlu0 %3000
    %v3006 = vadd.f32 %v2980, %v2995
    %v3007 = vadd.f32 %v2981, %v2997
    %v3008 = vadd.f32 %v2982, %v2999
    %v3009 = vadd.f32 %v2983, %v3001
    %v3010 = vld [vmem:[%s2607] sm:$0xff]
    %v3011 = vld [vmem:[%s2607 + $0x8] sm:$0xff]
    %v3012 = vld [vmem:[%s2607 + $0x48] sm:$0xff]
    %v3013 = vld [vmem:[%s2607 + $0x50] sm:$0xff]
    %s3014 = sld [smem:[#allocation9 + $0x14]]
    %v3015 = vstv %s3014
    %v3016 = vmul.f32 %v3010, %v3015
    %v3017 = vmul.f32 %v3011, %v3015
    %v3018 = vmul.f32 %v3012, %v3015
    %v3019 = vmul.f32 %v3013, %v3015
    %s3020 = sld [smem:[#allocation9 + $0x15]]
    %v3021 = vstv %s3020
    %v3022 = vmul.f32 %v3010, %v3021
    %v3023 = vmul.f32 %v3011, %v3021
    %v3024 = vmul.f32 %v3012, %v3021
    %v3025 = vmul.f32 %v3013, %v3021
    %3030 = vrot.lane.b32.xlu0 %v3022, 127
    %v3031 = vpop.permute.xlu0 %3030
    %3032 = vrot.lane.b32.xlu0 %v3023, 127
    %v3033 = vpop.permute.xlu0 %3032
    %3034 = vrot.lane.b32.xlu0 %v3024, 127
    %v3035 = vpop.permute.xlu0 %3034
    %3036 = vrot.lane.b32.xlu0 %v3025, 127
    %v3037 = vpop.permute.xlu0 %3036
    %v3042 = vadd.f32 %v3016, %v3031
    %v3043 = vadd.f32 %v3017, %v3033
    %v3044 = vadd.f32 %v3018, %v3035
    %v3045 = vadd.f32 %v3019, %v3037
    %v3046 = vld [vmem:[%s2607 + $0x1] sm:$0xff]
    %v3047 = vld [vmem:[%s2607 + $0x9] sm:$0xff]
    %v3048 = vld [vmem:[%s2607 + $0x49] sm:$0xff]
    %v3049 = vld [vmem:[%s2607 + $0x51] sm:$0xff]
    %s3050 = sld [smem:[#allocation9 + $0x16]]
    %v3051 = vstv %s3050
    %v3052 = vmul.f32 %v3046, %v3051
    %v3053 = vmul.f32 %v3047, %v3051
    %v3054 = vmul.f32 %v3048, %v3051
    %v3055 = vmul.f32 %v3049, %v3051
    %v3056 = vadd.f32 %v3042, %v3052
    %v3057 = vadd.f32 %v3043, %v3053
    %v3058 = vadd.f32 %v3044, %v3054
    %v3059 = vadd.f32 %v3045, %v3055
    %s3060 = sld [smem:[#allocation9 + $0x17]]
    %v3061 = vstv %s3060
    %v3062 = vmul.f32 %v3046, %v3061
    %v3063 = vmul.f32 %v3047, %v3061
    %v3064 = vmul.f32 %v3048, %v3061
    %v3065 = vmul.f32 %v3049, %v3061
    %3070 = vrot.lane.b32.xlu0 %v3062, 127
    %v3071 = vpop.permute.xlu0 %3070
    %3072 = vrot.lane.b32.xlu0 %v3063, 127
    %v3073 = vpop.permute.xlu0 %3072
    %3074 = vrot.lane.b32.xlu0 %v3064, 127
    %v3075 = vpop.permute.xlu0 %3074
    %3076 = vrot.lane.b32.xlu0 %v3065, 127
    %v3077 = vpop.permute.xlu0 %3076
    %v3082 = vadd.f32 %v3056, %v3071
    %v3083 = vadd.f32 %v3057, %v3073
    %v3084 = vadd.f32 %v3058, %v3075
    %v3085 = vadd.f32 %v3059, %v3077
    %v3086 = vadd.f32 %v2930, %v3006
    %v3087 = vadd.f32 %v2931, %v3007
    %v3088 = vadd.f32 %v2932, %v3008
    %v3089 = vadd.f32 %v2933, %v3009
    %v3090 = vadd.f32 %v3086, %v3082
    %v3091 = vadd.f32 %v3087, %v3083
    %v3092 = vadd.f32 %v3088, %v3084
    %v3093 = vadd.f32 %v3089, %v3085
    %s3094 = sld [smem:[#allocation10 + $0x1]]
    %v3095 = vstv %s3094
    %v3096 = vadd.f32 %v3090, %v3095
    %v3097 = vadd.f32 %v3091, %v3095
    %v3098 = vadd.f32 %v3092, %v3095
    %v3099 = vadd.f32 %v3093, %v3095
    %s3100 = scalar_lea.vmem [#allocation12], 16
    %3101 = vst.msk [vmem:[%s3100] sm:$0xff] %vm1009, %v3096
    %3102 = vst.msk [vmem:[%s3100 + $0x8] sm:$0xff] %vm1009, %v3097
    %3103 = vst.msk [vmem:[%s3100 + $0x80] sm:$0xff] %vm1009, %v3098
    %3104 = vst.msk [vmem:[%s3100 + $0x88] sm:$0xff] %vm1009, %v3099
    %v3105 = vld [vmem:[#allocation3] sm:$0xff]
    %v3106 = vld [vmem:[#allocation3 + $0x8] sm:$0xff]
    %v3107 = vld [vmem:[#allocation3 + $0x48] sm:$0xff]
    %v3108 = vld [vmem:[#allocation3 + $0x50] sm:$0xff]
    %s3109 = sld [smem:[#allocation9 + $0x18]]
    %v3110 = vstv %s3109
    %v3111 = vmul.f32 %v3105, %v3110
    %v3112 = vmul.f32 %v3106, %v3110
    %v3113 = vmul.f32 %v3107, %v3110
    %v3114 = vmul.f32 %v3108, %v3110
    %s3115 = sld [smem:[#allocation9 + $0x19]]
    %v3116 = vstv %s3115
    %v3117 = vmul.f32 %v3105, %v3116
    %v3118 = vmul.f32 %v3106, %v3116
    %v3119 = vmul.f32 %v3107, %v3116
    %v3120 = vmul.f32 %v3108, %v3116
    %3125 = vrot.lane.b32.xlu0 %v3117, 127
    %v3126 = vpop.permute.xlu0 %3125
    %3127 = vrot.lane.b32.xlu0 %v3118, 127
    %v3128 = vpop.permute.xlu0 %3127
    %3129 = vrot.lane.b32.xlu0 %v3119, 127
    %v3130 = vpop.permute.xlu0 %3129
    %3131 = vrot.lane.b32.xlu0 %v3120, 127
    %v3132 = vpop.permute.xlu0 %3131
    %v3137 = vadd.f32 %v3111, %v3126
    %v3138 = vadd.f32 %v3112, %v3128
    %v3139 = vadd.f32 %v3113, %v3130
    %v3140 = vadd.f32 %v3114, %v3132
    %v3141 = vld [vmem:[#allocation3 + $0x1] sm:$0xff]
    %v3142 = vld [vmem:[#allocation3 + $0x9] sm:$0xff]
    %v3143 = vld [vmem:[#allocation3 + $0x49] sm:$0xff]
    %v3144 = vld [vmem:[#allocation3 + $0x51] sm:$0xff]
    %s3145 = sld [smem:[#allocation9 + $0x1a]]
    %v3146 = vstv %s3145
    %v3147 = vmul.f32 %v3141, %v3146
    %v3148 = vmul.f32 %v3142, %v3146
    %v3149 = vmul.f32 %v3143, %v3146
    %v3150 = vmul.f32 %v3144, %v3146
    %v3151 = vadd.f32 %v3137, %v3147
    %v3152 = vadd.f32 %v3138, %v3148
    %v3153 = vadd.f32 %v3139, %v3149
    %v3154 = vadd.f32 %v3140, %v3150
    %s3155 = sld [smem:[#allocation9 + $0x1b]]
    %v3156 = vstv %s3155
    %v3157 = vmul.f32 %v3141, %v3156
    %v3158 = vmul.f32 %v3142, %v3156
    %v3159 = vmul.f32 %v3143, %v3156
    %v3160 = vmul.f32 %v3144, %v3156
    %3165 = vrot.lane.b32.xlu0 %v3157, 127
    %v3166 = vpop.permute.xlu0 %3165
    %3167 = vrot.lane.b32.xlu0 %v3158, 127
    %v3168 = vpop.permute.xlu0 %3167
    %3169 = vrot.lane.b32.xlu0 %v3159, 127
    %v3170 = vpop.permute.xlu0 %3169
    %3171 = vrot.lane.b32.xlu0 %v3160, 127
    %v3172 = vpop.permute.xlu0 %3171
    %v3177 = vadd.f32 %v3151, %v3166
    %v3178 = vadd.f32 %v3152, %v3168
    %v3179 = vadd.f32 %v3153, %v3170
    %v3180 = vadd.f32 %v3154, %v3172
    %v3181 = vld [vmem:[%s1808] sm:$0xff]
    %v3182 = vld [vmem:[%s1808 + $0x8] sm:$0xff]
    %v3183 = vld [vmem:[%s1808 + $0x48] sm:$0xff]
    %v3184 = vld [vmem:[%s1808 + $0x50] sm:$0xff]
    %s3185 = sld [smem:[#allocation9 + $0x1c]]
    %v3186 = vstv %s3185
    %v3187 = vmul.f32 %v3181, %v3186
    %v3188 = vmul.f32 %v3182, %v3186
    %v3189 = vmul.f32 %v3183, %v3186
    %v3190 = vmul.f32 %v3184, %v3186
    %s3191 = sld [smem:[#allocation9 + $0x1d]]
    %v3192 = vstv %s3191
    %v3193 = vmul.f32 %v3181, %v3192
    %v3194 = vmul.f32 %v3182, %v3192
    %v3195 = vmul.f32 %v3183, %v3192
    %v3196 = vmul.f32 %v3184, %v3192
    %3201 = vrot.lane.b32.xlu0 %v3193, 127
    %v3202 = vpop.permute.xlu0 %3201
    %3203 = vrot.lane.b32.xlu0 %v3194, 127
    %v3204 = vpop.permute.xlu0 %3203
    %3205 = vrot.lane.b32.xlu0 %v3195, 127
    %v3206 = vpop.permute.xlu0 %3205
    %3207 = vrot.lane.b32.xlu0 %v3196, 127
    %v3208 = vpop.permute.xlu0 %3207
    %v3213 = vadd.f32 %v3187, %v3202
    %v3214 = vadd.f32 %v3188, %v3204
    %v3215 = vadd.f32 %v3189, %v3206
    %v3216 = vadd.f32 %v3190, %v3208
    %v3217 = vld [vmem:[%s1808 + $0x1] sm:$0xff]
    %v3218 = vld [vmem:[%s1808 + $0x9] sm:$0xff]
    %v3219 = vld [vmem:[%s1808 + $0x49] sm:$0xff]
    %v3220 = vld [vmem:[%s1808 + $0x51] sm:$0xff]
    %s3221 = sld [smem:[#allocation9 + $0x1e]]
    %v3222 = vstv %s3221
    %v3223 = vmul.f32 %v3217, %v3222
    %v3224 = vmul.f32 %v3218, %v3222
    %v3225 = vmul.f32 %v3219, %v3222
    %v3226 = vmul.f32 %v3220, %v3222
    %v3227 = vadd.f32 %v3213, %v3223
    %v3228 = vadd.f32 %v3214, %v3224
    %v3229 = vadd.f32 %v3215, %v3225
    %v3230 = vadd.f32 %v3216, %v3226
    %s3231 = sld [smem:[#allocation9 + $0x1f]]
    %v3232 = vstv %s3231
    %v3233 = vmul.f32 %v3217, %v3232
    %v3234 = vmul.f32 %v3218, %v3232
    %v3235 = vmul.f32 %v3219, %v3232
    %v3236 = vmul.f32 %v3220, %v3232
    %3241 = vrot.lane.b32.xlu0 %v3233, 127
    %v3242 = vpop.permute.xlu0 %3241
    %3243 = vrot.lane.b32.xlu0 %v3234, 127
    %v3244 = vpop.permute.xlu0 %3243
    %3245 = vrot.lane.b32.xlu0 %v3235, 127
    %v3246 = vpop.permute.xlu0 %3245
    %3247 = vrot.lane.b32.xlu0 %v3236, 127
    %v3248 = vpop.permute.xlu0 %3247
    %v3253 = vadd.f32 %v3227, %v3242
    %v3254 = vadd.f32 %v3228, %v3244
    %v3255 = vadd.f32 %v3229, %v3246
    %v3256 = vadd.f32 %v3230, %v3248
    %v3257 = vld [vmem:[%s2607] sm:$0xff]
    %v3258 = vld [vmem:[%s2607 + $0x8] sm:$0xff]
    %v3259 = vld [vmem:[%s2607 + $0x48] sm:$0xff]
    %v3260 = vld [vmem:[%s2607 + $0x50] sm:$0xff]
    %s3261 = sld [smem:[#allocation9 + $0x20]]
    %v3262 = vstv %s3261
    %v3263 = vmul.f32 %v3257, %v3262
    %v3264 = vmul.f32 %v3258, %v3262
    %v3265 = vmul.f32 %v3259, %v3262
    %v3266 = vmul.f32 %v3260, %v3262
    %s3267 = sld [smem:[#allocation9 + $0x21]]
    %v3268 = vstv %s3267
    %v3269 = vmul.f32 %v3257, %v3268
    %v3270 = vmul.f32 %v3258, %v3268
    %v3271 = vmul.f32 %v3259, %v3268
    %v3272 = vmul.f32 %v3260, %v3268
    %3277 = vrot.lane.b32.xlu0 %v3269, 127
    %v3278 = vpop.permute.xlu0 %3277
    %3279 = vrot.lane.b32.xlu0 %v3270, 127
    %v3280 = vpop.permute.xlu0 %3279
    %3281 = vrot.lane.b32.xlu0 %v3271, 127
    %v3282 = vpop.permute.xlu0 %3281
    %3283 = vrot.lane.b32.xlu0 %v3272, 127
    %v3284 = vpop.permute.xlu0 %3283
    %v3289 = vadd.f32 %v3263, %v3278
    %v3290 = vadd.f32 %v3264, %v3280
    %v3291 = vadd.f32 %v3265, %v3282
    %v3292 = vadd.f32 %v3266, %v3284
    %v3293 = vld [vmem:[%s2607 + $0x1] sm:$0xff]
    %v3294 = vld [vmem:[%s2607 + $0x9] sm:$0xff]
    %v3295 = vld [vmem:[%s2607 + $0x49] sm:$0xff]
    %v3296 = vld [vmem:[%s2607 + $0x51] sm:$0xff]
    %s3297 = sld [smem:[#allocation9 + $0x22]]
    %v3298 = vstv %s3297
    %v3299 = vmul.f32 %v3293, %v3298
    %v3300 = vmul.f32 %v3294, %v3298
    %v3301 = vmul.f32 %v3295, %v3298
    %v3302 = vmul.f32 %v3296, %v3298
    %v3303 = vadd.f32 %v3289, %v3299
    %v3304 = vadd.f32 %v3290, %v3300
    %v3305 = vadd.f32 %v3291, %v3301
    %v3306 = vadd.f32 %v3292, %v3302
    %s3307 = sld [smem:[#allocation9 + $0x23]]
    %v3308 = vstv %s3307
    %v3309 = vmul.f32 %v3293, %v3308
    %v3310 = vmul.f32 %v3294, %v3308
    %v3311 = vmul.f32 %v3295, %v3308
    %v3312 = vmul.f32 %v3296, %v3308
    %3317 = vrot.lane.b32.xlu0 %v3309, 127
    %v3318 = vpop.permute.xlu0 %3317
    %3319 = vrot.lane.b32.xlu0 %v3310, 127
    %v3320 = vpop.permute.xlu0 %3319
    %3321 = vrot.lane.b32.xlu0 %v3311, 127
    %v3322 = vpop.permute.xlu0 %3321
    %3323 = vrot.lane.b32.xlu0 %v3312, 127
    %v3324 = vpop.permute.xlu0 %3323
    %v3329 = vadd.f32 %v3303, %v3318
    %v3330 = vadd.f32 %v3304, %v3320
    %v3331 = vadd.f32 %v3305, %v3322
    %v3332 = vadd.f32 %v3306, %v3324
    %v3333 = vadd.f32 %v3177, %v3253
    %v3334 = vadd.f32 %v3178, %v3254
    %v3335 = vadd.f32 %v3179, %v3255
    %v3336 = vadd.f32 %v3180, %v3256
    %v3337 = vadd.f32 %v3333, %v3329
    %v3338 = vadd.f32 %v3334, %v3330
    %v3339 = vadd.f32 %v3335, %v3331
    %v3340 = vadd.f32 %v3336, %v3332
    %s3341 = sld [smem:[#allocation10 + $0x2]]
    %v3342 = vstv %s3341
    %v3343 = vadd.f32 %v3337, %v3342
    %v3344 = vadd.f32 %v3338, %v3342
    %v3345 = vadd.f32 %v3339, %v3342
    %v3346 = vadd.f32 %v3340, %v3342
    %s3347 = scalar_lea.vmem [#allocation12], 32
    %3348 = vst.msk [vmem:[%s3347] sm:$0xff] %vm1009, %v3343
    %3349 = vst.msk [vmem:[%s3347 + $0x8] sm:$0xff] %vm1009, %v3344
    %3350 = vst.msk [vmem:[%s3347 + $0x80] sm:$0xff] %vm1009, %v3345
    %3351 = vst.msk [vmem:[%s3347 + $0x88] sm:$0xff] %vm1009, %v3346
    %v3352 = vld [vmem:[#allocation3] sm:$0xff]
    %v3353 = vld [vmem:[#allocation3 + $0x8] sm:$0xff]
    %v3354 = vld [vmem:[#allocation3 + $0x48] sm:$0xff]
    %v3355 = vld [vmem:[#allocation3 + $0x50] sm:$0xff]
    %s3356 = sld [smem:[#allocation9 + $0x24]]
    %v3357 = vstv %s3356
    %v3358 = vmul.f32 %v3352, %v3357
    %v3359 = vmul.f32 %v3353, %v3357
    %v3360 = vmul.f32 %v3354, %v3357
    %v3361 = vmul.f32 %v3355, %v3357
    %s3362 = sld [smem:[#allocation9 + $0x25]]
    %v3363 = vstv %s3362
    %v3364 = vmul.f32 %v3352, %v3363
    %v3365 = vmul.f32 %v3353, %v3363
    %v3366 = vmul.f32 %v3354, %v3363
    %v3367 = vmul.f32 %v3355, %v3363
    %3372 = vrot.lane.b32.xlu0 %v3364, 127
    %v3373 = vpop.permute.xlu0 %3372
    %3374 = vrot.lane.b32.xlu0 %v3365, 127
    %v3375 = vpop.permute.xlu0 %3374
    %3376 = vrot.lane.b32.xlu0 %v3366, 127
    %v3377 = vpop.permute.xlu0 %3376
    %3378 = vrot.lane.b32.xlu0 %v3367, 127
    %v3379 = vpop.permute.xlu0 %3378
    %v3384 = vadd.f32 %v3358, %v3373
    %v3385 = vadd.f32 %v3359, %v3375
    %v3386 = vadd.f32 %v3360, %v3377
    %v3387 = vadd.f32 %v3361, %v3379
    %v3388 = vld [vmem:[#allocation3 + $0x1] sm:$0xff]
    %v3389 = vld [vmem:[#allocation3 + $0x9] sm:$0xff]
    %v3390 = vld [vmem:[#allocation3 + $0x49] sm:$0xff]
    %v3391 = vld [vmem:[#allocation3 + $0x51] sm:$0xff]
    %s3392 = sld [smem:[#allocation9 + $0x26]]
    %v3393 = vstv %s3392
    %v3394 = vmul.f32 %v3388, %v3393
    %v3395 = vmul.f32 %v3389, %v3393
    %v3396 = vmul.f32 %v3390, %v3393
    %v3397 = vmul.f32 %v3391, %v3393
    %v3398 = vadd.f32 %v3384, %v3394
    %v3399 = vadd.f32 %v3385, %v3395
    %v3400 = vadd.f32 %v3386, %v3396
    %v3401 = vadd.f32 %v3387, %v3397
    %s3402 = sld [smem:[#allocation9 + $0x27]]
    %v3403 = vstv %s3402
    %v3404 = vmul.f32 %v3388, %v3403
    %v3405 = vmul.f32 %v3389, %v3403
    %v3406 = vmul.f32 %v3390, %v3403
    %v3407 = vmul.f32 %v3391, %v3403
    %3412 = vrot.lane.b32.xlu0 %v3404, 127
    %v3413 = vpop.permute.xlu0 %3412
    %3414 = vrot.lane.b32.xlu0 %v3405, 127
    %v3415 = vpop.permute.xlu0 %3414
    %3416 = vrot.lane.b32.xlu0 %v3406, 127
    %v3417 = vpop.permute.xlu0 %3416
    %3418 = vrot.lane.b32.xlu0 %v3407, 127
    %v3419 = vpop.permute.xlu0 %3418
    %v3424 = vadd.f32 %v3398, %v3413
    %v3425 = vadd.f32 %v3399, %v3415
    %v3426 = vadd.f32 %v3400, %v3417
    %v3427 = vadd.f32 %v3401, %v3419
    %v3428 = vld [vmem:[%s1808] sm:$0xff]
    %v3429 = vld [vmem:[%s1808 + $0x8] sm:$0xff]
    %v3430 = vld [vmem:[%s1808 + $0x48] sm:$0xff]
    %v3431 = vld [vmem:[%s1808 + $0x50] sm:$0xff]
    %s3432 = sld [smem:[#allocation9 + $0x28]]
    %v3433 = vstv %s3432
    %v3434 = vmul.f32 %v3428, %v3433
    %v3435 = vmul.f32 %v3429, %v3433
    %v3436 = vmul.f32 %v3430, %v3433
    %v3437 = vmul.f32 %v3431, %v3433
    %s3438 = sld [smem:[#allocation9 + $0x29]]
    %v3439 = vstv %s3438
    %v3440 = vmul.f32 %v3428, %v3439
    %v3441 = vmul.f32 %v3429, %v3439
    %v3442 = vmul.f32 %v3430, %v3439
    %v3443 = vmul.f32 %v3431, %v3439
    %3448 = vrot.lane.b32.xlu0 %v3440, 127
    %v3449 = vpop.permute.xlu0 %3448
    %3450 = vrot.lane.b32.xlu0 %v3441, 127
    %v3451 = vpop.permute.xlu0 %3450
    %3452 = vrot.lane.b32.xlu0 %v3442, 127
    %v3453 = vpop.permute.xlu0 %3452
    %3454 = vrot.lane.b32.xlu0 %v3443, 127
    %v3455 = vpop.permute.xlu0 %3454
    %v3460 = vadd.f32 %v3434, %v3449
    %v3461 = vadd.f32 %v3435, %v3451
    %v3462 = vadd.f32 %v3436, %v3453
    %v3463 = vadd.f32 %v3437, %v3455
    %v3464 = vld [vmem:[%s1808 + $0x1] sm:$0xff]
    %v3465 = vld [vmem:[%s1808 + $0x9] sm:$0xff]
    %v3466 = vld [vmem:[%s1808 + $0x49] sm:$0xff]
    %v3467 = vld [vmem:[%s1808 + $0x51] sm:$0xff]
    %s3468 = sld [smem:[#allocation9 + $0x2a]]
    %v3469 = vstv %s3468
    %v3470 = vmul.f32 %v3464, %v3469
    %v3471 = vmul.f32 %v3465, %v3469
    %v3472 = vmul.f32 %v3466, %v3469
    %v3473 = vmul.f32 %v3467, %v3469
    %v3474 = vadd.f32 %v3460, %v3470
    %v3475 = vadd.f32 %v3461, %v3471
    %v3476 = vadd.f32 %v3462, %v3472
    %v3477 = vadd.f32 %v3463, %v3473
    %s3478 = sld [smem:[#allocation9 + $0x2b]]
    %v3479 = vstv %s3478
    %v3480 = vmul.f32 %v3464, %v3479
    %v3481 = vmul.f32 %v3465, %v3479
    %v3482 = vmul.f32 %v3466, %v3479
    %v3483 = vmul.f32 %v3467, %v3479
    %3488 = vrot.lane.b32.xlu0 %v3480, 127
    %v3489 = vpop.permute.xlu0 %3488
    %3490 = vrot.lane.b32.xlu0 %v3481, 127
    %v3491 = vpop.permute.xlu0 %3490
    %3492 = vrot.lane.b32.xlu0 %v3482, 127
    %v3493 = vpop.permute.xlu0 %3492
    %3494 = vrot.lane.b32.xlu0 %v3483, 127
    %v3495 = vpop.permute.xlu0 %3494
    %v3500 = vadd.f32 %v3474, %v3489
    %v3501 = vadd.f32 %v3475, %v3491
    %v3502 = vadd.f32 %v3476, %v3493
    %v3503 = vadd.f32 %v3477, %v3495
    %v3504 = vld [vmem:[%s2607] sm:$0xff]
    %v3505 = vld [vmem:[%s2607 + $0x8] sm:$0xff]
    %v3506 = vld [vmem:[%s2607 + $0x48] sm:$0xff]
    %v3507 = vld [vmem:[%s2607 + $0x50] sm:$0xff]
    %s3508 = sld [smem:[#allocation9 + $0x2c]]
    %v3509 = vstv %s3508
    %v3510 = vmul.f32 %v3504, %v3509
    %v3511 = vmul.f32 %v3505, %v3509
    %v3512 = vmul.f32 %v3506, %v3509
    %v3513 = vmul.f32 %v3507, %v3509
    %s3514 = sld [smem:[#allocation9 + $0x2d]]
    %v3515 = vstv %s3514
    %v3516 = vmul.f32 %v3504, %v3515
    %v3517 = vmul.f32 %v3505, %v3515
    %v3518 = vmul.f32 %v3506, %v3515
    %v3519 = vmul.f32 %v3507, %v3515
    %3524 = vrot.lane.b32.xlu0 %v3516, 127
    %v3525 = vpop.permute.xlu0 %3524
    %3526 = vrot.lane.b32.xlu0 %v3517, 127
    %v3527 = vpop.permute.xlu0 %3526
    %3528 = vrot.lane.b32.xlu0 %v3518, 127
    %v3529 = vpop.permute.xlu0 %3528
    %3530 = vrot.lane.b32.xlu0 %v3519, 127
    %v3531 = vpop.permute.xlu0 %3530
    %v3536 = vadd.f32 %v3510, %v3525
    %v3537 = vadd.f32 %v3511, %v3527
    %v3538 = vadd.f32 %v3512, %v3529
    %v3539 = vadd.f32 %v3513, %v3531
    %v3540 = vld [vmem:[%s2607 + $0x1] sm:$0xff]
    %v3541 = vld [vmem:[%s2607 + $0x9] sm:$0xff]
    %v3542 = vld [vmem:[%s2607 + $0x49] sm:$0xff]
    %v3543 = vld [vmem:[%s2607 + $0x51] sm:$0xff]
    %s3544 = sld [smem:[#allocation9 + $0x2e]]
    %v3545 = vstv %s3544
    %v3546 = vmul.f32 %v3540, %v3545
    %v3547 = vmul.f32 %v3541, %v3545
    %v3548 = vmul.f32 %v3542, %v3545
    %v3549 = vmul.f32 %v3543, %v3545
    %v3550 = vadd.f32 %v3536, %v3546
    %v3551 = vadd.f32 %v3537, %v3547
    %v3552 = vadd.f32 %v3538, %v3548
    %v3553 = vadd.f32 %v3539, %v3549
    %s3554 = sld [smem:[#allocation9 + $0x2f]]
    %v3555 = vstv %s3554
    %v3556 = vmul.f32 %v3540, %v3555
    %v3557 = vmul.f32 %v3541, %v3555
    %v3558 = vmul.f32 %v3542, %v3555
    %v3559 = vmul.f32 %v3543, %v3555
    %3564 = vrot.lane.b32.xlu0 %v3556, 127
    %v3565 = vpop.permute.xlu0 %3564
    %3566 = vrot.lane.b32.xlu0 %v3557, 127
    %v3567 = vpop.permute.xlu0 %3566
    %3568 = vrot.lane.b32.xlu0 %v3558, 127
    %v3569 = vpop.permute.xlu0 %3568
    %3570 = vrot.lane.b32.xlu0 %v3559, 127
    %v3571 = vpop.permute.xlu0 %3570
    %v3576 = vadd.f32 %v3550, %v3565
    %v3577 = vadd.f32 %v3551, %v3567
    %v3578 = vadd.f32 %v3552, %v3569
    %v3579 = vadd.f32 %v3553, %v3571
    %v3580 = vadd.f32 %v3424, %v3500
    %v3581 = vadd.f32 %v3425, %v3501
    %v3582 = vadd.f32 %v3426, %v3502
    %v3583 = vadd.f32 %v3427, %v3503
    %v3584 = vadd.f32 %v3580, %v3576
    %v3585 = vadd.f32 %v3581, %v3577
    %v3586 = vadd.f32 %v3582, %v3578
    %v3587 = vadd.f32 %v3583, %v3579
    %s3588 = sld [smem:[#allocation10 + $0x3]]
    %v3589 = vstv %s3588
    %v3590 = vadd.f32 %v3584, %v3589
    %v3591 = vadd.f32 %v3585, %v3589
    %v3592 = vadd.f32 %v3586, %v3589
    %v3593 = vadd.f32 %v3587, %v3589
    %s3594 = scalar_lea.vmem [#allocation12], 48
    %3595 = vst.msk [vmem:[%s3594] sm:$0xff] %vm1009, %v3590
    %3596 = vst.msk [vmem:[%s3594 + $0x8] sm:$0xff] %vm1009, %v3591
    %3597 = vst.msk [vmem:[%s3594 + $0x80] sm:$0xff] %vm1009, %v3592
    %3598 = vst.msk [vmem:[%s3594 + $0x88] sm:$0xff] %vm1009, %v3593
    %v3599 = vld [vmem:[#allocation3] sm:$0xff]
    %v3600 = vld [vmem:[#allocation3 + $0x8] sm:$0xff]
    %v3601 = vld [vmem:[#allocation3 + $0x48] sm:$0xff]
    %v3602 = vld [vmem:[#allocation3 + $0x50] sm:$0xff]
    %s3603 = sld [smem:[#allocation9 + $0x30]]
    %v3604 = vstv %s3603
    %v3605 = vmul.f32 %v3599, %v3604
    %v3606 = vmul.f32 %v3600, %v3604
    %v3607 = vmul.f32 %v3601, %v3604
    %v3608 = vmul.f32 %v3602, %v3604
    %s3609 = sld [smem:[#allocation9 + $0x31]]
    %v3610 = vstv %s3609
    %v3611 = vmul.f32 %v3599, %v3610
    %v3612 = vmul.f32 %v3600, %v3610
    %v3613 = vmul.f32 %v3601, %v3610
    %v3614 = vmul.f32 %v3602, %v3610
    %3619 = vrot.lane.b32.xlu0 %v3611, 127
    %v3620 = vpop.permute.xlu0 %3619
    %3621 = vrot.lane.b32.xlu0 %v3612, 127
    %v3622 = vpop.permute.xlu0 %3621
    %3623 = vrot.lane.b32.xlu0 %v3613, 127
    %v3624 = vpop.permute.xlu0 %3623
    %3625 = vrot.lane.b32.xlu0 %v3614, 127
    %v3626 = vpop.permute.xlu0 %3625
    %v3631 = vadd.f32 %v3605, %v3620
    %v3632 = vadd.f32 %v3606, %v3622
    %v3633 = vadd.f32 %v3607, %v3624
    %v3634 = vadd.f32 %v3608, %v3626
    %v3635 = vld [vmem:[#allocation3 + $0x1] sm:$0xff]
    %v3636 = vld [vmem:[#allocation3 + $0x9] sm:$0xff]
    %v3637 = vld [vmem:[#allocation3 + $0x49] sm:$0xff]
    %v3638 = vld [vmem:[#allocation3 + $0x51] sm:$0xff]
    %s3639 = sld [smem:[#allocation9 + $0x32]]
    %v3640 = vstv %s3639
    %v3641 = vmul.f32 %v3635, %v3640
    %v3642 = vmul.f32 %v3636, %v3640
    %v3643 = vmul.f32 %v3637, %v3640
    %v3644 = vmul.f32 %v3638, %v3640
    %v3645 = vadd.f32 %v3631, %v3641
    %v3646 = vadd.f32 %v3632, %v3642
    %v3647 = vadd.f32 %v3633, %v3643
    %v3648 = vadd.f32 %v3634, %v3644
    %s3649 = sld [smem:[#allocation9 + $0x33]]
    %v3650 = vstv %s3649
    %v3651 = vmul.f32 %v3635, %v3650
    %v3652 = vmul.f32 %v3636, %v3650
    %v3653 = vmul.f32 %v3637, %v3650
    %v3654 = vmul.f32 %v3638, %v3650
    %3659 = vrot.lane.b32.xlu0 %v3651, 127
    %v3660 = vpop.permute.xlu0 %3659
    %3661 = vrot.lane.b32.xlu0 %v3652, 127
    %v3662 = vpop.permute.xlu0 %3661
    %3663 = vrot.lane.b32.xlu0 %v3653, 127
    %v3664 = vpop.permute.xlu0 %3663
    %3665 = vrot.lane.b32.xlu0 %v3654, 127
    %v3666 = vpop.permute.xlu0 %3665
    %v3671 = vadd.f32 %v3645, %v3660
    %v3672 = vadd.f32 %v3646, %v3662
    %v3673 = vadd.f32 %v3647, %v3664
    %v3674 = vadd.f32 %v3648, %v3666
    %v3675 = vld [vmem:[%s1808] sm:$0xff]
    %v3676 = vld [vmem:[%s1808 + $0x8] sm:$0xff]
    %v3677 = vld [vmem:[%s1808 + $0x48] sm:$0xff]
    %v3678 = vld [vmem:[%s1808 + $0x50] sm:$0xff]
    %s3679 = sld [smem:[#allocation9 + $0x34]]
    %v3680 = vstv %s3679
    %v3681 = vmul.f32 %v3675, %v3680
    %v3682 = vmul.f32 %v3676, %v3680
    %v3683 = vmul.f32 %v3677, %v3680
    %v3684 = vmul.f32 %v3678, %v3680
    %s3685 = sld [smem:[#allocation9 + $0x35]]
    %v3686 = vstv %s3685
    %v3687 = vmul.f32 %v3675, %v3686
    %v3688 = vmul.f32 %v3676, %v3686
    %v3689 = vmul.f32 %v3677, %v3686
    %v3690 = vmul.f32 %v3678, %v3686
    %3695 = vrot.lane.b32.xlu0 %v3687, 127
    %v3696 = vpop.permute.xlu0 %3695
    %3697 = vrot.lane.b32.xlu0 %v3688, 127
    %v3698 = vpop.permute.xlu0 %3697
    %3699 = vrot.lane.b32.xlu0 %v3689, 127
    %v3700 = vpop.permute.xlu0 %3699
    %3701 = vrot.lane.b32.xlu0 %v3690, 127
    %v3702 = vpop.permute.xlu0 %3701
    %v3707 = vadd.f32 %v3681, %v3696
    %v3708 = vadd.f32 %v3682, %v3698
    %v3709 = vadd.f32 %v3683, %v3700
    %v3710 = vadd.f32 %v3684, %v3702
    %v3711 = vld [vmem:[%s1808 + $0x1] sm:$0xff]
    %v3712 = vld [vmem:[%s1808 + $0x9] sm:$0xff]
    %v3713 = vld [vmem:[%s1808 + $0x49] sm:$0xff]
    %v3714 = vld [vmem:[%s1808 + $0x51] sm:$0xff]
    %s3715 = sld [smem:[#allocation9 + $0x36]]
    %v3716 = vstv %s3715
    %v3717 = vmul.f32 %v3711, %v3716
    %v3718 = vmul.f32 %v3712, %v3716
    %v3719 = vmul.f32 %v3713, %v3716
    %v3720 = vmul.f32 %v3714, %v3716
    %v3721 = vadd.f32 %v3707, %v3717
    %v3722 = vadd.f32 %v3708, %v3718
    %v3723 = vadd.f32 %v3709, %v3719
    %v3724 = vadd.f32 %v3710, %v3720
    %s3725 = sld [smem:[#allocation9 + $0x37]]
    %v3726 = vstv %s3725
    %v3727 = vmul.f32 %v3711, %v3726
    %v3728 = vmul.f32 %v3712, %v3726
    %v3729 = vmul.f32 %v3713, %v3726
    %v3730 = vmul.f32 %v3714, %v3726
    %3735 = vrot.lane.b32.xlu0 %v3727, 127
    %v3736 = vpop.permute.xlu0 %3735
    %3737 = vrot.lane.b32.xlu0 %v3728, 127
    %v3738 = vpop.permute.xlu0 %3737
    %3739 = vrot.lane.b32.xlu0 %v3729, 127
    %v3740 = vpop.permute.xlu0 %3739
    %3741 = vrot.lane.b32.xlu0 %v3730, 127
    %v3742 = vpop.permute.xlu0 %3741
    %v3747 = vadd.f32 %v3721, %v3736
    %v3748 = vadd.f32 %v3722, %v3738
    %v3749 = vadd.f32 %v3723, %v3740
    %v3750 = vadd.f32 %v3724, %v3742
    %v3751 = vld [vmem:[%s2607] sm:$0xff]
    %v3752 = vld [vmem:[%s2607 + $0x8] sm:$0xff]
    %v3753 = vld [vmem:[%s2607 + $0x48] sm:$0xff]
    %v3754 = vld [vmem:[%s2607 + $0x50] sm:$0xff]
    %s3755 = sld [smem:[#allocation9 + $0x38]]
    %v3756 = vstv %s3755
    %v3757 = vmul.f32 %v3751, %v3756
    %v3758 = vmul.f32 %v3752, %v3756
    %v3759 = vmul.f32 %v3753, %v3756
    %v3760 = vmul.f32 %v3754, %v3756
    %s3761 = sld [smem:[#allocation9 + $0x39]]
    %v3762 = vstv %s3761
    %v3763 = vmul.f32 %v3751, %v3762
    %v3764 = vmul.f32 %v3752, %v3762
    %v3765 = vmul.f32 %v3753, %v3762
    %v3766 = vmul.f32 %v3754, %v3762
    %3771 = vrot.lane.b32.xlu0 %v3763, 127
    %v3772 = vpop.permute.xlu0 %3771
    %3773 = vrot.lane.b32.xlu0 %v3764, 127
    %v3774 = vpop.permute.xlu0 %3773
    %3775 = vrot.lane.b32.xlu0 %v3765, 127
    %v3776 = vpop.permute.xlu0 %3775
    %3777 = vrot.lane.b32.xlu0 %v3766, 127
    %v3778 = vpop.permute.xlu0 %3777
    %v3783 = vadd.f32 %v3757, %v3772
    %v3784 = vadd.f32 %v3758, %v3774
    %v3785 = vadd.f32 %v3759, %v3776
    %v3786 = vadd.f32 %v3760, %v3778
    %v3787 = vld [vmem:[%s2607 + $0x1] sm:$0xff]
    %v3788 = vld [vmem:[%s2607 + $0x9] sm:$0xff]
    %v3789 = vld [vmem:[%s2607 + $0x49] sm:$0xff]
    %v3790 = vld [vmem:[%s2607 + $0x51] sm:$0xff]
    %s3791 = sld [smem:[#allocation9 + $0x3a]]
    %v3792 = vstv %s3791
    %v3793 = vmul.f32 %v3787, %v3792
    %v3794 = vmul.f32 %v3788, %v3792
    %v3795 = vmul.f32 %v3789, %v3792
    %v3796 = vmul.f32 %v3790, %v3792
    %v3797 = vadd.f32 %v3783, %v3793
    %v3798 = vadd.f32 %v3784, %v3794
    %v3799 = vadd.f32 %v3785, %v3795
    %v3800 = vadd.f32 %v3786, %v3796
    %s3801 = sld [smem:[#allocation9 + $0x3b]]
    %v3802 = vstv %s3801
    %v3803 = vmul.f32 %v3787, %v3802
    %v3804 = vmul.f32 %v3788, %v3802
    %v3805 = vmul.f32 %v3789, %v3802
    %v3806 = vmul.f32 %v3790, %v3802
    %3811 = vrot.lane.b32.xlu0 %v3803, 127
    %v3812 = vpop.permute.xlu0 %3811
    %3813 = vrot.lane.b32.xlu0 %v3804, 127
    %v3814 = vpop.permute.xlu0 %3813
    %3815 = vrot.lane.b32.xlu0 %v3805, 127
    %v3816 = vpop.permute.xlu0 %3815
    %3817 = vrot.lane.b32.xlu0 %v3806, 127
    %v3818 = vpop.permute.xlu0 %3817
    %v3823 = vadd.f32 %v3797, %v3812
    %v3824 = vadd.f32 %v3798, %v3814
    %v3825 = vadd.f32 %v3799, %v3816
    %v3826 = vadd.f32 %v3800, %v3818
    %v3827 = vadd.f32 %v3671, %v3747
    %v3828 = vadd.f32 %v3672, %v3748
    %v3829 = vadd.f32 %v3673, %v3749
    %v3830 = vadd.f32 %v3674, %v3750
    %v3831 = vadd.f32 %v3827, %v3823
    %v3832 = vadd.f32 %v3828, %v3824
    %v3833 = vadd.f32 %v3829, %v3825
    %v3834 = vadd.f32 %v3830, %v3826
    %s3835 = sld [smem:[#allocation10 + $0x4]]
    %v3836 = vstv %s3835
    %v3837 = vadd.f32 %v3831, %v3836
    %v3838 = vadd.f32 %v3832, %v3836
    %v3839 = vadd.f32 %v3833, %v3836
    %v3840 = vadd.f32 %v3834, %v3836
    %s3841 = scalar_lea.vmem [#allocation12], 64
    %3842 = vst.msk [vmem:[%s3841] sm:$0xff] %vm1009, %v3837
    %3843 = vst.msk [vmem:[%s3841 + $0x8] sm:$0xff] %vm1009, %v3838
    %3844 = vst.msk [vmem:[%s3841 + $0x80] sm:$0xff] %vm1009, %v3839
    %3845 = vst.msk [vmem:[%s3841 + $0x88] sm:$0xff] %vm1009, %v3840
    %v3846 = vld [vmem:[#allocation3] sm:$0xff]
    %v3847 = vld [vmem:[#allocation3 + $0x8] sm:$0xff]
    %v3848 = vld [vmem:[#allocation3 + $0x48] sm:$0xff]
    %v3849 = vld [vmem:[#allocation3 + $0x50] sm:$0xff]
    %s3850 = sld [smem:[#allocation9 + $0x3c]]
    %v3851 = vstv %s3850
    %v3852 = vmul.f32 %v3846, %v3851
    %v3853 = vmul.f32 %v3847, %v3851
    %v3854 = vmul.f32 %v3848, %v3851
    %v3855 = vmul.f32 %v3849, %v3851
    %s3856 = sld [smem:[#allocation9 + $0x3d]]
    %v3857 = vstv %s3856
    %v3858 = vmul.f32 %v3846, %v3857
    %v3859 = vmul.f32 %v3847, %v3857
    %v3860 = vmul.f32 %v3848, %v3857
    %v3861 = vmul.f32 %v3849, %v3857
    %3866 = vrot.lane.b32.xlu0 %v3858, 127
    %v3867 = vpop.permute.xlu0 %3866
    %3868 = vrot.lane.b32.xlu0 %v3859, 127
    %v3869 = vpop.permute.xlu0 %3868
    %3870 = vrot.lane.b32.xlu0 %v3860, 127
    %v3871 = vpop.permute.xlu0 %3870
    %3872 = vrot.lane.b32.xlu0 %v3861, 127
    %v3873 = vpop.permute.xlu0 %3872
    %v3878 = vadd.f32 %v3852, %v3867
    %v3879 = vadd.f32 %v3853, %v3869
    %v3880 = vadd.f32 %v3854, %v3871
    %v3881 = vadd.f32 %v3855, %v3873
    %v3882 = vld [vmem:[#allocation3 + $0x1] sm:$0xff]
    %v3883 = vld [vmem:[#allocation3 + $0x9] sm:$0xff]
    %v3884 = vld [vmem:[#allocation3 + $0x49] sm:$0xff]
    %v3885 = vld [vmem:[#allocation3 + $0x51] sm:$0xff]
    %s3886 = sld [smem:[#allocation9 + $0x3e]]
    %v3887 = vstv %s3886
    %v3888 = vmul.f32 %v3882, %v3887
    %v3889 = vmul.f32 %v3883, %v3887
    %v3890 = vmul.f32 %v3884, %v3887
    %v3891 = vmul.f32 %v3885, %v3887
    %v3892 = vadd.f32 %v3878, %v3888
    %v3893 = vadd.f32 %v3879, %v3889
    %v3894 = vadd.f32 %v3880, %v3890
    %v3895 = vadd.f32 %v3881, %v3891
    %s3896 = sld [smem:[#allocation9 + $0x3f]]
    %v3897 = vstv %s3896
    %v3898 = vmul.f32 %v3882, %v3897
    %v3899 = vmul.f32 %v3883, %v3897
    %v3900 = vmul.f32 %v3884, %v3897
    %v3901 = vmul.f32 %v3885, %v3897
    %3906 = vrot.lane.b32.xlu0 %v3898, 127
    %v3907 = vpop.permute.xlu0 %3906
    %3908 = vrot.lane.b32.xlu0 %v3899, 127
    %v3909 = vpop.permute.xlu0 %3908
    %3910 = vrot.lane.b32.xlu0 %v3900, 127
    %v3911 = vpop.permute.xlu0 %3910
    %3912 = vrot.lane.b32.xlu0 %v3901, 127
    %v3913 = vpop.permute.xlu0 %3912
    %v3918 = vadd.f32 %v3892, %v3907
    %v3919 = vadd.f32 %v3893, %v3909
    %v3920 = vadd.f32 %v3894, %v3911
    %v3921 = vadd.f32 %v3895, %v3913
    %v3922 = vld [vmem:[%s1808] sm:$0xff]
    %v3923 = vld [vmem:[%s1808 + $0x8] sm:$0xff]
    %v3924 = vld [vmem:[%s1808 + $0x48] sm:$0xff]
    %v3925 = vld [vmem:[%s1808 + $0x50] sm:$0xff]
    %s3926 = sld [smem:[#allocation9 + $0x40]]
    %v3927 = vstv %s3926
    %v3928 = vmul.f32 %v3922, %v3927
    %v3929 = vmul.f32 %v3923, %v3927
    %v3930 = vmul.f32 %v3924, %v3927
    %v3931 = vmul.f32 %v3925, %v3927
    %s3932 = sld [smem:[#allocation9 + $0x41]]
    %v3933 = vstv %s3932
    %v3934 = vmul.f32 %v3922, %v3933
    %v3935 = vmul.f32 %v3923, %v3933
    %v3936 = vmul.f32 %v3924, %v3933
    %v3937 = vmul.f32 %v3925, %v3933
    %3942 = vrot.lane.b32.xlu0 %v3934, 127
    %v3943 = vpop.permute.xlu0 %3942
    %3944 = vrot.lane.b32.xlu0 %v3935, 127
    %v3945 = vpop.permute.xlu0 %3944
    %3946 = vrot.lane.b32.xlu0 %v3936, 127
    %v3947 = vpop.permute.xlu0 %3946
    %3948 = vrot.lane.b32.xlu0 %v3937, 127
    %v3949 = vpop.permute.xlu0 %3948
    %v3954 = vadd.f32 %v3928, %v3943
    %v3955 = vadd.f32 %v3929, %v3945
    %v3956 = vadd.f32 %v3930, %v3947
    %v3957 = vadd.f32 %v3931, %v3949
    %v3958 = vld [vmem:[%s1808 + $0x1] sm:$0xff]
    %v3959 = vld [vmem:[%s1808 + $0x9] sm:$0xff]
    %v3960 = vld [vmem:[%s1808 + $0x49] sm:$0xff]
    %v3961 = vld [vmem:[%s1808 + $0x51] sm:$0xff]
    %s3962 = sld [smem:[#allocation9 + $0x42]]
    %v3963 = vstv %s3962
    %v3964 = vmul.f32 %v3958, %v3963
    %v3965 = vmul.f32 %v3959, %v3963
    %v3966 = vmul.f32 %v3960, %v3963
    %v3967 = vmul.f32 %v3961, %v3963
    %v3968 = vadd.f32 %v3954, %v3964
    %v3969 = vadd.f32 %v3955, %v3965
    %v3970 = vadd.f32 %v3956, %v3966
    %v3971 = vadd.f32 %v3957, %v3967
    %s3972 = sld [smem:[#allocation9 + $0x43]]
    %v3973 = vstv %s3972
    %v3974 = vmul.f32 %v3958, %v3973
    %v3975 = vmul.f32 %v3959, %v3973
    %v3976 = vmul.f32 %v3960, %v3973
    %v3977 = vmul.f32 %v3961, %v3973
    %3982 = vrot.lane.b32.xlu0 %v3974, 127
    %v3983 = vpop.permute.xlu0 %3982
    %3984 = vrot.lane.b32.xlu0 %v3975, 127
    %v3985 = vpop.permute.xlu0 %3984
    %3986 = vrot.lane.b32.xlu0 %v3976, 127
    %v3987 = vpop.permute.xlu0 %3986
    %3988 = vrot.lane.b32.xlu0 %v3977, 127
    %v3989 = vpop.permute.xlu0 %3988
    %v3994 = vadd.f32 %v3968, %v3983
    %v3995 = vadd.f32 %v3969, %v3985
    %v3996 = vadd.f32 %v3970, %v3987
    %v3997 = vadd.f32 %v3971, %v3989
    %v3998 = vld [vmem:[%s2607] sm:$0xff]
    %v3999 = vld [vmem:[%s2607 + $0x8] sm:$0xff]
    %v4000 = vld [vmem:[%s2607 + $0x48] sm:$0xff]
    %v4001 = vld [vmem:[%s2607 + $0x50] sm:$0xff]
    %s4002 = sld [smem:[#allocation9 + $0x44]]
    %v4003 = vstv %s4002
    %v4004 = vmul.f32 %v3998, %v4003
    %v4005 = vmul.f32 %v3999, %v4003
    %v4006 = vmul.f32 %v4000, %v4003
    %v4007 = vmul.f32 %v4001, %v4003
    %s4008 = sld [smem:[#allocation9 + $0x45]]
    %v4009 = vstv %s4008
    %v4010 = vmul.f32 %v3998, %v4009
    %v4011 = vmul.f32 %v3999, %v4009
    %v4012 = vmul.f32 %v4000, %v4009
    %v4013 = vmul.f32 %v4001, %v4009
    %4018 = vrot.lane.b32.xlu0 %v4010, 127
    %v4019 = vpop.permute.xlu0 %4018
    %4020 = vrot.lane.b32.xlu0 %v4011, 127
    %v4021 = vpop.permute.xlu0 %4020
    %4022 = vrot.lane.b32.xlu0 %v4012, 127
    %v4023 = vpop.permute.xlu0 %4022
    %4024 = vrot.lane.b32.xlu0 %v4013, 127
    %v4025 = vpop.permute.xlu0 %4024
    %v4030 = vadd.f32 %v4004, %v4019
    %v4031 = vadd.f32 %v4005, %v4021
    %v4032 = vadd.f32 %v4006, %v4023
    %v4033 = vadd.f32 %v4007, %v4025
    %v4034 = vld [vmem:[%s2607 + $0x1] sm:$0xff]
    %v4035 = vld [vmem:[%s2607 + $0x9] sm:$0xff]
    %v4036 = vld [vmem:[%s2607 + $0x49] sm:$0xff]
    %v4037 = vld [vmem:[%s2607 + $0x51] sm:$0xff]
    %s4038 = sld [smem:[#allocation9 + $0x46]]
    %v4039 = vstv %s4038
    %v4040 = vmul.f32 %v4034, %v4039
    %v4041 = vmul.f32 %v4035, %v4039
    %v4042 = vmul.f32 %v4036, %v4039
    %v4043 = vmul.f32 %v4037, %v4039
    %v4044 = vadd.f32 %v4030, %v4040
    %v4045 = vadd.f32 %v4031, %v4041
    %v4046 = vadd.f32 %v4032, %v4042
    %v4047 = vadd.f32 %v4033, %v4043
    %s4048 = sld [smem:[#allocation9 + $0x47]]
    %v4049 = vstv %s4048
    %v4050 = vmul.f32 %v4034, %v4049
    %v4051 = vmul.f32 %v4035, %v4049
    %v4052 = vmul.f32 %v4036, %v4049
    %v4053 = vmul.f32 %v4037, %v4049
    %4058 = vrot.lane.b32.xlu0 %v4050, 127
    %v4059 = vpop.permute.xlu0 %4058
    %4060 = vrot.lane.b32.xlu0 %v4051, 127
    %v4061 = vpop.permute.xlu0 %4060
    %4062 = vrot.lane.b32.xlu0 %v4052, 127
    %v4063 = vpop.permute.xlu0 %4062
    %4064 = vrot.lane.b32.xlu0 %v4053, 127
    %v4065 = vpop.permute.xlu0 %4064
    %v4070 = vadd.f32 %v4044, %v4059
    %v4071 = vadd.f32 %v4045, %v4061
    %v4072 = vadd.f32 %v4046, %v4063
    %v4073 = vadd.f32 %v4047, %v4065
    %v4074 = vadd.f32 %v3918, %v3994
    %v4075 = vadd.f32 %v3919, %v3995
    %v4076 = vadd.f32 %v3920, %v3996
    %v4077 = vadd.f32 %v3921, %v3997
    %v4078 = vadd.f32 %v4074, %v4070
    %v4079 = vadd.f32 %v4075, %v4071
    %v4080 = vadd.f32 %v4076, %v4072
    %v4081 = vadd.f32 %v4077, %v4073
    %s4082 = sld [smem:[#allocation10 + $0x5]]
    %v4083 = vstv %s4082
    %v4084 = vadd.f32 %v4078, %v4083
    %v4085 = vadd.f32 %v4079, %v4083
    %v4086 = vadd.f32 %v4080, %v4083
    %v4087 = vadd.f32 %v4081, %v4083
    %s4088 = scalar_lea.vmem [#allocation12], 80
    %4089 = vst.msk [vmem:[%s4088] sm:$0xff] %vm1009, %v4084
    %4090 = vst.msk [vmem:[%s4088 + $0x8] sm:$0xff] %vm1009, %v4085
    %4091 = vst.msk [vmem:[%s4088 + $0x80] sm:$0xff] %vm1009, %v4086
    %4092 = vst.msk [vmem:[%s4088 + $0x88] sm:$0xff] %vm1009, %v4087
    %v4093 = vld [vmem:[#allocation3] sm:$0xff]
    %v4094 = vld [vmem:[#allocation3 + $0x8] sm:$0xff]
    %v4095 = vld [vmem:[#allocation3 + $0x48] sm:$0xff]
    %v4096 = vld [vmem:[#allocation3 + $0x50] sm:$0xff]
    %s4097 = sld [smem:[#allocation9 + $0x48]]
    %v4098 = vstv %s4097
    %v4099 = vmul.f32 %v4093, %v4098
    %v4100 = vmul.f32 %v4094, %v4098
    %v4101 = vmul.f32 %v4095, %v4098
    %v4102 = vmul.f32 %v4096, %v4098
    %s4103 = sld [smem:[#allocation9 + $0x49]]
    %v4104 = vstv %s4103
    %v4105 = vmul.f32 %v4093, %v4104
    %v4106 = vmul.f32 %v4094, %v4104
    %v4107 = vmul.f32 %v4095, %v4104
    %v4108 = vmul.f32 %v4096, %v4104
    %4113 = vrot.lane.b32.xlu0 %v4105, 127
    %v4114 = vpop.permute.xlu0 %4113
    %4115 = vrot.lane.b32.xlu0 %v4106, 127
    %v4116 = vpop.permute.xlu0 %4115
    %4117 = vrot.lane.b32.xlu0 %v4107, 127
    %v4118 = vpop.permute.xlu0 %4117
    %4119 = vrot.lane.b32.xlu0 %v4108, 127
    %v4120 = vpop.permute.xlu0 %4119
    %v4125 = vadd.f32 %v4099, %v4114
    %v4126 = vadd.f32 %v4100, %v4116
    %v4127 = vadd.f32 %v4101, %v4118
    %v4128 = vadd.f32 %v4102, %v4120
    %v4129 = vld [vmem:[#allocation3 + $0x1] sm:$0xff]
    %v4130 = vld [vmem:[#allocation3 + $0x9] sm:$0xff]
    %v4131 = vld [vmem:[#allocation3 + $0x49] sm:$0xff]
    %v4132 = vld [vmem:[#allocation3 + $0x51] sm:$0xff]
    %s4133 = sld [smem:[#allocation9 + $0x4a]]
    %v4134 = vstv %s4133
    %v4135 = vmul.f32 %v4129, %v4134
    %v4136 = vmul.f32 %v4130, %v4134
    %v4137 = vmul.f32 %v4131, %v4134
    %v4138 = vmul.f32 %v4132, %v4134
    %v4139 = vadd.f32 %v4125, %v4135
    %v4140 = vadd.f32 %v4126, %v4136
    %v4141 = vadd.f32 %v4127, %v4137
    %v4142 = vadd.f32 %v4128, %v4138
    %s4143 = sld [smem:[#allocation9 + $0x4b]]
    %v4144 = vstv %s4143
    %v4145 = vmul.f32 %v4129, %v4144
    %v4146 = vmul.f32 %v4130, %v4144
    %v4147 = vmul.f32 %v4131, %v4144
    %v4148 = vmul.f32 %v4132, %v4144
    %4153 = vrot.lane.b32.xlu0 %v4145, 127
    %v4154 = vpop.permute.xlu0 %4153
    %4155 = vrot.lane.b32.xlu0 %v4146, 127
    %v4156 = vpop.permute.xlu0 %4155
    %4157 = vrot.lane.b32.xlu0 %v4147, 127
    %v4158 = vpop.permute.xlu0 %4157
    %4159 = vrot.lane.b32.xlu0 %v4148, 127
    %v4160 = vpop.permute.xlu0 %4159
    %v4165 = vadd.f32 %v4139, %v4154
    %v4166 = vadd.f32 %v4140, %v4156
    %v4167 = vadd.f32 %v4141, %v4158
    %v4168 = vadd.f32 %v4142, %v4160
    %v4169 = vld [vmem:[%s1808] sm:$0xff]
    %v4170 = vld [vmem:[%s1808 + $0x8] sm:$0xff]
    %v4171 = vld [vmem:[%s1808 + $0x48] sm:$0xff]
    %v4172 = vld [vmem:[%s1808 + $0x50] sm:$0xff]
    %s4173 = sld [smem:[#allocation9 + $0x4c]]
    %v4174 = vstv %s4173
    %v4175 = vmul.f32 %v4169, %v4174
    %v4176 = vmul.f32 %v4170, %v4174
    %v4177 = vmul.f32 %v4171, %v4174
    %v4178 = vmul.f32 %v4172, %v4174
    %s4179 = sld [smem:[#allocation9 + $0x4d]]
    %v4180 = vstv %s4179
    %v4181 = vmul.f32 %v4169, %v4180
    %v4182 = vmul.f32 %v4170, %v4180
    %v4183 = vmul.f32 %v4171, %v4180
    %v4184 = vmul.f32 %v4172, %v4180
    %4189 = vrot.lane.b32.xlu0 %v4181, 127
    %v4190 = vpop.permute.xlu0 %4189
    %4191 = vrot.lane.b32.xlu0 %v4182, 127
    %v4192 = vpop.permute.xlu0 %4191
    %4193 = vrot.lane.b32.xlu0 %v4183, 127
    %v4194 = vpop.permute.xlu0 %4193
    %4195 = vrot.lane.b32.xlu0 %v4184, 127
    %v4196 = vpop.permute.xlu0 %4195
    %v4201 = vadd.f32 %v4175, %v4190
    %v4202 = vadd.f32 %v4176, %v4192
    %v4203 = vadd.f32 %v4177, %v4194
    %v4204 = vadd.f32 %v4178, %v4196
    %v4205 = vld [vmem:[%s1808 + $0x1] sm:$0xff]
    %v4206 = vld [vmem:[%s1808 + $0x9] sm:$0xff]
    %v4207 = vld [vmem:[%s1808 + $0x49] sm:$0xff]
    %v4208 = vld [vmem:[%s1808 + $0x51] sm:$0xff]
    %s4209 = sld [smem:[#allocation9 + $0x4e]]
    %v4210 = vstv %s4209
    %v4211 = vmul.f32 %v4205, %v4210
    %v4212 = vmul.f32 %v4206, %v4210
    %v4213 = vmul.f32 %v4207, %v4210
    %v4214 = vmul.f32 %v4208, %v4210
    %v4215 = vadd.f32 %v4201, %v4211
    %v4216 = vadd.f32 %v4202, %v4212
    %v4217 = vadd.f32 %v4203, %v4213
    %v4218 = vadd.f32 %v4204, %v4214
    %s4219 = sld [smem:[#allocation9 + $0x4f]]
    %v4220 = vstv %s4219
    %v4221 = vmul.f32 %v4205, %v4220
    %v4222 = vmul.f32 %v4206, %v4220
    %v4223 = vmul.f32 %v4207, %v4220
    %v4224 = vmul.f32 %v4208, %v4220
    %4229 = vrot.lane.b32.xlu0 %v4221, 127
    %v4230 = vpop.permute.xlu0 %4229
    %4231 = vrot.lane.b32.xlu0 %v4222, 127
    %v4232 = vpop.permute.xlu0 %4231
    %4233 = vrot.lane.b32.xlu0 %v4223, 127
    %v4234 = vpop.permute.xlu0 %4233
    %4235 = vrot.lane.b32.xlu0 %v4224, 127
    %v4236 = vpop.permute.xlu0 %4235
    %v4241 = vadd.f32 %v4215, %v4230
    %v4242 = vadd.f32 %v4216, %v4232
    %v4243 = vadd.f32 %v4217, %v4234
    %v4244 = vadd.f32 %v4218, %v4236
    %v4245 = vld [vmem:[%s2607] sm:$0xff]
    %v4246 = vld [vmem:[%s2607 + $0x8] sm:$0xff]
    %v4247 = vld [vmem:[%s2607 + $0x48] sm:$0xff]
    %v4248 = vld [vmem:[%s2607 + $0x50] sm:$0xff]
    %s4249 = sld [smem:[#allocation9 + $0x50]]
    %v4250 = vstv %s4249
    %v4251 = vmul.f32 %v4245, %v4250
    %v4252 = vmul.f32 %v4246, %v4250
    %v4253 = vmul.f32 %v4247, %v4250
    %v4254 = vmul.f32 %v4248, %v4250
    %s4255 = sld [smem:[#allocation9 + $0x51]]
    %v4256 = vstv %s4255
    %v4257 = vmul.f32 %v4245, %v4256
    %v4258 = vmul.f32 %v4246, %v4256
    %v4259 = vmul.f32 %v4247, %v4256
    %v4260 = vmul.f32 %v4248, %v4256
    %4265 = vrot.lane.b32.xlu0 %v4257, 127
    %v4266 = vpop.permute.xlu0 %4265
    %4267 = vrot.lane.b32.xlu0 %v4258, 127
    %v4268 = vpop.permute.xlu0 %4267
    %4269 = vrot.lane.b32.xlu0 %v4259, 127
    %v4270 = vpop.permute.xlu0 %4269
    %4271 = vrot.lane.b32.xlu0 %v4260, 127
    %v4272 = vpop.permute.xlu0 %4271
    %v4277 = vadd.f32 %v4251, %v4266
    %v4278 = vadd.f32 %v4252, %v4268
    %v4279 = vadd.f32 %v4253, %v4270
    %v4280 = vadd.f32 %v4254, %v4272
    %v4281 = vld [vmem:[%s2607 + $0x1] sm:$0xff]
    %v4282 = vld [vmem:[%s2607 + $0x9] sm:$0xff]
    %v4283 = vld [vmem:[%s2607 + $0x49] sm:$0xff]
    %v4284 = vld [vmem:[%s2607 + $0x51] sm:$0xff]
    %s4285 = sld [smem:[#allocation9 + $0x52]]
    %v4286 = vstv %s4285
    %v4287 = vmul.f32 %v4281, %v4286
    %v4288 = vmul.f32 %v4282, %v4286
    %v4289 = vmul.f32 %v4283, %v4286
    %v4290 = vmul.f32 %v4284, %v4286
    %v4291 = vadd.f32 %v4277, %v4287
    %v4292 = vadd.f32 %v4278, %v4288
    %v4293 = vadd.f32 %v4279, %v4289
    %v4294 = vadd.f32 %v4280, %v4290
    %s4295 = sld [smem:[#allocation9 + $0x53]]
    %v4296 = vstv %s4295
    %v4297 = vmul.f32 %v4281, %v4296
    %v4298 = vmul.f32 %v4282, %v4296
    %v4299 = vmul.f32 %v4283, %v4296
    %v4300 = vmul.f32 %v4284, %v4296
    %4305 = vrot.lane.b32.xlu0 %v4297, 127
    %v4306 = vpop.permute.xlu0 %4305
    %4307 = vrot.lane.b32.xlu0 %v4298, 127
    %v4308 = vpop.permute.xlu0 %4307
    %4309 = vrot.lane.b32.xlu0 %v4299, 127
    %v4310 = vpop.permute.xlu0 %4309
    %4311 = vrot.lane.b32.xlu0 %v4300, 127
    %v4312 = vpop.permute.xlu0 %4311
    %v4317 = vadd.f32 %v4291, %v4306
    %v4318 = vadd.f32 %v4292, %v4308
    %v4319 = vadd.f32 %v4293, %v4310
    %v4320 = vadd.f32 %v4294, %v4312
    %v4321 = vadd.f32 %v4165, %v4241
    %v4322 = vadd.f32 %v4166, %v4242
    %v4323 = vadd.f32 %v4167, %v4243
    %v4324 = vadd.f32 %v4168, %v4244
    %v4325 = vadd.f32 %v4321, %v4317
    %v4326 = vadd.f32 %v4322, %v4318
    %v4327 = vadd.f32 %v4323, %v4319
    %v4328 = vadd.f32 %v4324, %v4320
    %s4329 = sld [smem:[#allocation10 + $0x6]]
    %v4330 = vstv %s4329
    %v4331 = vadd.f32 %v4325, %v4330
    %v4332 = vadd.f32 %v4326, %v4330
    %v4333 = vadd.f32 %v4327, %v4330
    %v4334 = vadd.f32 %v4328, %v4330
    %s4335 = scalar_lea.vmem [#allocation12], 96
    %4336 = vst.msk [vmem:[%s4335] sm:$0xff] %vm1009, %v4331
    %4337 = vst.msk [vmem:[%s4335 + $0x8] sm:$0xff] %vm1009, %v4332
    %4338 = vst.msk [vmem:[%s4335 + $0x80] sm:$0xff] %vm1009, %v4333
    %4339 = vst.msk [vmem:[%s4335 + $0x88] sm:$0xff] %vm1009, %v4334
    %v4340 = vld [vmem:[#allocation3] sm:$0xff]
    %v4341 = vld [vmem:[#allocation3 + $0x8] sm:$0xff]
    %v4342 = vld [vmem:[#allocation3 + $0x48] sm:$0xff]
    %v4343 = vld [vmem:[#allocation3 + $0x50] sm:$0xff]
    %s4344 = sld [smem:[#allocation9 + $0x54]]
    %v4345 = vstv %s4344
    %v4346 = vmul.f32 %v4340, %v4345
    %v4347 = vmul.f32 %v4341, %v4345
    %v4348 = vmul.f32 %v4342, %v4345
    %v4349 = vmul.f32 %v4343, %v4345
    %s4350 = sld [smem:[#allocation9 + $0x55]]
    %v4351 = vstv %s4350
    %v4352 = vmul.f32 %v4340, %v4351
    %v4353 = vmul.f32 %v4341, %v4351
    %v4354 = vmul.f32 %v4342, %v4351
    %v4355 = vmul.f32 %v4343, %v4351
    %4360 = vrot.lane.b32.xlu0 %v4352, 127
    %v4361 = vpop.permute.xlu0 %4360
    %4362 = vrot.lane.b32.xlu0 %v4353, 127
    %v4363 = vpop.permute.xlu0 %4362
    %4364 = vrot.lane.b32.xlu0 %v4354, 127
    %v4365 = vpop.permute.xlu0 %4364
    %4366 = vrot.lane.b32.xlu0 %v4355, 127
    %v4367 = vpop.permute.xlu0 %4366
    %v4372 = vadd.f32 %v4346, %v4361
    %v4373 = vadd.f32 %v4347, %v4363
    %v4374 = vadd.f32 %v4348, %v4365
    %v4375 = vadd.f32 %v4349, %v4367
    %v4376 = vld [vmem:[#allocation3 + $0x1] sm:$0xff]
    %v4377 = vld [vmem:[#allocation3 + $0x9] sm:$0xff]
    %v4378 = vld [vmem:[#allocation3 + $0x49] sm:$0xff]
    %v4379 = vld [vmem:[#allocation3 + $0x51] sm:$0xff]
    %s4380 = sld [smem:[#allocation9 + $0x56]]
    %v4381 = vstv %s4380
    %v4382 = vmul.f32 %v4376, %v4381
    %v4383 = vmul.f32 %v4377, %v4381
    %v4384 = vmul.f32 %v4378, %v4381
    %v4385 = vmul.f32 %v4379, %v4381
    %v4386 = vadd.f32 %v4372, %v4382
    %v4387 = vadd.f32 %v4373, %v4383
    %v4388 = vadd.f32 %v4374, %v4384
    %v4389 = vadd.f32 %v4375, %v4385
    %s4390 = sld [smem:[#allocation9 + $0x57]]
    %v4391 = vstv %s4390
    %v4392 = vmul.f32 %v4376, %v4391
    %v4393 = vmul.f32 %v4377, %v4391
    %v4394 = vmul.f32 %v4378, %v4391
    %v4395 = vmul.f32 %v4379, %v4391
    %4400 = vrot.lane.b32.xlu0 %v4392, 127
    %v4401 = vpop.permute.xlu0 %4400
    %4402 = vrot.lane.b32.xlu0 %v4393, 127
    %v4403 = vpop.permute.xlu0 %4402
    %4404 = vrot.lane.b32.xlu0 %v4394, 127
    %v4405 = vpop.permute.xlu0 %4404
    %4406 = vrot.lane.b32.xlu0 %v4395, 127
    %v4407 = vpop.permute.xlu0 %4406
    %v4412 = vadd.f32 %v4386, %v4401
    %v4413 = vadd.f32 %v4387, %v4403
    %v4414 = vadd.f32 %v4388, %v4405
    %v4415 = vadd.f32 %v4389, %v4407
    %v4416 = vld [vmem:[%s1808] sm:$0xff]
    %v4417 = vld [vmem:[%s1808 + $0x8] sm:$0xff]
    %v4418 = vld [vmem:[%s1808 + $0x48] sm:$0xff]
    %v4419 = vld [vmem:[%s1808 + $0x50] sm:$0xff]
    %s4420 = sld [smem:[#allocation9 + $0x58]]
    %v4421 = vstv %s4420
    %v4422 = vmul.f32 %v4416, %v4421
    %v4423 = vmul.f32 %v4417, %v4421
    %v4424 = vmul.f32 %v4418, %v4421
    %v4425 = vmul.f32 %v4419, %v4421
    %s4426 = sld [smem:[#allocation9 + $0x59]]
    %v4427 = vstv %s4426
    %v4428 = vmul.f32 %v4416, %v4427
    %v4429 = vmul.f32 %v4417, %v4427
    %v4430 = vmul.f32 %v4418, %v4427
    %v4431 = vmul.f32 %v4419, %v4427
    %4436 = vrot.lane.b32.xlu0 %v4428, 127
    %v4437 = vpop.permute.xlu0 %4436
    %4438 = vrot.lane.b32.xlu0 %v4429, 127
    %v4439 = vpop.permute.xlu0 %4438
    %4440 = vrot.lane.b32.xlu0 %v4430, 127
    %v4441 = vpop.permute.xlu0 %4440
    %4442 = vrot.lane.b32.xlu0 %v4431, 127
    %v4443 = vpop.permute.xlu0 %4442
    %v4448 = vadd.f32 %v4422, %v4437
    %v4449 = vadd.f32 %v4423, %v4439
    %v4450 = vadd.f32 %v4424, %v4441
    %v4451 = vadd.f32 %v4425, %v4443
    %v4452 = vld [vmem:[%s1808 + $0x1] sm:$0xff]
    %v4453 = vld [vmem:[%s1808 + $0x9] sm:$0xff]
    %v4454 = vld [vmem:[%s1808 + $0x49] sm:$0xff]
    %v4455 = vld [vmem:[%s1808 + $0x51] sm:$0xff]
    %s4456 = sld [smem:[#allocation9 + $0x5a]]
    %v4457 = vstv %s4456
    %v4458 = vmul.f32 %v4452, %v4457
    %v4459 = vmul.f32 %v4453, %v4457
    %v4460 = vmul.f32 %v4454, %v4457
    %v4461 = vmul.f32 %v4455, %v4457
    %v4462 = vadd.f32 %v4448, %v4458
    %v4463 = vadd.f32 %v4449, %v4459
    %v4464 = vadd.f32 %v4450, %v4460
    %v4465 = vadd.f32 %v4451, %v4461
    %s4466 = sld [smem:[#allocation9 + $0x5b]]
    %v4467 = vstv %s4466
    %v4468 = vmul.f32 %v4452, %v4467
    %v4469 = vmul.f32 %v4453, %v4467
    %v4470 = vmul.f32 %v4454, %v4467
    %v4471 = vmul.f32 %v4455, %v4467
    %4476 = vrot.lane.b32.xlu0 %v4468, 127
    %v4477 = vpop.permute.xlu0 %4476
    %4478 = vrot.lane.b32.xlu0 %v4469, 127
    %v4479 = vpop.permute.xlu0 %4478
    %4480 = vrot.lane.b32.xlu0 %v4470, 127
    %v4481 = vpop.permute.xlu0 %4480
    %4482 = vrot.lane.b32.xlu0 %v4471, 127
    %v4483 = vpop.permute.xlu0 %4482
    %v4488 = vadd.f32 %v4462, %v4477
    %v4489 = vadd.f32 %v4463, %v4479
    %v4490 = vadd.f32 %v4464, %v4481
    %v4491 = vadd.f32 %v4465, %v4483
    %v4492 = vld [vmem:[%s2607] sm:$0xff]
    %v4493 = vld [vmem:[%s2607 + $0x8] sm:$0xff]
    %v4494 = vld [vmem:[%s2607 + $0x48] sm:$0xff]
    %v4495 = vld [vmem:[%s2607 + $0x50] sm:$0xff]
    %s4496 = sld [smem:[#allocation9 + $0x5c]]
    %v4497 = vstv %s4496
    %v4498 = vmul.f32 %v4492, %v4497
    %v4499 = vmul.f32 %v4493, %v4497
    %v4500 = vmul.f32 %v4494, %v4497
    %v4501 = vmul.f32 %v4495, %v4497
    %s4502 = sld [smem:[#allocation9 + $0x5d]]
    %v4503 = vstv %s4502
    %v4504 = vmul.f32 %v4492, %v4503
    %v4505 = vmul.f32 %v4493, %v4503
    %v4506 = vmul.f32 %v4494, %v4503
    %v4507 = vmul.f32 %v4495, %v4503
    %4512 = vrot.lane.b32.xlu0 %v4504, 127
    %v4513 = vpop.permute.xlu0 %4512
    %4514 = vrot.lane.b32.xlu0 %v4505, 127
    %v4515 = vpop.permute.xlu0 %4514
    %4516 = vrot.lane.b32.xlu0 %v4506, 127
    %v4517 = vpop.permute.xlu0 %4516
    %4518 = vrot.lane.b32.xlu0 %v4507, 127
    %v4519 = vpop.permute.xlu0 %4518
    %v4524 = vadd.f32 %v4498, %v4513
    %v4525 = vadd.f32 %v4499, %v4515
    %v4526 = vadd.f32 %v4500, %v4517
    %v4527 = vadd.f32 %v4501, %v4519
    %v4528 = vld [vmem:[%s2607 + $0x1] sm:$0xff]
    %v4529 = vld [vmem:[%s2607 + $0x9] sm:$0xff]
    %v4530 = vld [vmem:[%s2607 + $0x49] sm:$0xff]
    %v4531 = vld [vmem:[%s2607 + $0x51] sm:$0xff]
    %s4532 = sld [smem:[#allocation9 + $0x5e]]
    %v4533 = vstv %s4532
    %v4534 = vmul.f32 %v4528, %v4533
    %v4535 = vmul.f32 %v4529, %v4533
    %v4536 = vmul.f32 %v4530, %v4533
    %v4537 = vmul.f32 %v4531, %v4533
    %v4538 = vadd.f32 %v4524, %v4534
    %v4539 = vadd.f32 %v4525, %v4535
    %v4540 = vadd.f32 %v4526, %v4536
    %v4541 = vadd.f32 %v4527, %v4537
    %s4542 = sld [smem:[#allocation9 + $0x5f]]
    %v4543 = vstv %s4542
    %v4544 = vmul.f32 %v4528, %v4543
    %v4545 = vmul.f32 %v4529, %v4543
    %v4546 = vmul.f32 %v4530, %v4543
    %v4547 = vmul.f32 %v4531, %v4543
    %4552 = vrot.lane.b32.xlu0 %v4544, 127
    %v4553 = vpop.permute.xlu0 %4552
    %4554 = vrot.lane.b32.xlu0 %v4545, 127
    %v4555 = vpop.permute.xlu0 %4554
    %4556 = vrot.lane.b32.xlu0 %v4546, 127
    %v4557 = vpop.permute.xlu0 %4556
    %4558 = vrot.lane.b32.xlu0 %v4547, 127
    %v4559 = vpop.permute.xlu0 %4558
    %v4564 = vadd.f32 %v4538, %v4553
    %v4565 = vadd.f32 %v4539, %v4555
    %v4566 = vadd.f32 %v4540, %v4557
    %v4567 = vadd.f32 %v4541, %v4559
    %v4568 = vadd.f32 %v4412, %v4488
    %v4569 = vadd.f32 %v4413, %v4489
    %v4570 = vadd.f32 %v4414, %v4490
    %v4571 = vadd.f32 %v4415, %v4491
    %v4572 = vadd.f32 %v4568, %v4564
    %v4573 = vadd.f32 %v4569, %v4565
    %v4574 = vadd.f32 %v4570, %v4566
    %v4575 = vadd.f32 %v4571, %v4567
    %s4576 = sld [smem:[#allocation10 + $0x7]]
    %v4577 = vstv %s4576
    %v4578 = vadd.f32 %v4572, %v4577
    %v4579 = vadd.f32 %v4573, %v4577
    %v4580 = vadd.f32 %v4574, %v4577
    %v4581 = vadd.f32 %v4575, %v4577
    %s4582 = scalar_lea.vmem [#allocation12], 112
    %4583 = vst.msk [vmem:[%s4582] sm:$0xff] %vm1009, %v4578
    %4584 = vst.msk [vmem:[%s4582 + $0x8] sm:$0xff] %vm1009, %v4579
    %4585 = vst.msk [vmem:[%s4582 + $0x80] sm:$0xff] %vm1009, %v4580
    %4586 = vst.msk [vmem:[%s4582 + $0x88] sm:$0xff] %vm1009, %v4581
    // Predicated region
    $region38: #{custom_layer_forward.1} parent=1 // pred_check
      _
    $region39: #{custom_layer_forward.1} parent=1 // pred_check_branch
      %4588 = sbr.rel (0) target = $region41
    $region40: #{custom_layer_forward.1} parent=1 // pred_region
      %s4590 = ssub.s32 4096, 4096
      %4591 = vsyncadd [#allocation5], %s4590
      %s4592 = sshll.u32 [#allocation12], 4
      %s4593 = int_to_ptr.vmem [resolvable:$true] %s4592
      %4598 = dma.vmem_to_hbm [thread:$0]  %s4593, 4096, %s5, [#allocation5], 128, 128, 8
    $region41: #{custom_layer_forward.1} parent=1 // pred_fallthru
      _
    // Predicated region
    $region42: #{custom_layer_forward.1} parent=1 // pred_check
      _
    $region43: #{custom_layer_forward.1} parent=1 // pred_check_branch
      %4600 = sbr.rel (0) target = $region45
    $region44: #{custom_layer_forward.1} parent=1 // pred_region
      %4601 = dma.done [#allocation5], 4096
    $region45: #{custom_layer_forward.1} parent=1 // pred_fallthru
      _
    %4602 = vsyncpa [#allocation5], 1
    %4603 = vsyncpa [#allocation6], 1
    %4604 = vsyncpa [#allocation8], 1
    %4605 = vsyncpa [#allocation11], 1

</llo_original>
